<compile_context>
chip_gen: v7x
topology: tpu7x:2x2x1
jax: 0.10.0
libtpu: 0.0.40
codegen_flags: <defaults>
</compile_context>

<pallas_src>
import math
import functools

import jax
import jax.numpy as jnp
from jax.experimental import pallas as pl
from jax.experimental.pallas import tpu as pltpu

OUT_LANES = 128  # lane-dense output slab width for the fused head


# ----------------------------------------------------------------------------
# Kernel 1: fused RPN head (3x3 conv + ReLU + fused 1x1 cls/box) + proposal decode
# ----------------------------------------------------------------------------
def rpn_head_decode(xcol, wconv, bconv, wfused, bfused, anchor_info,
                    img_h, img_w, num_anchors, tile_hw=128):
    """xcol        (HWp, 9C) bf16  im2col, columns ordered (kh, kw, cin)
       wconv       (9C, C)   bf16  3x3 conv weight, rows ordered (kh, kw, cin)
       bconv       (1, C)    f32
       wfused      (C, 128)  bf16  [wcls(A) | wbox dx(A)|dy(A)|dw(A)|dh(A) | 0-pad]
       bfused      (1, 128)  f32
       anchor_info (HWp, 4A) f32   [w | h | cx | cy] per anchor (prediction row order)
       returns slab (HWp, 128) f32: [sigmoid score | x1 | y1 | x2 | y2 | 0-pad]"""
    HWp, K9C = xcol.shape
    A = num_anchors
    dwh_max = math.log(1000.0 / 16)
    img_h_f = float(img_h)
    img_w_f = float(img_w)

    def kernel(xcol_ref, wconv_ref, bconv_ref, wf_ref, bf_ref, anch_ref, out_ref):
        # 3x3 conv as a single big-K bf16 matmul, f32 accumulate
        acc = jnp.dot(xcol_ref[...], wconv_ref[...],
                      preferred_element_type=jnp.float32)
        feat = jnp.maximum(acc + bconv_ref[...], 0.0)                      # ReLU
        # fused 1x1 cls + bbox conv, lane-dense 128-wide output
        y = jnp.dot(feat.astype(jnp.bfloat16), wf_ref[...],
                    preferred_element_type=jnp.float32) + bf_ref[...]      # (tile, 128)

        logits = y[:, 0:A]
        dx = y[:, A:2 * A]
        dy = y[:, 2 * A:3 * A]
        dw = jnp.minimum(y[:, 3 * A:4 * A], dwh_max)
        dh = jnp.minimum(y[:, 4 * A:5 * A], dwh_max)

        aw = anch_ref[:, 0:A]
        ah = anch_ref[:, A:2 * A]
        acx = anch_ref[:, 2 * A:3 * A]
        acy = anch_ref[:, 3 * A:4 * A]

        pcx = dx * aw + acx
        pcy = dy * ah + acy
        pw = jnp.exp(dw) * aw
        ph = jnp.exp(dh) * ah
        x1 = jnp.clip(pcx - 0.5 * pw, 0.0, img_w_f)
        y1 = jnp.clip(pcy - 0.5 * ph, 0.0, img_h_f)
        x2 = jnp.clip(pcx + 0.5 * pw, 0.0, img_w_f)
        y2 = jnp.clip(pcy + 0.5 * ph, 0.0, img_h_f)
        score = 1.0 / (1.0 + jnp.exp(-logits))                             # sigmoid

        out_ref[...] = jnp.zeros_like(out_ref)                             # zero pad lanes
        out_ref[:, 0:A] = score
        out_ref[:, A:2 * A] = x1
        out_ref[:, 2 * A:3 * A] = y1
        out_ref[:, 3 * A:4 * A] = x2
        out_ref[:, 4 * A:5 * A] = y2

    in_specs = [
        pl.BlockSpec((tile_hw, K9C), lambda i: (i, 0)),
        pl.BlockSpec(wconv.shape, lambda i: (0, 0)),
        pl.BlockSpec(bconv.shape, lambda i: (0, 0)),
        pl.BlockSpec(wfused.shape, lambda i: (0, 0)),
        pl.BlockSpec(bfused.shape, lambda i: (0, 0)),
        pl.BlockSpec((tile_hw, 4 * A), lambda i: (i, 0)),
    ]
    out_specs = pl.BlockSpec((tile_hw, OUT_LANES), lambda i: (i, 0))
    return pl.pallas_call(
        kernel,
        out_shape=jax.ShapeDtypeStruct((HWp, OUT_LANES), jnp.float32),
        grid=(HWp // tile_hw,),
        in_specs=in_specs, out_specs=out_specs,
        compiler_params=pltpu.CompilerParams(dimension_semantics=("parallel",)),
    )(xcol, wconv, bconv, wfused, bfused, anchor_info)


# ----------------------------------------------------------------------------
# Kernel 2: greedy NMS fully in VMEM (IoU computed on the fly, no KxK HBM matrix)
# ----------------------------------------------------------------------------
def nms_keep(boxes, valid, iou_threshold, block=128):
    """boxes (K,4) f32 sorted by score desc (K % block == 0), valid (K,) bool.
       Returns keep mask (K,) f32 (1.0 = kept)."""
    K = boxes.shape[0]
    T = block
    thr = float(iou_threshold)
    boxes_soa = boxes.T                                       # (4, K), K on lanes
    valid_f = valid.astype(jnp.float32).reshape(1, K)

    def kernel(q_ref, soa_ref, valid_ref, keep_ref, ov_ref):
        j = pl.program_id(0)

        @pl.when(j == 0)
        def _():
            keep_ref[...] = valid_ref[...]

        # query block (T boxes) vs all K boxes, lane-dense (T, K)
        qx1 = q_ref[:, 0:1]; qy1 = q_ref[:, 1:2]
        qx2 = q_ref[:, 2:3]; qy2 = q_ref[:, 3:4]
        kx1 = soa_ref[0:1, :]; ky1 = soa_ref[1:2, :]
        kx2 = soa_ref[2:3, :]; ky2 = soa_ref[3:4, :]
        area_q = (qx2 - qx1) * (qy2 - qy1)                    # (T, 1)
        area_k = (kx2 - kx1) * (ky2 - ky1)                    # (1, K)
        xl = jnp.maximum(qx1, kx1); yt = jnp.maximum(qy1, ky1)
        xr = jnp.minimum(qx2, kx2); yb = jnp.minimum(qy2, ky2)
        inter = jnp.maximum(xr - xl, 0.0) * jnp.maximum(yb - yt, 0.0)
        union = jnp.maximum(area_q + area_k - inter, 1e-6)    # eps: zero-area padded boxes
        iou = inter * pl.reciprocal(union, approx=True)       # divide on the EUP

        col = jax.lax.broadcasted_iota(jnp.int32, (T, K), 1)
        row_g = jax.lax.broadcasted_iota(jnp.int32, (T, K), 0) + j * T
        # suppression candidates: IoU > thr AND key has strictly higher priority
        ov_ref[...] = jnp.where((iou > thr) & (col < row_g), 1.0, 0.0)

        col1 = jax.lax.broadcasted_iota(jnp.int32, (1, K), 1)

        def body(t, keep_vec):
            g = j * T + t
            row = ov_ref[pl.ds(t, 1), :]                      # (1, K)
            suppressed = jnp.sum(row * keep_vec) > 0.0
            return jnp.where((col1 == g) & suppressed, 0.0, keep_vec)

        keep_ref[...] = jax.lax.fori_loop(0, T, body, keep_ref[...])

    keep = pl.pallas_call(
        kernel,
        out_shape=jax.ShapeDtypeStruct((1, K), jnp.float32),
        grid=(K // T,),
        in_specs=[pl.BlockSpec((T, 4), lambda j: (j, 0)),
                  pl.BlockSpec((4, K), lambda j: (0, 0)),
                  pl.BlockSpec((1, K), lambda j: (0, 0))],
        out_specs=pl.BlockSpec((1, K), lambda j: (0, 0)),
        scratch_shapes=[pltpu.VMEM((T, K), jnp.float32)],
        compiler_params=pltpu.CompilerParams(dimension_semantics=("arbitrary",)),
    )(boxes, boxes_soa, valid_f)
    return keep.reshape(-1)


# ----------------------------------------------------------------------------
# Glue: anchor generation (mirrors the PyTorch module literally)
# ----------------------------------------------------------------------------
def generate_anchors(image_shape, feat_shape, scales, aspect_ratios):
    grid_h, grid_w = feat_shape[-2:]
    image_h, image_w = image_shape[-2:]
    stride_h = image_h // grid_h
    stride_w = image_w // grid_w
    scales = jnp.asarray(scales, jnp.float32)
    aspect_ratios = jnp.asarray(aspect_ratios, jnp.float32)
    h_ratios = jnp.sqrt(aspect_ratios)
    w_ratios = 1.0 / h_ratios
    ws = (w_ratios[:, None] * scales[None, :]).reshape(-1)
    hs = (h_ratios[:, None] * scales[None, :]).reshape(-1)
    base_anchors = jnp.round(jnp.stack([-ws / 2, -hs / 2, ws / 2, hs / 2], axis=1))
    shifts_x = jnp.arange(0, grid_w, dtype=jnp.int32) * stride_w
    shifts_y = jnp.arange(0, grid_h, dtype=jnp.int32) * stride_h
    sy, sx = jnp.meshgrid(shifts_y, shifts_x, indexing="ij")
    shifts = jnp.stack([sx, sy, sx, sy], axis=1)              # (grid_h, 4, grid_w), as in spec
    anchors = shifts.reshape(-1, 1, 4).astype(jnp.float32) + base_anchors.reshape(1, -1, 4)
    return anchors.reshape(-1, 4)


# ----------------------------------------------------------------------------
# RPN forward (inference path; target=None)
# ----------------------------------------------------------------------------
def rpn_forward(image, feat, params, scales, aspect_ratios,
                nms_threshold=0.7, post_nms_topk=2000, tile_hw=128):
    B, C, H, W = feat.shape
    assert B == 1, "reference RPN semantics assume batch size 1"
    A = len(scales) * len(aspect_ratios)
    HW = H * W
    img_h, img_w = image.shape[-2], image.shape[-1]

    # --- weight prep: single 9C-contraction conv weight + fused lane-dense cls/box ---
    wconv = params["wconv9"].reshape(9 * C, C).astype(jnp.bfloat16)         # rows (kh,kw,cin)
    bconv = params["bconv"].reshape(1, C).astype(jnp.float32)
    # wbox column c == torch conv out-channel c == (anchor a=c//4, coord c%4);
    # regroup to [dx(A)|dy(A)|dw(A)|dh(A)] so the kernel decode uses contiguous slices.
    wbox_g = params["wbox"].reshape(C, A, 4).transpose(0, 2, 1).reshape(C, 4 * A)
    bbox_g = params["bbox"].reshape(A, 4).transpose(1, 0).reshape(1, 4 * A)
    wfused = jnp.zeros((C, OUT_LANES), jnp.float32)
    wfused = wfused.at[:, 0:A].set(params["wcls"]).at[:, A:5 * A].set(wbox_g)
    wfused = wfused.astype(jnp.bfloat16)
    bfused = jnp.zeros((1, OUT_LANES), jnp.float32)
    bfused = bfused.at[:, 0:A].set(params["bcls"]).at[:, A:5 * A].set(bbox_g)

    # --- im2col built once, in bf16 ---
    # TODO(synk): for large feature maps, DMA a haloed (tile_h+2, W+2, C) block per grid
    # step inside the kernel instead of materializing the 9x-expanded im2col in HBM.
    feat_nhwc = jnp.transpose(feat, (0, 2, 3, 1))[0]                        # (H, W, C)
    xpad = jnp.pad(feat_nhwc, ((1, 1), (1, 1), (0, 0)))
    cols = [xpad[dh:dh + H, dw:dw + W, :] for dh in range(3) for dw in range(3)]
    xcol = jnp.concatenate(cols, axis=-1).reshape(HW, 9 * C).astype(jnp.bfloat16)

    # --- anchors (spec-literal ordering) + per-anchor (w,h,cx,cy) in prediction row order ---
    anchors = generate_anchors(image.shape, feat.shape, scales, aspect_ratios)  # (HW*A, 4)
    an = anchors.reshape(HW, A, 4)
    aw = an[..., 2] - an[..., 0]
    ah = an[..., 3] - an[..., 1]
    acx = an[..., 0] + 0.5 * aw
    acy = an[..., 1] + 0.5 * ah
    anchor_info = jnp.concatenate([aw, ah, acx, acy], axis=-1)              # (HW, 4A)

    HWp = ((HW + tile_hw - 1) // tile_hw) * tile_hw
    if HWp != HW:
        xcol = jnp.pad(xcol, ((0, HWp - HW), (0, 0)))
        anchor_info = jnp.pad(anchor_info, ((0, HWp - HW), (0, 0)))

    slab = rpn_head_decode(xcol, wconv, bconv, wfused, bfused, anchor_info,
                           img_h, img_w, A, tile_hw=tile_hw)[:HW]           # (HW, 128)

    scores = slab[:, 0:A].reshape(-1)                                       # (HW*A,) sigmoided
    proposals = jnp.stack([slab[:, A:2 * A], slab[:, 2 * A:3 * A],
                           slab[:, 3 * A:4 * A], slab[:, 4 * A:5 * A]],
                          axis=-1).reshape(-1, 4)                           # (HW*A, 4) clamped

    # --- filter_proposals: top-k, size filter, Pallas NMS, top post_nms_topk ---
    N = scores.shape[0]
    k = N - 1 if N < 10000 else 10000            # mirrors the reference module exactly
    top_scores, top_idx = jax.lax.top_k(scores, k)
    props = proposals[top_idx]
    widths = props[:, 2] - props[:, 0]
    heights = props[:, 3] - props[:, 1]
    valid = (widths >= 1.0) & (heights >= 1.0)

    nms_block = 128
    KP = ((k + nms_block - 1) // nms_block) * nms_block
    pad = KP - k
    props_p = jnp.pad(props, ((0, pad), (0, 0)))
    scores_p = jnp.pad(top_scores, (0, pad), constant_values=-1.0)
    valid_p = jnp.pad(valid, (0, pad), constant_values=False)

    keep = nms_keep(props_p, valid_p, nms_threshold, block=nms_block)       # (KP,) f32

    # TODO(synk): torch returns dynamically sized proposals[:2000]; with static shapes we
    # return fixed-size score-sorted arrays plus num_keep (rows past num_keep have score -1).
    masked_scores = jnp.where(keep > 0.5, scores_p, -1.0)
    k2 = min(post_nms_topk, KP)
    final_scores, order = jax.lax.top_k(masked_scores, k2)
    final_props = props_p[order]
    num_keep = jnp.minimum(jnp.sum((keep > 0.5).astype(jnp.int32)), post_nms_topk)
    return {"proposals": final_props, "scores": final_scores,
            "keep": keep > 0.5, "num_keep": num_keep}


# ----------------------------------------------------------------------------
# Deterministic synthetic parameters (mirrors module __init__ shapes / init)
# ----------------------------------------------------------------------------
def make_params(key, in_channels, num_anchors):
    k1, k2, k3 = jax.random.split(key, 3)
    C, A = in_channels, num_anchors
    # rpn_conv: Conv2d(C, C, 3, padding=1); stored as (kh, kw, Cin, Cout) -> (9, C, C)
    wconv = jax.random.normal(k1, (3, 3, C, C), jnp.float32) * 0.05
    return {
        "wconv9": wconv.reshape(9, C, C),
        "bconv": jnp.zeros((1, C), jnp.float32),
        # cls_layer / bbox_reg_layer: normal(std=0.01) weights, zero bias
        # wbox column c corresponds to torch out-channel c = (anchor a=c//4, coord c%4)
        "wcls": jax.random.normal(k2, (C, A), jnp.float32) * 0.01,
        "bcls": jnp.zeros((1, A), jnp.float32),
        "wbox": jax.random.normal(k3, (C, 4 * A), jnp.float32) * 0.01,
        "bbox": jnp.zeros((1, 4 * A), jnp.float32),
    }


if __name__ == "__main__":
    in_channels = 32
    scales = (8.0, 16.0)
    aspect_ratios = (0.5, 1.0, 2.0)
    num_anchors = len(scales) * len(aspect_ratios)     # 6

    key = jax.random.PRNGKey(0)
    k_img, k_feat, k_par = jax.random.split(key, 3)
    image = jax.random.normal(k_img, (1, 3, 64, 64), jnp.float32)                 # NCHW
    feat = jax.random.normal(k_feat, (1, in_channels, 16, 16), jnp.float32)       # NCHW
    params = make_params(k_par, in_channels, num_anchors)

    fwd = jax.jit(functools.partial(rpn_forward,
                                    scales=scales,
                                    aspect_ratios=aspect_ratios,
                                    nms_threshold=0.7))
    out = fwd(image, feat, params)
    jax.block_until_ready(out)

    assert out["proposals"].shape[-1] == 4
    assert bool(jnp.all(jnp.isfinite(out["proposals"])))
    assert bool(jnp.all(jnp.isfinite(out["scores"])))
    assert int(out["num_keep"]) > 0
    print("KERNEL_OK")
</pallas_src>

<mosaic_0001>
module attributes {stable_mosaic.version = 11 : i64} {
  func.func private @main(%arg0: i32) attributes {dimension_semantics = [#tpu.dimension_semantics<core_parallel>], iteration_bounds = array<i64: 2>, tpu.core_type = #tpu.core_type<sc_scalar_subcore>, window_params = []} {
    return
  }
}

module attributes {stable_mosaic.version = 11 : i64} {
  func.func private @main(%arg0: i32) attributes {dimension_semantics = [#tpu.dimension_semantics<core_parallel>], iteration_bounds = array<i64: 2>, tpu.core_type = #tpu.core_type<sc_scalar_subcore>, window_params = []} {
    return
  }
}

module attributes {stable_mosaic.version = 11 : i64} {
  func.func @kernel(%arg0: i32, %arg1: memref<128x288xbf16, #tpu.memory_space<vmem>>, %arg2: memref<288x32xbf16, #tpu.memory_space<vmem>>, %arg3: memref<1x32xf32, #tpu.memory_space<vmem>>, %arg4: memref<32x128xbf16, #tpu.memory_space<vmem>>, %arg5: memref<1x128xf32, #tpu.memory_space<vmem>>, %arg6: memref<128x24xf32, #tpu.memory_space<vmem>>, %arg7: memref<128x128xf32, #tpu.memory_space<vmem>>) attributes {dimension_semantics = [#tpu.dimension_semantics<parallel>], iteration_bounds = array<i64: 2>, scalar_prefetch = 0 : i64, scratch_operands = 0 : i64, tpu.core_type = #tpu.core_type<tc>, window_params = [{transform_indices = @transform_0, window_bounds = array<i64: 128, 288>}, {pipeline_mode = #tpu.pipeline_mode<synchronous>, transform_indices = @transform_1, window_bounds = array<i64: 288, 32>}, {pipeline_mode = #tpu.pipeline_mode<synchronous>, transform_indices = @transform_2, window_bounds = array<i64: 1, 32>}, {pipeline_mode = #tpu.pipeline_mode<synchronous>, transform_indices = @transform_3, window_bounds = array<i64: 32, 128>}, {pipeline_mode = #tpu.pipeline_mode<synchronous>, transform_indices = @transform_4, window_bounds = array<i64: 1, 128>}, {transform_indices = @transform_5, window_bounds = array<i64: 128, 24>}, {transform_indices = @transform_6, window_bounds = array<i64: 128, 128>}]} {
    %c0 = arith.constant 0 : index
    %c0_0 = arith.constant 0 : index
    %0 = vector.load %arg1[%c0, %c0_0] : memref<128x288xbf16, #tpu.memory_space<vmem>>, vector<128x288xbf16>
    %c0_1 = arith.constant 0 : index
    %c0_2 = arith.constant 0 : index
    %1 = vector.load %arg2[%c0_1, %c0_2] : memref<288x32xbf16, #tpu.memory_space<vmem>>, vector<288x32xbf16>
    %cst = arith.constant dense<0.000000e+00> : vector<128x32xf32>
    %2 = tpu.matmul %0, %1, %cst {dimension_numbers = #tpu.dot_dimension_numbers<[1], [0], [0], [1], [0, 0, 1, 1], [], []>} : vector<128x288xbf16>, vector<288x32xbf16>, vector<128x32xf32> -> vector<128x32xf32>
    %c0_3 = arith.constant 0 : index
    %c0_4 = arith.constant 0 : index
    %3 = vector.load %arg3[%c0_3, %c0_4] : memref<1x32xf32, #tpu.memory_space<vmem>>, vector<1x32xf32>
    %4 = vector.broadcast %3 : vector<1x32xf32> to vector<128x32xf32>
    %5 = arith.addf %2, %4 : vector<128x32xf32>
    %cst_5 = arith.constant 0.000000e+00 : f32
    %6 = vector.broadcast %cst_5 : f32 to vector<128x32xf32>
    %7 = arith.maximumf %5, %6 : vector<128x32xf32>
    %8 = arith.truncf %7 : vector<128x32xf32> to vector<128x32xbf16>
    %c0_6 = arith.constant 0 : index
    %c0_7 = arith.constant 0 : index
    %9 = vector.load %arg4[%c0_6, %c0_7] : memref<32x128xbf16, #tpu.memory_space<vmem>>, vector<32x128xbf16>
    %cst_8 = arith.constant dense<0.000000e+00> : vector<128x128xf32>
    %10 = tpu.matmul %8, %9, %cst_8 {dimension_numbers = #tpu.dot_dimension_numbers<[1], [0], [0], [1], [0, 0, 1, 1], [], []>} : vector<128x32xbf16>, vector<32x128xbf16>, vector<128x128xf32> -> vector<128x128xf32>
    %c0_9 = arith.constant 0 : index
    %c0_10 = arith.constant 0 : index
    %11 = vector.load %arg5[%c0_9, %c0_10] : memref<1x128xf32, #tpu.memory_space<vmem>>, vector<1x128xf32>
    %12 = vector.broadcast %11 : vector<1x128xf32> to vector<128x128xf32>
    %13 = arith.addf %10, %12 : vector<128x128xf32>
    %14 = vector.extract_strided_slice %13 {offsets = [0, 0], sizes = [128, 6], strides = [1, 1]} : vector<128x128xf32> to vector<128x6xf32>
    %15 = vector.extract_strided_slice %13 {offsets = [0, 6], sizes = [128, 6], strides = [1, 1]} : vector<128x128xf32> to vector<128x6xf32>
    %16 = vector.extract_strided_slice %13 {offsets = [0, 12], sizes = [128, 6], strides = [1, 1]} : vector<128x128xf32> to vector<128x6xf32>
    %17 = vector.extract_strided_slice %13 {offsets = [0, 18], sizes = [128, 6], strides = [1, 1]} : vector<128x128xf32> to vector<128x6xf32>
    %cst_11 = arith.constant 4.13516665 : f32
    %18 = vector.broadcast %cst_11 : f32 to vector<128x6xf32>
    %19 = arith.minimumf %17, %18 : vector<128x6xf32>
    %20 = vector.extract_strided_slice %13 {offsets = [0, 24], sizes = [128, 6], strides = [1, 1]} : vector<128x128xf32> to vector<128x6xf32>
    %cst_12 = arith.constant 4.13516665 : f32
    %21 = vector.broadcast %cst_12 : f32 to vector<128x6xf32>
    %22 = arith.minimumf %20, %21 : vector<128x6xf32>
    %c0_13 = arith.constant 0 : index
    %c0_14 = arith.constant 0 : index
    %23 = vector.load %arg6[%c0_13, %c0_14] : memref<128x24xf32, #tpu.memory_space<vmem>>, vector<128x6xf32>
    %c0_15 = arith.constant 0 : index
    %c6 = arith.constant 6 : index
    %24 = vector.load %arg6[%c0_15, %c6] : memref<128x24xf32, #tpu.memory_space<vmem>>, vector<128x6xf32>
    %c0_16 = arith.constant 0 : index
    %c12 = arith.constant 12 : index
    %25 = vector.load %arg6[%c0_16, %c12] : memref<128x24xf32, #tpu.memory_space<vmem>>, vector<128x6xf32>
    %c0_17 = arith.constant 0 : index
    %c18 = arith.constant 18 : index
    %26 = vector.load %arg6[%c0_17, %c18] : memref<128x24xf32, #tpu.memory_space<vmem>>, vector<128x6xf32>
    %27 = arith.mulf %15, %23 : vector<128x6xf32>
    %28 = arith.addf %27, %25 : vector<128x6xf32>
    %29 = arith.mulf %16, %24 : vector<128x6xf32>
    %30 = arith.addf %29, %26 : vector<128x6xf32>
    %31 = math.exp %19 : vector<128x6xf32>
    %32 = arith.mulf %31, %23 : vector<128x6xf32>
    %33 = math.exp %22 : vector<128x6xf32>
    %34 = arith.mulf %33, %24 : vector<128x6xf32>
    %cst_18 = arith.constant 5.000000e-01 : f32
    %35 = vector.broadcast %cst_18 : f32 to vector<128x6xf32>
    %36 = arith.mulf %35, %32 : vector<128x6xf32>
    %37 = arith.subf %28, %36 : vector<128x6xf32>
    %cst_19 = arith.constant 0.000000e+00 : f32
    %cst_20 = arith.constant 6.400000e+01 : f32
    %38 = vector.broadcast %cst_19 : f32 to vector<128x6xf32>
    %39 = arith.maximumf %38, %37 : vector<128x6xf32>
    %40 = vector.broadcast %cst_20 : f32 to vector<128x6xf32>
    %41 = arith.minimumf %40, %39 : vector<128x6xf32>
    %cst_21 = arith.constant 5.000000e-01 : f32
    %42 = vector.broadcast %cst_21 : f32 to vector<128x6xf32>
    %43 = arith.mulf %42, %34 : vector<128x6xf32>
    %44 = arith.subf %30, %43 : vector<128x6xf32>
    %cst_22 = arith.constant 0.000000e+00 : f32
    %cst_23 = arith.constant 6.400000e+01 : f32
    %45 = vector.broadcast %cst_22 : f32 to vector<128x6xf32>
    %46 = arith.maximumf %45, %44 : vector<128x6xf32>
    %47 = vector.broadcast %cst_23 : f32 to vector<128x6xf32>
    %48 = arith.minimumf %47, %46 : vector<128x6xf32>
    %cst_24 = arith.constant 5.000000e-01 : f32
    %49 = vector.broadcast %cst_24 : f32 to vector<128x6xf32>
    %50 = arith.mulf %49, %32 : vector<128x6xf32>
    %51 = arith.addf %28, %50 : vector<128x6xf32>
    %cst_25 = arith.constant 0.000000e+00 : f32
    %cst_26 = arith.constant 6.400000e+01 : f32
    %52 = vector.broadcast %cst_25 : f32 to vector<128x6xf32>
    %53 = arith.maximumf %52, %51 : vector<128x6xf32>
    %54 = vector.broadcast %cst_26 : f32 to vector<128x6xf32>
    %55 = arith.minimumf %54, %53 : vector<128x6xf32>
    %cst_27 = arith.constant 5.000000e-01 : f32
    %56 = vector.broadcast %cst_27 : f32 to vector<128x6xf32>
    %57 = arith.mulf %56, %34 : vector<128x6xf32>
    %58 = arith.addf %30, %57 : vector<128x6xf32>
    %cst_28 = arith.constant 0.000000e+00 : f32
    %cst_29 = arith.constant 6.400000e+01 : f32
    %59 = vector.broadcast %cst_28 : f32 to vector<128x6xf32>
    %60 = arith.maximumf %59, %58 : vector<128x6xf32>
    %61 = vector.broadcast %cst_29 : f32 to vector<128x6xf32>
    %62 = arith.minimumf %61, %60 : vector<128x6xf32>
    %cst_30 = arith.constant 0.000000e+00 : f32
    %63 = vector.broadcast %cst_30 : f32 to vector<128x6xf32>
    %64 = arith.subf %63, %14 : vector<128x6xf32>
    %65 = math.exp %64 : vector<128x6xf32>
    %cst_31 = arith.constant 1.000000e+00 : f32
    %66 = vector.broadcast %cst_31 : f32 to vector<128x6xf32>
    %67 = arith.addf %66, %65 : vector<128x6xf32>
    %cst_32 = arith.constant 1.000000e+00 : f32
    %68 = vector.broadcast %cst_32 : f32 to vector<128x6xf32>
    %69 = arith.divf %68, %67 : vector<128x6xf32>
    %cst_33 = arith.constant 0.000000e+00 : f32
    %70 = vector.broadcast %cst_33 : f32 to vector<128x128xf32>
    %c0_34 = arith.constant 0 : index
    %c0_35 = arith.constant 0 : index
    %71 = vector.load %arg7[%c0_34, %c0_35] : memref<128x128xf32, #tpu.memory_space<vmem>>, vector<128x128xf32>
    tpu.vector_store %arg7[%c0_34, %c0_35], %70 {strides = array<i32>} : memref<128x128xf32, #tpu.memory_space<vmem>>, vector<128x128xf32>,
    %c0_36 = arith.constant 0 : index
    %c0_37 = arith.constant 0 : index
    %72 = vector.load %arg7[%c0_36, %c0_37] : memref<128x128xf32, #tpu.memory_space<vmem>>, vector<128x6xf32>
    tpu.vector_store %arg7[%c0_36, %c0_37], %69 {strides = array<i32>} : memref<128x128xf32, #tpu.memory_space<vmem>>, vector<128x6xf32>,
    %c0_38 = arith.constant 0 : index
    %c6_39 = arith.constant 6 : index
    %73 = vector.load %arg7[%c0_38, %c6_39] : memref<128x128xf32, #tpu.memory_space<vmem>>, vector<128x6xf32>
    tpu.vector_store %arg7[%c0_38, %c6_39], %41 {strides = array<i32>} : memref<128x128xf32, #tpu.memory_space<vmem>>, vector<128x6xf32>,
    %c0_40 = arith.constant 0 : index
    %c12_41 = arith.constant 12 : index
    %74 = vector.load %arg7[%c0_40, %c12_41] : memref<128x128xf32, #tpu.memory_space<vmem>>, vector<128x6xf32>
    tpu.vector_store %arg7[%c0_40, %c12_41], %48 {strides = array<i32>} : memref<128x128xf32, #tpu.memory_space<vmem>>, vector<128x6xf32>,
    %c0_42 = arith.constant 0 : index
    %c18_43 = arith.constant 18 : index
    %75 = vector.load %arg7[%c0_42, %c18_43] : memref<128x128xf32, #tpu.memory_space<vmem>>, vector<128x6xf32>
    tpu.vector_store %arg7[%c0_42, %c18_43], %55 {strides = array<i32>} : memref<128x128xf32, #tpu.memory_space<vmem>>, vector<128x6xf32>,
    %c0_44 = arith.constant 0 : index
    %c24 = arith.constant 24 : index
    %76 = vector.load %arg7[%c0_44, %c24] : memref<128x128xf32, #tpu.memory_space<vmem>>, vector<128x6xf32>
    tpu.vector_store %arg7[%c0_44, %c24], %62 {strides = array<i32>} : memref<128x128xf32, #tpu.memory_space<vmem>>, vector<128x6xf32>,
    return
  }
  func.func @transform_0(%arg0: i32) -> (i32, i32) {
    %c0_i32 = arith.constant 0 : i32
    %c0_i32_0 = arith.constant 0 : i32
    return %arg0, %c0_i32 : i32, i32
  }
  func.func @transform_1(%arg0: i32) -> (i32, i32) {
    %c0_i32 = arith.constant 0 : i32
    %c0_i32_0 = arith.constant 0 : i32
    %c0_i32_1 = arith.constant 0 : i32
    return %c0_i32, %c0_i32_0 : i32, i32
  }
  func.func @transform_2(%arg0: i32) -> (i32, i32) {
    %c0_i32 = arith.constant 0 : i32
    %c0_i32_0 = arith.constant 0 : i32
    %c0_i32_1 = arith.constant 0 : i32
    return %c0_i32, %c0_i32_0 : i32, i32
  }
  func.func @transform_3(%arg0: i32) -> (i32, i32) {
    %c0_i32 = arith.constant 0 : i32
    %c0_i32_0 = arith.constant 0 : i32
    %c0_i32_1 = arith.constant 0 : i32
    return %c0_i32, %c0_i32_0 : i32, i32
  }
  func.func @transform_4(%arg0: i32) -> (i32, i32) {
    %c0_i32 = arith.constant 0 : i32
    %c0_i32_0 = arith.constant 0 : i32
    %c0_i32_1 = arith.constant 0 : i32
    return %c0_i32, %c0_i32_0 : i32, i32
  }
  func.func @transform_5(%arg0: i32) -> (i32, i32) {
    %c0_i32 = arith.constant 0 : i32
    %c0_i32_0 = arith.constant 0 : i32
    return %arg0, %c0_i32 : i32, i32
  }
  func.func @transform_6(%arg0: i32) -> (i32, i32) {
    %c0_i32 = arith.constant 0 : i32
    %c0_i32_0 = arith.constant 0 : i32
    return %arg0, %c0_i32 : i32, i32
  }
}

module attributes {stable_mosaic.version = 11 : i64} {
  func.func @kernel(%arg0: i32, %arg1: memref<128x4xf32, #tpu.memory_space<vmem>>, %arg2: memref<4x1536xf32, #tpu.memory_space<vmem>>, %arg3: memref<1x1536xf32, #tpu.memory_space<vmem>>, %arg4: memref<1x1536xf32, #tpu.memory_space<vmem>>, %arg5: memref<128x1536xf32, #tpu.memory_space<vmem>>) attributes {dimension_semantics = [#tpu.dimension_semantics<arbitrary>], iteration_bounds = array<i64: 12>, scalar_prefetch = 0 : i64, scratch_operands = 1 : i64, tpu.core_type = #tpu.core_type<tc>, window_params = [{transform_indices = @transform_0, window_bounds = array<i64: 128, 4>}, {pipeline_mode = #tpu.pipeline_mode<synchronous>, transform_indices = @transform_1, window_bounds = array<i64: 4, 1536>}, {pipeline_mode = #tpu.pipeline_mode<synchronous>, transform_indices = @transform_2, window_bounds = array<i64: 1, 1536>}, {pipeline_mode = #tpu.pipeline_mode<synchronous>, transform_indices = @transform_3, window_bounds = array<i64: 1, 1536>}]} {
    %c0_i32 = arith.constant 0 : i32
    %0 = arith.cmpi eq, %arg0, %c0_i32 : i32
    %1 = arith.extui %0 : i1 to i32
    %c0_i32_0 = arith.constant 0 : i32
    %2 = arith.cmpi ne, %1, %c0_i32_0 : i32
    scf.if %2 {
      %c0_27 = arith.constant 0 : index
      %c0_28 = arith.constant 0 : index
      %62 = vector.load %arg3[%c0_27, %c0_28] : memref<1x1536xf32, #tpu.memory_space<vmem>>, vector<1x1536xf32>
      %c0_29 = arith.constant 0 : index
      %c0_30 = arith.constant 0 : index
      %63 = vector.load %arg4[%c0_29, %c0_30] : memref<1x1536xf32, #tpu.memory_space<vmem>>, vector<1x1536xf32>
      tpu.vector_store %arg4[%c0_29, %c0_30], %62 {strides = array<i32>} : memref<1x1536xf32, #tpu.memory_space<vmem>>, vector<1x1536xf32>,
    } else {
    }
    %c0 = arith.constant 0 : index
    %c0_1 = arith.constant 0 : index
    %3 = vector.load %arg1[%c0, %c0_1] : memref<128x4xf32, #tpu.memory_space<vmem>>, vector<128x1xf32>
    %c0_2 = arith.constant 0 : index
    %c1 = arith.constant 1 : index
    %4 = vector.load %arg1[%c0_2, %c1] : memref<128x4xf32, #tpu.memory_space<vmem>>, vector<128x1xf32>
    %c0_3 = arith.constant 0 : index
    %c2 = arith.constant 2 : index
    %5 = vector.load %arg1[%c0_3, %c2] : memref<128x4xf32, #tpu.memory_space<vmem>>, vector<128x1xf32>
    %c0_4 = arith.constant 0 : index
    %c3 = arith.constant 3 : index
    %6 = vector.load %arg1[%c0_4, %c3] : memref<128x4xf32, #tpu.memory_space<vmem>>, vector<128x1xf32>
    %c0_5 = arith.constant 0 : index
    %c0_6 = arith.constant 0 : index
    %7 = vector.load %arg2[%c0_5, %c0_6] : memref<4x1536xf32, #tpu.memory_space<vmem>>, vector<1x1536xf32>
    %c1_7 = arith.constant 1 : index
    %c0_8 = arith.constant 0 : index
    %8 = vector.load %arg2[%c1_7, %c0_8] : memref<4x1536xf32, #tpu.memory_space<vmem>>, vector<1x1536xf32>
    %c2_9 = arith.constant 2 : index
    %c0_10 = arith.constant 0 : index
    %9 = vector.load %arg2[%c2_9, %c0_10] : memref<4x1536xf32, #tpu.memory_space<vmem>>, vector<1x1536xf32>
    %c3_11 = arith.constant 3 : index
    %c0_12 = arith.constant 0 : index
    %10 = vector.load %arg2[%c3_11, %c0_12] : memref<4x1536xf32, #tpu.memory_space<vmem>>, vector<1x1536xf32>
    %11 = arith.subf %5, %3 : vector<128x1xf32>
    %12 = arith.subf %6, %4 : vector<128x1xf32>
    %13 = arith.mulf %11, %12 : vector<128x1xf32>
    %14 = arith.subf %9, %7 : vector<1x1536xf32>
    %15 = arith.subf %10, %8 : vector<1x1536xf32>
    %16 = arith.mulf %14, %15 : vector<1x1536xf32>
    %17 = vector.broadcast %3 : vector<128x1xf32> to vector<128x1536xf32>
    %18 = vector.broadcast %7 : vector<1x1536xf32> to vector<128x1536xf32>
    %19 = arith.maximumf %17, %18 : vector<128x1536xf32>
    %20 = vector.broadcast %4 : vector<128x1xf32> to vector<128x1536xf32>
    %21 = vector.broadcast %8 : vector<1x1536xf32> to vector<128x1536xf32>
    %22 = arith.maximumf %20, %21 : vector<128x1536xf32>
    %23 = vector.broadcast %5 : vector<128x1xf32> to vector<128x1536xf32>
    %24 = vector.broadcast %9 : vector<1x1536xf32> to vector<128x1536xf32>
    %25 = arith.minimumf %23, %24 : vector<128x1536xf32>
    %26 = vector.broadcast %6 : vector<128x1xf32> to vector<128x1536xf32>
    %27 = vector.broadcast %10 : vector<1x1536xf32> to vector<128x1536xf32>
    %28 = arith.minimumf %26, %27 : vector<128x1536xf32>
    %29 = arith.subf %25, %19 : vector<128x1536xf32>
    %cst = arith.constant 0.000000e+00 : f32
    %30 = vector.broadcast %cst : f32 to vector<128x1536xf32>
    %31 = arith.maximumf %29, %30 : vector<128x1536xf32>
    %32 = arith.subf %28, %22 : vector<128x1536xf32>
    %cst_13 = arith.constant 0.000000e+00 : f32
    %33 = vector.broadcast %cst_13 : f32 to vector<128x1536xf32>
    %34 = arith.maximumf %32, %33 : vector<128x1536xf32>
    %35 = arith.mulf %31, %34 : vector<128x1536xf32>
    %36 = vector.broadcast %13 : vector<128x1xf32> to vector<128x1536xf32>
    %37 = vector.broadcast %16 : vector<1x1536xf32> to vector<128x1536xf32>
    %38 = arith.addf %36, %37 : vector<128x1536xf32>
    %39 = arith.subf %38, %35 : vector<128x1536xf32>
    %cst_14 = arith.constant 9.99999997E-7 : f32
    %40 = vector.broadcast %cst_14 : f32 to vector<128x1536xf32>
    %41 = arith.maximumf %39, %40 : vector<128x1536xf32>
    %42 = tpu.reciprocal %41 {approx = true} : vector<128x1536xf32> -> vector<128x1536xf32>
    %43 = arith.mulf %35, %42 : vector<128x1536xf32>
    %44 = tpu.iota {dimensions = array<i32: 1>} : vector<128x1536xi32>
    %45 = tpu.iota {dimensions = array<i32: 0>} : vector<128x1536xi32>
    %c128_i32 = arith.constant 128 : i32
    %46 = arith.muli %arg0, %c128_i32 : i32
    %47 = vector.broadcast %46 : i32 to vector<128x1536xi32>
    %48 = arith.addi %45, %47 : vector<128x1536xi32>
    %cst_15 = arith.constant 0.699999988 : f32
    %49 = vector.broadcast %cst_15 : f32 to vector<128x1536xf32>
    %50 = arith.cmpf ogt, %43, %49 : vector<128x1536xf32>
    %51 = arith.cmpi slt, %44, %48 : vector<128x1536xi32>
    %52 = arith.andi %50, %51 : vector<128x1536xi1>
    %cst_16 = arith.constant 1.000000e+00 : f32
    %cst_17 = arith.constant 0.000000e+00 : f32
    %53 = vector.broadcast %cst_16 : f32 to vector<128x1536xf32>
    %54 = vector.broadcast %cst_17 : f32 to vector<128x1536xf32>
    %55 = arith.select %52, %53, %54 : vector<128x1536xi1>, vector<128x1536xf32>
    %c0_18 = arith.constant 0 : index
    %c0_19 = arith.constant 0 : index
    %56 = vector.load %arg5[%c0_18, %c0_19] : memref<128x1536xf32, #tpu.memory_space<vmem>>, vector<128x1536xf32>
    tpu.vector_store %arg5[%c0_18, %c0_19], %55 {strides = array<i32>} : memref<128x1536xf32, #tpu.memory_space<vmem>>, vector<128x1536xf32>,
    %57 = tpu.iota {dimensions = array<i32: 1>} : vector<1x1536xi32>
    %c0_20 = arith.constant 0 : index
    %c0_21 = arith.constant 0 : index
    %58 = vector.load %arg4[%c0_20, %c0_21] : memref<1x1536xf32, #tpu.memory_space<vmem>>, vector<1x1536xf32>
    %c0_i32_22 = arith.constant 0 : i32
    %c128_i32_23 = arith.constant 128 : i32
    %59 = arith.addi %c0_i32_22, %c128_i32_23 : i32
    %c1_i32 = arith.constant 1 : i32
    %60 = scf.for %arg6 = %c0_i32_22 to %59 step %c1_i32 iter_args(%arg7 = %58) -> (vector<1x1536xf32>)  : i32 {
      %c128_i32_27 = arith.constant 128 : i32
      %62 = arith.muli %arg0, %c128_i32_27 : i32
      %63 = arith.addi %62, %arg6 : i32
      %64 = arith.index_cast %arg6 : i32 to index
      %c0_28 = arith.constant 0 : index
      %65 = vector.load %arg5[%64, %c0_28] : memref<128x1536xf32, #tpu.memory_space<vmem>>, vector<1x1536xf32>
      %66 = arith.mulf %65, %arg7 : vector<1x1536xf32>
      %67 = vector.shape_cast %66 : vector<1x1536xf32> to vector<1x1x1536xf32>
      %cst_29 = arith.constant dense<0.000000e+00> : vector<1xf32>
      %68 = vector.multi_reduction <add>, %67, %cst_29 [1, 2] : vector<1x1x1536xf32> to vector<1xf32>
      %69 = vector.shape_cast %68 : vector<1xf32> to vector<1x1x1xf32>
      %70 = vector.extract %69[0, 0, 0] : f32 from vector<1x1x1xf32>
      %cst_30 = arith.constant 0.000000e+00 : f32
      %71 = arith.cmpf ogt, %70, %cst_30 : f32
      %72 = vector.broadcast %63 : i32 to vector<1x1536xi32>
      %73 = arith.cmpi eq, %57, %72 : vector<1x1536xi32>
      %74 = vector.broadcast %71 : i1 to vector<1x1536xi1>
      %75 = arith.andi %73, %74 : vector<1x1536xi1>
      %cst_31 = arith.constant 0.000000e+00 : f32
      %76 = vector.broadcast %cst_31 : f32 to vector<1x1536xf32>
      %77 = arith.select %75, %76, %arg7 : vector<1x1536xi1>, vector<1x1536xf32>
      scf.yield %77 : vector<1x1536xf32>
    }
    %c128_i32_24 = arith.constant 128 : i32
    %c0_25 = arith.constant 0 : index
    %c0_26 = arith.constant 0 : index
    %61 = vector.load %arg4[%c0_25, %c0_26] : memref<1x1536xf32, #tpu.memory_space<vmem>>, vector<1x1536xf32>
    tpu.vector_store %arg4[%c0_25, %c0_26], %60 {strides = array<i32>} : memref<1x1536xf32, #tpu.memory_space<vmem>>, vector<1x1536xf32>,
    return
  }
  func.func @transform_0(%arg0: i32) -> (i32, i32) {
    %c0_i32 = arith.constant 0 : i32
    %c0_i32_0 = arith.constant 0 : i32
    return %arg0, %c0_i32 : i32, i32
  }
  func.func @transform_1(%arg0: i32) -> (i32, i32) {
    %c0_i32 = arith.constant 0 : i32
    %c0_i32_0 = arith.constant 0 : i32
    %c0_i32_1 = arith.constant 0 : i32
    return %c0_i32, %c0_i32_0 : i32, i32
  }
  func.func @transform_2(%arg0: i32) -> (i32, i32) {
    %c0_i32 = arith.constant 0 : i32
    %c0_i32_0 = arith.constant 0 : i32
    %c0_i32_1 = arith.constant 0 : i32
    return %c0_i32, %c0_i32_0 : i32, i32
  }
  func.func @transform_3(%arg0: i32) -> (i32, i32) {
    %c0_i32 = arith.constant 0 : i32
    %c0_i32_0 = arith.constant 0 : i32
    %c0_i32_1 = arith.constant 0 : i32
    return %c0_i32, %c0_i32_0 : i32, i32
  }
}

</mosaic_0001>

<llo_original>
// kernel: rpn_forward.2
$region0: #{rpn_forward.2}
  #allocation0 [shape = 'u32[]', space=smem, size = 0x4, offset = 0x4, fixed_abs, tag = 'smem constant byte address 0x4 - core index']
  #allocation1 [shape = 'u32[144,128]{1,0:T(1,128)}', space=vmem, size = 0x12000, scoped, tag = 'internal scratch']
  %s0 = inlined_call_operand.vmem [shape: bf16[256,288], index: 0, kind: input, shape index: {}]
  %s1 = inlined_call_operand.vmem [shape: bf16[288,32], index: 1, kind: input, shape index: {}]
  %s2 = inlined_call_operand.vmem [shape: f32[1,32], index: 2, kind: input, shape index: {}]
  %s3 = inlined_call_operand.vmem [shape: bf16[32,128], index: 3, kind: input, shape index: {}]
  %s4 = inlined_call_operand.vmem [shape: f32[1,128], index: 4, kind: input, shape index: {}]
  %s5 = inlined_call_operand.vmem [shape: f32[256,24], index: 5, kind: input, shape index: {}]
  %s6 = inlined_call_operand.vmem [shape: f32[256,128], index: 6, kind: output, shape index: {}]
  %s7 = sld [smem:[#allocation0]]
  $region57: #{rpn_forward.2} parent=0
    _
  %s9 = ssub.s32 1, %s7
  %s10 = scalar_select 0, %s9, %s7
  loop: start=0, step=1, limit=4
  $region2: #{rpn_forward.2} parent=0 // loop_pre_header
    _
  $region3: #{rpn_forward.2} parent=0 // loop_header
    %s12 = sphi 0, %s16
    %p13 = scmp.ge.s32.totalorder %s12, 4
    %s22 = sphi 0, %s24
    %s25 = sphi 0, %s22
    %s26 = sphi 0, %s25
    %s42 = sphi 0, %s26
    %s46 = sphi 0, %s46
    %s48 = sphi 0, %s46
    %s49 = sphi 0, %s48
    %s63 = sphi 0, %s49
    %s67 = sphi 0, %s67
    %s69 = sphi 0, %s67
    %s70 = sphi 0, %s69
    %s84 = sphi 0, %s70
    %s88 = sphi 0, %s88
    %s90 = sphi 0, %s88
    %s91 = sphi 0, %s90
    %s105 = sphi 0, %s91
    %s109 = sphi 0, %s109
    %s111 = sphi 0, %s109
    %s112 = sphi 0, %s111
    %s126 = sphi 0, %s112
    %s132 = sphi 0, %s134
    %s135 = sphi 0, %s132
    %s136 = sphi 0, %s135
    %s152 = sphi 0, %s136
    %s158 = sphi 0, %s160
    %s161 = sphi 0, %s158
    %s162 = sphi 0, %s161
    %s178 = sphi 0, %s162
  $region4: #{rpn_forward.2} parent=0 // loop_header_branch
    %15 = sbr.rel (%p13) target = $region8
  $region5: #{rpn_forward.2} parent=0 // loop_body
    %s17 = ssub.s32 %s12, 1
    %s18 = ssub.s32 %s12, 2
    %s19 = sadd.s32 %s12, 1
    %s20 = ssub.s32 %s12, %s19
    %p21 = scmp.eq.s32.totalorder %s20, 0
    %s23 = sadd.s32 %s22, 1
    %s24 = scalar_select %p21, %s22, %s23
    %p27 = pneg %p21
    %p28 = scmp.eq.s32.totalorder %s12, 1
    %p29 = por %p27, %p28
    %p30 = scmp.ne.s32.totalorder %s22, %s25
    %p31 = scmp.eq.s32.totalorder %s12, 0
    %p32 = por %p30, %p31
    %p33 = scmp.ne.s32.totalorder %s22, %s25
    %p34 = scmp.eq.s32.totalorder %s17, 1
    %p35 = por %p33, %p34
    %p36 = scmp.ne.s32.totalorder %s25, %s26
    %p37 = scmp.eq.s32.totalorder %s17, 0
    %p38 = por %p36, %p37
    %p39 = scmp.ne.s32.totalorder %s25, %s26
    %p40 = scmp.eq.s32.totalorder %s18, 1
    %p41 = por %p39, %p40
    %p43 = scmp.ne.s32.totalorder %s26, %s42
    %p44 = scmp.eq.s32.totalorder %s18, 0
    %p45 = por %p43, %p44
    %s47 = sadd.s32 %s46, 1
    %p50 = scmp.eq.s32.totalorder %s12, 1
    %p51 = scmp.ne.s32.totalorder %s46, %s48
    %p52 = scmp.eq.s32.totalorder %s12, 0
    %p53 = por %p51, %p52
    %p54 = scmp.ne.s32.totalorder %s46, %s48
    %p55 = scmp.eq.s32.totalorder %s17, 1
    %p56 = por %p54, %p55
    %p57 = scmp.ne.s32.totalorder %s48, %s49
    %p58 = scmp.eq.s32.totalorder %s17, 0
    %p59 = por %p57, %p58
    %p60 = scmp.ne.s32.totalorder %s48, %s49
    %p61 = scmp.eq.s32.totalorder %s18, 1
    %p62 = por %p60, %p61
    %p64 = scmp.ne.s32.totalorder %s49, %s63
    %p65 = scmp.eq.s32.totalorder %s18, 0
    %p66 = por %p64, %p65
    %s68 = sadd.s32 %s67, 1
    %p71 = scmp.eq.s32.totalorder %s12, 1
    %p72 = scmp.ne.s32.totalorder %s67, %s69
    %p73 = scmp.eq.s32.totalorder %s12, 0
    %p74 = por %p72, %p73
    %p75 = scmp.ne.s32.totalorder %s67, %s69
    %p76 = scmp.eq.s32.totalorder %s17, 1
    %p77 = por %p75, %p76
    %p78 = scmp.ne.s32.totalorder %s69, %s70
    %p79 = scmp.eq.s32.totalorder %s17, 0
    %p80 = por %p78, %p79
    %p81 = scmp.ne.s32.totalorder %s69, %s70
    %p82 = scmp.eq.s32.totalorder %s18, 1
    %p83 = por %p81, %p82
    %p85 = scmp.ne.s32.totalorder %s70, %s84
    %p86 = scmp.eq.s32.totalorder %s18, 0
    %p87 = por %p85, %p86
    %s89 = sadd.s32 %s88, 1
    %p92 = scmp.eq.s32.totalorder %s12, 1
    %p93 = scmp.ne.s32.totalorder %s88, %s90
    %p94 = scmp.eq.s32.totalorder %s12, 0
    %p95 = por %p93, %p94
    %p96 = scmp.ne.s32.totalorder %s88, %s90
    %p97 = scmp.eq.s32.totalorder %s17, 1
    %p98 = por %p96, %p97
    %p99 = scmp.ne.s32.totalorder %s90, %s91
    %p100 = scmp.eq.s32.totalorder %s17, 0
    %p101 = por %p99, %p100
    %p102 = scmp.ne.s32.totalorder %s90, %s91
    %p103 = scmp.eq.s32.totalorder %s18, 1
    %p104 = por %p102, %p103
    %p106 = scmp.ne.s32.totalorder %s91, %s105
    %p107 = scmp.eq.s32.totalorder %s18, 0
    %p108 = por %p106, %p107
    %s110 = sadd.s32 %s109, 1
    %p113 = scmp.eq.s32.totalorder %s12, 1
    %p114 = scmp.ne.s32.totalorder %s109, %s111
    %p115 = scmp.eq.s32.totalorder %s12, 0
    %p116 = por %p114, %p115
    %p117 = scmp.ne.s32.totalorder %s109, %s111
    %p118 = scmp.eq.s32.totalorder %s17, 1
    %p119 = por %p117, %p118
    %p120 = scmp.ne.s32.totalorder %s111, %s112
    %p121 = scmp.eq.s32.totalorder %s17, 0
    %p122 = por %p120, %p121
    %p123 = scmp.ne.s32.totalorder %s111, %s112
    %p124 = scmp.eq.s32.totalorder %s18, 1
    %p125 = por %p123, %p124
    %p127 = scmp.ne.s32.totalorder %s112, %s126
    %p128 = scmp.eq.s32.totalorder %s18, 0
    %p129 = por %p127, %p128
    %s130 = ssub.s32 %s12, %s19
    %p131 = scmp.eq.s32.totalorder %s130, 0
    %s133 = sadd.s32 %s132, 1
    %s134 = scalar_select %p131, %s132, %s133
    %p137 = pneg %p131
    %p138 = scmp.eq.s32.totalorder %s12, 1
    %p139 = por %p137, %p138
    %p140 = scmp.ne.s32.totalorder %s132, %s135
    %p141 = scmp.eq.s32.totalorder %s12, 0
    %p142 = por %p140, %p141
    %p143 = scmp.ne.s32.totalorder %s132, %s135
    %p144 = scmp.eq.s32.totalorder %s17, 1
    %p145 = por %p143, %p144
    %p146 = scmp.ne.s32.totalorder %s135, %s136
    %p147 = scmp.eq.s32.totalorder %s17, 0
    %p148 = por %p146, %p147
    %p149 = scmp.ne.s32.totalorder %s135, %s136
    %p150 = scmp.eq.s32.totalorder %s18, 1
    %p151 = por %p149, %p150
    %p153 = scmp.ne.s32.totalorder %s136, %s152
    %p154 = scmp.eq.s32.totalorder %s18, 0
    %p155 = por %p153, %p154
    %s156 = ssub.s32 %s12, %s19
    %p157 = scmp.eq.s32.totalorder %s156, 0
    %s159 = sadd.s32 %s158, 1
    %s160 = scalar_select %p157, %s158, %s159
    %p163 = pneg %p157
    %p164 = scmp.eq.s32.totalorder %s12, 1
    %p165 = por %p163, %p164
    %p166 = scmp.ne.s32.totalorder %s158, %s161
    %p167 = scmp.eq.s32.totalorder %s12, 0
    %p168 = por %p166, %p167
    %p169 = scmp.ne.s32.totalorder %s158, %s161
    %p170 = scmp.eq.s32.totalorder %s17, 1
    %p171 = por %p169, %p170
    %p172 = scmp.ne.s32.totalorder %s161, %s162
    %p173 = scmp.eq.s32.totalorder %s17, 0
    %p174 = por %p172, %p173
    %p175 = scmp.ne.s32.totalorder %s161, %s162
    %p176 = scmp.eq.s32.totalorder %s18, 1
    %p177 = por %p175, %p176
    %p179 = scmp.ne.s32.totalorder %s162, %s178
    %p180 = scmp.eq.s32.totalorder %s18, 0
    %p181 = por %p179, %p180
    %p182 = scmp.le.s32.totalorder 1, %s12
    %p183 = scmp.lt.s32.totalorder %s12, 3
    %p184 = pnand %p182, %p183
    %p185 = pneg %p184
    // Predicated region
    $region9: #{rpn_forward.2} parent=5 // pred_check
      _
    $region10: #{rpn_forward.2} parent=5 // pred_check_branch
      %187 = sbr.rel (%p184) target = $region12
    $region11: #{rpn_forward.2} parent=5 // pred_region
      %s188 = ssub.s32 %s12, 1
      // Predicated region
      $region13: #{rpn_forward.2} parent=11 // pred_check
        %p189 = pneg %p59
      $region14: #{rpn_forward.2} parent=11 // pred_check_branch
        %191 = sbr.rel (%p189) target = $region16
      $region15: #{rpn_forward.2} parent=11 // pred_region
        _
      $region16: #{rpn_forward.2} parent=11 // pred_fallthru
        _
      // Predicated region
      $region17: #{rpn_forward.2} parent=11 // pred_check
        %p192 = pneg %p80
      $region18: #{rpn_forward.2} parent=11 // pred_check_branch
        %194 = sbr.rel (%p192) target = $region20
      $region19: #{rpn_forward.2} parent=11 // pred_region
        _
      $region20: #{rpn_forward.2} parent=11 // pred_fallthru
        _
      // Predicated region
      $region21: #{rpn_forward.2} parent=11 // pred_check
        %p195 = pneg %p101
      $region22: #{rpn_forward.2} parent=11 // pred_check_branch
        %197 = sbr.rel (%p195) target = $region24
      $region23: #{rpn_forward.2} parent=11 // pred_region
        _
      $region24: #{rpn_forward.2} parent=11 // pred_fallthru
        _
      // Predicated region
      $region25: #{rpn_forward.2} parent=11 // pred_check
        %p198 = pneg %p122
      $region26: #{rpn_forward.2} parent=11 // pred_check_branch
        %200 = sbr.rel (%p198) target = $region28
      $region27: #{rpn_forward.2} parent=11 // pred_region
        _
      $region28: #{rpn_forward.2} parent=11 // pred_fallthru
        _
    $region12: #{rpn_forward.2} parent=5 // pred_fallthru
      _
    %p201 = scmp.lt.s32.totalorder %s12, 2
    // Predicated region
    $region29: #{rpn_forward.2} parent=5 // pred_check
      %p202 = pneg %p201
    $region30: #{rpn_forward.2} parent=5 // pred_check_branch
      %204 = sbr.rel (%p202) target = $region32
    $region31: #{rpn_forward.2} parent=5 // pred_region
      // Predicated region
      $region33: #{rpn_forward.2} parent=31 // pred_check
        %p205 = pneg %p32
      $region34: #{rpn_forward.2} parent=31 // pred_check_branch
        %207 = sbr.rel (%p205) target = $region36
      $region35: #{rpn_forward.2} parent=31 // pred_region
        %s208 = smul.u32 16, %s12
        %p209 = scmp.lt.s32.totalorder %s208, 31
        %s210 = scalar_select %p209, %s208, 31
        %s211 = smul.addr %s210, 3
        %s212 = smul.addr %s211, 4
        %s213 = scalar_lea.vmem %s0, %s212
        %s214 = smul.u32 16, %s12
      $region36: #{rpn_forward.2} parent=31 // pred_fallthru
        _
      // Predicated region
      $region37: #{rpn_forward.2} parent=31 // pred_check
        %p215 = pneg %p142
      $region38: #{rpn_forward.2} parent=31 // pred_check_branch
        %217 = sbr.rel (%p215) target = $region40
      $region39: #{rpn_forward.2} parent=31 // pred_region
        %s218 = smul.u32 16, %s12
        %p219 = scmp.lt.s32.totalorder %s218, 31
        %s220 = scalar_select %p219, %s218, 31
        %s221 = smul.addr %s220, 8
        %s222 = scalar_lea.vmem %s5, %s221
        %s223 = smul.u32 16, %s12
      $region40: #{rpn_forward.2} parent=31 // pred_fallthru
        _
    $region32: #{rpn_forward.2} parent=5 // pred_fallthru
      _
    %p224 = scmp.le.s32.totalorder 1, %s12
    %p225 = scmp.lt.s32.totalorder %s12, 3
    %p226 = pnand %p224, %p225
    %p227 = pneg %p226
    // Predicated region
    $region41: #{rpn_forward.2} parent=5 // pred_check
      _
    $region42: #{rpn_forward.2} parent=5 // pred_check_branch
      %229 = sbr.rel (%p226) target = $region44
    $region43: #{rpn_forward.2} parent=5 // pred_region
      %s230 = ssub.s32 %s12, 1
      %s231 = smul.u32 16, %s17
      %p232 = scmp.lt.s32.totalorder %s231, 31
      %s233 = scalar_select %p232, %s231, 31
      %s234 = smul.addr %s233, 3
      %s235 = smul.addr %s234, 4
      %s236 = scalar_lea.vmem %s0, %s235
      %p237 = pneg %p38
      %p238 = pneg %p35
      %p239 = pneg %p59
      %p240 = pneg %p56
      %p241 = pneg %p80
      %p242 = pneg %p77
      %p243 = pneg %p101
      %p244 = pneg %p98
      %p245 = pneg %p122
      %p246 = pneg %p119
      %s247 = smul.u32 16, %s17
      %p248 = scmp.lt.s32.totalorder %s247, 31
      %s249 = scalar_select %p248, %s247, 31
      %s250 = smul.addr %s249, 8
      %s251 = scalar_lea.vmem %s5, %s250
      %p252 = pneg %p148
      %p253 = pneg %p145
      %p254 = pneg %p174
      %p255 = pneg %p171
      %s256 = smul.u32 16, %s17
      %p257 = scmp.lt.s32.totalorder %s256, 31
      %s258 = scalar_select %p257, %s256, 31
      %s259 = smul.addr %s258, 8
      %s260 = scalar_lea.vmem %s6, %s259
      %s261 = smul.u32 16, %s17
      %p262 = scmp.lt.s32.totalorder %s261, 31
      %s263 = scalar_select %p262, %s261, 31
      %s264 = smul.addr %s263, 3
      %s265 = smul.addr %s264, 4
      %s266 = scalar_lea.vmem %s0, %s265
      %s267 = smul.u32 16, %s17
      %s268 = smul.u32 16, %s17
      %p269 = scmp.lt.s32.totalorder %s268, 31
      %s270 = scalar_select %p269, %s268, 31
      %s271 = smul.addr %s270, 8
      %s272 = scalar_lea.vmem %s5, %s271
      %s273 = smul.u32 16, %s17
      %s274 = smul.u32 16, %s17
      %p275 = scmp.lt.s32.totalorder %s274, 31
      %s276 = scalar_select %p275, %s274, 31
      %s277 = smul.addr %s276, 8
      %s278 = scalar_lea.vmem %s6, %s277
      %s279 = smul.u32 16, %s17
      %v281 = vld [vmem:[%s266] sm:$0xff]
      %v282 = vld [vmem:[%s266 + $0x8] sm:$0xf]
      %v283 = vld [vmem:[%s266 + $0xc] sm:$0xff]
      %v284 = vld [vmem:[%s266 + $0x14] sm:$0xf]
      %v285 = vld [vmem:[%s266 + $0x18] sm:$0xff]
      %v286 = vld [vmem:[%s266 + $0x20] sm:$0xf]
      %v287 = vld [vmem:[%s266 + $0x24] sm:$0xff]
      %v288 = vld [vmem:[%s266 + $0x2c] sm:$0xf]
      %v289 = vld [vmem:[%s266 + $0x30] sm:$0xff]
      %v290 = vld [vmem:[%s266 + $0x38] sm:$0xf]
      %v291 = vld [vmem:[%s266 + $0x3c] sm:$0xff]
      %v292 = vld [vmem:[%s266 + $0x44] sm:$0xf]
      %v293 = vld [vmem:[%s266 + $0x48] sm:$0xff]
      %v294 = vld [vmem:[%s266 + $0x50] sm:$0xf]
      %v295 = vld [vmem:[%s266 + $0x54] sm:$0xff]
      %v296 = vld [vmem:[%s266 + $0x5c] sm:$0xf]
      %v297 = vld [vmem:[%s266 + $0x60] sm:$0xff]
      %v298 = vld [vmem:[%s266 + $0x68] sm:$0xf]
      %v299 = vld [vmem:[%s266 + $0x6c] sm:$0xff]
      %v300 = vld [vmem:[%s266 + $0x74] sm:$0xf]
      %v301 = vld [vmem:[%s266 + $0x78] sm:$0xff]
      %v302 = vld [vmem:[%s266 + $0x80] sm:$0xf]
      %v303 = vld [vmem:[%s266 + $0x84] sm:$0xff]
      %v304 = vld [vmem:[%s266 + $0x8c] sm:$0xf]
      %v305 = vld [vmem:[%s266 + $0x90] sm:$0xff]
      %v306 = vld [vmem:[%s266 + $0x98] sm:$0xf]
      %v307 = vld [vmem:[%s266 + $0x9c] sm:$0xff]
      %v308 = vld [vmem:[%s266 + $0xa4] sm:$0xf]
      %v309 = vld [vmem:[%s266 + $0xa8] sm:$0xff]
      %v310 = vld [vmem:[%s266 + $0xb0] sm:$0xf]
      %v311 = vld [vmem:[%s266 + $0xb4] sm:$0xff]
      %v312 = vld [vmem:[%s266 + $0xbc] sm:$0xf]
      %v313 = vld [vmem:[%s1] sm:$0xf]
      %v314 = vld [vmem:[%s1 + $0x4] sm:$0xf]
      %v315 = vld [vmem:[%s1 + $0x8] sm:$0xf]
      %v316 = vld [vmem:[%s1 + $0xc] sm:$0xf]
      %v317 = vld [vmem:[%s1 + $0x10] sm:$0xf]
      %v318 = vld [vmem:[%s1 + $0x14] sm:$0xf]
      %v319 = vld [vmem:[%s1 + $0x18] sm:$0xf]
      %v320 = vld [vmem:[%s1 + $0x1c] sm:$0xf]
      %v321 = vld [vmem:[%s1 + $0x20] sm:$0xf]
      %v322 = vld [vmem:[%s1 + $0x24] sm:$0xf]
      %v323 = vld [vmem:[%s1 + $0x28] sm:$0xf]
      %v324 = vld [vmem:[%s1 + $0x2c] sm:$0xf]
      %v325 = vld [vmem:[%s1 + $0x30] sm:$0xf]
      %v326 = vld [vmem:[%s1 + $0x34] sm:$0xf]
      %v327 = vld [vmem:[%s1 + $0x38] sm:$0xf]
      %v328 = vld [vmem:[%s1 + $0x3c] sm:$0xf]
      %v329 = vld [vmem:[%s1 + $0x40] sm:$0xf]
      %v330 = vld [vmem:[%s1 + $0x44] sm:$0xf]
      %v331 = vld [vmem:[%s1 + $0x48] sm:$0xf]
      %v332 = vld [vmem:[%s1 + $0x4c] sm:$0xf]
      %v333 = vld [vmem:[%s1 + $0x50] sm:$0xf]
      %v334 = vld [vmem:[%s1 + $0x54] sm:$0xf]
      %v335 = vld [vmem:[%s1 + $0x58] sm:$0xf]
      %v336 = vld [vmem:[%s1 + $0x5c] sm:$0xf]
      %v337 = vld [vmem:[%s1 + $0x60] sm:$0xf]
      %v338 = vld [vmem:[%s1 + $0x64] sm:$0xf]
      %v339 = vld [vmem:[%s1 + $0x68] sm:$0xf]
      %v340 = vld [vmem:[%s1 + $0x6c] sm:$0xf]
      %v341 = vld [vmem:[%s1 + $0x70] sm:$0xf]
      %v342 = vld [vmem:[%s1 + $0x74] sm:$0xf]
      %v343 = vld [vmem:[%s1 + $0x78] sm:$0xf]
      %v344 = vld [vmem:[%s1 + $0x7c] sm:$0xf]
      %v345 = vld [vmem:[%s1 + $0x80] sm:$0xf]
      %v346 = vld [vmem:[%s1 + $0x84] sm:$0xf]
      %v347 = vld [vmem:[%s1 + $0x88] sm:$0xf]
      %v348 = vld [vmem:[%s1 + $0x8c] sm:$0xf]
      %v349 = vld [vmem:[%s2] sm:$0x1]
      %v351 = vlaneseq
      %v352 = vshrl.u32 %v351, 7
      %v353 = vsub.s32 0, %v352
      %v354 = vrot.slane %v349, %v353
      %v388 = vunpack.c.l.b16 %v281
      %v389 = vunpack.c.h.b16 %v281
      %v390 = vunpack.c.l.b16 %v282
      %v391 = vunpack.c.l.b16 %v283
      %v392 = vunpack.c.h.b16 %v283
      %v393 = vunpack.c.l.b16 %v284
      %v394 = vunpack.c.l.b16 %v285
      %v395 = vunpack.c.h.b16 %v285
      %v396 = vunpack.c.l.b16 %v286
      %v397 = vunpack.c.l.b16 %v287
      %v398 = vunpack.c.h.b16 %v287
      %v399 = vunpack.c.l.b16 %v288
      %v400 = vunpack.c.l.b16 %v289
      %v401 = vunpack.c.h.b16 %v289
      %v402 = vunpack.c.l.b16 %v290
      %v403 = vunpack.c.l.b16 %v291
      %v404 = vunpack.c.h.b16 %v291
      %v405 = vunpack.c.l.b16 %v292
      %v406 = vunpack.c.l.b16 %v293
      %v407 = vunpack.c.h.b16 %v293
      %v408 = vunpack.c.l.b16 %v294
      %v409 = vunpack.c.l.b16 %v295
      %v410 = vunpack.c.h.b16 %v295
      %v411 = vunpack.c.l.b16 %v296
      %v412 = vunpack.c.l.b16 %v297
      %v413 = vunpack.c.h.b16 %v297
      %v414 = vunpack.c.l.b16 %v298
      %v415 = vunpack.c.l.b16 %v299
      %v416 = vunpack.c.h.b16 %v299
      %v417 = vunpack.c.l.b16 %v300
      %v418 = vunpack.c.l.b16 %v301
      %v419 = vunpack.c.h.b16 %v301
      %v420 = vunpack.c.l.b16 %v302
      %v421 = vunpack.c.l.b16 %v303
      %v422 = vunpack.c.h.b16 %v303
      %v423 = vunpack.c.l.b16 %v304
      %v424 = vunpack.c.l.b16 %v305
      %v425 = vunpack.c.h.b16 %v305
      %v426 = vunpack.c.l.b16 %v306
      %v427 = vunpack.c.l.b16 %v307
      %v428 = vunpack.c.h.b16 %v307
      %v429 = vunpack.c.l.b16 %v308
      %v430 = vunpack.c.l.b16 %v309
      %v431 = vunpack.c.h.b16 %v309
      %v432 = vunpack.c.l.b16 %v310
      %v433 = vunpack.c.l.b16 %v311
      %v434 = vunpack.c.h.b16 %v311
      %v435 = vunpack.c.l.b16 %v312
      %v436 = vpack.c.b16 %v391, %v388
      %v437 = vpack.c.b16 %v392, %v389
      %v438 = vpack.c.b16 %v393, %v390
      %v439 = vpack.c.b16 %v397, %v394
      %v440 = vpack.c.b16 %v398, %v395
      %v441 = vpack.c.b16 %v399, %v396
      %v442 = vpack.c.b16 %v403, %v400
      %v443 = vpack.c.b16 %v404, %v401
      %v444 = vpack.c.b16 %v405, %v402
      %v445 = vpack.c.b16 %v409, %v406
      %v446 = vpack.c.b16 %v410, %v407
      %v447 = vpack.c.b16 %v411, %v408
      %v448 = vpack.c.b16 %v415, %v412
      %v449 = vpack.c.b16 %v416, %v413
      %v450 = vpack.c.b16 %v417, %v414
      %v451 = vpack.c.b16 %v421, %v418
      %v452 = vpack.c.b16 %v422, %v419
      %v453 = vpack.c.b16 %v423, %v420
      %v454 = vpack.c.b16 %v427, %v424
      %v455 = vpack.c.b16 %v428, %v425
      %v456 = vpack.c.b16 %v429, %v426
      %v457 = vpack.c.b16 %v433, %v430
      %v458 = vpack.c.b16 %v434, %v431
      %v459 = vpack.c.b16 %v435, %v432
      %v512 = vunpack.c.l.b16 %v313
      %v513 = vunpack.c.l.b16 %v314
      %v514 = vunpack.c.l.b16 %v315
      %v515 = vunpack.c.l.b16 %v316
      %v516 = vunpack.c.l.b16 %v317
      %v517 = vunpack.c.l.b16 %v318
      %v518 = vunpack.c.l.b16 %v319
      %v519 = vunpack.c.l.b16 %v320
      %v520 = vunpack.c.l.b16 %v321
      %v521 = vunpack.c.l.b16 %v322
      %v522 = vunpack.c.l.b16 %v323
      %v523 = vunpack.c.l.b16 %v324
      %v524 = vunpack.c.l.b16 %v325
      %v525 = vunpack.c.l.b16 %v326
      %v526 = vunpack.c.l.b16 %v327
      %v527 = vunpack.c.l.b16 %v328
      %v528 = vunpack.c.l.b16 %v329
      %v529 = vunpack.c.l.b16 %v330
      %v530 = vunpack.c.l.b16 %v331
      %v531 = vunpack.c.l.b16 %v332
      %v532 = vunpack.c.l.b16 %v333
      %v533 = vunpack.c.l.b16 %v334
      %v534 = vunpack.c.l.b16 %v335
      %v535 = vunpack.c.l.b16 %v336
      %v536 = vunpack.c.l.b16 %v337
      %v537 = vunpack.c.l.b16 %v338
      %v538 = vunpack.c.l.b16 %v339
      %v539 = vunpack.c.l.b16 %v340
      %v540 = vunpack.c.l.b16 %v341
      %v541 = vunpack.c.l.b16 %v342
      %v542 = vunpack.c.l.b16 %v343
      %v543 = vunpack.c.l.b16 %v344
      %v544 = vunpack.c.l.b16 %v345
      %v545 = vunpack.c.l.b16 %v346
      %v546 = vunpack.c.l.b16 %v347
      %v547 = vunpack.c.l.b16 %v348
      %v548 = vpack.c.b16 %v513, %v512
      %v549 = vpack.c.b16 %v515, %v514
      %v550 = vpack.c.b16 %v517, %v516
      %v551 = vpack.c.b16 %v519, %v518
      %v552 = vpack.c.b16 %v521, %v520
      %v553 = vpack.c.b16 %v523, %v522
      %v554 = vpack.c.b16 %v525, %v524
      %v555 = vpack.c.b16 %v527, %v526
      %v556 = vpack.c.b16 %v529, %v528
      %v557 = vpack.c.b16 %v531, %v530
      %v558 = vpack.c.b16 %v533, %v532
      %v559 = vpack.c.b16 %v535, %v534
      %v560 = vpack.c.b16 %v537, %v536
      %v561 = vpack.c.b16 %v539, %v538
      %v562 = vpack.c.b16 %v541, %v540
      %v563 = vpack.c.b16 %v543, %v542
      %v564 = vpack.c.b16 %v545, %v544
      %v565 = vpack.c.b16 %v547, %v546
      %vm584 = vcmask 261120
      %v586 = vsel %vm584, %v438, 0
      %v589 = vsel %vm584, %v441, 0
      %v592 = vsel %vm584, %v444, 0
      %v595 = vsel %vm584, %v447, 0
      %v598 = vsel %vm584, %v450, 0
      %v601 = vsel %vm584, %v453, 0
      %v604 = vsel %vm584, %v456, 0
      %v607 = vsel %vm584, %v459, 0
      %609 = vmatprep.subr.bf16.mxu0 0
      %610 = vmatpush1.bf16.msra.mxu0 %v548
      %611 = vmatprep.subr.bf16.mxu0 0
      %612 = vmatpush1.bf16.msra.mxu0 %v549
      %613 = vmatprep.subr.bf16.mxu0 0
      %614 = vmatpush1.bf16.msra.mxu0 %v550
      %615 = vmatprep.subr.bf16.mxu0 0
      %616 = vmatpush1.bf16.msra.mxu0 %v551
      %617 = vmatprep.subr.bf16.mxu0 0
      %618 = vmatpush1.bf16.msra.mxu0 %v552
      %619 = vmatprep.subr.bf16.mxu0 0
      %620 = vmatpush1.bf16.msra.mxu0 %v553
      %621 = vmatprep.subr.bf16.mxu0 0
      %622 = vmatpush1.bf16.msra.mxu0 %v554
      %623 = vmatprep.subr.bf16.mxu0 0
      %624 = vmatpush1.bf16.msra.mxu0 %v555
      %625 = vmatprep.subr.bf16.mxu0 0
      %626 = vmatpush1.bf16.msra.mxu0 %v556
      %627 = vmatprep.subr.bf16.mxu0 0
      %628 = vmatpush1.bf16.msra.mxu0 %v557
      %629 = vmatprep.subr.bf16.mxu0 0
      %630 = vmatpush1.bf16.msra.mxu0 %v558
      %631 = vmatprep.subr.bf16.mxu0 0
      %632 = vmatpush1.bf16.msra.mxu0 %v559
      %633 = vmatprep.subr.bf16.mxu0 0
      %634 = vmatpush1.bf16.msra.mxu0 %v560
      %635 = vmatprep.subr.bf16.mxu0 0
      %636 = vmatpush1.bf16.msra.mxu0 %v561
      %637 = vmatprep.subr.bf16.mxu0 0
      %638 = vmatpush1.bf16.msra.mxu0 %v562
      %639 = vmatprep.subr.bf16.mxu0 0
      %640 = vmatpush1.bf16.msra.mxu0 %v563
      %641 = vmatprep.mubr.bf16.mxu0 %v437
      %642 = vmatmul.mubr.bf16.gmra.mrb[0].mxu0 %v436
      %v643 = vpop.f32.mrb[0].mxu0
      %v644 = vadd.f32 %v354, %v643
      %v645 = vpop.f32.mrb[0].mxu0
      %v646 = vpop.f32.mrb[0].mxu0
      %v647 = vadd.f32 %v354, %v646
      %v648 = vpop.f32.mrb[0].mxu0
      %649 = vmatprep.mubr.bf16.mxu0 %v440
      %650 = vmatmul.mubr.bf16.gmra.mrb[0].mxu0 %v439
      %v651 = vpop.f32.mrb[0].mxu0
      %v652 = vadd.f32 %v354, %v651
      %v653 = vpop.f32.mrb[0].mxu0
      %v654 = vpop.f32.mrb[0].mxu0
      %v655 = vadd.f32 %v354, %v654
      %v656 = vpop.f32.mrb[0].mxu0
      %657 = vmatprep.mubr.bf16.mxu0 %v443
      %658 = vmatmul.mubr.bf16.gmra.mrb[0].mxu0 %v442
      %v659 = vpop.f32.mrb[0].mxu0
      %v660 = vadd.f32 %v354, %v659
      %v661 = vpop.f32.mrb[0].mxu0
      %v662 = vpop.f32.mrb[0].mxu0
      %v663 = vadd.f32 %v354, %v662
      %v664 = vpop.f32.mrb[0].mxu0
      %665 = vmatprep.mubr.bf16.mxu0 %v446
      %666 = vmatmul.mubr.bf16.gmra.mrb[0].mxu0 %v445
      %v667 = vpop.f32.mrb[0].mxu0
      %v668 = vadd.f32 %v354, %v667
      %v669 = vpop.f32.mrb[0].mxu0
      %v670 = vpop.f32.mrb[0].mxu0
      %v671 = vadd.f32 %v354, %v670
      %v672 = vpop.f32.mrb[0].mxu0
      %673 = vmatprep.mubr.bf16.mxu0 %v449
      %674 = vmatmul.mubr.bf16.gmra.mrb[0].mxu0 %v448
      %v675 = vpop.f32.mrb[0].mxu0
      %v676 = vadd.f32 %v354, %v675
      %v677 = vpop.f32.mrb[0].mxu0
      %v678 = vpop.f32.mrb[0].mxu0
      %v679 = vadd.f32 %v354, %v678
      %v680 = vpop.f32.mrb[0].mxu0
      %681 = vmatprep.mubr.bf16.mxu0 %v452
      %682 = vmatmul.mubr.bf16.gmra.mrb[0].mxu0 %v451
      %v683 = vpop.f32.mrb[0].mxu0
      %v684 = vadd.f32 %v354, %v683
      %v685 = vpop.f32.mrb[0].mxu0
      %v686 = vpop.f32.mrb[0].mxu0
      %v687 = vadd.f32 %v354, %v686
      %v688 = vpop.f32.mrb[0].mxu0
      %689 = vmatprep.mubr.bf16.mxu0 %v455
      %690 = vmatmul.mubr.bf16.gmra.mrb[0].mxu0 %v454
      %v691 = vpop.f32.mrb[0].mxu0
      %v692 = vadd.f32 %v354, %v691
      %v693 = vpop.f32.mrb[0].mxu0
      %v694 = vpop.f32.mrb[0].mxu0
      %v695 = vadd.f32 %v354, %v694
      %v696 = vpop.f32.mrb[0].mxu0
      %697 = vmatprep.mubr.bf16.mxu0 %v458
      %698 = vmatmul.mubr.bf16.gmra.mrb[0].mxu0 %v457
      %v699 = vpop.f32.mrb[0].mxu0
      %v700 = vadd.f32 %v354, %v699
      %v701 = vpop.f32.mrb[0].mxu0
      %v702 = vpop.f32.mrb[0].mxu0
      %v703 = vadd.f32 %v354, %v702
      %v704 = vpop.f32.mrb[0].mxu0
      %705 = vdwg.mxu0
      %706 = vmatprep.subr.bf16.mxu0 0
      %707 = vmatpush1.bf16.msra.mxu0 %v564
      %708 = vmatprep.subr.bf16.mxu0 0
      %709 = vmatpush1.bf16.msra.mxu0 %v565
      %710 = vmatprep.subr.bf16.mxu0 0
      %711 = vmatpush1.bf16.msra.mxu0 0
      %712 = vmatprep.subr.bf16.mxu0 0
      %713 = vmatpush1.bf16.msra.mxu0 0
      %714 = vmatprep.subr.bf16.mxu0 0
      %715 = vmatpush1.bf16.msra.mxu0 0
      %716 = vmatprep.subr.bf16.mxu0 0
      %717 = vmatpush1.bf16.msra.mxu0 0
      %718 = vmatprep.subr.bf16.mxu0 0
      %719 = vmatpush1.bf16.msra.mxu0 0
      %720 = vmatprep.subr.bf16.mxu0 0
      %721 = vmatpush1.bf16.msra.mxu0 0
      %722 = vmatprep.subr.bf16.mxu0 0
      %723 = vmatpush1.bf16.msra.mxu0 0
      %724 = vmatprep.subr.bf16.mxu0 0
      %725 = vmatpush1.bf16.msra.mxu0 0
      %726 = vmatprep.subr.bf16.mxu0 0
      %727 = vmatpush1.bf16.msra.mxu0 0
      %728 = vmatprep.subr.bf16.mxu0 0
      %729 = vmatpush1.bf16.msra.mxu0 0
      %730 = vmatprep.subr.bf16.mxu0 0
      %731 = vmatpush1.bf16.msra.mxu0 0
      %732 = vmatprep.subr.bf16.mxu0 0
      %733 = vmatpush1.bf16.msra.mxu0 0
      %734 = vmatprep.subr.bf16.mxu0 0
      %735 = vmatpush1.bf16.msra.mxu0 0
      %736 = vmatprep.subr.bf16.mxu0 0
      %737 = vmatpush1.bf16.msra.mxu0 0
      %738 = vmatprep.mubr.bf16.mxu0 0
      %739 = vmatmul.mubr.bf16.gmra.mrb[0].mxu0 %v586
      %v740 = vpop.f32.mrb[0].mxu0
      %v741 = vadd.f32 %v644, %v740
      %v742 = vpop.f32.mrb[0].mxu0
      %v743 = vpop.f32.mrb[0].mxu0
      %v744 = vadd.f32 %v647, %v743
      %v745 = vpop.f32.mrb[0].mxu0
      %746 = vmatprep.mubr.bf16.mxu0 0
      %747 = vmatmul.mubr.bf16.gmra.mrb[0].mxu0 %v589
      %v748 = vpop.f32.mrb[0].mxu0
      %v749 = vadd.f32 %v652, %v748
      %v750 = vpop.f32.mrb[0].mxu0
      %v751 = vpop.f32.mrb[0].mxu0
      %v752 = vadd.f32 %v655, %v751
      %v753 = vpop.f32.mrb[0].mxu0
      %754 = vmatprep.mubr.bf16.mxu0 0
      %755 = vmatmul.mubr.bf16.gmra.mrb[0].mxu0 %v592
      %v756 = vpop.f32.mrb[0].mxu0
      %v757 = vadd.f32 %v660, %v756
      %v758 = vpop.f32.mrb[0].mxu0
      %v759 = vpop.f32.mrb[0].mxu0
      %v760 = vadd.f32 %v663, %v759
      %v761 = vpop.f32.mrb[0].mxu0
      %762 = vmatprep.mubr.bf16.mxu0 0
      %763 = vmatmul.mubr.bf16.gmra.mrb[0].mxu0 %v595
      %v764 = vpop.f32.mrb[0].mxu0
      %v765 = vadd.f32 %v668, %v764
      %v766 = vpop.f32.mrb[0].mxu0
      %v767 = vpop.f32.mrb[0].mxu0
      %v768 = vadd.f32 %v671, %v767
      %v769 = vpop.f32.mrb[0].mxu0
      %770 = vmatprep.mubr.bf16.mxu0 0
      %771 = vmatmul.mubr.bf16.gmra.mrb[0].mxu0 %v598
      %v772 = vpop.f32.mrb[0].mxu0
      %v773 = vadd.f32 %v676, %v772
      %v774 = vpop.f32.mrb[0].mxu0
      %v775 = vpop.f32.mrb[0].mxu0
      %v776 = vadd.f32 %v679, %v775
      %v777 = vpop.f32.mrb[0].mxu0
      %778 = vmatprep.mubr.bf16.mxu0 0
      %779 = vmatmul.mubr.bf16.gmra.mrb[0].mxu0 %v601
      %v780 = vpop.f32.mrb[0].mxu0
      %v781 = vadd.f32 %v684, %v780
      %v782 = vpop.f32.mrb[0].mxu0
      %v783 = vpop.f32.mrb[0].mxu0
      %v784 = vadd.f32 %v687, %v783
      %v785 = vpop.f32.mrb[0].mxu0
      %786 = vmatprep.mubr.bf16.mxu0 0
      %787 = vmatmul.mubr.bf16.gmra.mrb[0].mxu0 %v604
      %v788 = vpop.f32.mrb[0].mxu0
      %v789 = vadd.f32 %v692, %v788
      %v790 = vpop.f32.mrb[0].mxu0
      %v791 = vpop.f32.mrb[0].mxu0
      %v792 = vadd.f32 %v695, %v791
      %v793 = vpop.f32.mrb[0].mxu0
      %794 = vmatprep.mubr.bf16.mxu0 0
      %795 = vmatmul.mubr.bf16.gmra.mrb[0].mxu0 %v607
      %v796 = vpop.f32.mrb[0].mxu0
      %v797 = vadd.f32 %v700, %v796
      %v798 = vpop.f32.mrb[0].mxu0
      %v799 = vpop.f32.mrb[0].mxu0
      %v800 = vadd.f32 %v703, %v799
      %v801 = vpop.f32.mrb[0].mxu0
      %802 = vdwg.mxu0
      %v803 = vmax.f32 %v741, 0.0
      %v804 = vmax.f32 %v744, 0.0
      %v805 = vmax.f32 %v749, 0.0
      %v806 = vmax.f32 %v752, 0.0
      %v807 = vmax.f32 %v757, 0.0
      %v808 = vmax.f32 %v760, 0.0
      %v809 = vmax.f32 %v765, 0.0
      %v810 = vmax.f32 %v768, 0.0
      %v811 = vmax.f32 %v773, 0.0
      %v812 = vmax.f32 %v776, 0.0
      %v813 = vmax.f32 %v781, 0.0
      %v814 = vmax.f32 %v784, 0.0
      %v815 = vmax.f32 %v789, 0.0
      %v816 = vmax.f32 %v792, 0.0
      %v817 = vmax.f32 %v797, 0.0
      %v818 = vmax.f32 %v800, 0.0
      %v819 = vpack.c.bf16 %v804, %v803
      %v820 = vpack.c.bf16 %v806, %v805
      %v821 = vpack.c.bf16 %v808, %v807
      %v822 = vpack.c.bf16 %v810, %v809
      %v823 = vpack.c.bf16 %v812, %v811
      %v824 = vpack.c.bf16 %v814, %v813
      %v825 = vpack.c.bf16 %v816, %v815
      %v826 = vpack.c.bf16 %v818, %v817
      %v827 = vld [vmem:[%s3] sm:$0xf]
      %v828 = vld [vmem:[%s3 + $0x4] sm:$0xf]
      %v829 = vld [vmem:[%s3 + $0x8] sm:$0xf]
      %v830 = vld [vmem:[%s3 + $0xc] sm:$0xf]
      %v831 = vld [vmem:[%s4] sm:$0x1]
      %v833 = vlaneseq
      %v834 = vshrl.u32 %v833, 7
      %v835 = vsub.s32 0, %v834
      %v836 = vrot.slane %v831, %v835
      %v842 = vunpack.c.l.b16 %v827
      %v843 = vunpack.c.l.b16 %v828
      %v844 = vunpack.c.l.b16 %v829
      %v845 = vunpack.c.l.b16 %v830
      %v846 = vpack.c.b16 %v843, %v842
      %v847 = vpack.c.b16 %v845, %v844
      %v851 = vsel %vm584, %v819, 0
      %v854 = vsel %vm584, %v820, 0
      %v857 = vsel %vm584, %v821, 0
      %v860 = vsel %vm584, %v822, 0
      %v863 = vsel %vm584, %v823, 0
      %v866 = vsel %vm584, %v824, 0
      %v869 = vsel %vm584, %v825, 0
      %v872 = vsel %vm584, %v826, 0
      %874 = vmatprep.subr.bf16.mxu0 0
      %875 = vmatpush1.bf16.msra.mxu0 %v846
      %876 = vmatprep.subr.bf16.mxu0 0
      %877 = vmatpush1.bf16.msra.mxu0 %v847
      %878 = vmatprep.subr.bf16.mxu0 0
      %879 = vmatpush1.bf16.msra.mxu0 0
      %880 = vmatprep.subr.bf16.mxu0 0
      %881 = vmatpush1.bf16.msra.mxu0 0
      %882 = vmatprep.subr.bf16.mxu0 0
      %883 = vmatpush1.bf16.msra.mxu0 0
      %884 = vmatprep.subr.bf16.mxu0 0
      %885 = vmatpush1.bf16.msra.mxu0 0
      %886 = vmatprep.subr.bf16.mxu0 0
      %887 = vmatpush1.bf16.msra.mxu0 0
      %888 = vmatprep.subr.bf16.mxu0 0
      %889 = vmatpush1.bf16.msra.mxu0 0
      %890 = vmatprep.subr.bf16.mxu0 0
      %891 = vmatpush1.bf16.msra.mxu0 0
      %892 = vmatprep.subr.bf16.mxu0 0
      %893 = vmatpush1.bf16.msra.mxu0 0
      %894 = vmatprep.subr.bf16.mxu0 0
      %895 = vmatpush1.bf16.msra.mxu0 0
      %896 = vmatprep.subr.bf16.mxu0 0
      %897 = vmatpush1.bf16.msra.mxu0 0
      %898 = vmatprep.subr.bf16.mxu0 0
      %899 = vmatpush1.bf16.msra.mxu0 0
      %900 = vmatprep.subr.bf16.mxu0 0
      %901 = vmatpush1.bf16.msra.mxu0 0
      %902 = vmatprep.subr.bf16.mxu0 0
      %903 = vmatpush1.bf16.msra.mxu0 0
      %904 = vmatprep.subr.bf16.mxu0 0
      %905 = vmatpush1.bf16.msra.mxu0 0
      %906 = vmatprep.mubr.bf16.mxu0 0
      %907 = vmatmul.mubr.bf16.gmra.mrb[0].mxu0 %v851
      %v908 = vpop.f32.mrb[0].mxu0
      %v909 = vadd.f32 %v836, %v908
      %v910 = vpop.f32.mrb[0].mxu0
      %v911 = vpop.f32.mrb[0].mxu0
      %v912 = vadd.f32 %v836, %v911
      %v913 = vpop.f32.mrb[0].mxu0
      %914 = vmatprep.mubr.bf16.mxu0 0
      %915 = vmatmul.mubr.bf16.gmra.mrb[0].mxu0 %v854
      %v916 = vpop.f32.mrb[0].mxu0
      %v917 = vadd.f32 %v836, %v916
      %v918 = vpop.f32.mrb[0].mxu0
      %v919 = vpop.f32.mrb[0].mxu0
      %v920 = vadd.f32 %v836, %v919
      %v921 = vpop.f32.mrb[0].mxu0
      %922 = vmatprep.mubr.bf16.mxu0 0
      %923 = vmatmul.mubr.bf16.gmra.mrb[0].mxu0 %v857
      %v924 = vpop.f32.mrb[0].mxu0
      %v925 = vadd.f32 %v836, %v924
      %v926 = vpop.f32.mrb[0].mxu0
      %v927 = vpop.f32.mrb[0].mxu0
      %v928 = vadd.f32 %v836, %v927
      %v929 = vpop.f32.mrb[0].mxu0
      %930 = vmatprep.mubr.bf16.mxu0 0
      %931 = vmatmul.mubr.bf16.gmra.mrb[0].mxu0 %v860
      %v932 = vpop.f32.mrb[0].mxu0
      %v933 = vadd.f32 %v836, %v932
      %v934 = vpop.f32.mrb[0].mxu0
      %v935 = vpop.f32.mrb[0].mxu0
      %v936 = vadd.f32 %v836, %v935
      %v937 = vpop.f32.mrb[0].mxu0
      %938 = vmatprep.mubr.bf16.mxu0 0
      %939 = vmatmul.mubr.bf16.gmra.mrb[0].mxu0 %v863
      %v940 = vpop.f32.mrb[0].mxu0
      %v941 = vadd.f32 %v836, %v940
      %v942 = vpop.f32.mrb[0].mxu0
      %v943 = vpop.f32.mrb[0].mxu0
      %v944 = vadd.f32 %v836, %v943
      %v945 = vpop.f32.mrb[0].mxu0
      %946 = vmatprep.mubr.bf16.mxu0 0
      %947 = vmatmul.mubr.bf16.gmra.mrb[0].mxu0 %v866
      %v948 = vpop.f32.mrb[0].mxu0
      %v949 = vadd.f32 %v836, %v948
      %v950 = vpop.f32.mrb[0].mxu0
      %v951 = vpop.f32.mrb[0].mxu0
      %v952 = vadd.f32 %v836, %v951
      %v953 = vpop.f32.mrb[0].mxu0
      %954 = vmatprep.mubr.bf16.mxu0 0
      %955 = vmatmul.mubr.bf16.gmra.mrb[0].mxu0 %v869
      %v956 = vpop.f32.mrb[0].mxu0
      %v957 = vadd.f32 %v836, %v956
      %v958 = vpop.f32.mrb[0].mxu0
      %v959 = vpop.f32.mrb[0].mxu0
      %v960 = vadd.f32 %v836, %v959
      %v961 = vpop.f32.mrb[0].mxu0
      %962 = vmatprep.mubr.bf16.mxu0 0
      %963 = vmatmul.mubr.bf16.gmra.mrb[0].mxu0 %v872
      %v964 = vpop.f32.mrb[0].mxu0
      %v965 = vadd.f32 %v836, %v964
      %v966 = vpop.f32.mrb[0].mxu0
      %v967 = vpop.f32.mrb[0].mxu0
      %v968 = vadd.f32 %v836, %v967
      %v969 = vpop.f32.mrb[0].mxu0
      %970 = vdwg.mxu0
      %v971 = vmin.f32 %v909, 4.1351666
      %v972 = vmin.f32 %v912, 4.1351666
      %v973 = vmin.f32 %v917, 4.1351666
      %v974 = vmin.f32 %v920, 4.1351666
      %v975 = vmin.f32 %v925, 4.1351666
      %v976 = vmin.f32 %v928, 4.1351666
      %v977 = vmin.f32 %v933, 4.1351666
      %v978 = vmin.f32 %v936, 4.1351666
      %v979 = vmin.f32 %v941, 4.1351666
      %v980 = vmin.f32 %v944, 4.1351666
      %v981 = vmin.f32 %v949, 4.1351666
      %v982 = vmin.f32 %v952, 4.1351666
      %v983 = vmin.f32 %v957, 4.1351666
      %v984 = vmin.f32 %v960, 4.1351666
      %v985 = vmin.f32 %v965, 4.1351666
      %v986 = vmin.f32 %v968, 4.1351666
      %v987 = vld [vmem:[%s272] sm:$0xff]
      %v988 = vld [vmem:[%s272 + $0x8] sm:$0xff]
      %v989 = vld [vmem:[%s272 + $0x10] sm:$0xff]
      %v990 = vld [vmem:[%s272 + $0x18] sm:$0xff]
      %v991 = vld [vmem:[%s272 + $0x20] sm:$0xff]
      %v992 = vld [vmem:[%s272 + $0x28] sm:$0xff]
      %v993 = vld [vmem:[%s272 + $0x30] sm:$0xff]
      %v994 = vld [vmem:[%s272 + $0x38] sm:$0xff]
      %v995 = vld [vmem:[%s272 + $0x40] sm:$0xff]
      %v996 = vld [vmem:[%s272 + $0x48] sm:$0xff]
      %v997 = vld [vmem:[%s272 + $0x50] sm:$0xff]
      %v998 = vld [vmem:[%s272 + $0x58] sm:$0xff]
      %v999 = vld [vmem:[%s272 + $0x60] sm:$0xff]
      %v1000 = vld [vmem:[%s272 + $0x68] sm:$0xff]
      %v1001 = vld [vmem:[%s272 + $0x70] sm:$0xff]
      %v1002 = vld [vmem:[%s272 + $0x78] sm:$0xff]
      %1019 = vrot.lane.b32.xlu0 %v987, 6
      %v1020 = vpop.permute.xlu0 %1019
      %1021 = vrot.lane.b32.xlu0 %v988, 6
      %v1022 = vpop.permute.xlu0 %1021
      %1023 = vrot.lane.b32.xlu0 %v989, 6
      %v1024 = vpop.permute.xlu0 %1023
      %1025 = vrot.lane.b32.xlu0 %v990, 6
      %v1026 = vpop.permute.xlu0 %1025
      %1027 = vrot.lane.b32.xlu0 %v991, 6
      %v1028 = vpop.permute.xlu0 %1027
      %1029 = vrot.lane.b32.xlu0 %v992, 6
      %v1030 = vpop.permute.xlu0 %1029
      %1031 = vrot.lane.b32.xlu0 %v993, 6
      %v1032 = vpop.permute.xlu0 %1031
      %1033 = vrot.lane.b32.xlu0 %v994, 6
      %v1034 = vpop.permute.xlu0 %1033
      %1035 = vrot.lane.b32.xlu0 %v995, 6
      %v1036 = vpop.permute.xlu0 %1035
      %1037 = vrot.lane.b32.xlu0 %v996, 6
      %v1038 = vpop.permute.xlu0 %1037
      %1039 = vrot.lane.b32.xlu0 %v997, 6
      %v1040 = vpop.permute.xlu0 %1039
      %1041 = vrot.lane.b32.xlu0 %v998, 6
      %v1042 = vpop.permute.xlu0 %1041
      %1043 = vrot.lane.b32.xlu0 %v999, 6
      %v1044 = vpop.permute.xlu0 %1043
      %1045 = vrot.lane.b32.xlu0 %v1000, 6
      %v1046 = vpop.permute.xlu0 %1045
      %1047 = vrot.lane.b32.xlu0 %v1001, 6
      %v1048 = vpop.permute.xlu0 %1047
      %1049 = vrot.lane.b32.xlu0 %v1002, 6
      %v1050 = vpop.permute.xlu0 %1049
      %v1067 = vmul.f32 %v909, %v1020
      %v1068 = vmul.f32 %v912, %v1022
      %v1069 = vmul.f32 %v917, %v1024
      %v1070 = vmul.f32 %v920, %v1026
      %v1071 = vmul.f32 %v925, %v1028
      %v1072 = vmul.f32 %v928, %v1030
      %v1073 = vmul.f32 %v933, %v1032
      %v1074 = vmul.f32 %v936, %v1034
      %v1075 = vmul.f32 %v941, %v1036
      %v1076 = vmul.f32 %v944, %v1038
      %v1077 = vmul.f32 %v949, %v1040
      %v1078 = vmul.f32 %v952, %v1042
      %v1079 = vmul.f32 %v957, %v1044
      %v1080 = vmul.f32 %v960, %v1046
      %v1081 = vmul.f32 %v965, %v1048
      %v1082 = vmul.f32 %v968, %v1050
      %1083 = vrot.lane.b32.xlu0 %v987, 122
      %v1084 = vpop.permute.xlu0 %1083
      %1085 = vrot.lane.b32.xlu0 %v988, 122
      %v1086 = vpop.permute.xlu0 %1085
      %1087 = vrot.lane.b32.xlu0 %v989, 122
      %v1088 = vpop.permute.xlu0 %1087
      %1089 = vrot.lane.b32.xlu0 %v990, 122
      %v1090 = vpop.permute.xlu0 %1089
      %1091 = vrot.lane.b32.xlu0 %v991, 122
      %v1092 = vpop.permute.xlu0 %1091
      %1093 = vrot.lane.b32.xlu0 %v992, 122
      %v1094 = vpop.permute.xlu0 %1093
      %1095 = vrot.lane.b32.xlu0 %v993, 122
      %v1096 = vpop.permute.xlu0 %1095
      %1097 = vrot.lane.b32.xlu0 %v994, 122
      %v1098 = vpop.permute.xlu0 %1097
      %1099 = vrot.lane.b32.xlu0 %v995, 122
      %v1100 = vpop.permute.xlu0 %1099
      %1101 = vrot.lane.b32.xlu0 %v996, 122
      %v1102 = vpop.permute.xlu0 %1101
      %1103 = vrot.lane.b32.xlu0 %v997, 122
      %v1104 = vpop.permute.xlu0 %1103
      %1105 = vrot.lane.b32.xlu0 %v998, 122
      %v1106 = vpop.permute.xlu0 %1105
      %1107 = vrot.lane.b32.xlu0 %v999, 122
      %v1108 = vpop.permute.xlu0 %1107
      %1109 = vrot.lane.b32.xlu0 %v1000, 122
      %v1110 = vpop.permute.xlu0 %1109
      %1111 = vrot.lane.b32.xlu0 %v1001, 122
      %v1112 = vpop.permute.xlu0 %1111
      %1113 = vrot.lane.b32.xlu0 %v1002, 122
      %v1114 = vpop.permute.xlu0 %1113
      %v1131 = vadd.f32 %v1067, %v1084
      %v1132 = vadd.f32 %v1068, %v1086
      %v1133 = vadd.f32 %v1069, %v1088
      %v1134 = vadd.f32 %v1070, %v1090
      %v1135 = vadd.f32 %v1071, %v1092
      %v1136 = vadd.f32 %v1072, %v1094
      %v1137 = vadd.f32 %v1073, %v1096
      %v1138 = vadd.f32 %v1074, %v1098
      %v1139 = vadd.f32 %v1075, %v1100
      %v1140 = vadd.f32 %v1076, %v1102
      %v1141 = vadd.f32 %v1077, %v1104
      %v1142 = vadd.f32 %v1078, %v1106
      %v1143 = vadd.f32 %v1079, %v1108
      %v1144 = vadd.f32 %v1080, %v1110
      %v1145 = vadd.f32 %v1081, %v1112
      %v1146 = vadd.f32 %v1082, %v1114
      %v1147 = vmul.f32 %v971, 1.442695
      %v1148 = vpow.pop %v1147
      %v1149 = vmul.f32 %v972, 1.442695
      %v1150 = vpow.pop %v1149
      %v1151 = vmul.f32 %v973, 1.442695
      %v1152 = vpow.pop %v1151
      %v1153 = vmul.f32 %v974, 1.442695
      %v1154 = vpow.pop %v1153
      %v1155 = vmul.f32 %v975, 1.442695
      %v1156 = vpow.pop %v1155
      %v1157 = vmul.f32 %v976, 1.442695
      %v1158 = vpow.pop %v1157
      %v1159 = vmul.f32 %v977, 1.442695
      %v1160 = vpow.pop %v1159
      %v1161 = vmul.f32 %v978, 1.442695
      %v1162 = vpow.pop %v1161
      %v1163 = vmul.f32 %v979, 1.442695
      %v1164 = vpow.pop %v1163
      %v1165 = vmul.f32 %v980, 1.442695
      %v1166 = vpow.pop %v1165
      %v1167 = vmul.f32 %v981, 1.442695
      %v1168 = vpow.pop %v1167
      %v1169 = vmul.f32 %v982, 1.442695
      %v1170 = vpow.pop %v1169
      %v1171 = vmul.f32 %v983, 1.442695
      %v1172 = vpow.pop %v1171
      %v1173 = vmul.f32 %v984, 1.442695
      %v1174 = vpow.pop %v1173
      %v1175 = vmul.f32 %v985, 1.442695
      %v1176 = vpow.pop %v1175
      %v1177 = vmul.f32 %v986, 1.442695
      %v1178 = vpow.pop %v1177
      %1179 = vrot.lane.b32.xlu0 %v987, 18
      %v1180 = vpop.permute.xlu0 %1179
      %1181 = vrot.lane.b32.xlu0 %v988, 18
      %v1182 = vpop.permute.xlu0 %1181
      %1183 = vrot.lane.b32.xlu0 %v989, 18
      %v1184 = vpop.permute.xlu0 %1183
      %1185 = vrot.lane.b32.xlu0 %v990, 18
      %v1186 = vpop.permute.xlu0 %1185
      %1187 = vrot.lane.b32.xlu0 %v991, 18
      %v1188 = vpop.permute.xlu0 %1187
      %1189 = vrot.lane.b32.xlu0 %v992, 18
      %v1190 = vpop.permute.xlu0 %1189
      %1191 = vrot.lane.b32.xlu0 %v993, 18
      %v1192 = vpop.permute.xlu0 %1191
      %1193 = vrot.lane.b32.xlu0 %v994, 18
      %v1194 = vpop.permute.xlu0 %1193
      %1195 = vrot.lane.b32.xlu0 %v995, 18
      %v1196 = vpop.permute.xlu0 %1195
      %1197 = vrot.lane.b32.xlu0 %v996, 18
      %v1198 = vpop.permute.xlu0 %1197
      %1199 = vrot.lane.b32.xlu0 %v997, 18
      %v1200 = vpop.permute.xlu0 %1199
      %1201 = vrot.lane.b32.xlu0 %v998, 18
      %v1202 = vpop.permute.xlu0 %1201
      %1203 = vrot.lane.b32.xlu0 %v999, 18
      %v1204 = vpop.permute.xlu0 %1203
      %1205 = vrot.lane.b32.xlu0 %v1000, 18
      %v1206 = vpop.permute.xlu0 %1205
      %1207 = vrot.lane.b32.xlu0 %v1001, 18
      %v1208 = vpop.permute.xlu0 %1207
      %1209 = vrot.lane.b32.xlu0 %v1002, 18
      %v1210 = vpop.permute.xlu0 %1209
      %v1227 = vmul.f32 %v1148, %v1180
      %v1228 = vmul.f32 %v1150, %v1182
      %v1229 = vmul.f32 %v1152, %v1184
      %v1230 = vmul.f32 %v1154, %v1186
      %v1231 = vmul.f32 %v1156, %v1188
      %v1232 = vmul.f32 %v1158, %v1190
      %v1233 = vmul.f32 %v1160, %v1192
      %v1234 = vmul.f32 %v1162, %v1194
      %v1235 = vmul.f32 %v1164, %v1196
      %v1236 = vmul.f32 %v1166, %v1198
      %v1237 = vmul.f32 %v1168, %v1200
      %v1238 = vmul.f32 %v1170, %v1202
      %v1239 = vmul.f32 %v1172, %v1204
      %v1240 = vmul.f32 %v1174, %v1206
      %v1241 = vmul.f32 %v1176, %v1208
      %v1242 = vmul.f32 %v1178, %v1210
      %v1243 = vmul.f32 %v1227, 0.5
      %v1244 = vmul.f32 %v1228, 0.5
      %v1245 = vmul.f32 %v1229, 0.5
      %v1246 = vmul.f32 %v1230, 0.5
      %v1247 = vmul.f32 %v1231, 0.5
      %v1248 = vmul.f32 %v1232, 0.5
      %v1249 = vmul.f32 %v1233, 0.5
      %v1250 = vmul.f32 %v1234, 0.5
      %v1251 = vmul.f32 %v1235, 0.5
      %v1252 = vmul.f32 %v1236, 0.5
      %v1253 = vmul.f32 %v1237, 0.5
      %v1254 = vmul.f32 %v1238, 0.5
      %v1255 = vmul.f32 %v1239, 0.5
      %v1256 = vmul.f32 %v1240, 0.5
      %v1257 = vmul.f32 %v1241, 0.5
      %v1258 = vmul.f32 %v1242, 0.5
      %1275 = vrot.lane.b32.xlu0 %v1243, 116
      %v1276 = vpop.permute.xlu0 %1275
      %1277 = vrot.lane.b32.xlu0 %v1244, 116
      %v1278 = vpop.permute.xlu0 %1277
      %1279 = vrot.lane.b32.xlu0 %v1245, 116
      %v1280 = vpop.permute.xlu0 %1279
      %1281 = vrot.lane.b32.xlu0 %v1246, 116
      %v1282 = vpop.permute.xlu0 %1281
      %1283 = vrot.lane.b32.xlu0 %v1247, 116
      %v1284 = vpop.permute.xlu0 %1283
      %1285 = vrot.lane.b32.xlu0 %v1248, 116
      %v1286 = vpop.permute.xlu0 %1285
      %1287 = vrot.lane.b32.xlu0 %v1249, 116
      %v1288 = vpop.permute.xlu0 %1287
      %1289 = vrot.lane.b32.xlu0 %v1250, 116
      %v1290 = vpop.permute.xlu0 %1289
      %1291 = vrot.lane.b32.xlu0 %v1251, 116
      %v1292 = vpop.permute.xlu0 %1291
      %1293 = vrot.lane.b32.xlu0 %v1252, 116
      %v1294 = vpop.permute.xlu0 %1293
      %1295 = vrot.lane.b32.xlu0 %v1253, 116
      %v1296 = vpop.permute.xlu0 %1295
      %1297 = vrot.lane.b32.xlu0 %v1254, 116
      %v1298 = vpop.permute.xlu0 %1297
      %1299 = vrot.lane.b32.xlu0 %v1255, 116
      %v1300 = vpop.permute.xlu0 %1299
      %1301 = vrot.lane.b32.xlu0 %v1256, 116
      %v1302 = vpop.permute.xlu0 %1301
      %1303 = vrot.lane.b32.xlu0 %v1257, 116
      %v1304 = vpop.permute.xlu0 %1303
      %1305 = vrot.lane.b32.xlu0 %v1258, 116
      %v1306 = vpop.permute.xlu0 %1305
      %v1323 = vsub.f32 %v1131, %v1276
      %v1324 = vsub.f32 %v1132, %v1278
      %v1325 = vsub.f32 %v1133, %v1280
      %v1326 = vsub.f32 %v1134, %v1282
      %v1327 = vsub.f32 %v1135, %v1284
      %v1328 = vsub.f32 %v1136, %v1286
      %v1329 = vsub.f32 %v1137, %v1288
      %v1330 = vsub.f32 %v1138, %v1290
      %v1331 = vsub.f32 %v1139, %v1292
      %v1332 = vsub.f32 %v1140, %v1294
      %v1333 = vsub.f32 %v1141, %v1296
      %v1334 = vsub.f32 %v1142, %v1298
      %v1335 = vsub.f32 %v1143, %v1300
      %v1336 = vsub.f32 %v1144, %v1302
      %v1337 = vsub.f32 %v1145, %v1304
      %v1338 = vsub.f32 %v1146, %v1306
      %v1339 = vmax.f32 %v1323, 0.0
      %v1340 = vmax.f32 %v1324, 0.0
      %v1341 = vmax.f32 %v1325, 0.0
      %v1342 = vmax.f32 %v1326, 0.0
      %v1343 = vmax.f32 %v1327, 0.0
      %v1344 = vmax.f32 %v1328, 0.0
      %v1345 = vmax.f32 %v1329, 0.0
      %v1346 = vmax.f32 %v1330, 0.0
      %v1347 = vmax.f32 %v1331, 0.0
      %v1348 = vmax.f32 %v1332, 0.0
      %v1349 = vmax.f32 %v1333, 0.0
      %v1350 = vmax.f32 %v1334, 0.0
      %v1351 = vmax.f32 %v1335, 0.0
      %v1352 = vmax.f32 %v1336, 0.0
      %v1353 = vmax.f32 %v1337, 0.0
      %v1354 = vmax.f32 %v1338, 0.0
      %v1355 = vmin.f32 %v1339, 64.0
      %v1356 = vmin.f32 %v1340, 64.0
      %v1357 = vmin.f32 %v1341, 64.0
      %v1358 = vmin.f32 %v1342, 64.0
      %v1359 = vmin.f32 %v1343, 64.0
      %v1360 = vmin.f32 %v1344, 64.0
      %v1361 = vmin.f32 %v1345, 64.0
      %v1362 = vmin.f32 %v1346, 64.0
      %v1363 = vmin.f32 %v1347, 64.0
      %v1364 = vmin.f32 %v1348, 64.0
      %v1365 = vmin.f32 %v1349, 64.0
      %v1366 = vmin.f32 %v1350, 64.0
      %v1367 = vmin.f32 %v1351, 64.0
      %v1368 = vmin.f32 %v1352, 64.0
      %v1369 = vmin.f32 %v1353, 64.0
      %v1370 = vmin.f32 %v1354, 64.0
      %v1371 = vadd.f32 %v1131, %v1276
      %v1372 = vadd.f32 %v1132, %v1278
      %v1373 = vadd.f32 %v1133, %v1280
      %v1374 = vadd.f32 %v1134, %v1282
      %v1375 = vadd.f32 %v1135, %v1284
      %v1376 = vadd.f32 %v1136, %v1286
      %v1377 = vadd.f32 %v1137, %v1288
      %v1378 = vadd.f32 %v1138, %v1290
      %v1379 = vadd.f32 %v1139, %v1292
      %v1380 = vadd.f32 %v1140, %v1294
      %v1381 = vadd.f32 %v1141, %v1296
      %v1382 = vadd.f32 %v1142, %v1298
      %v1383 = vadd.f32 %v1143, %v1300
      %v1384 = vadd.f32 %v1144, %v1302
      %v1385 = vadd.f32 %v1145, %v1304
      %v1386 = vadd.f32 %v1146, %v1306
      %v1387 = vmax.f32 %v1371, 0.0
      %v1388 = vmax.f32 %v1372, 0.0
      %v1389 = vmax.f32 %v1373, 0.0
      %v1390 = vmax.f32 %v1374, 0.0
      %v1391 = vmax.f32 %v1375, 0.0
      %v1392 = vmax.f32 %v1376, 0.0
      %v1393 = vmax.f32 %v1377, 0.0
      %v1394 = vmax.f32 %v1378, 0.0
      %v1395 = vmax.f32 %v1379, 0.0
      %v1396 = vmax.f32 %v1380, 0.0
      %v1397 = vmax.f32 %v1381, 0.0
      %v1398 = vmax.f32 %v1382, 0.0
      %v1399 = vmax.f32 %v1383, 0.0
      %v1400 = vmax.f32 %v1384, 0.0
      %v1401 = vmax.f32 %v1385, 0.0
      %v1402 = vmax.f32 %v1386, 0.0
      %v1403 = vmin.f32 %v1387, 64.0
      %v1404 = vmin.f32 %v1388, 64.0
      %v1405 = vmin.f32 %v1389, 64.0
      %v1406 = vmin.f32 %v1390, 64.0
      %v1407 = vmin.f32 %v1391, 64.0
      %v1408 = vmin.f32 %v1392, 64.0
      %v1409 = vmin.f32 %v1393, 64.0
      %v1410 = vmin.f32 %v1394, 64.0
      %v1411 = vmin.f32 %v1395, 64.0
      %v1412 = vmin.f32 %v1396, 64.0
      %v1413 = vmin.f32 %v1397, 64.0
      %v1414 = vmin.f32 %v1398, 64.0
      %v1415 = vmin.f32 %v1399, 64.0
      %v1416 = vmin.f32 %v1400, 64.0
      %v1417 = vmin.f32 %v1401, 64.0
      %v1418 = vmin.f32 %v1402, 64.0
      %v1419 = vsub.f32 0.0, %v909
      %v1420 = vsub.f32 0.0, %v912
      %v1421 = vsub.f32 0.0, %v917
      %v1422 = vsub.f32 0.0, %v920
      %v1423 = vsub.f32 0.0, %v925
      %v1424 = vsub.f32 0.0, %v928
      %v1425 = vsub.f32 0.0, %v933
      %v1426 = vsub.f32 0.0, %v936
      %v1427 = vsub.f32 0.0, %v941
      %v1428 = vsub.f32 0.0, %v944
      %v1429 = vsub.f32 0.0, %v949
      %v1430 = vsub.f32 0.0, %v952
      %v1431 = vsub.f32 0.0, %v957
      %v1432 = vsub.f32 0.0, %v960
      %v1433 = vsub.f32 0.0, %v965
      %v1434 = vsub.f32 0.0, %v968
      %v1435 = vmul.f32 %v1419, 1.442695
      %v1436 = vpow.pop %v1435
      %v1437 = vmul.f32 %v1420, 1.442695
      %v1438 = vpow.pop %v1437
      %v1439 = vmul.f32 %v1421, 1.442695
      %v1440 = vpow.pop %v1439
      %v1441 = vmul.f32 %v1422, 1.442695
      %v1442 = vpow.pop %v1441
      %v1443 = vmul.f32 %v1423, 1.442695
      %v1444 = vpow.pop %v1443
      %v1445 = vmul.f32 %v1424, 1.442695
      %v1446 = vpow.pop %v1445
      %v1447 = vmul.f32 %v1425, 1.442695
      %v1448 = vpow.pop %v1447
      %v1449 = vmul.f32 %v1426, 1.442695
      %v1450 = vpow.pop %v1449
      %v1451 = vmul.f32 %v1427, 1.442695
      %v1452 = vpow.pop %v1451
      %v1453 = vmul.f32 %v1428, 1.442695
      %v1454 = vpow.pop %v1453
      %v1455 = vmul.f32 %v1429, 1.442695
      %v1456 = vpow.pop %v1455
      %v1457 = vmul.f32 %v1430, 1.442695
      %v1458 = vpow.pop %v1457
      %v1459 = vmul.f32 %v1431, 1.442695
      %v1460 = vpow.pop %v1459
      %v1461 = vmul.f32 %v1432, 1.442695
      %v1462 = vpow.pop %v1461
      %v1463 = vmul.f32 %v1433, 1.442695
      %v1464 = vpow.pop %v1463
      %v1465 = vmul.f32 %v1434, 1.442695
      %v1466 = vpow.pop %v1465
      %v1467 = vadd.f32 %v1436, 1.0
      %v1468 = vadd.f32 %v1438, 1.0
      %v1469 = vadd.f32 %v1440, 1.0
      %v1470 = vadd.f32 %v1442, 1.0
      %v1471 = vadd.f32 %v1444, 1.0
      %v1472 = vadd.f32 %v1446, 1.0
      %v1473 = vadd.f32 %v1448, 1.0
      %v1474 = vadd.f32 %v1450, 1.0
      %v1475 = vadd.f32 %v1452, 1.0
      %v1476 = vadd.f32 %v1454, 1.0
      %v1477 = vadd.f32 %v1456, 1.0
      %v1478 = vadd.f32 %v1458, 1.0
      %v1479 = vadd.f32 %v1460, 1.0
      %v1480 = vadd.f32 %v1462, 1.0
      %v1481 = vadd.f32 %v1464, 1.0
      %v1482 = vadd.f32 %v1466, 1.0
      %v1483 = vrcp.pop %v1467
      %v1484 = vmul.f32 1.0, %v1483
      %v1485 = vrcp.pop %v1468
      %v1486 = vmul.f32 1.0, %v1485
      %v1487 = vrcp.pop %v1469
      %v1488 = vmul.f32 1.0, %v1487
      %v1489 = vrcp.pop %v1470
      %v1490 = vmul.f32 1.0, %v1489
      %v1491 = vrcp.pop %v1471
      %v1492 = vmul.f32 1.0, %v1491
      %v1493 = vrcp.pop %v1472
      %v1494 = vmul.f32 1.0, %v1493
      %v1495 = vrcp.pop %v1473
      %v1496 = vmul.f32 1.0, %v1495
      %v1497 = vrcp.pop %v1474
      %v1498 = vmul.f32 1.0, %v1497
      %v1499 = vrcp.pop %v1475
      %v1500 = vmul.f32 1.0, %v1499
      %v1501 = vrcp.pop %v1476
      %v1502 = vmul.f32 1.0, %v1501
      %v1503 = vrcp.pop %v1477
      %v1504 = vmul.f32 1.0, %v1503
      %v1505 = vrcp.pop %v1478
      %v1506 = vmul.f32 1.0, %v1505
      %v1507 = vrcp.pop %v1479
      %v1508 = vmul.f32 1.0, %v1507
      %v1509 = vrcp.pop %v1480
      %v1510 = vmul.f32 1.0, %v1509
      %v1511 = vrcp.pop %v1481
      %v1512 = vmul.f32 1.0, %v1511
      %v1513 = vrcp.pop %v1482
      %v1514 = vmul.f32 1.0, %v1513
      %1515 = vst [vmem:[%s278] sm:$0xff] 0.0
      %1516 = vst [vmem:[%s278 + $0x8] sm:$0xff] 0.0
      %1517 = vst [vmem:[%s278 + $0x10] sm:$0xff] 0.0
      %1518 = vst [vmem:[%s278 + $0x18] sm:$0xff] 0.0
      %1519 = vst [vmem:[%s278 + $0x20] sm:$0xff] 0.0
      %1520 = vst [vmem:[%s278 + $0x28] sm:$0xff] 0.0
      %1521 = vst [vmem:[%s278 + $0x30] sm:$0xff] 0.0
      %1522 = vst [vmem:[%s278 + $0x38] sm:$0xff] 0.0
      %1523 = vst [vmem:[%s278 + $0x40] sm:$0xff] 0.0
      %1524 = vst [vmem:[%s278 + $0x48] sm:$0xff] 0.0
      %1525 = vst [vmem:[%s278 + $0x50] sm:$0xff] 0.0
      %1526 = vst [vmem:[%s278 + $0x58] sm:$0xff] 0.0
      %1527 = vst [vmem:[%s278 + $0x60] sm:$0xff] 0.0
      %1528 = vst [vmem:[%s278 + $0x68] sm:$0xff] 0.0
      %1529 = vst [vmem:[%s278 + $0x70] sm:$0xff] 0.0
      %1530 = vst [vmem:[%s278 + $0x78] sm:$0xff] 0.0
      %vm1531 = vcmask 48128
      %1532 = vst.msk [vmem:[%s278] sm:$0xff] %vm1531, %v1484
      %1533 = vst.msk [vmem:[%s278 + $0x8] sm:$0xff] %vm1531, %v1486
      %1534 = vst.msk [vmem:[%s278 + $0x10] sm:$0xff] %vm1531, %v1488
      %1535 = vst.msk [vmem:[%s278 + $0x18] sm:$0xff] %vm1531, %v1490
      %1536 = vst.msk [vmem:[%s278 + $0x20] sm:$0xff] %vm1531, %v1492
      %1537 = vst.msk [vmem:[%s278 + $0x28] sm:$0xff] %vm1531, %v1494
      %1538 = vst.msk [vmem:[%s278 + $0x30] sm:$0xff] %vm1531, %v1496
      %1539 = vst.msk [vmem:[%s278 + $0x38] sm:$0xff] %vm1531, %v1498
      %1540 = vst.msk [vmem:[%s278 + $0x40] sm:$0xff] %vm1531, %v1500
      %1541 = vst.msk [vmem:[%s278 + $0x48] sm:$0xff] %vm1531, %v1502
      %1542 = vst.msk [vmem:[%s278 + $0x50] sm:$0xff] %vm1531, %v1504
      %1543 = vst.msk [vmem:[%s278 + $0x58] sm:$0xff] %vm1531, %v1506
      %1544 = vst.msk [vmem:[%s278 + $0x60] sm:$0xff] %vm1531, %v1508
      %1545 = vst.msk [vmem:[%s278 + $0x68] sm:$0xff] %vm1531, %v1510
      %1546 = vst.msk [vmem:[%s278 + $0x70] sm:$0xff] %vm1531, %v1512
      %1547 = vst.msk [vmem:[%s278 + $0x78] sm:$0xff] %vm1531, %v1514
      %vm1548 = vcmask 97328
      %1549 = vst.msk [vmem:[%s278] sm:$0xff] %vm1548, %v1355
      %1550 = vst.msk [vmem:[%s278 + $0x8] sm:$0xff] %vm1548, %v1356
      %1551 = vst.msk [vmem:[%s278 + $0x10] sm:$0xff] %vm1548, %v1357
      %1552 = vst.msk [vmem:[%s278 + $0x18] sm:$0xff] %vm1548, %v1358
      %1553 = vst.msk [vmem:[%s278 + $0x20] sm:$0xff] %vm1548, %v1359
      %1554 = vst.msk [vmem:[%s278 + $0x28] sm:$0xff] %vm1548, %v1360
      %1555 = vst.msk [vmem:[%s278 + $0x30] sm:$0xff] %vm1548, %v1361
      %1556 = vst.msk [vmem:[%s278 + $0x38] sm:$0xff] %vm1548, %v1362
      %1557 = vst.msk [vmem:[%s278 + $0x40] sm:$0xff] %vm1548, %v1363
      %1558 = vst.msk [vmem:[%s278 + $0x48] sm:$0xff] %vm1548, %v1364
      %1559 = vst.msk [vmem:[%s278 + $0x50] sm:$0xff] %vm1548, %v1365
      %1560 = vst.msk [vmem:[%s278 + $0x58] sm:$0xff] %vm1548, %v1366
      %1561 = vst.msk [vmem:[%s278 + $0x60] sm:$0xff] %vm1548, %v1367
      %1562 = vst.msk [vmem:[%s278 + $0x68] sm:$0xff] %vm1548, %v1368
      %1563 = vst.msk [vmem:[%s278 + $0x70] sm:$0xff] %vm1548, %v1369
      %1564 = vst.msk [vmem:[%s278 + $0x78] sm:$0xff] %vm1548, %v1370
      %vm1565 = vcmask 146528
      %1566 = vst.msk [vmem:[%s278] sm:$0xff] %vm1565, %v1355
      %1567 = vst.msk [vmem:[%s278 + $0x8] sm:$0xff] %vm1565, %v1356
      %1568 = vst.msk [vmem:[%s278 + $0x10] sm:$0xff] %vm1565, %v1357
      %1569 = vst.msk [vmem:[%s278 + $0x18] sm:$0xff] %vm1565, %v1358
      %1570 = vst.msk [vmem:[%s278 + $0x20] sm:$0xff] %vm1565, %v1359
      %1571 = vst.msk [vmem:[%s278 + $0x28] sm:$0xff] %vm1565, %v1360
      %1572 = vst.msk [vmem:[%s278 + $0x30] sm:$0xff] %vm1565, %v1361
      %1573 = vst.msk [vmem:[%s278 + $0x38] sm:$0xff] %vm1565, %v1362
      %1574 = vst.msk [vmem:[%s278 + $0x40] sm:$0xff] %vm1565, %v1363
      %1575 = vst.msk [vmem:[%s278 + $0x48] sm:$0xff] %vm1565, %v1364
      %1576 = vst.msk [vmem:[%s278 + $0x50] sm:$0xff] %vm1565, %v1365
      %1577 = vst.msk [vmem:[%s278 + $0x58] sm:$0xff] %vm1565, %v1366
      %1578 = vst.msk [vmem:[%s278 + $0x60] sm:$0xff] %vm1565, %v1367
      %1579 = vst.msk [vmem:[%s278 + $0x68] sm:$0xff] %vm1565, %v1368
      %1580 = vst.msk [vmem:[%s278 + $0x70] sm:$0xff] %vm1565, %v1369
      %1581 = vst.msk [vmem:[%s278 + $0x78] sm:$0xff] %vm1565, %v1370
      %1598 = vrot.lane.b32.xlu0 %v1403, 12
      %v1599 = vpop.permute.xlu0 %1598
      %1600 = vrot.lane.b32.xlu0 %v1404, 12
      %v1601 = vpop.permute.xlu0 %1600
      %1602 = vrot.lane.b32.xlu0 %v1405, 12
      %v1603 = vpop.permute.xlu0 %1602
      %1604 = vrot.lane.b32.xlu0 %v1406, 12
      %v1605 = vpop.permute.xlu0 %1604
      %1606 = vrot.lane.b32.xlu0 %v1407, 12
      %v1607 = vpop.permute.xlu0 %1606
      %1608 = vrot.lane.b32.xlu0 %v1408, 12
      %v1609 = vpop.permute.xlu0 %1608
      %1610 = vrot.lane.b32.xlu0 %v1409, 12
      %v1611 = vpop.permute.xlu0 %1610
      %1612 = vrot.lane.b32.xlu0 %v1410, 12
      %v1613 = vpop.permute.xlu0 %1612
      %1614 = vrot.lane.b32.xlu0 %v1411, 12
      %v1615 = vpop.permute.xlu0 %1614
      %1616 = vrot.lane.b32.xlu0 %v1412, 12
      %v1617 = vpop.permute.xlu0 %1616
      %1618 = vrot.lane.b32.xlu0 %v1413, 12
      %v1619 = vpop.permute.xlu0 %1618
      %1620 = vrot.lane.b32.xlu0 %v1414, 12
      %v1621 = vpop.permute.xlu0 %1620
      %1622 = vrot.lane.b32.xlu0 %v1415, 12
      %v1623 = vpop.permute.xlu0 %1622
      %1624 = vrot.lane.b32.xlu0 %v1416, 12
      %v1625 = vpop.permute.xlu0 %1624
      %1626 = vrot.lane.b32.xlu0 %v1417, 12
      %v1627 = vpop.permute.xlu0 %1626
      %1628 = vrot.lane.b32.xlu0 %v1418, 12
      %v1629 = vpop.permute.xlu0 %1628
      %vm1646 = vcmask 195728
      %1647 = vst.msk [vmem:[%s278] sm:$0xff] %vm1646, %v1599
      %1648 = vst.msk [vmem:[%s278 + $0x8] sm:$0xff] %vm1646, %v1601
      %1649 = vst.msk [vmem:[%s278 + $0x10] sm:$0xff] %vm1646, %v1603
      %1650 = vst.msk [vmem:[%s278 + $0x18] sm:$0xff] %vm1646, %v1605
      %1651 = vst.msk [vmem:[%s278 + $0x20] sm:$0xff] %vm1646, %v1607
      %1652 = vst.msk [vmem:[%s278 + $0x28] sm:$0xff] %vm1646, %v1609
      %1653 = vst.msk [vmem:[%s278 + $0x30] sm:$0xff] %vm1646, %v1611
      %1654 = vst.msk [vmem:[%s278 + $0x38] sm:$0xff] %vm1646, %v1613
      %1655 = vst.msk [vmem:[%s278 + $0x40] sm:$0xff] %vm1646, %v1615
      %1656 = vst.msk [vmem:[%s278 + $0x48] sm:$0xff] %vm1646, %v1617
      %1657 = vst.msk [vmem:[%s278 + $0x50] sm:$0xff] %vm1646, %v1619
      %1658 = vst.msk [vmem:[%s278 + $0x58] sm:$0xff] %vm1646, %v1621
      %1659 = vst.msk [vmem:[%s278 + $0x60] sm:$0xff] %vm1646, %v1623
      %1660 = vst.msk [vmem:[%s278 + $0x68] sm:$0xff] %vm1646, %v1625
      %1661 = vst.msk [vmem:[%s278 + $0x70] sm:$0xff] %vm1646, %v1627
      %1662 = vst.msk [vmem:[%s278 + $0x78] sm:$0xff] %vm1646, %v1629
      %vm1663 = vcmask 244928
      %1664 = vst.msk [vmem:[%s278] sm:$0xff] %vm1663, %v1599
      %1665 = vst.msk [vmem:[%s278 + $0x8] sm:$0xff] %vm1663, %v1601
      %1666 = vst.msk [vmem:[%s278 + $0x10] sm:$0xff] %vm1663, %v1603
      %1667 = vst.msk [vmem:[%s278 + $0x18] sm:$0xff] %vm1663, %v1605
      %1668 = vst.msk [vmem:[%s278 + $0x20] sm:$0xff] %vm1663, %v1607
      %1669 = vst.msk [vmem:[%s278 + $0x28] sm:$0xff] %vm1663, %v1609
      %1670 = vst.msk [vmem:[%s278 + $0x30] sm:$0xff] %vm1663, %v1611
      %1671 = vst.msk [vmem:[%s278 + $0x38] sm:$0xff] %vm1663, %v1613
      %1672 = vst.msk [vmem:[%s278 + $0x40] sm:$0xff] %vm1663, %v1615
      %1673 = vst.msk [vmem:[%s278 + $0x48] sm:$0xff] %vm1663, %v1617
      %1674 = vst.msk [vmem:[%s278 + $0x50] sm:$0xff] %vm1663, %v1619
      %1675 = vst.msk [vmem:[%s278 + $0x58] sm:$0xff] %vm1663, %v1621
      %1676 = vst.msk [vmem:[%s278 + $0x60] sm:$0xff] %vm1663, %v1623
      %1677 = vst.msk [vmem:[%s278 + $0x68] sm:$0xff] %vm1663, %v1625
      %1678 = vst.msk [vmem:[%s278 + $0x70] sm:$0xff] %vm1663, %v1627
      %1679 = vst.msk [vmem:[%s278 + $0x78] sm:$0xff] %vm1663, %v1629
      %s1680 = smul.u32 16, %s17
      %p1681 = scmp.lt.s32.totalorder %s1680, 31
      %s1682 = scalar_select %p1681, %s1680, 31
      %s1683 = smul.addr %s1682, 8
      %s1684 = scalar_lea.vmem %s6, %s1683
      // Predicated region
      $region45: #{rpn_forward.2} parent=43 // pred_check
        %p1685 = pneg %p171
      $region46: #{rpn_forward.2} parent=43 // pred_check_branch
        %1687 = sbr.rel (%p1685) target = $region48
      $region47: #{rpn_forward.2} parent=43 // pred_region
        %s1688 = smul.u32 16, %s17
      $region48: #{rpn_forward.2} parent=43 // pred_fallthru
        _
    $region44: #{rpn_forward.2} parent=5 // pred_fallthru
      _
    %p1689 = scmp.le.s32.totalorder 2, %s12
    // Predicated region
    $region49: #{rpn_forward.2} parent=5 // pred_check
      %p1690 = pneg %p1689
    $region50: #{rpn_forward.2} parent=5 // pred_check_branch
      %1692 = sbr.rel (%p1690) target = $region52
    $region51: #{rpn_forward.2} parent=5 // pred_region
      %s1693 = ssub.s32 %s12, 2
      // Predicated region
      $region53: #{rpn_forward.2} parent=51 // pred_check
        %p1694 = pneg %p177
      $region54: #{rpn_forward.2} parent=51 // pred_check_branch
        %1696 = sbr.rel (%p1694) target = $region56
      $region55: #{rpn_forward.2} parent=51 // pred_region
        %s1697 = smul.u32 16, %s18
        %p1698 = scmp.lt.s32.totalorder %s1697, 31
        %s1699 = scalar_select %p1698, %s1697, 31
        %s1700 = smul.addr %s1699, 8
        %s1701 = scalar_lea.vmem %s6, %s1700
      $region56: #{rpn_forward.2} parent=51 // pred_fallthru
        _
    $region52: #{rpn_forward.2} parent=5 // pred_fallthru
      _
  $region6: #{rpn_forward.2} parent=0 // loop_footer
    %s16 = sadd.s32 1, %s12
  $region7: #{rpn_forward.2} parent=0 // loop_footer_branch
    %11 = sbr.rel target = $region3
  $region8: #{rpn_forward.2} parent=0 // loop_exit
    _

// kernel: rpn_forward.3
$region0: #{rpn_forward.3}
  #allocation0 [shape = 'u32[]', space=smem, size = 0x4, offset = 0x4, fixed_abs, tag = 'smem constant byte address 0x4 - core index']
  #allocation1 [shape = 'u32[144,128]{1,0:T(1,128)}', space=vmem, size = 0x12000, scoped, tag = 'internal scratch']
  #allocation2 [shape = 'f32[128,1536]{1,0:T(8,128)}', space=vmem, size = 0xc0000, scoped, tag = 'scratch operand']
  %s0 = inlined_call_operand.vmem [shape: f32[1536,4], index: 0, kind: input, shape index: {}]
  %s1 = inlined_call_operand.vmem [shape: f32[4,1536], index: 1, kind: input, shape index: {}]
  %s2 = inlined_call_operand.vmem [shape: f32[1,1536], index: 2, kind: input, shape index: {}]
  %s3 = inlined_call_operand.vmem [shape: f32[1,1536], index: 3, kind: output, shape index: {}]
  %s4 = sld [smem:[#allocation0]]
  $region56: #{rpn_forward.3} parent=0
    _
  %s6 = ssub.s32 1, %s4
  %s7 = scalar_select 0, %s6, %s4
  loop: start=0, step=1, limit=14
  $region2: #{rpn_forward.3} parent=0 // loop_pre_header
    _
  $region3: #{rpn_forward.3} parent=0 // loop_header
    %s9 = sphi 0, %s13
    %p10 = scmp.ge.s32.totalorder %s9, 14
    %s19 = sphi 0, %s21
    %s22 = sphi 0, %s19
    %s23 = sphi 0, %s22
    %s39 = sphi 0, %s23
    %s43 = sphi 0, %s43
    %s45 = sphi 0, %s43
    %s46 = sphi 0, %s45
    %s60 = sphi 0, %s46
    %s64 = sphi 0, %s64
    %s66 = sphi 0, %s64
    %s67 = sphi 0, %s66
    %s81 = sphi 0, %s67
    %s85 = sphi 0, %s85
    %s87 = sphi 0, %s85
    %s88 = sphi 0, %s87
    %s102 = sphi 0, %s88
  $region4: #{rpn_forward.3} parent=0 // loop_header_branch
    %12 = sbr.rel (%p10) target = $region8
  $region5: #{rpn_forward.3} parent=0 // loop_body
    %s14 = ssub.s32 %s9, 1
    %s15 = ssub.s32 %s9, 2
    %s16 = sadd.s32 %s9, 1
    %s17 = ssub.s32 %s9, %s16
    %p18 = scmp.eq.s32.totalorder %s17, 0
    %s20 = sadd.s32 %s19, 1
    %s21 = scalar_select %p18, %s19, %s20
    %p24 = pneg %p18
    %p25 = scmp.eq.s32.totalorder %s9, 11
    %p26 = por %p24, %p25
    %p27 = scmp.ne.s32.totalorder %s19, %s22
    %p28 = scmp.eq.s32.totalorder %s9, 0
    %p29 = por %p27, %p28
    %p30 = scmp.ne.s32.totalorder %s19, %s22
    %p31 = scmp.eq.s32.totalorder %s14, 11
    %p32 = por %p30, %p31
    %p33 = scmp.ne.s32.totalorder %s22, %s23
    %p34 = scmp.eq.s32.totalorder %s14, 0
    %p35 = por %p33, %p34
    %p36 = scmp.ne.s32.totalorder %s22, %s23
    %p37 = scmp.eq.s32.totalorder %s15, 11
    %p38 = por %p36, %p37
    %p40 = scmp.ne.s32.totalorder %s23, %s39
    %p41 = scmp.eq.s32.totalorder %s15, 0
    %p42 = por %p40, %p41
    %s44 = sadd.s32 %s43, 1
    %p47 = scmp.eq.s32.totalorder %s9, 11
    %p48 = scmp.ne.s32.totalorder %s43, %s45
    %p49 = scmp.eq.s32.totalorder %s9, 0
    %p50 = por %p48, %p49
    %p51 = scmp.ne.s32.totalorder %s43, %s45
    %p52 = scmp.eq.s32.totalorder %s14, 11
    %p53 = por %p51, %p52
    %p54 = scmp.ne.s32.totalorder %s45, %s46
    %p55 = scmp.eq.s32.totalorder %s14, 0
    %p56 = por %p54, %p55
    %p57 = scmp.ne.s32.totalorder %s45, %s46
    %p58 = scmp.eq.s32.totalorder %s15, 11
    %p59 = por %p57, %p58
    %p61 = scmp.ne.s32.totalorder %s46, %s60
    %p62 = scmp.eq.s32.totalorder %s15, 0
    %p63 = por %p61, %p62
    %s65 = sadd.s32 %s64, 1
    %p68 = scmp.eq.s32.totalorder %s9, 11
    %p69 = scmp.ne.s32.totalorder %s64, %s66
    %p70 = scmp.eq.s32.totalorder %s9, 0
    %p71 = por %p69, %p70
    %p72 = scmp.ne.s32.totalorder %s64, %s66
    %p73 = scmp.eq.s32.totalorder %s14, 11
    %p74 = por %p72, %p73
    %p75 = scmp.ne.s32.totalorder %s66, %s67
    %p76 = scmp.eq.s32.totalorder %s14, 0
    %p77 = por %p75, %p76
    %p78 = scmp.ne.s32.totalorder %s66, %s67
    %p79 = scmp.eq.s32.totalorder %s15, 11
    %p80 = por %p78, %p79
    %p82 = scmp.ne.s32.totalorder %s67, %s81
    %p83 = scmp.eq.s32.totalorder %s15, 0
    %p84 = por %p82, %p83
    %s86 = sadd.s32 %s85, 1
    %p89 = scmp.eq.s32.totalorder %s9, 11
    %p90 = scmp.ne.s32.totalorder %s85, %s87
    %p91 = scmp.eq.s32.totalorder %s9, 0
    %p92 = por %p90, %p91
    %p93 = scmp.ne.s32.totalorder %s85, %s87
    %p94 = scmp.eq.s32.totalorder %s14, 11
    %p95 = por %p93, %p94
    %p96 = scmp.ne.s32.totalorder %s87, %s88
    %p97 = scmp.eq.s32.totalorder %s14, 0
    %p98 = por %p96, %p97
    %p99 = scmp.ne.s32.totalorder %s87, %s88
    %p100 = scmp.eq.s32.totalorder %s15, 11
    %p101 = por %p99, %p100
    %p103 = scmp.ne.s32.totalorder %s88, %s102
    %p104 = scmp.eq.s32.totalorder %s15, 0
    %p105 = por %p103, %p104
    %p106 = scmp.le.s32.totalorder 1, %s9
    %p107 = scmp.lt.s32.totalorder %s9, 13
    %p108 = pnand %p106, %p107
    %p109 = pneg %p108
    // Predicated region
    $region9: #{rpn_forward.3} parent=5 // pred_check
      _
    $region10: #{rpn_forward.3} parent=5 // pred_check_branch
      %111 = sbr.rel (%p108) target = $region12
    $region11: #{rpn_forward.3} parent=5 // pred_region
      %s112 = ssub.s32 %s9, 1
      // Predicated region
      $region13: #{rpn_forward.3} parent=11 // pred_check
        %p113 = pneg %p56
      $region14: #{rpn_forward.3} parent=11 // pred_check_branch
        %115 = sbr.rel (%p113) target = $region16
      $region15: #{rpn_forward.3} parent=11 // pred_region
        _
      $region16: #{rpn_forward.3} parent=11 // pred_fallthru
        _
      // Predicated region
      $region17: #{rpn_forward.3} parent=11 // pred_check
        %p116 = pneg %p77
      $region18: #{rpn_forward.3} parent=11 // pred_check_branch
        %118 = sbr.rel (%p116) target = $region20
      $region19: #{rpn_forward.3} parent=11 // pred_region
        _
      $region20: #{rpn_forward.3} parent=11 // pred_fallthru
        _
    $region12: #{rpn_forward.3} parent=5 // pred_fallthru
      _
    %p119 = scmp.lt.s32.totalorder %s9, 12
    // Predicated region
    $region21: #{rpn_forward.3} parent=5 // pred_check
      %p120 = pneg %p119
    $region22: #{rpn_forward.3} parent=5 // pred_check_branch
      %122 = sbr.rel (%p120) target = $region24
    $region23: #{rpn_forward.3} parent=5 // pred_region
      // Predicated region
      $region25: #{rpn_forward.3} parent=23 // pred_check
        %p123 = pneg %p29
      $region26: #{rpn_forward.3} parent=23 // pred_check_branch
        %125 = sbr.rel (%p123) target = $region28
      $region27: #{rpn_forward.3} parent=23 // pred_region
        %s126 = smul.u32 16, %s9
        %p127 = scmp.lt.s32.totalorder %s126, 191
        %s128 = scalar_select %p127, %s126, 191
        %s129 = smul.addr %s128, 8
        %s130 = scalar_lea.vmem %s0, %s129
        %s131 = smul.u32 16, %s9
      $region28: #{rpn_forward.3} parent=23 // pred_fallthru
        _
    $region24: #{rpn_forward.3} parent=5 // pred_fallthru
      _
    %p132 = scmp.le.s32.totalorder 1, %s9
    %p133 = scmp.lt.s32.totalorder %s9, 13
    %p134 = pnand %p132, %p133
    %p135 = pneg %p134
    // Predicated region
    $region29: #{rpn_forward.3} parent=5 // pred_check
      _
    $region30: #{rpn_forward.3} parent=5 // pred_check_branch
      %137 = sbr.rel (%p134) target = $region32
    $region31: #{rpn_forward.3} parent=5 // pred_region
      %s138 = ssub.s32 %s9, 1
      %s139 = smul.u32 16, %s14
      %p140 = scmp.lt.s32.totalorder %s139, 191
      %s141 = scalar_select %p140, %s139, 191
      %s142 = smul.addr %s141, 8
      %s143 = scalar_lea.vmem %s0, %s142
      %p144 = pneg %p35
      %p145 = pneg %p32
      %p146 = pneg %p56
      %p147 = pneg %p53
      %p148 = pneg %p77
      %p149 = pneg %p74
      %p150 = pneg %p98
      %p151 = pneg %p95
      %s152 = smul.u32 16, %s14
      %p153 = scmp.lt.s32.totalorder %s152, 191
      %s154 = scalar_select %p153, %s152, 191
      %s155 = smul.addr %s154, 8
      %s156 = scalar_lea.vmem %s0, %s155
      %s157 = smul.u32 16, %s14
      %p158 = scmp.eq.s32.totalorder %s14, 0
      // Predicated region
      $region33: #{rpn_forward.3} parent=31 // pred_check
        %p159 = pneg %p158
      $region34: #{rpn_forward.3} parent=31 // pred_check_branch
        %161 = sbr.rel (%p159) target = $region36
      $region35: #{rpn_forward.3} parent=31 // pred_region
        %v162 = vld [vmem:[%s2] sm:$0xff]
        %v163 = vld [vmem:[%s2 + $0x8] sm:$0xf]
        %164 = vst [vmem:[%s3] sm:$0xff] %v162
        %v165 = vlaneseq
        %vm166 = vcmp.ge.s32.totalorder %v165, 0
        %vm167 = vcmp.lt.s32.totalorder %v165, 512
        %vm168 = vmand %vm166, %vm167
        %169 = vst.msk [vmem:[%s3 + $0x8] sm:$0xf] %vm168, %v163
      $region36: #{rpn_forward.3} parent=31 // pred_fallthru
        _
      %v170 = vld [vmem:[%s156] sm:$0xff]
      %v171 = vld [vmem:[%s156 + $0x8] sm:$0xff]
      %v172 = vld [vmem:[%s156 + $0x10] sm:$0xff]
      %v173 = vld [vmem:[%s156 + $0x18] sm:$0xff]
      %v174 = vld [vmem:[%s156 + $0x20] sm:$0xff]
      %v175 = vld [vmem:[%s156 + $0x28] sm:$0xff]
      %v176 = vld [vmem:[%s156 + $0x30] sm:$0xff]
      %v177 = vld [vmem:[%s156 + $0x38] sm:$0xff]
      %v178 = vld [vmem:[%s156 + $0x40] sm:$0xff]
      %v179 = vld [vmem:[%s156 + $0x48] sm:$0xff]
      %v180 = vld [vmem:[%s156 + $0x50] sm:$0xff]
      %v181 = vld [vmem:[%s156 + $0x58] sm:$0xff]
      %v182 = vld [vmem:[%s156 + $0x60] sm:$0xff]
      %v183 = vld [vmem:[%s156 + $0x68] sm:$0xff]
      %v184 = vld [vmem:[%s156 + $0x70] sm:$0xff]
      %v185 = vld [vmem:[%s156 + $0x78] sm:$0xff]
      %v186 = vld [vmem:[%s1] ss:$4 sm:$0xff]
      %s187 = scalar_lea.vmem %s1, 32
      %v188 = vld [vmem:[%s187] ss:$4 sm:$0xf]
      %s189 = scalar_lea.vmem %s1, 1
      %v190 = vld [vmem:[%s189] ss:$4 sm:$0xff]
      %s191 = scalar_lea.vmem %s1, 33
      %v192 = vld [vmem:[%s191] ss:$4 sm:$0xf]
      %s193 = scalar_lea.vmem %s1, 2
      %v194 = vld [vmem:[%s193] ss:$4 sm:$0xff]
      %s195 = scalar_lea.vmem %s1, 34
      %v196 = vld [vmem:[%s195] ss:$4 sm:$0xf]
      %s197 = scalar_lea.vmem %s1, 3
      %v198 = vld [vmem:[%s197] ss:$4 sm:$0xff]
      %s199 = scalar_lea.vmem %s1, 35
      %v200 = vld [vmem:[%s199] ss:$4 sm:$0xf]
      %217 = vrot.lane.b32.xlu0 %v170, 2
      %v218 = vpop.permute.xlu0 %217
      %219 = vrot.lane.b32.xlu0 %v171, 2
      %v220 = vpop.permute.xlu0 %219
      %221 = vrot.lane.b32.xlu0 %v172, 2
      %v222 = vpop.permute.xlu0 %221
      %223 = vrot.lane.b32.xlu0 %v173, 2
      %v224 = vpop.permute.xlu0 %223
      %225 = vrot.lane.b32.xlu0 %v174, 2
      %v226 = vpop.permute.xlu0 %225
      %227 = vrot.lane.b32.xlu0 %v175, 2
      %v228 = vpop.permute.xlu0 %227
      %229 = vrot.lane.b32.xlu0 %v176, 2
      %v230 = vpop.permute.xlu0 %229
      %231 = vrot.lane.b32.xlu0 %v177, 2
      %v232 = vpop.permute.xlu0 %231
      %233 = vrot.lane.b32.xlu0 %v178, 2
      %v234 = vpop.permute.xlu0 %233
      %235 = vrot.lane.b32.xlu0 %v179, 2
      %v236 = vpop.permute.xlu0 %235
      %237 = vrot.lane.b32.xlu0 %v180, 2
      %v238 = vpop.permute.xlu0 %237
      %239 = vrot.lane.b32.xlu0 %v181, 2
      %v240 = vpop.permute.xlu0 %239
      %241 = vrot.lane.b32.xlu0 %v182, 2
      %v242 = vpop.permute.xlu0 %241
      %243 = vrot.lane.b32.xlu0 %v183, 2
      %v244 = vpop.permute.xlu0 %243
      %245 = vrot.lane.b32.xlu0 %v184, 2
      %v246 = vpop.permute.xlu0 %245
      %247 = vrot.lane.b32.xlu0 %v185, 2
      %v248 = vpop.permute.xlu0 %247
      %v265 = vsub.f32 %v170, %v218
      %v266 = vsub.f32 %v171, %v220
      %v267 = vsub.f32 %v172, %v222
      %v268 = vsub.f32 %v173, %v224
      %v269 = vsub.f32 %v174, %v226
      %v270 = vsub.f32 %v175, %v228
      %v271 = vsub.f32 %v176, %v230
      %v272 = vsub.f32 %v177, %v232
      %v273 = vsub.f32 %v178, %v234
      %v274 = vsub.f32 %v179, %v236
      %v275 = vsub.f32 %v180, %v238
      %v276 = vsub.f32 %v181, %v240
      %v277 = vsub.f32 %v182, %v242
      %v278 = vsub.f32 %v183, %v244
      %v279 = vsub.f32 %v184, %v246
      %v280 = vsub.f32 %v185, %v248
      %297 = vrot.lane.b32.xlu0 %v265, 127
      %v298 = vpop.permute.xlu0 %297
      %299 = vrot.lane.b32.xlu0 %v266, 127
      %v300 = vpop.permute.xlu0 %299
      %301 = vrot.lane.b32.xlu0 %v267, 127
      %v302 = vpop.permute.xlu0 %301
      %303 = vrot.lane.b32.xlu0 %v268, 127
      %v304 = vpop.permute.xlu0 %303
      %305 = vrot.lane.b32.xlu0 %v269, 127
      %v306 = vpop.permute.xlu0 %305
      %307 = vrot.lane.b32.xlu0 %v270, 127
      %v308 = vpop.permute.xlu0 %307
      %309 = vrot.lane.b32.xlu0 %v271, 127
      %v310 = vpop.permute.xlu0 %309
      %311 = vrot.lane.b32.xlu0 %v272, 127
      %v312 = vpop.permute.xlu0 %311
      %313 = vrot.lane.b32.xlu0 %v273, 127
      %v314 = vpop.permute.xlu0 %313
      %315 = vrot.lane.b32.xlu0 %v274, 127
      %v316 = vpop.permute.xlu0 %315
      %317 = vrot.lane.b32.xlu0 %v275, 127
      %v318 = vpop.permute.xlu0 %317
      %319 = vrot.lane.b32.xlu0 %v276, 127
      %v320 = vpop.permute.xlu0 %319
      %321 = vrot.lane.b32.xlu0 %v277, 127
      %v322 = vpop.permute.xlu0 %321
      %323 = vrot.lane.b32.xlu0 %v278, 127
      %v324 = vpop.permute.xlu0 %323
      %325 = vrot.lane.b32.xlu0 %v279, 127
      %v326 = vpop.permute.xlu0 %325
      %327 = vrot.lane.b32.xlu0 %v280, 127
      %v328 = vpop.permute.xlu0 %327
      %v345 = vmul.f32 %v265, %v298
      %v346 = vmul.f32 %v266, %v300
      %v347 = vmul.f32 %v267, %v302
      %v348 = vmul.f32 %v268, %v304
      %v349 = vmul.f32 %v269, %v306
      %v350 = vmul.f32 %v270, %v308
      %v351 = vmul.f32 %v271, %v310
      %v352 = vmul.f32 %v272, %v312
      %v353 = vmul.f32 %v273, %v314
      %v354 = vmul.f32 %v274, %v316
      %v355 = vmul.f32 %v275, %v318
      %v356 = vmul.f32 %v276, %v320
      %v357 = vmul.f32 %v277, %v322
      %v358 = vmul.f32 %v278, %v324
      %v359 = vmul.f32 %v279, %v326
      %v360 = vmul.f32 %v280, %v328
      %v361 = vsub.f32 %v194, %v186
      %v362 = vsub.f32 %v196, %v188
      %v363 = vsub.f32 %v198, %v190
      %v364 = vsub.f32 %v200, %v192
      %v365 = vmul.f32 %v361, %v363
      %v366 = vmul.f32 %v362, %v364
      %367 = vset.pattern.permute.xlu0 0
      %368 = vperm.xlu0 %367, %v170
      %v369 = vpop.permute.xlu0 %368
      %371 = vset.pattern.permute.xlu0 0
      %372 = vperm.xlu0 %371, %v171
      %v373 = vpop.permute.xlu0 %372
      %375 = vset.pattern.permute.xlu0 0
      %376 = vperm.xlu0 %375, %v172
      %v377 = vpop.permute.xlu0 %376
      %379 = vset.pattern.permute.xlu0 0
      %380 = vperm.xlu0 %379, %v173
      %v381 = vpop.permute.xlu0 %380
      %383 = vset.pattern.permute.xlu0 0
      %384 = vperm.xlu0 %383, %v174
      %v385 = vpop.permute.xlu0 %384
      %387 = vset.pattern.permute.xlu0 0
      %388 = vperm.xlu0 %387, %v175
      %v389 = vpop.permute.xlu0 %388
      %391 = vset.pattern.permute.xlu0 0
      %392 = vperm.xlu0 %391, %v176
      %v393 = vpop.permute.xlu0 %392
      %395 = vset.pattern.permute.xlu0 0
      %396 = vperm.xlu0 %395, %v177
      %v397 = vpop.permute.xlu0 %396
      %399 = vset.pattern.permute.xlu0 0
      %400 = vperm.xlu0 %399, %v178
      %v401 = vpop.permute.xlu0 %400
      %403 = vset.pattern.permute.xlu0 0
      %404 = vperm.xlu0 %403, %v179
      %v405 = vpop.permute.xlu0 %404
      %407 = vset.pattern.permute.xlu0 0
      %408 = vperm.xlu0 %407, %v180
      %v409 = vpop.permute.xlu0 %408
      %411 = vset.pattern.permute.xlu0 0
      %412 = vperm.xlu0 %411, %v181
      %v413 = vpop.permute.xlu0 %412
      %415 = vset.pattern.permute.xlu0 0
      %416 = vperm.xlu0 %415, %v182
      %v417 = vpop.permute.xlu0 %416
      %419 = vset.pattern.permute.xlu0 0
      %420 = vperm.xlu0 %419, %v183
      %v421 = vpop.permute.xlu0 %420
      %423 = vset.pattern.permute.xlu0 0
      %424 = vperm.xlu0 %423, %v184
      %v425 = vpop.permute.xlu0 %424
      %427 = vset.pattern.permute.xlu0 0
      %428 = vperm.xlu0 %427, %v185
      %v429 = vpop.permute.xlu0 %428
      %v433 = vlaneseq
      %v434 = vshrl.u32 %v433, 7
      %v435 = vsub.s32 0, %v434
      %v436 = vrot.slane %v186, %v435
      %v437 = vlaneseq
      %v438 = vshrl.u32 %v437, 7
      %v439 = vsub.s32 1, %v438
      %v440 = vrot.slane %v186, %v439
      %v441 = vlaneseq
      %v442 = vshrl.u32 %v441, 7
      %v443 = vsub.s32 2, %v442
      %v444 = vrot.slane %v186, %v443
      %v445 = vlaneseq
      %v446 = vshrl.u32 %v445, 7
      %v447 = vsub.s32 3, %v446
      %v448 = vrot.slane %v186, %v447
      %v449 = vlaneseq
      %v450 = vshrl.u32 %v449, 7
      %v451 = vsub.s32 4, %v450
      %v452 = vrot.slane %v186, %v451
      %v453 = vlaneseq
      %v454 = vshrl.u32 %v453, 7
      %v455 = vsub.s32 5, %v454
      %v456 = vrot.slane %v186, %v455
      %v457 = vlaneseq
      %v458 = vshrl.u32 %v457, 7
      %v459 = vsub.s32 6, %v458
      %v460 = vrot.slane %v186, %v459
      %v461 = vlaneseq
      %v462 = vshrl.u32 %v461, 7
      %v463 = vsub.s32 7, %v462
      %v464 = vrot.slane %v186, %v463
      %v465 = vlaneseq
      %v466 = vshrl.u32 %v465, 7
      %v467 = vsub.s32 0, %v466
      %v468 = vrot.slane %v188, %v467
      %v469 = vlaneseq
      %v470 = vshrl.u32 %v469, 7
      %v471 = vsub.s32 1, %v470
      %v472 = vrot.slane %v188, %v471
      %v473 = vlaneseq
      %v474 = vshrl.u32 %v473, 7
      %v475 = vsub.s32 2, %v474
      %v476 = vrot.slane %v188, %v475
      %v477 = vlaneseq
      %v478 = vshrl.u32 %v477, 7
      %v479 = vsub.s32 3, %v478
      %v480 = vrot.slane %v188, %v479
      %v493 = vmax.f32 %v369, %v436
      %v494 = vmax.f32 %v369, %v440
      %v495 = vmax.f32 %v369, %v444
      %v496 = vmax.f32 %v369, %v448
      %v497 = vmax.f32 %v369, %v452
      %v498 = vmax.f32 %v369, %v456
      %v499 = vmax.f32 %v369, %v460
      %v500 = vmax.f32 %v369, %v464
      %v501 = vmax.f32 %v369, %v468
      %v502 = vmax.f32 %v369, %v472
      %v503 = vmax.f32 %v369, %v476
      %v504 = vmax.f32 %v369, %v480
      %v505 = vmax.f32 %v373, %v436
      %v506 = vmax.f32 %v373, %v440
      %v507 = vmax.f32 %v373, %v444
      %v508 = vmax.f32 %v373, %v448
      %v509 = vmax.f32 %v373, %v452
      %v510 = vmax.f32 %v373, %v456
      %v511 = vmax.f32 %v373, %v460
      %v512 = vmax.f32 %v373, %v464
      %v513 = vmax.f32 %v373, %v468
      %v514 = vmax.f32 %v373, %v472
      %v515 = vmax.f32 %v373, %v476
      %v516 = vmax.f32 %v373, %v480
      %v517 = vmax.f32 %v377, %v436
      %v518 = vmax.f32 %v377, %v440
      %v519 = vmax.f32 %v377, %v444
      %v520 = vmax.f32 %v377, %v448
      %v521 = vmax.f32 %v377, %v452
      %v522 = vmax.f32 %v377, %v456
      %v523 = vmax.f32 %v377, %v460
      %v524 = vmax.f32 %v377, %v464
      %v525 = vmax.f32 %v377, %v468
      %v526 = vmax.f32 %v377, %v472
      %v527 = vmax.f32 %v377, %v476
      %v528 = vmax.f32 %v377, %v480
      %v529 = vmax.f32 %v381, %v436
      %v530 = vmax.f32 %v381, %v440
      %v531 = vmax.f32 %v381, %v444
      %v532 = vmax.f32 %v381, %v448
      %v533 = vmax.f32 %v381, %v452
      %v534 = vmax.f32 %v381, %v456
      %v535 = vmax.f32 %v381, %v460
      %v536 = vmax.f32 %v381, %v464
      %v537 = vmax.f32 %v381, %v468
      %v538 = vmax.f32 %v381, %v472
      %v539 = vmax.f32 %v381, %v476
      %v540 = vmax.f32 %v381, %v480
      %v541 = vmax.f32 %v385, %v436
      %v542 = vmax.f32 %v385, %v440
      %v543 = vmax.f32 %v385, %v444
      %v544 = vmax.f32 %v385, %v448
      %v545 = vmax.f32 %v385, %v452
      %v546 = vmax.f32 %v385, %v456
      %v547 = vmax.f32 %v385, %v460
      %v548 = vmax.f32 %v385, %v464
      %v549 = vmax.f32 %v385, %v468
      %v550 = vmax.f32 %v385, %v472
      %v551 = vmax.f32 %v385, %v476
      %v552 = vmax.f32 %v385, %v480
      %v553 = vmax.f32 %v389, %v436
      %v554 = vmax.f32 %v389, %v440
      %v555 = vmax.f32 %v389, %v444
      %v556 = vmax.f32 %v389, %v448
      %v557 = vmax.f32 %v389, %v452
      %v558 = vmax.f32 %v389, %v456
      %v559 = vmax.f32 %v389, %v460
      %v560 = vmax.f32 %v389, %v464
      %v561 = vmax.f32 %v389, %v468
      %v562 = vmax.f32 %v389, %v472
      %v563 = vmax.f32 %v389, %v476
      %v564 = vmax.f32 %v389, %v480
      %v565 = vmax.f32 %v393, %v436
      %v566 = vmax.f32 %v393, %v440
      %v567 = vmax.f32 %v393, %v444
      %v568 = vmax.f32 %v393, %v448
      %v569 = vmax.f32 %v393, %v452
      %v570 = vmax.f32 %v393, %v456
      %v571 = vmax.f32 %v393, %v460
      %v572 = vmax.f32 %v393, %v464
      %v573 = vmax.f32 %v393, %v468
      %v574 = vmax.f32 %v393, %v472
      %v575 = vmax.f32 %v393, %v476
      %v576 = vmax.f32 %v393, %v480
      %v577 = vmax.f32 %v397, %v436
      %v578 = vmax.f32 %v397, %v440
      %v579 = vmax.f32 %v397, %v444
      %v580 = vmax.f32 %v397, %v448
      %v581 = vmax.f32 %v397, %v452
      %v582 = vmax.f32 %v397, %v456
      %v583 = vmax.f32 %v397, %v460
      %v584 = vmax.f32 %v397, %v464
      %v585 = vmax.f32 %v397, %v468
      %v586 = vmax.f32 %v397, %v472
      %v587 = vmax.f32 %v397, %v476
      %v588 = vmax.f32 %v397, %v480
      %v589 = vmax.f32 %v401, %v436
      %v590 = vmax.f32 %v401, %v440
      %v591 = vmax.f32 %v401, %v444
      %v592 = vmax.f32 %v401, %v448
      %v593 = vmax.f32 %v401, %v452
      %v594 = vmax.f32 %v401, %v456
      %v595 = vmax.f32 %v401, %v460
      %v596 = vmax.f32 %v401, %v464
      %v597 = vmax.f32 %v401, %v468
      %v598 = vmax.f32 %v401, %v472
      %v599 = vmax.f32 %v401, %v476
      %v600 = vmax.f32 %v401, %v480
      %v601 = vmax.f32 %v405, %v436
      %v602 = vmax.f32 %v405, %v440
      %v603 = vmax.f32 %v405, %v444
      %v604 = vmax.f32 %v405, %v448
      %v605 = vmax.f32 %v405, %v452
      %v606 = vmax.f32 %v405, %v456
      %v607 = vmax.f32 %v405, %v460
      %v608 = vmax.f32 %v405, %v464
      %v609 = vmax.f32 %v405, %v468
      %v610 = vmax.f32 %v405, %v472
      %v611 = vmax.f32 %v405, %v476
      %v612 = vmax.f32 %v405, %v480
      %v613 = vmax.f32 %v409, %v436
      %v614 = vmax.f32 %v409, %v440
      %v615 = vmax.f32 %v409, %v444
      %v616 = vmax.f32 %v409, %v448
      %v617 = vmax.f32 %v409, %v452
      %v618 = vmax.f32 %v409, %v456
      %v619 = vmax.f32 %v409, %v460
      %v620 = vmax.f32 %v409, %v464
      %v621 = vmax.f32 %v409, %v468
      %v622 = vmax.f32 %v409, %v472
      %v623 = vmax.f32 %v409, %v476
      %v624 = vmax.f32 %v409, %v480
      %v625 = vmax.f32 %v413, %v436
      %v626 = vmax.f32 %v413, %v440
      %v627 = vmax.f32 %v413, %v444
      %v628 = vmax.f32 %v413, %v448
      %v629 = vmax.f32 %v413, %v452
      %v630 = vmax.f32 %v413, %v456
      %v631 = vmax.f32 %v413, %v460
      %v632 = vmax.f32 %v413, %v464
      %v633 = vmax.f32 %v413, %v468
      %v634 = vmax.f32 %v413, %v472
      %v635 = vmax.f32 %v413, %v476
      %v636 = vmax.f32 %v413, %v480
      %v637 = vmax.f32 %v417, %v436
      %v638 = vmax.f32 %v417, %v440
      %v639 = vmax.f32 %v417, %v444
      %v640 = vmax.f32 %v417, %v448
      %v641 = vmax.f32 %v417, %v452
      %v642 = vmax.f32 %v417, %v456
      %v643 = vmax.f32 %v417, %v460
      %v644 = vmax.f32 %v417, %v464
      %v645 = vmax.f32 %v417, %v468
      %v646 = vmax.f32 %v417, %v472
      %v647 = vmax.f32 %v417, %v476
      %v648 = vmax.f32 %v417, %v480
      %v649 = vmax.f32 %v421, %v436
      %v650 = vmax.f32 %v421, %v440
      %v651 = vmax.f32 %v421, %v444
      %v652 = vmax.f32 %v421, %v448
      %v653 = vmax.f32 %v421, %v452
      %v654 = vmax.f32 %v421, %v456
      %v655 = vmax.f32 %v421, %v460
      %v656 = vmax.f32 %v421, %v464
      %v657 = vmax.f32 %v421, %v468
      %v658 = vmax.f32 %v421, %v472
      %v659 = vmax.f32 %v421, %v476
      %v660 = vmax.f32 %v421, %v480
      %v661 = vmax.f32 %v425, %v436
      %v662 = vmax.f32 %v425, %v440
      %v663 = vmax.f32 %v425, %v444
      %v664 = vmax.f32 %v425, %v448
      %v665 = vmax.f32 %v425, %v452
      %v666 = vmax.f32 %v425, %v456
      %v667 = vmax.f32 %v425, %v460
      %v668 = vmax.f32 %v425, %v464
      %v669 = vmax.f32 %v425, %v468
      %v670 = vmax.f32 %v425, %v472
      %v671 = vmax.f32 %v425, %v476
      %v672 = vmax.f32 %v425, %v480
      %v673 = vmax.f32 %v429, %v436
      %v674 = vmax.f32 %v429, %v440
      %v675 = vmax.f32 %v429, %v444
      %v676 = vmax.f32 %v429, %v448
      %v677 = vmax.f32 %v429, %v452
      %v678 = vmax.f32 %v429, %v456
      %v679 = vmax.f32 %v429, %v460
      %v680 = vmax.f32 %v429, %v464
      %v681 = vmax.f32 %v429, %v468
      %v682 = vmax.f32 %v429, %v472
      %v683 = vmax.f32 %v429, %v476
      %v684 = vmax.f32 %v429, %v480
      %685 = vset.pattern.permute.xlu0 1
      %686 = vperm.xlu0 %685, %v170
      %v687 = vpop.permute.xlu0 %686
      %689 = vset.pattern.permute.xlu0 1
      %690 = vperm.xlu0 %689, %v171
      %v691 = vpop.permute.xlu0 %690
      %693 = vset.pattern.permute.xlu0 1
      %694 = vperm.xlu0 %693, %v172
      %v695 = vpop.permute.xlu0 %694
      %697 = vset.pattern.permute.xlu0 1
      %698 = vperm.xlu0 %697, %v173
      %v699 = vpop.permute.xlu0 %698
      %701 = vset.pattern.permute.xlu0 1
      %702 = vperm.xlu0 %701, %v174
      %v703 = vpop.permute.xlu0 %702
      %705 = vset.pattern.permute.xlu0 1
      %706 = vperm.xlu0 %705, %v175
      %v707 = vpop.permute.xlu0 %706
      %709 = vset.pattern.permute.xlu0 1
      %710 = vperm.xlu0 %709, %v176
      %v711 = vpop.permute.xlu0 %710
      %713 = vset.pattern.permute.xlu0 1
      %714 = vperm.xlu0 %713, %v177
      %v715 = vpop.permute.xlu0 %714
      %717 = vset.pattern.permute.xlu0 1
      %718 = vperm.xlu0 %717, %v178
      %v719 = vpop.permute.xlu0 %718
      %721 = vset.pattern.permute.xlu0 1
      %722 = vperm.xlu0 %721, %v179
      %v723 = vpop.permute.xlu0 %722
      %725 = vset.pattern.permute.xlu0 1
      %726 = vperm.xlu0 %725, %v180
      %v727 = vpop.permute.xlu0 %726
      %729 = vset.pattern.permute.xlu0 1
      %730 = vperm.xlu0 %729, %v181
      %v731 = vpop.permute.xlu0 %730
      %733 = vset.pattern.permute.xlu0 1
      %734 = vperm.xlu0 %733, %v182
      %v735 = vpop.permute.xlu0 %734
      %737 = vset.pattern.permute.xlu0 1
      %738 = vperm.xlu0 %737, %v183
      %v739 = vpop.permute.xlu0 %738
      %741 = vset.pattern.permute.xlu0 1
      %742 = vperm.xlu0 %741, %v184
      %v743 = vpop.permute.xlu0 %742
      %745 = vset.pattern.permute.xlu0 1
      %746 = vperm.xlu0 %745, %v185
      %v747 = vpop.permute.xlu0 %746
      %v751 = vlaneseq
      %v752 = vshrl.u32 %v751, 7
      %v753 = vsub.s32 0, %v752
      %v754 = vrot.slane %v190, %v753
      %v755 = vlaneseq
      %v756 = vshrl.u32 %v755, 7
      %v757 = vsub.s32 1, %v756
      %v758 = vrot.slane %v190, %v757
      %v759 = vlaneseq
      %v760 = vshrl.u32 %v759, 7
      %v761 = vsub.s32 2, %v760
      %v762 = vrot.slane %v190, %v761
      %v763 = vlaneseq
      %v764 = vshrl.u32 %v763, 7
      %v765 = vsub.s32 3, %v764
      %v766 = vrot.slane %v190, %v765
      %v767 = vlaneseq
      %v768 = vshrl.u32 %v767, 7
      %v769 = vsub.s32 4, %v768
      %v770 = vrot.slane %v190, %v769
      %v771 = vlaneseq
      %v772 = vshrl.u32 %v771, 7
      %v773 = vsub.s32 5, %v772
      %v774 = vrot.slane %v190, %v773
      %v775 = vlaneseq
      %v776 = vshrl.u32 %v775, 7
      %v777 = vsub.s32 6, %v776
      %v778 = vrot.slane %v190, %v777
      %v779 = vlaneseq
      %v780 = vshrl.u32 %v779, 7
      %v781 = vsub.s32 7, %v780
      %v782 = vrot.slane %v190, %v781
      %v783 = vlaneseq
      %v784 = vshrl.u32 %v783, 7
      %v785 = vsub.s32 0, %v784
      %v786 = vrot.slane %v192, %v785
      %v787 = vlaneseq
      %v788 = vshrl.u32 %v787, 7
      %v789 = vsub.s32 1, %v788
      %v790 = vrot.slane %v192, %v789
      %v791 = vlaneseq
      %v792 = vshrl.u32 %v791, 7
      %v793 = vsub.s32 2, %v792
      %v794 = vrot.slane %v192, %v793
      %v795 = vlaneseq
      %v796 = vshrl.u32 %v795, 7
      %v797 = vsub.s32 3, %v796
      %v798 = vrot.slane %v192, %v797
      %v811 = vmax.f32 %v687, %v754
      %v812 = vmax.f32 %v687, %v758
      %v813 = vmax.f32 %v687, %v762
      %v814 = vmax.f32 %v687, %v766
      %v815 = vmax.f32 %v687, %v770
      %v816 = vmax.f32 %v687, %v774
      %v817 = vmax.f32 %v687, %v778
      %v818 = vmax.f32 %v687, %v782
      %v819 = vmax.f32 %v687, %v786
      %v820 = vmax.f32 %v687, %v790
      %v821 = vmax.f32 %v687, %v794
      %v822 = vmax.f32 %v687, %v798
      %v823 = vmax.f32 %v691, %v754
      %v824 = vmax.f32 %v691, %v758
      %v825 = vmax.f32 %v691, %v762
      %v826 = vmax.f32 %v691, %v766
      %v827 = vmax.f32 %v691, %v770
      %v828 = vmax.f32 %v691, %v774
      %v829 = vmax.f32 %v691, %v778
      %v830 = vmax.f32 %v691, %v782
      %v831 = vmax.f32 %v691, %v786
      %v832 = vmax.f32 %v691, %v790
      %v833 = vmax.f32 %v691, %v794
      %v834 = vmax.f32 %v691, %v798
      %v835 = vmax.f32 %v695, %v754
      %v836 = vmax.f32 %v695, %v758
      %v837 = vmax.f32 %v695, %v762
      %v838 = vmax.f32 %v695, %v766
      %v839 = vmax.f32 %v695, %v770
      %v840 = vmax.f32 %v695, %v774
      %v841 = vmax.f32 %v695, %v778
      %v842 = vmax.f32 %v695, %v782
      %v843 = vmax.f32 %v695, %v786
      %v844 = vmax.f32 %v695, %v790
      %v845 = vmax.f32 %v695, %v794
      %v846 = vmax.f32 %v695, %v798
      %v847 = vmax.f32 %v699, %v754
      %v848 = vmax.f32 %v699, %v758
      %v849 = vmax.f32 %v699, %v762
      %v850 = vmax.f32 %v699, %v766
      %v851 = vmax.f32 %v699, %v770
      %v852 = vmax.f32 %v699, %v774
      %v853 = vmax.f32 %v699, %v778
      %v854 = vmax.f32 %v699, %v782
      %v855 = vmax.f32 %v699, %v786
      %v856 = vmax.f32 %v699, %v790
      %v857 = vmax.f32 %v699, %v794
      %v858 = vmax.f32 %v699, %v798
      %v859 = vmax.f32 %v703, %v754
      %v860 = vmax.f32 %v703, %v758
      %v861 = vmax.f32 %v703, %v762
      %v862 = vmax.f32 %v703, %v766
      %v863 = vmax.f32 %v703, %v770
      %v864 = vmax.f32 %v703, %v774
      %v865 = vmax.f32 %v703, %v778
      %v866 = vmax.f32 %v703, %v782
      %v867 = vmax.f32 %v703, %v786
      %v868 = vmax.f32 %v703, %v790
      %v869 = vmax.f32 %v703, %v794
      %v870 = vmax.f32 %v703, %v798
      %v871 = vmax.f32 %v707, %v754
      %v872 = vmax.f32 %v707, %v758
      %v873 = vmax.f32 %v707, %v762
      %v874 = vmax.f32 %v707, %v766
      %v875 = vmax.f32 %v707, %v770
      %v876 = vmax.f32 %v707, %v774
      %v877 = vmax.f32 %v707, %v778
      %v878 = vmax.f32 %v707, %v782
      %v879 = vmax.f32 %v707, %v786
      %v880 = vmax.f32 %v707, %v790
      %v881 = vmax.f32 %v707, %v794
      %v882 = vmax.f32 %v707, %v798
      %v883 = vmax.f32 %v711, %v754
      %v884 = vmax.f32 %v711, %v758
      %v885 = vmax.f32 %v711, %v762
      %v886 = vmax.f32 %v711, %v766
      %v887 = vmax.f32 %v711, %v770
      %v888 = vmax.f32 %v711, %v774
      %v889 = vmax.f32 %v711, %v778
      %v890 = vmax.f32 %v711, %v782
      %v891 = vmax.f32 %v711, %v786
      %v892 = vmax.f32 %v711, %v790
      %v893 = vmax.f32 %v711, %v794
      %v894 = vmax.f32 %v711, %v798
      %v895 = vmax.f32 %v715, %v754
      %v896 = vmax.f32 %v715, %v758
      %v897 = vmax.f32 %v715, %v762
      %v898 = vmax.f32 %v715, %v766
      %v899 = vmax.f32 %v715, %v770
      %v900 = vmax.f32 %v715, %v774
      %v901 = vmax.f32 %v715, %v778
      %v902 = vmax.f32 %v715, %v782
      %v903 = vmax.f32 %v715, %v786
      %v904 = vmax.f32 %v715, %v790
      %v905 = vmax.f32 %v715, %v794
      %v906 = vmax.f32 %v715, %v798
      %v907 = vmax.f32 %v719, %v754
      %v908 = vmax.f32 %v719, %v758
      %v909 = vmax.f32 %v719, %v762
      %v910 = vmax.f32 %v719, %v766
      %v911 = vmax.f32 %v719, %v770
      %v912 = vmax.f32 %v719, %v774
      %v913 = vmax.f32 %v719, %v778
      %v914 = vmax.f32 %v719, %v782
      %v915 = vmax.f32 %v719, %v786
      %v916 = vmax.f32 %v719, %v790
      %v917 = vmax.f32 %v719, %v794
      %v918 = vmax.f32 %v719, %v798
      %v919 = vmax.f32 %v723, %v754
      %v920 = vmax.f32 %v723, %v758
      %v921 = vmax.f32 %v723, %v762
      %v922 = vmax.f32 %v723, %v766
      %v923 = vmax.f32 %v723, %v770
      %v924 = vmax.f32 %v723, %v774
      %v925 = vmax.f32 %v723, %v778
      %v926 = vmax.f32 %v723, %v782
      %v927 = vmax.f32 %v723, %v786
      %v928 = vmax.f32 %v723, %v790
      %v929 = vmax.f32 %v723, %v794
      %v930 = vmax.f32 %v723, %v798
      %v931 = vmax.f32 %v727, %v754
      %v932 = vmax.f32 %v727, %v758
      %v933 = vmax.f32 %v727, %v762
      %v934 = vmax.f32 %v727, %v766
      %v935 = vmax.f32 %v727, %v770
      %v936 = vmax.f32 %v727, %v774
      %v937 = vmax.f32 %v727, %v778
      %v938 = vmax.f32 %v727, %v782
      %v939 = vmax.f32 %v727, %v786
      %v940 = vmax.f32 %v727, %v790
      %v941 = vmax.f32 %v727, %v794
      %v942 = vmax.f32 %v727, %v798
      %v943 = vmax.f32 %v731, %v754
      %v944 = vmax.f32 %v731, %v758
      %v945 = vmax.f32 %v731, %v762
      %v946 = vmax.f32 %v731, %v766
      %v947 = vmax.f32 %v731, %v770
      %v948 = vmax.f32 %v731, %v774
      %v949 = vmax.f32 %v731, %v778
      %v950 = vmax.f32 %v731, %v782
      %v951 = vmax.f32 %v731, %v786
      %v952 = vmax.f32 %v731, %v790
      %v953 = vmax.f32 %v731, %v794
      %v954 = vmax.f32 %v731, %v798
      %v955 = vmax.f32 %v735, %v754
      %v956 = vmax.f32 %v735, %v758
      %v957 = vmax.f32 %v735, %v762
      %v958 = vmax.f32 %v735, %v766
      %v959 = vmax.f32 %v735, %v770
      %v960 = vmax.f32 %v735, %v774
      %v961 = vmax.f32 %v735, %v778
      %v962 = vmax.f32 %v735, %v782
      %v963 = vmax.f32 %v735, %v786
      %v964 = vmax.f32 %v735, %v790
      %v965 = vmax.f32 %v735, %v794
      %v966 = vmax.f32 %v735, %v798
      %v967 = vmax.f32 %v739, %v754
      %v968 = vmax.f32 %v739, %v758
      %v969 = vmax.f32 %v739, %v762
      %v970 = vmax.f32 %v739, %v766
      %v971 = vmax.f32 %v739, %v770
      %v972 = vmax.f32 %v739, %v774
      %v973 = vmax.f32 %v739, %v778
      %v974 = vmax.f32 %v739, %v782
      %v975 = vmax.f32 %v739, %v786
      %v976 = vmax.f32 %v739, %v790
      %v977 = vmax.f32 %v739, %v794
      %v978 = vmax.f32 %v739, %v798
      %v979 = vmax.f32 %v743, %v754
      %v980 = vmax.f32 %v743, %v758
      %v981 = vmax.f32 %v743, %v762
      %v982 = vmax.f32 %v743, %v766
      %v983 = vmax.f32 %v743, %v770
      %v984 = vmax.f32 %v743, %v774
      %v985 = vmax.f32 %v743, %v778
      %v986 = vmax.f32 %v743, %v782
      %v987 = vmax.f32 %v743, %v786
      %v988 = vmax.f32 %v743, %v790
      %v989 = vmax.f32 %v743, %v794
      %v990 = vmax.f32 %v743, %v798
      %v991 = vmax.f32 %v747, %v754
      %v992 = vmax.f32 %v747, %v758
      %v993 = vmax.f32 %v747, %v762
      %v994 = vmax.f32 %v747, %v766
      %v995 = vmax.f32 %v747, %v770
      %v996 = vmax.f32 %v747, %v774
      %v997 = vmax.f32 %v747, %v778
      %v998 = vmax.f32 %v747, %v782
      %v999 = vmax.f32 %v747, %v786
      %v1000 = vmax.f32 %v747, %v790
      %v1001 = vmax.f32 %v747, %v794
      %v1002 = vmax.f32 %v747, %v798
      %1003 = vset.pattern.permute.xlu0 2
      %1004 = vperm.xlu0 %1003, %v170
      %v1005 = vpop.permute.xlu0 %1004
      %1007 = vset.pattern.permute.xlu0 2
      %1008 = vperm.xlu0 %1007, %v171
      %v1009 = vpop.permute.xlu0 %1008
      %1011 = vset.pattern.permute.xlu0 2
      %1012 = vperm.xlu0 %1011, %v172
      %v1013 = vpop.permute.xlu0 %1012
      %1015 = vset.pattern.permute.xlu0 2
      %1016 = vperm.xlu0 %1015, %v173
      %v1017 = vpop.permute.xlu0 %1016
      %1019 = vset.pattern.permute.xlu0 2
      %1020 = vperm.xlu0 %1019, %v174
      %v1021 = vpop.permute.xlu0 %1020
      %1023 = vset.pattern.permute.xlu0 2
      %1024 = vperm.xlu0 %1023, %v175
      %v1025 = vpop.permute.xlu0 %1024
      %1027 = vset.pattern.permute.xlu0 2
      %1028 = vperm.xlu0 %1027, %v176
      %v1029 = vpop.permute.xlu0 %1028
      %1031 = vset.pattern.permute.xlu0 2
      %1032 = vperm.xlu0 %1031, %v177
      %v1033 = vpop.permute.xlu0 %1032
      %1035 = vset.pattern.permute.xlu0 2
      %1036 = vperm.xlu0 %1035, %v178
      %v1037 = vpop.permute.xlu0 %1036
      %1039 = vset.pattern.permute.xlu0 2
      %1040 = vperm.xlu0 %1039, %v179
      %v1041 = vpop.permute.xlu0 %1040
      %1043 = vset.pattern.permute.xlu0 2
      %1044 = vperm.xlu0 %1043, %v180
      %v1045 = vpop.permute.xlu0 %1044
      %1047 = vset.pattern.permute.xlu0 2
      %1048 = vperm.xlu0 %1047, %v181
      %v1049 = vpop.permute.xlu0 %1048
      %1051 = vset.pattern.permute.xlu0 2
      %1052 = vperm.xlu0 %1051, %v182
      %v1053 = vpop.permute.xlu0 %1052
      %1055 = vset.pattern.permute.xlu0 2
      %1056 = vperm.xlu0 %1055, %v183
      %v1057 = vpop.permute.xlu0 %1056
      %1059 = vset.pattern.permute.xlu0 2
      %1060 = vperm.xlu0 %1059, %v184
      %v1061 = vpop.permute.xlu0 %1060
      %1063 = vset.pattern.permute.xlu0 2
      %1064 = vperm.xlu0 %1063, %v185
      %v1065 = vpop.permute.xlu0 %1064
      %v1069 = vlaneseq
      %v1070 = vshrl.u32 %v1069, 7
      %v1071 = vsub.s32 0, %v1070
      %v1072 = vrot.slane %v194, %v1071
      %v1073 = vlaneseq
      %v1074 = vshrl.u32 %v1073, 7
      %v1075 = vsub.s32 1, %v1074
      %v1076 = vrot.slane %v194, %v1075
      %v1077 = vlaneseq
      %v1078 = vshrl.u32 %v1077, 7
      %v1079 = vsub.s32 2, %v1078
      %v1080 = vrot.slane %v194, %v1079
      %v1081 = vlaneseq
      %v1082 = vshrl.u32 %v1081, 7
      %v1083 = vsub.s32 3, %v1082
      %v1084 = vrot.slane %v194, %v1083
      %v1085 = vlaneseq
      %v1086 = vshrl.u32 %v1085, 7
      %v1087 = vsub.s32 4, %v1086
      %v1088 = vrot.slane %v194, %v1087
      %v1089 = vlaneseq
      %v1090 = vshrl.u32 %v1089, 7
      %v1091 = vsub.s32 5, %v1090
      %v1092 = vrot.slane %v194, %v1091
      %v1093 = vlaneseq
      %v1094 = vshrl.u32 %v1093, 7
      %v1095 = vsub.s32 6, %v1094
      %v1096 = vrot.slane %v194, %v1095
      %v1097 = vlaneseq
      %v1098 = vshrl.u32 %v1097, 7
      %v1099 = vsub.s32 7, %v1098
      %v1100 = vrot.slane %v194, %v1099
      %v1101 = vlaneseq
      %v1102 = vshrl.u32 %v1101, 7
      %v1103 = vsub.s32 0, %v1102
      %v1104 = vrot.slane %v196, %v1103
      %v1105 = vlaneseq
      %v1106 = vshrl.u32 %v1105, 7
      %v1107 = vsub.s32 1, %v1106
      %v1108 = vrot.slane %v196, %v1107
      %v1109 = vlaneseq
      %v1110 = vshrl.u32 %v1109, 7
      %v1111 = vsub.s32 2, %v1110
      %v1112 = vrot.slane %v196, %v1111
      %v1113 = vlaneseq
      %v1114 = vshrl.u32 %v1113, 7
      %v1115 = vsub.s32 3, %v1114
      %v1116 = vrot.slane %v196, %v1115
      %v1129 = vmin.f32 %v1005, %v1072
      %v1130 = vmin.f32 %v1005, %v1076
      %v1131 = vmin.f32 %v1005, %v1080
      %v1132 = vmin.f32 %v1005, %v1084
      %v1133 = vmin.f32 %v1005, %v1088
      %v1134 = vmin.f32 %v1005, %v1092
      %v1135 = vmin.f32 %v1005, %v1096
      %v1136 = vmin.f32 %v1005, %v1100
      %v1137 = vmin.f32 %v1005, %v1104
      %v1138 = vmin.f32 %v1005, %v1108
      %v1139 = vmin.f32 %v1005, %v1112
      %v1140 = vmin.f32 %v1005, %v1116
      %v1141 = vmin.f32 %v1009, %v1072
      %v1142 = vmin.f32 %v1009, %v1076
      %v1143 = vmin.f32 %v1009, %v1080
      %v1144 = vmin.f32 %v1009, %v1084
      %v1145 = vmin.f32 %v1009, %v1088
      %v1146 = vmin.f32 %v1009, %v1092
      %v1147 = vmin.f32 %v1009, %v1096
      %v1148 = vmin.f32 %v1009, %v1100
      %v1149 = vmin.f32 %v1009, %v1104
      %v1150 = vmin.f32 %v1009, %v1108
      %v1151 = vmin.f32 %v1009, %v1112
      %v1152 = vmin.f32 %v1009, %v1116
      %v1153 = vmin.f32 %v1013, %v1072
      %v1154 = vmin.f32 %v1013, %v1076
      %v1155 = vmin.f32 %v1013, %v1080
      %v1156 = vmin.f32 %v1013, %v1084
      %v1157 = vmin.f32 %v1013, %v1088
      %v1158 = vmin.f32 %v1013, %v1092
      %v1159 = vmin.f32 %v1013, %v1096
      %v1160 = vmin.f32 %v1013, %v1100
      %v1161 = vmin.f32 %v1013, %v1104
      %v1162 = vmin.f32 %v1013, %v1108
      %v1163 = vmin.f32 %v1013, %v1112
      %v1164 = vmin.f32 %v1013, %v1116
      %v1165 = vmin.f32 %v1017, %v1072
      %v1166 = vmin.f32 %v1017, %v1076
      %v1167 = vmin.f32 %v1017, %v1080
      %v1168 = vmin.f32 %v1017, %v1084
      %v1169 = vmin.f32 %v1017, %v1088
      %v1170 = vmin.f32 %v1017, %v1092
      %v1171 = vmin.f32 %v1017, %v1096
      %v1172 = vmin.f32 %v1017, %v1100
      %v1173 = vmin.f32 %v1017, %v1104
      %v1174 = vmin.f32 %v1017, %v1108
      %v1175 = vmin.f32 %v1017, %v1112
      %v1176 = vmin.f32 %v1017, %v1116
      %v1177 = vmin.f32 %v1021, %v1072
      %v1178 = vmin.f32 %v1021, %v1076
      %v1179 = vmin.f32 %v1021, %v1080
      %v1180 = vmin.f32 %v1021, %v1084
      %v1181 = vmin.f32 %v1021, %v1088
      %v1182 = vmin.f32 %v1021, %v1092
      %v1183 = vmin.f32 %v1021, %v1096
      %v1184 = vmin.f32 %v1021, %v1100
      %v1185 = vmin.f32 %v1021, %v1104
      %v1186 = vmin.f32 %v1021, %v1108
      %v1187 = vmin.f32 %v1021, %v1112
      %v1188 = vmin.f32 %v1021, %v1116
      %v1189 = vmin.f32 %v1025, %v1072
      %v1190 = vmin.f32 %v1025, %v1076
      %v1191 = vmin.f32 %v1025, %v1080
      %v1192 = vmin.f32 %v1025, %v1084
      %v1193 = vmin.f32 %v1025, %v1088
      %v1194 = vmin.f32 %v1025, %v1092
      %v1195 = vmin.f32 %v1025, %v1096
      %v1196 = vmin.f32 %v1025, %v1100
      %v1197 = vmin.f32 %v1025, %v1104
      %v1198 = vmin.f32 %v1025, %v1108
      %v1199 = vmin.f32 %v1025, %v1112
      %v1200 = vmin.f32 %v1025, %v1116
      %v1201 = vmin.f32 %v1029, %v1072
      %v1202 = vmin.f32 %v1029, %v1076
      %v1203 = vmin.f32 %v1029, %v1080
      %v1204 = vmin.f32 %v1029, %v1084
      %v1205 = vmin.f32 %v1029, %v1088
      %v1206 = vmin.f32 %v1029, %v1092
      %v1207 = vmin.f32 %v1029, %v1096
      %v1208 = vmin.f32 %v1029, %v1100
      %v1209 = vmin.f32 %v1029, %v1104
      %v1210 = vmin.f32 %v1029, %v1108
      %v1211 = vmin.f32 %v1029, %v1112
      %v1212 = vmin.f32 %v1029, %v1116
      %v1213 = vmin.f32 %v1033, %v1072
      %v1214 = vmin.f32 %v1033, %v1076
      %v1215 = vmin.f32 %v1033, %v1080
      %v1216 = vmin.f32 %v1033, %v1084
      %v1217 = vmin.f32 %v1033, %v1088
      %v1218 = vmin.f32 %v1033, %v1092
      %v1219 = vmin.f32 %v1033, %v1096
      %v1220 = vmin.f32 %v1033, %v1100
      %v1221 = vmin.f32 %v1033, %v1104
      %v1222 = vmin.f32 %v1033, %v1108
      %v1223 = vmin.f32 %v1033, %v1112
      %v1224 = vmin.f32 %v1033, %v1116
      %v1225 = vmin.f32 %v1037, %v1072
      %v1226 = vmin.f32 %v1037, %v1076
      %v1227 = vmin.f32 %v1037, %v1080
      %v1228 = vmin.f32 %v1037, %v1084
      %v1229 = vmin.f32 %v1037, %v1088
      %v1230 = vmin.f32 %v1037, %v1092
      %v1231 = vmin.f32 %v1037, %v1096
      %v1232 = vmin.f32 %v1037, %v1100
      %v1233 = vmin.f32 %v1037, %v1104
      %v1234 = vmin.f32 %v1037, %v1108
      %v1235 = vmin.f32 %v1037, %v1112
      %v1236 = vmin.f32 %v1037, %v1116
      %v1237 = vmin.f32 %v1041, %v1072
      %v1238 = vmin.f32 %v1041, %v1076
      %v1239 = vmin.f32 %v1041, %v1080
      %v1240 = vmin.f32 %v1041, %v1084
      %v1241 = vmin.f32 %v1041, %v1088
      %v1242 = vmin.f32 %v1041, %v1092
      %v1243 = vmin.f32 %v1041, %v1096
      %v1244 = vmin.f32 %v1041, %v1100
      %v1245 = vmin.f32 %v1041, %v1104
      %v1246 = vmin.f32 %v1041, %v1108
      %v1247 = vmin.f32 %v1041, %v1112
      %v1248 = vmin.f32 %v1041, %v1116
      %v1249 = vmin.f32 %v1045, %v1072
      %v1250 = vmin.f32 %v1045, %v1076
      %v1251 = vmin.f32 %v1045, %v1080
      %v1252 = vmin.f32 %v1045, %v1084
      %v1253 = vmin.f32 %v1045, %v1088
      %v1254 = vmin.f32 %v1045, %v1092
      %v1255 = vmin.f32 %v1045, %v1096
      %v1256 = vmin.f32 %v1045, %v1100
      %v1257 = vmin.f32 %v1045, %v1104
      %v1258 = vmin.f32 %v1045, %v1108
      %v1259 = vmin.f32 %v1045, %v1112
      %v1260 = vmin.f32 %v1045, %v1116
      %v1261 = vmin.f32 %v1049, %v1072
      %v1262 = vmin.f32 %v1049, %v1076
      %v1263 = vmin.f32 %v1049, %v1080
      %v1264 = vmin.f32 %v1049, %v1084
      %v1265 = vmin.f32 %v1049, %v1088
      %v1266 = vmin.f32 %v1049, %v1092
      %v1267 = vmin.f32 %v1049, %v1096
      %v1268 = vmin.f32 %v1049, %v1100
      %v1269 = vmin.f32 %v1049, %v1104
      %v1270 = vmin.f32 %v1049, %v1108
      %v1271 = vmin.f32 %v1049, %v1112
      %v1272 = vmin.f32 %v1049, %v1116
      %v1273 = vmin.f32 %v1053, %v1072
      %v1274 = vmin.f32 %v1053, %v1076
      %v1275 = vmin.f32 %v1053, %v1080
      %v1276 = vmin.f32 %v1053, %v1084
      %v1277 = vmin.f32 %v1053, %v1088
      %v1278 = vmin.f32 %v1053, %v1092
      %v1279 = vmin.f32 %v1053, %v1096
      %v1280 = vmin.f32 %v1053, %v1100
      %v1281 = vmin.f32 %v1053, %v1104
      %v1282 = vmin.f32 %v1053, %v1108
      %v1283 = vmin.f32 %v1053, %v1112
      %v1284 = vmin.f32 %v1053, %v1116
      %v1285 = vmin.f32 %v1057, %v1072
      %v1286 = vmin.f32 %v1057, %v1076
      %v1287 = vmin.f32 %v1057, %v1080
      %v1288 = vmin.f32 %v1057, %v1084
      %v1289 = vmin.f32 %v1057, %v1088
      %v1290 = vmin.f32 %v1057, %v1092
      %v1291 = vmin.f32 %v1057, %v1096
      %v1292 = vmin.f32 %v1057, %v1100
      %v1293 = vmin.f32 %v1057, %v1104
      %v1294 = vmin.f32 %v1057, %v1108
      %v1295 = vmin.f32 %v1057, %v1112
      %v1296 = vmin.f32 %v1057, %v1116
      %v1297 = vmin.f32 %v1061, %v1072
      %v1298 = vmin.f32 %v1061, %v1076
      %v1299 = vmin.f32 %v1061, %v1080
      %v1300 = vmin.f32 %v1061, %v1084
      %v1301 = vmin.f32 %v1061, %v1088
      %v1302 = vmin.f32 %v1061, %v1092
      %v1303 = vmin.f32 %v1061, %v1096
      %v1304 = vmin.f32 %v1061, %v1100
      %v1305 = vmin.f32 %v1061, %v1104
      %v1306 = vmin.f32 %v1061, %v1108
      %v1307 = vmin.f32 %v1061, %v1112
      %v1308 = vmin.f32 %v1061, %v1116
      %v1309 = vmin.f32 %v1065, %v1072
      %v1310 = vmin.f32 %v1065, %v1076
      %v1311 = vmin.f32 %v1065, %v1080
      %v1312 = vmin.f32 %v1065, %v1084
      %v1313 = vmin.f32 %v1065, %v1088
      %v1314 = vmin.f32 %v1065, %v1092
      %v1315 = vmin.f32 %v1065, %v1096
      %v1316 = vmin.f32 %v1065, %v1100
      %v1317 = vmin.f32 %v1065, %v1104
      %v1318 = vmin.f32 %v1065, %v1108
      %v1319 = vmin.f32 %v1065, %v1112
      %v1320 = vmin.f32 %v1065, %v1116
      %1321 = vset.pattern.permute.xlu0 3
      %1322 = vperm.xlu0 %1321, %v170
      %v1323 = vpop.permute.xlu0 %1322
      %1325 = vset.pattern.permute.xlu0 3
      %1326 = vperm.xlu0 %1325, %v171
      %v1327 = vpop.permute.xlu0 %1326
      %1329 = vset.pattern.permute.xlu0 3
      %1330 = vperm.xlu0 %1329, %v172
      %v1331 = vpop.permute.xlu0 %1330
      %1333 = vset.pattern.permute.xlu0 3
      %1334 = vperm.xlu0 %1333, %v173
      %v1335 = vpop.permute.xlu0 %1334
      %1337 = vset.pattern.permute.xlu0 3
      %1338 = vperm.xlu0 %1337, %v174
      %v1339 = vpop.permute.xlu0 %1338
      %1341 = vset.pattern.permute.xlu0 3
      %1342 = vperm.xlu0 %1341, %v175
      %v1343 = vpop.permute.xlu0 %1342
      %1345 = vset.pattern.permute.xlu0 3
      %1346 = vperm.xlu0 %1345, %v176
      %v1347 = vpop.permute.xlu0 %1346
      %1349 = vset.pattern.permute.xlu0 3
      %1350 = vperm.xlu0 %1349, %v177
      %v1351 = vpop.permute.xlu0 %1350
      %1353 = vset.pattern.permute.xlu0 3
      %1354 = vperm.xlu0 %1353, %v178
      %v1355 = vpop.permute.xlu0 %1354
      %1357 = vset.pattern.permute.xlu0 3
      %1358 = vperm.xlu0 %1357, %v179
      %v1359 = vpop.permute.xlu0 %1358
      %1361 = vset.pattern.permute.xlu0 3
      %1362 = vperm.xlu0 %1361, %v180
      %v1363 = vpop.permute.xlu0 %1362
      %1365 = vset.pattern.permute.xlu0 3
      %1366 = vperm.xlu0 %1365, %v181
      %v1367 = vpop.permute.xlu0 %1366
      %1369 = vset.pattern.permute.xlu0 3
      %1370 = vperm.xlu0 %1369, %v182
      %v1371 = vpop.permute.xlu0 %1370
      %1373 = vset.pattern.permute.xlu0 3
      %1374 = vperm.xlu0 %1373, %v183
      %v1375 = vpop.permute.xlu0 %1374
      %1377 = vset.pattern.permute.xlu0 3
      %1378 = vperm.xlu0 %1377, %v184
      %v1379 = vpop.permute.xlu0 %1378
      %1381 = vset.pattern.permute.xlu0 3
      %1382 = vperm.xlu0 %1381, %v185
      %v1383 = vpop.permute.xlu0 %1382
      %v1387 = vlaneseq
      %v1388 = vshrl.u32 %v1387, 7
      %v1389 = vsub.s32 0, %v1388
      %v1390 = vrot.slane %v198, %v1389
      %v1391 = vlaneseq
      %v1392 = vshrl.u32 %v1391, 7
      %v1393 = vsub.s32 1, %v1392
      %v1394 = vrot.slane %v198, %v1393
      %v1395 = vlaneseq
      %v1396 = vshrl.u32 %v1395, 7
      %v1397 = vsub.s32 2, %v1396
      %v1398 = vrot.slane %v198, %v1397
      %v1399 = vlaneseq
      %v1400 = vshrl.u32 %v1399, 7
      %v1401 = vsub.s32 3, %v1400
      %v1402 = vrot.slane %v198, %v1401
      %v1403 = vlaneseq
      %v1404 = vshrl.u32 %v1403, 7
      %v1405 = vsub.s32 4, %v1404
      %v1406 = vrot.slane %v198, %v1405
      %v1407 = vlaneseq
      %v1408 = vshrl.u32 %v1407, 7
      %v1409 = vsub.s32 5, %v1408
      %v1410 = vrot.slane %v198, %v1409
      %v1411 = vlaneseq
      %v1412 = vshrl.u32 %v1411, 7
      %v1413 = vsub.s32 6, %v1412
      %v1414 = vrot.slane %v198, %v1413
      %v1415 = vlaneseq
      %v1416 = vshrl.u32 %v1415, 7
      %v1417 = vsub.s32 7, %v1416
      %v1418 = vrot.slane %v198, %v1417
      %v1419 = vlaneseq
      %v1420 = vshrl.u32 %v1419, 7
      %v1421 = vsub.s32 0, %v1420
      %v1422 = vrot.slane %v200, %v1421
      %v1423 = vlaneseq
      %v1424 = vshrl.u32 %v1423, 7
      %v1425 = vsub.s32 1, %v1424
      %v1426 = vrot.slane %v200, %v1425
      %v1427 = vlaneseq
      %v1428 = vshrl.u32 %v1427, 7
      %v1429 = vsub.s32 2, %v1428
      %v1430 = vrot.slane %v200, %v1429
      %v1431 = vlaneseq
      %v1432 = vshrl.u32 %v1431, 7
      %v1433 = vsub.s32 3, %v1432
      %v1434 = vrot.slane %v200, %v1433
      %v1447 = vmin.f32 %v1323, %v1390
      %v1448 = vmin.f32 %v1323, %v1394
      %v1449 = vmin.f32 %v1323, %v1398
      %v1450 = vmin.f32 %v1323, %v1402
      %v1451 = vmin.f32 %v1323, %v1406
      %v1452 = vmin.f32 %v1323, %v1410
      %v1453 = vmin.f32 %v1323, %v1414
      %v1454 = vmin.f32 %v1323, %v1418
      %v1455 = vmin.f32 %v1323, %v1422
      %v1456 = vmin.f32 %v1323, %v1426
      %v1457 = vmin.f32 %v1323, %v1430
      %v1458 = vmin.f32 %v1323, %v1434
      %v1459 = vmin.f32 %v1327, %v1390
      %v1460 = vmin.f32 %v1327, %v1394
      %v1461 = vmin.f32 %v1327, %v1398
      %v1462 = vmin.f32 %v1327, %v1402
      %v1463 = vmin.f32 %v1327, %v1406
      %v1464 = vmin.f32 %v1327, %v1410
      %v1465 = vmin.f32 %v1327, %v1414
      %v1466 = vmin.f32 %v1327, %v1418
      %v1467 = vmin.f32 %v1327, %v1422
      %v1468 = vmin.f32 %v1327, %v1426
      %v1469 = vmin.f32 %v1327, %v1430
      %v1470 = vmin.f32 %v1327, %v1434
      %v1471 = vmin.f32 %v1331, %v1390
      %v1472 = vmin.f32 %v1331, %v1394
      %v1473 = vmin.f32 %v1331, %v1398
      %v1474 = vmin.f32 %v1331, %v1402
      %v1475 = vmin.f32 %v1331, %v1406
      %v1476 = vmin.f32 %v1331, %v1410
      %v1477 = vmin.f32 %v1331, %v1414
      %v1478 = vmin.f32 %v1331, %v1418
      %v1479 = vmin.f32 %v1331, %v1422
      %v1480 = vmin.f32 %v1331, %v1426
      %v1481 = vmin.f32 %v1331, %v1430
      %v1482 = vmin.f32 %v1331, %v1434
      %v1483 = vmin.f32 %v1335, %v1390
      %v1484 = vmin.f32 %v1335, %v1394
      %v1485 = vmin.f32 %v1335, %v1398
      %v1486 = vmin.f32 %v1335, %v1402
      %v1487 = vmin.f32 %v1335, %v1406
      %v1488 = vmin.f32 %v1335, %v1410
      %v1489 = vmin.f32 %v1335, %v1414
      %v1490 = vmin.f32 %v1335, %v1418
      %v1491 = vmin.f32 %v1335, %v1422
      %v1492 = vmin.f32 %v1335, %v1426
      %v1493 = vmin.f32 %v1335, %v1430
      %v1494 = vmin.f32 %v1335, %v1434
      %v1495 = vmin.f32 %v1339, %v1390
      %v1496 = vmin.f32 %v1339, %v1394
      %v1497 = vmin.f32 %v1339, %v1398
      %v1498 = vmin.f32 %v1339, %v1402
      %v1499 = vmin.f32 %v1339, %v1406
      %v1500 = vmin.f32 %v1339, %v1410
      %v1501 = vmin.f32 %v1339, %v1414
      %v1502 = vmin.f32 %v1339, %v1418
      %v1503 = vmin.f32 %v1339, %v1422
      %v1504 = vmin.f32 %v1339, %v1426
      %v1505 = vmin.f32 %v1339, %v1430
      %v1506 = vmin.f32 %v1339, %v1434
      %v1507 = vmin.f32 %v1343, %v1390
      %v1508 = vmin.f32 %v1343, %v1394
      %v1509 = vmin.f32 %v1343, %v1398
      %v1510 = vmin.f32 %v1343, %v1402
      %v1511 = vmin.f32 %v1343, %v1406
      %v1512 = vmin.f32 %v1343, %v1410
      %v1513 = vmin.f32 %v1343, %v1414
      %v1514 = vmin.f32 %v1343, %v1418
      %v1515 = vmin.f32 %v1343, %v1422
      %v1516 = vmin.f32 %v1343, %v1426
      %v1517 = vmin.f32 %v1343, %v1430
      %v1518 = vmin.f32 %v1343, %v1434
      %v1519 = vmin.f32 %v1347, %v1390
      %v1520 = vmin.f32 %v1347, %v1394
      %v1521 = vmin.f32 %v1347, %v1398
      %v1522 = vmin.f32 %v1347, %v1402
      %v1523 = vmin.f32 %v1347, %v1406
      %v1524 = vmin.f32 %v1347, %v1410
      %v1525 = vmin.f32 %v1347, %v1414
      %v1526 = vmin.f32 %v1347, %v1418
      %v1527 = vmin.f32 %v1347, %v1422
      %v1528 = vmin.f32 %v1347, %v1426
      %v1529 = vmin.f32 %v1347, %v1430
      %v1530 = vmin.f32 %v1347, %v1434
      %v1531 = vmin.f32 %v1351, %v1390
      %v1532 = vmin.f32 %v1351, %v1394
      %v1533 = vmin.f32 %v1351, %v1398
      %v1534 = vmin.f32 %v1351, %v1402
      %v1535 = vmin.f32 %v1351, %v1406
      %v1536 = vmin.f32 %v1351, %v1410
      %v1537 = vmin.f32 %v1351, %v1414
      %v1538 = vmin.f32 %v1351, %v1418
      %v1539 = vmin.f32 %v1351, %v1422
      %v1540 = vmin.f32 %v1351, %v1426
      %v1541 = vmin.f32 %v1351, %v1430
      %v1542 = vmin.f32 %v1351, %v1434
      %v1543 = vmin.f32 %v1355, %v1390
      %v1544 = vmin.f32 %v1355, %v1394
      %v1545 = vmin.f32 %v1355, %v1398
      %v1546 = vmin.f32 %v1355, %v1402
      %v1547 = vmin.f32 %v1355, %v1406
      %v1548 = vmin.f32 %v1355, %v1410
      %v1549 = vmin.f32 %v1355, %v1414
      %v1550 = vmin.f32 %v1355, %v1418
      %v1551 = vmin.f32 %v1355, %v1422
      %v1552 = vmin.f32 %v1355, %v1426
      %v1553 = vmin.f32 %v1355, %v1430
      %v1554 = vmin.f32 %v1355, %v1434
      %v1555 = vmin.f32 %v1359, %v1390
      %v1556 = vmin.f32 %v1359, %v1394
      %v1557 = vmin.f32 %v1359, %v1398
      %v1558 = vmin.f32 %v1359, %v1402
      %v1559 = vmin.f32 %v1359, %v1406
      %v1560 = vmin.f32 %v1359, %v1410
      %v1561 = vmin.f32 %v1359, %v1414
      %v1562 = vmin.f32 %v1359, %v1418
      %v1563 = vmin.f32 %v1359, %v1422
      %v1564 = vmin.f32 %v1359, %v1426
      %v1565 = vmin.f32 %v1359, %v1430
      %v1566 = vmin.f32 %v1359, %v1434
      %v1567 = vmin.f32 %v1363, %v1390
      %v1568 = vmin.f32 %v1363, %v1394
      %v1569 = vmin.f32 %v1363, %v1398
      %v1570 = vmin.f32 %v1363, %v1402
      %v1571 = vmin.f32 %v1363, %v1406
      %v1572 = vmin.f32 %v1363, %v1410
      %v1573 = vmin.f32 %v1363, %v1414
      %v1574 = vmin.f32 %v1363, %v1418
      %v1575 = vmin.f32 %v1363, %v1422
      %v1576 = vmin.f32 %v1363, %v1426
      %v1577 = vmin.f32 %v1363, %v1430
      %v1578 = vmin.f32 %v1363, %v1434
      %v1579 = vmin.f32 %v1367, %v1390
      %v1580 = vmin.f32 %v1367, %v1394
      %v1581 = vmin.f32 %v1367, %v1398
      %v1582 = vmin.f32 %v1367, %v1402
      %v1583 = vmin.f32 %v1367, %v1406
      %v1584 = vmin.f32 %v1367, %v1410
      %v1585 = vmin.f32 %v1367, %v1414
      %v1586 = vmin.f32 %v1367, %v1418
      %v1587 = vmin.f32 %v1367, %v1422
      %v1588 = vmin.f32 %v1367, %v1426
      %v1589 = vmin.f32 %v1367, %v1430
      %v1590 = vmin.f32 %v1367, %v1434
      %v1591 = vmin.f32 %v1371, %v1390
      %v1592 = vmin.f32 %v1371, %v1394
      %v1593 = vmin.f32 %v1371, %v1398
      %v1594 = vmin.f32 %v1371, %v1402
      %v1595 = vmin.f32 %v1371, %v1406
      %v1596 = vmin.f32 %v1371, %v1410
      %v1597 = vmin.f32 %v1371, %v1414
      %v1598 = vmin.f32 %v1371, %v1418
      %v1599 = vmin.f32 %v1371, %v1422
      %v1600 = vmin.f32 %v1371, %v1426
      %v1601 = vmin.f32 %v1371, %v1430
      %v1602 = vmin.f32 %v1371, %v1434
      %v1603 = vmin.f32 %v1375, %v1390
      %v1604 = vmin.f32 %v1375, %v1394
      %v1605 = vmin.f32 %v1375, %v1398
      %v1606 = vmin.f32 %v1375, %v1402
      %v1607 = vmin.f32 %v1375, %v1406
      %v1608 = vmin.f32 %v1375, %v1410
      %v1609 = vmin.f32 %v1375, %v1414
      %v1610 = vmin.f32 %v1375, %v1418
      %v1611 = vmin.f32 %v1375, %v1422
      %v1612 = vmin.f32 %v1375, %v1426
      %v1613 = vmin.f32 %v1375, %v1430
      %v1614 = vmin.f32 %v1375, %v1434
      %v1615 = vmin.f32 %v1379, %v1390
      %v1616 = vmin.f32 %v1379, %v1394
      %v1617 = vmin.f32 %v1379, %v1398
      %v1618 = vmin.f32 %v1379, %v1402
      %v1619 = vmin.f32 %v1379, %v1406
      %v1620 = vmin.f32 %v1379, %v1410
      %v1621 = vmin.f32 %v1379, %v1414
      %v1622 = vmin.f32 %v1379, %v1418
      %v1623 = vmin.f32 %v1379, %v1422
      %v1624 = vmin.f32 %v1379, %v1426
      %v1625 = vmin.f32 %v1379, %v1430
      %v1626 = vmin.f32 %v1379, %v1434
      %v1627 = vmin.f32 %v1383, %v1390
      %v1628 = vmin.f32 %v1383, %v1394
      %v1629 = vmin.f32 %v1383, %v1398
      %v1630 = vmin.f32 %v1383, %v1402
      %v1631 = vmin.f32 %v1383, %v1406
      %v1632 = vmin.f32 %v1383, %v1410
      %v1633 = vmin.f32 %v1383, %v1414
      %v1634 = vmin.f32 %v1383, %v1418
      %v1635 = vmin.f32 %v1383, %v1422
      %v1636 = vmin.f32 %v1383, %v1426
      %v1637 = vmin.f32 %v1383, %v1430
      %v1638 = vmin.f32 %v1383, %v1434
      %v1639 = vsub.f32 %v1129, %v493
      %v1640 = vsub.f32 %v1130, %v494
      %v1641 = vsub.f32 %v1131, %v495
      %v1642 = vsub.f32 %v1132, %v496
      %v1643 = vsub.f32 %v1133, %v497
      %v1644 = vsub.f32 %v1134, %v498
      %v1645 = vsub.f32 %v1135, %v499
      %v1646 = vsub.f32 %v1136, %v500
      %v1647 = vsub.f32 %v1137, %v501
      %v1648 = vsub.f32 %v1138, %v502
      %v1649 = vsub.f32 %v1139, %v503
      %v1650 = vsub.f32 %v1140, %v504
      %v1651 = vsub.f32 %v1141, %v505
      %v1652 = vsub.f32 %v1142, %v506
      %v1653 = vsub.f32 %v1143, %v507
      %v1654 = vsub.f32 %v1144, %v508
      %v1655 = vsub.f32 %v1145, %v509
      %v1656 = vsub.f32 %v1146, %v510
      %v1657 = vsub.f32 %v1147, %v511
      %v1658 = vsub.f32 %v1148, %v512
      %v1659 = vsub.f32 %v1149, %v513
      %v1660 = vsub.f32 %v1150, %v514
      %v1661 = vsub.f32 %v1151, %v515
      %v1662 = vsub.f32 %v1152, %v516
      %v1663 = vsub.f32 %v1153, %v517
      %v1664 = vsub.f32 %v1154, %v518
      %v1665 = vsub.f32 %v1155, %v519
      %v1666 = vsub.f32 %v1156, %v520
      %v1667 = vsub.f32 %v1157, %v521
      %v1668 = vsub.f32 %v1158, %v522
      %v1669 = vsub.f32 %v1159, %v523
      %v1670 = vsub.f32 %v1160, %v524
      %v1671 = vsub.f32 %v1161, %v525
      %v1672 = vsub.f32 %v1162, %v526
      %v1673 = vsub.f32 %v1163, %v527
      %v1674 = vsub.f32 %v1164, %v528
      %v1675 = vsub.f32 %v1165, %v529
      %v1676 = vsub.f32 %v1166, %v530
      %v1677 = vsub.f32 %v1167, %v531
      %v1678 = vsub.f32 %v1168, %v532
      %v1679 = vsub.f32 %v1169, %v533
      %v1680 = vsub.f32 %v1170, %v534
      %v1681 = vsub.f32 %v1171, %v535
      %v1682 = vsub.f32 %v1172, %v536
      %v1683 = vsub.f32 %v1173, %v537
      %v1684 = vsub.f32 %v1174, %v538
      %v1685 = vsub.f32 %v1175, %v539
      %v1686 = vsub.f32 %v1176, %v540
      %v1687 = vsub.f32 %v1177, %v541
      %v1688 = vsub.f32 %v1178, %v542
      %v1689 = vsub.f32 %v1179, %v543
      %v1690 = vsub.f32 %v1180, %v544
      %v1691 = vsub.f32 %v1181, %v545
      %v1692 = vsub.f32 %v1182, %v546
      %v1693 = vsub.f32 %v1183, %v547
      %v1694 = vsub.f32 %v1184, %v548
      %v1695 = vsub.f32 %v1185, %v549
      %v1696 = vsub.f32 %v1186, %v550
      %v1697 = vsub.f32 %v1187, %v551
      %v1698 = vsub.f32 %v1188, %v552
      %v1699 = vsub.f32 %v1189, %v553
      %v1700 = vsub.f32 %v1190, %v554
      %v1701 = vsub.f32 %v1191, %v555
      %v1702 = vsub.f32 %v1192, %v556
      %v1703 = vsub.f32 %v1193, %v557
      %v1704 = vsub.f32 %v1194, %v558
      %v1705 = vsub.f32 %v1195, %v559
      %v1706 = vsub.f32 %v1196, %v560
      %v1707 = vsub.f32 %v1197, %v561
      %v1708 = vsub.f32 %v1198, %v562
      %v1709 = vsub.f32 %v1199, %v563
      %v1710 = vsub.f32 %v1200, %v564
      %v1711 = vsub.f32 %v1201, %v565
      %v1712 = vsub.f32 %v1202, %v566
      %v1713 = vsub.f32 %v1203, %v567
      %v1714 = vsub.f32 %v1204, %v568
      %v1715 = vsub.f32 %v1205, %v569
      %v1716 = vsub.f32 %v1206, %v570
      %v1717 = vsub.f32 %v1207, %v571
      %v1718 = vsub.f32 %v1208, %v572
      %v1719 = vsub.f32 %v1209, %v573
      %v1720 = vsub.f32 %v1210, %v574
      %v1721 = vsub.f32 %v1211, %v575
      %v1722 = vsub.f32 %v1212, %v576
      %v1723 = vsub.f32 %v1213, %v577
      %v1724 = vsub.f32 %v1214, %v578
      %v1725 = vsub.f32 %v1215, %v579
      %v1726 = vsub.f32 %v1216, %v580
      %v1727 = vsub.f32 %v1217, %v581
      %v1728 = vsub.f32 %v1218, %v582
      %v1729 = vsub.f32 %v1219, %v583
      %v1730 = vsub.f32 %v1220, %v584
      %v1731 = vsub.f32 %v1221, %v585
      %v1732 = vsub.f32 %v1222, %v586
      %v1733 = vsub.f32 %v1223, %v587
      %v1734 = vsub.f32 %v1224, %v588
      %v1735 = vsub.f32 %v1225, %v589
      %v1736 = vsub.f32 %v1226, %v590
      %v1737 = vsub.f32 %v1227, %v591
      %v1738 = vsub.f32 %v1228, %v592
      %v1739 = vsub.f32 %v1229, %v593
      %v1740 = vsub.f32 %v1230, %v594
      %v1741 = vsub.f32 %v1231, %v595
      %v1742 = vsub.f32 %v1232, %v596
      %v1743 = vsub.f32 %v1233, %v597
      %v1744 = vsub.f32 %v1234, %v598
      %v1745 = vsub.f32 %v1235, %v599
      %v1746 = vsub.f32 %v1236, %v600
      %v1747 = vsub.f32 %v1237, %v601
      %v1748 = vsub.f32 %v1238, %v602
      %v1749 = vsub.f32 %v1239, %v603
      %v1750 = vsub.f32 %v1240, %v604
      %v1751 = vsub.f32 %v1241, %v605
      %v1752 = vsub.f32 %v1242, %v606
      %v1753 = vsub.f32 %v1243, %v607
      %v1754 = vsub.f32 %v1244, %v608
      %v1755 = vsub.f32 %v1245, %v609
      %v1756 = vsub.f32 %v1246, %v610
      %v1757 = vsub.f32 %v1247, %v611
      %v1758 = vsub.f32 %v1248, %v612
      %v1759 = vsub.f32 %v1249, %v613
      %v1760 = vsub.f32 %v1250, %v614
      %v1761 = vsub.f32 %v1251, %v615
      %v1762 = vsub.f32 %v1252, %v616
      %v1763 = vsub.f32 %v1253, %v617
      %v1764 = vsub.f32 %v1254, %v618
      %v1765 = vsub.f32 %v1255, %v619
      %v1766 = vsub.f32 %v1256, %v620
      %v1767 = vsub.f32 %v1257, %v621
      %v1768 = vsub.f32 %v1258, %v622
      %v1769 = vsub.f32 %v1259, %v623
      %v1770 = vsub.f32 %v1260, %v624
      %v1771 = vsub.f32 %v1261, %v625
      %v1772 = vsub.f32 %v1262, %v626
      %v1773 = vsub.f32 %v1263, %v627
      %v1774 = vsub.f32 %v1264, %v628
      %v1775 = vsub.f32 %v1265, %v629
      %v1776 = vsub.f32 %v1266, %v630
      %v1777 = vsub.f32 %v1267, %v631
      %v1778 = vsub.f32 %v1268, %v632
      %v1779 = vsub.f32 %v1269, %v633
      %v1780 = vsub.f32 %v1270, %v634
      %v1781 = vsub.f32 %v1271, %v635
      %v1782 = vsub.f32 %v1272, %v636
      %v1783 = vsub.f32 %v1273, %v637
      %v1784 = vsub.f32 %v1274, %v638
      %v1785 = vsub.f32 %v1275, %v639
      %v1786 = vsub.f32 %v1276, %v640
      %v1787 = vsub.f32 %v1277, %v641
      %v1788 = vsub.f32 %v1278, %v642
      %v1789 = vsub.f32 %v1279, %v643
      %v1790 = vsub.f32 %v1280, %v644
      %v1791 = vsub.f32 %v1281, %v645
      %v1792 = vsub.f32 %v1282, %v646
      %v1793 = vsub.f32 %v1283, %v647
      %v1794 = vsub.f32 %v1284, %v648
      %v1795 = vsub.f32 %v1285, %v649
      %v1796 = vsub.f32 %v1286, %v650
      %v1797 = vsub.f32 %v1287, %v651
      %v1798 = vsub.f32 %v1288, %v652
      %v1799 = vsub.f32 %v1289, %v653
      %v1800 = vsub.f32 %v1290, %v654
      %v1801 = vsub.f32 %v1291, %v655
      %v1802 = vsub.f32 %v1292, %v656
      %v1803 = vsub.f32 %v1293, %v657
      %v1804 = vsub.f32 %v1294, %v658
      %v1805 = vsub.f32 %v1295, %v659
      %v1806 = vsub.f32 %v1296, %v660
      %v1807 = vsub.f32 %v1297, %v661
      %v1808 = vsub.f32 %v1298, %v662
      %v1809 = vsub.f32 %v1299, %v663
      %v1810 = vsub.f32 %v1300, %v664
      %v1811 = vsub.f32 %v1301, %v665
      %v1812 = vsub.f32 %v1302, %v666
      %v1813 = vsub.f32 %v1303, %v667
      %v1814 = vsub.f32 %v1304, %v668
      %v1815 = vsub.f32 %v1305, %v669
      %v1816 = vsub.f32 %v1306, %v670
      %v1817 = vsub.f32 %v1307, %v671
      %v1818 = vsub.f32 %v1308, %v672
      %v1819 = vsub.f32 %v1309, %v673
      %v1820 = vsub.f32 %v1310, %v674
      %v1821 = vsub.f32 %v1311, %v675
      %v1822 = vsub.f32 %v1312, %v676
      %v1823 = vsub.f32 %v1313, %v677
      %v1824 = vsub.f32 %v1314, %v678
      %v1825 = vsub.f32 %v1315, %v679
      %v1826 = vsub.f32 %v1316, %v680
      %v1827 = vsub.f32 %v1317, %v681
      %v1828 = vsub.f32 %v1318, %v682
      %v1829 = vsub.f32 %v1319, %v683
      %v1830 = vsub.f32 %v1320, %v684
      %v1831 = vmax.f32 %v1639, 0.0
      %v1832 = vmax.f32 %v1640, 0.0
      %v1833 = vmax.f32 %v1641, 0.0
      %v1834 = vmax.f32 %v1642, 0.0
      %v1835 = vmax.f32 %v1643, 0.0
      %v1836 = vmax.f32 %v1644, 0.0
      %v1837 = vmax.f32 %v1645, 0.0
      %v1838 = vmax.f32 %v1646, 0.0
      %v1839 = vmax.f32 %v1647, 0.0
      %v1840 = vmax.f32 %v1648, 0.0
      %v1841 = vmax.f32 %v1649, 0.0
      %v1842 = vmax.f32 %v1650, 0.0
      %v1843 = vmax.f32 %v1651, 0.0
      %v1844 = vmax.f32 %v1652, 0.0
      %v1845 = vmax.f32 %v1653, 0.0
      %v1846 = vmax.f32 %v1654, 0.0
      %v1847 = vmax.f32 %v1655, 0.0
      %v1848 = vmax.f32 %v1656, 0.0
      %v1849 = vmax.f32 %v1657, 0.0
      %v1850 = vmax.f32 %v1658, 0.0
      %v1851 = vmax.f32 %v1659, 0.0
      %v1852 = vmax.f32 %v1660, 0.0
      %v1853 = vmax.f32 %v1661, 0.0
      %v1854 = vmax.f32 %v1662, 0.0
      %v1855 = vmax.f32 %v1663, 0.0
      %v1856 = vmax.f32 %v1664, 0.0
      %v1857 = vmax.f32 %v1665, 0.0
      %v1858 = vmax.f32 %v1666, 0.0
      %v1859 = vmax.f32 %v1667, 0.0
      %v1860 = vmax.f32 %v1668, 0.0
      %v1861 = vmax.f32 %v1669, 0.0
      %v1862 = vmax.f32 %v1670, 0.0
      %v1863 = vmax.f32 %v1671, 0.0
      %v1864 = vmax.f32 %v1672, 0.0
      %v1865 = vmax.f32 %v1673, 0.0
      %v1866 = vmax.f32 %v1674, 0.0
      %v1867 = vmax.f32 %v1675, 0.0
      %v1868 = vmax.f32 %v1676, 0.0
      %v1869 = vmax.f32 %v1677, 0.0
      %v1870 = vmax.f32 %v1678, 0.0
      %v1871 = vmax.f32 %v1679, 0.0
      %v1872 = vmax.f32 %v1680, 0.0
      %v1873 = vmax.f32 %v1681, 0.0
      %v1874 = vmax.f32 %v1682, 0.0
      %v1875 = vmax.f32 %v1683, 0.0
      %v1876 = vmax.f32 %v1684, 0.0
      %v1877 = vmax.f32 %v1685, 0.0
      %v1878 = vmax.f32 %v1686, 0.0
      %v1879 = vmax.f32 %v1687, 0.0
      %v1880 = vmax.f32 %v1688, 0.0
      %v1881 = vmax.f32 %v1689, 0.0
      %v1882 = vmax.f32 %v1690, 0.0
      %v1883 = vmax.f32 %v1691, 0.0
      %v1884 = vmax.f32 %v1692, 0.0
      %v1885 = vmax.f32 %v1693, 0.0
      %v1886 = vmax.f32 %v1694, 0.0
      %v1887 = vmax.f32 %v1695, 0.0
      %v1888 = vmax.f32 %v1696, 0.0
      %v1889 = vmax.f32 %v1697, 0.0
      %v1890 = vmax.f32 %v1698, 0.0
      %v1891 = vmax.f32 %v1699, 0.0
      %v1892 = vmax.f32 %v1700, 0.0
      %v1893 = vmax.f32 %v1701, 0.0
      %v1894 = vmax.f32 %v1702, 0.0
      %v1895 = vmax.f32 %v1703, 0.0
      %v1896 = vmax.f32 %v1704, 0.0
      %v1897 = vmax.f32 %v1705, 0.0
      %v1898 = vmax.f32 %v1706, 0.0
      %v1899 = vmax.f32 %v1707, 0.0
      %v1900 = vmax.f32 %v1708, 0.0
      %v1901 = vmax.f32 %v1709, 0.0
      %v1902 = vmax.f32 %v1710, 0.0
      %v1903 = vmax.f32 %v1711, 0.0
      %v1904 = vmax.f32 %v1712, 0.0
      %v1905 = vmax.f32 %v1713, 0.0
      %v1906 = vmax.f32 %v1714, 0.0
      %v1907 = vmax.f32 %v1715, 0.0
      %v1908 = vmax.f32 %v1716, 0.0
      %v1909 = vmax.f32 %v1717, 0.0
      %v1910 = vmax.f32 %v1718, 0.0
      %v1911 = vmax.f32 %v1719, 0.0
      %v1912 = vmax.f32 %v1720, 0.0
      %v1913 = vmax.f32 %v1721, 0.0
      %v1914 = vmax.f32 %v1722, 0.0
      %v1915 = vmax.f32 %v1723, 0.0
      %v1916 = vmax.f32 %v1724, 0.0
      %v1917 = vmax.f32 %v1725, 0.0
      %v1918 = vmax.f32 %v1726, 0.0
      %v1919 = vmax.f32 %v1727, 0.0
      %v1920 = vmax.f32 %v1728, 0.0
      %v1921 = vmax.f32 %v1729, 0.0
      %v1922 = vmax.f32 %v1730, 0.0
      %v1923 = vmax.f32 %v1731, 0.0
      %v1924 = vmax.f32 %v1732, 0.0
      %v1925 = vmax.f32 %v1733, 0.0
      %v1926 = vmax.f32 %v1734, 0.0
      %v1927 = vmax.f32 %v1735, 0.0
      %v1928 = vmax.f32 %v1736, 0.0
      %v1929 = vmax.f32 %v1737, 0.0
      %v1930 = vmax.f32 %v1738, 0.0
      %v1931 = vmax.f32 %v1739, 0.0
      %v1932 = vmax.f32 %v1740, 0.0
      %v1933 = vmax.f32 %v1741, 0.0
      %v1934 = vmax.f32 %v1742, 0.0
      %v1935 = vmax.f32 %v1743, 0.0
      %v1936 = vmax.f32 %v1744, 0.0
      %v1937 = vmax.f32 %v1745, 0.0
      %v1938 = vmax.f32 %v1746, 0.0
      %v1939 = vmax.f32 %v1747, 0.0
      %v1940 = vmax.f32 %v1748, 0.0
      %v1941 = vmax.f32 %v1749, 0.0
      %v1942 = vmax.f32 %v1750, 0.0
      %v1943 = vmax.f32 %v1751, 0.0
      %v1944 = vmax.f32 %v1752, 0.0
      %v1945 = vmax.f32 %v1753, 0.0
      %v1946 = vmax.f32 %v1754, 0.0
      %v1947 = vmax.f32 %v1755, 0.0
      %v1948 = vmax.f32 %v1756, 0.0
      %v1949 = vmax.f32 %v1757, 0.0
      %v1950 = vmax.f32 %v1758, 0.0
      %v1951 = vmax.f32 %v1759, 0.0
      %v1952 = vmax.f32 %v1760, 0.0
      %v1953 = vmax.f32 %v1761, 0.0
      %v1954 = vmax.f32 %v1762, 0.0
      %v1955 = vmax.f32 %v1763, 0.0
      %v1956 = vmax.f32 %v1764, 0.0
      %v1957 = vmax.f32 %v1765, 0.0
      %v1958 = vmax.f32 %v1766, 0.0
      %v1959 = vmax.f32 %v1767, 0.0
      %v1960 = vmax.f32 %v1768, 0.0
      %v1961 = vmax.f32 %v1769, 0.0
      %v1962 = vmax.f32 %v1770, 0.0
      %v1963 = vmax.f32 %v1771, 0.0
      %v1964 = vmax.f32 %v1772, 0.0
      %v1965 = vmax.f32 %v1773, 0.0
      %v1966 = vmax.f32 %v1774, 0.0
      %v1967 = vmax.f32 %v1775, 0.0
      %v1968 = vmax.f32 %v1776, 0.0
      %v1969 = vmax.f32 %v1777, 0.0
      %v1970 = vmax.f32 %v1778, 0.0
      %v1971 = vmax.f32 %v1779, 0.0
      %v1972 = vmax.f32 %v1780, 0.0
      %v1973 = vmax.f32 %v1781, 0.0
      %v1974 = vmax.f32 %v1782, 0.0
      %v1975 = vmax.f32 %v1783, 0.0
      %v1976 = vmax.f32 %v1784, 0.0
      %v1977 = vmax.f32 %v1785, 0.0
      %v1978 = vmax.f32 %v1786, 0.0
      %v1979 = vmax.f32 %v1787, 0.0
      %v1980 = vmax.f32 %v1788, 0.0
      %v1981 = vmax.f32 %v1789, 0.0
      %v1982 = vmax.f32 %v1790, 0.0
      %v1983 = vmax.f32 %v1791, 0.0
      %v1984 = vmax.f32 %v1792, 0.0
      %v1985 = vmax.f32 %v1793, 0.0
      %v1986 = vmax.f32 %v1794, 0.0
      %v1987 = vmax.f32 %v1795, 0.0
      %v1988 = vmax.f32 %v1796, 0.0
      %v1989 = vmax.f32 %v1797, 0.0
      %v1990 = vmax.f32 %v1798, 0.0
      %v1991 = vmax.f32 %v1799, 0.0
      %v1992 = vmax.f32 %v1800, 0.0
      %v1993 = vmax.f32 %v1801, 0.0
      %v1994 = vmax.f32 %v1802, 0.0
      %v1995 = vmax.f32 %v1803, 0.0
      %v1996 = vmax.f32 %v1804, 0.0
      %v1997 = vmax.f32 %v1805, 0.0
      %v1998 = vmax.f32 %v1806, 0.0
      %v1999 = vmax.f32 %v1807, 0.0
      %v2000 = vmax.f32 %v1808, 0.0
      %v2001 = vmax.f32 %v1809, 0.0
      %v2002 = vmax.f32 %v1810, 0.0
      %v2003 = vmax.f32 %v1811, 0.0
      %v2004 = vmax.f32 %v1812, 0.0
      %v2005 = vmax.f32 %v1813, 0.0
      %v2006 = vmax.f32 %v1814, 0.0
      %v2007 = vmax.f32 %v1815, 0.0
      %v2008 = vmax.f32 %v1816, 0.0
      %v2009 = vmax.f32 %v1817, 0.0
      %v2010 = vmax.f32 %v1818, 0.0
      %v2011 = vmax.f32 %v1819, 0.0
      %v2012 = vmax.f32 %v1820, 0.0
      %v2013 = vmax.f32 %v1821, 0.0
      %v2014 = vmax.f32 %v1822, 0.0
      %v2015 = vmax.f32 %v1823, 0.0
      %v2016 = vmax.f32 %v1824, 0.0
      %v2017 = vmax.f32 %v1825, 0.0
      %v2018 = vmax.f32 %v1826, 0.0
      %v2019 = vmax.f32 %v1827, 0.0
      %v2020 = vmax.f32 %v1828, 0.0
      %v2021 = vmax.f32 %v1829, 0.0
      %v2022 = vmax.f32 %v1830, 0.0
      %v2023 = vsub.f32 %v1447, %v811
      %v2024 = vsub.f32 %v1448, %v812
      %v2025 = vsub.f32 %v1449, %v813
      %v2026 = vsub.f32 %v1450, %v814
      %v2027 = vsub.f32 %v1451, %v815
      %v2028 = vsub.f32 %v1452, %v816
      %v2029 = vsub.f32 %v1453, %v817
      %v2030 = vsub.f32 %v1454, %v818
      %v2031 = vsub.f32 %v1455, %v819
      %v2032 = vsub.f32 %v1456, %v820
      %v2033 = vsub.f32 %v1457, %v821
      %v2034 = vsub.f32 %v1458, %v822
      %v2035 = vsub.f32 %v1459, %v823
      %v2036 = vsub.f32 %v1460, %v824
      %v2037 = vsub.f32 %v1461, %v825
      %v2038 = vsub.f32 %v1462, %v826
      %v2039 = vsub.f32 %v1463, %v827
      %v2040 = vsub.f32 %v1464, %v828
      %v2041 = vsub.f32 %v1465, %v829
      %v2042 = vsub.f32 %v1466, %v830
      %v2043 = vsub.f32 %v1467, %v831
      %v2044 = vsub.f32 %v1468, %v832
      %v2045 = vsub.f32 %v1469, %v833
      %v2046 = vsub.f32 %v1470, %v834
      %v2047 = vsub.f32 %v1471, %v835
      %v2048 = vsub.f32 %v1472, %v836
      %v2049 = vsub.f32 %v1473, %v837
      %v2050 = vsub.f32 %v1474, %v838
      %v2051 = vsub.f32 %v1475, %v839
      %v2052 = vsub.f32 %v1476, %v840
      %v2053 = vsub.f32 %v1477, %v841
      %v2054 = vsub.f32 %v1478, %v842
      %v2055 = vsub.f32 %v1479, %v843
      %v2056 = vsub.f32 %v1480, %v844
      %v2057 = vsub.f32 %v1481, %v845
      %v2058 = vsub.f32 %v1482, %v846
      %v2059 = vsub.f32 %v1483, %v847
      %v2060 = vsub.f32 %v1484, %v848
      %v2061 = vsub.f32 %v1485, %v849
      %v2062 = vsub.f32 %v1486, %v850
      %v2063 = vsub.f32 %v1487, %v851
      %v2064 = vsub.f32 %v1488, %v852
      %v2065 = vsub.f32 %v1489, %v853
      %v2066 = vsub.f32 %v1490, %v854
      %v2067 = vsub.f32 %v1491, %v855
      %v2068 = vsub.f32 %v1492, %v856
      %v2069 = vsub.f32 %v1493, %v857
      %v2070 = vsub.f32 %v1494, %v858
      %v2071 = vsub.f32 %v1495, %v859
      %v2072 = vsub.f32 %v1496, %v860
      %v2073 = vsub.f32 %v1497, %v861
      %v2074 = vsub.f32 %v1498, %v862
      %v2075 = vsub.f32 %v1499, %v863
      %v2076 = vsub.f32 %v1500, %v864
      %v2077 = vsub.f32 %v1501, %v865
      %v2078 = vsub.f32 %v1502, %v866
      %v2079 = vsub.f32 %v1503, %v867
      %v2080 = vsub.f32 %v1504, %v868
      %v2081 = vsub.f32 %v1505, %v869
      %v2082 = vsub.f32 %v1506, %v870
      %v2083 = vsub.f32 %v1507, %v871
      %v2084 = vsub.f32 %v1508, %v872
      %v2085 = vsub.f32 %v1509, %v873
      %v2086 = vsub.f32 %v1510, %v874
      %v2087 = vsub.f32 %v1511, %v875
      %v2088 = vsub.f32 %v1512, %v876
      %v2089 = vsub.f32 %v1513, %v877
      %v2090 = vsub.f32 %v1514, %v878
      %v2091 = vsub.f32 %v1515, %v879
      %v2092 = vsub.f32 %v1516, %v880
      %v2093 = vsub.f32 %v1517, %v881
      %v2094 = vsub.f32 %v1518, %v882
      %v2095 = vsub.f32 %v1519, %v883
      %v2096 = vsub.f32 %v1520, %v884
      %v2097 = vsub.f32 %v1521, %v885
      %v2098 = vsub.f32 %v1522, %v886
      %v2099 = vsub.f32 %v1523, %v887
      %v2100 = vsub.f32 %v1524, %v888
      %v2101 = vsub.f32 %v1525, %v889
      %v2102 = vsub.f32 %v1526, %v890
      %v2103 = vsub.f32 %v1527, %v891
      %v2104 = vsub.f32 %v1528, %v892
      %v2105 = vsub.f32 %v1529, %v893
      %v2106 = vsub.f32 %v1530, %v894
      %v2107 = vsub.f32 %v1531, %v895
      %v2108 = vsub.f32 %v1532, %v896
      %v2109 = vsub.f32 %v1533, %v897
      %v2110 = vsub.f32 %v1534, %v898
      %v2111 = vsub.f32 %v1535, %v899
      %v2112 = vsub.f32 %v1536, %v900
      %v2113 = vsub.f32 %v1537, %v901
      %v2114 = vsub.f32 %v1538, %v902
      %v2115 = vsub.f32 %v1539, %v903
      %v2116 = vsub.f32 %v1540, %v904
      %v2117 = vsub.f32 %v1541, %v905
      %v2118 = vsub.f32 %v1542, %v906
      %v2119 = vsub.f32 %v1543, %v907
      %v2120 = vsub.f32 %v1544, %v908
      %v2121 = vsub.f32 %v1545, %v909
      %v2122 = vsub.f32 %v1546, %v910
      %v2123 = vsub.f32 %v1547, %v911
      %v2124 = vsub.f32 %v1548, %v912
      %v2125 = vsub.f32 %v1549, %v913
      %v2126 = vsub.f32 %v1550, %v914
      %v2127 = vsub.f32 %v1551, %v915
      %v2128 = vsub.f32 %v1552, %v916
      %v2129 = vsub.f32 %v1553, %v917
      %v2130 = vsub.f32 %v1554, %v918
      %v2131 = vsub.f32 %v1555, %v919
      %v2132 = vsub.f32 %v1556, %v920
      %v2133 = vsub.f32 %v1557, %v921
      %v2134 = vsub.f32 %v1558, %v922
      %v2135 = vsub.f32 %v1559, %v923
      %v2136 = vsub.f32 %v1560, %v924
      %v2137 = vsub.f32 %v1561, %v925
      %v2138 = vsub.f32 %v1562, %v926
      %v2139 = vsub.f32 %v1563, %v927
      %v2140 = vsub.f32 %v1564, %v928
      %v2141 = vsub.f32 %v1565, %v929
      %v2142 = vsub.f32 %v1566, %v930
      %v2143 = vsub.f32 %v1567, %v931
      %v2144 = vsub.f32 %v1568, %v932
      %v2145 = vsub.f32 %v1569, %v933
      %v2146 = vsub.f32 %v1570, %v934
      %v2147 = vsub.f32 %v1571, %v935
      %v2148 = vsub.f32 %v1572, %v936
      %v2149 = vsub.f32 %v1573, %v937
      %v2150 = vsub.f32 %v1574, %v938
      %v2151 = vsub.f32 %v1575, %v939
      %v2152 = vsub.f32 %v1576, %v940
      %v2153 = vsub.f32 %v1577, %v941
      %v2154 = vsub.f32 %v1578, %v942
      %v2155 = vsub.f32 %v1579, %v943
      %v2156 = vsub.f32 %v1580, %v944
      %v2157 = vsub.f32 %v1581, %v945
      %v2158 = vsub.f32 %v1582, %v946
      %v2159 = vsub.f32 %v1583, %v947
      %v2160 = vsub.f32 %v1584, %v948
      %v2161 = vsub.f32 %v1585, %v949
      %v2162 = vsub.f32 %v1586, %v950
      %v2163 = vsub.f32 %v1587, %v951
      %v2164 = vsub.f32 %v1588, %v952
      %v2165 = vsub.f32 %v1589, %v953
      %v2166 = vsub.f32 %v1590, %v954
      %v2167 = vsub.f32 %v1591, %v955
      %v2168 = vsub.f32 %v1592, %v956
      %v2169 = vsub.f32 %v1593, %v957
      %v2170 = vsub.f32 %v1594, %v958
      %v2171 = vsub.f32 %v1595, %v959
      %v2172 = vsub.f32 %v1596, %v960
      %v2173 = vsub.f32 %v1597, %v961
      %v2174 = vsub.f32 %v1598, %v962
      %v2175 = vsub.f32 %v1599, %v963
      %v2176 = vsub.f32 %v1600, %v964
      %v2177 = vsub.f32 %v1601, %v965
      %v2178 = vsub.f32 %v1602, %v966
      %v2179 = vsub.f32 %v1603, %v967
      %v2180 = vsub.f32 %v1604, %v968
      %v2181 = vsub.f32 %v1605, %v969
      %v2182 = vsub.f32 %v1606, %v970
      %v2183 = vsub.f32 %v1607, %v971
      %v2184 = vsub.f32 %v1608, %v972
      %v2185 = vsub.f32 %v1609, %v973
      %v2186 = vsub.f32 %v1610, %v974
      %v2187 = vsub.f32 %v1611, %v975
      %v2188 = vsub.f32 %v1612, %v976
      %v2189 = vsub.f32 %v1613, %v977
      %v2190 = vsub.f32 %v1614, %v978
      %v2191 = vsub.f32 %v1615, %v979
      %v2192 = vsub.f32 %v1616, %v980
      %v2193 = vsub.f32 %v1617, %v981
      %v2194 = vsub.f32 %v1618, %v982
      %v2195 = vsub.f32 %v1619, %v983
      %v2196 = vsub.f32 %v1620, %v984
      %v2197 = vsub.f32 %v1621, %v985
      %v2198 = vsub.f32 %v1622, %v986
      %v2199 = vsub.f32 %v1623, %v987
      %v2200 = vsub.f32 %v1624, %v988
      %v2201 = vsub.f32 %v1625, %v989
      %v2202 = vsub.f32 %v1626, %v990
      %v2203 = vsub.f32 %v1627, %v991
      %v2204 = vsub.f32 %v1628, %v992
      %v2205 = vsub.f32 %v1629, %v993
      %v2206 = vsub.f32 %v1630, %v994
      %v2207 = vsub.f32 %v1631, %v995
      %v2208 = vsub.f32 %v1632, %v996
      %v2209 = vsub.f32 %v1633, %v997
      %v2210 = vsub.f32 %v1634, %v998
      %v2211 = vsub.f32 %v1635, %v999
      %v2212 = vsub.f32 %v1636, %v1000
      %v2213 = vsub.f32 %v1637, %v1001
      %v2214 = vsub.f32 %v1638, %v1002
      %v2215 = vmax.f32 %v2023, 0.0
      %v2216 = vmax.f32 %v2024, 0.0
      %v2217 = vmax.f32 %v2025, 0.0
      %v2218 = vmax.f32 %v2026, 0.0
      %v2219 = vmax.f32 %v2027, 0.0
      %v2220 = vmax.f32 %v2028, 0.0
      %v2221 = vmax.f32 %v2029, 0.0
      %v2222 = vmax.f32 %v2030, 0.0
      %v2223 = vmax.f32 %v2031, 0.0
      %v2224 = vmax.f32 %v2032, 0.0
      %v2225 = vmax.f32 %v2033, 0.0
      %v2226 = vmax.f32 %v2034, 0.0
      %v2227 = vmax.f32 %v2035, 0.0
      %v2228 = vmax.f32 %v2036, 0.0
      %v2229 = vmax.f32 %v2037, 0.0
      %v2230 = vmax.f32 %v2038, 0.0
      %v2231 = vmax.f32 %v2039, 0.0
      %v2232 = vmax.f32 %v2040, 0.0
      %v2233 = vmax.f32 %v2041, 0.0
      %v2234 = vmax.f32 %v2042, 0.0
      %v2235 = vmax.f32 %v2043, 0.0
      %v2236 = vmax.f32 %v2044, 0.0
      %v2237 = vmax.f32 %v2045, 0.0
      %v2238 = vmax.f32 %v2046, 0.0
      %v2239 = vmax.f32 %v2047, 0.0
      %v2240 = vmax.f32 %v2048, 0.0
      %v2241 = vmax.f32 %v2049, 0.0
      %v2242 = vmax.f32 %v2050, 0.0
      %v2243 = vmax.f32 %v2051, 0.0
      %v2244 = vmax.f32 %v2052, 0.0
      %v2245 = vmax.f32 %v2053, 0.0
      %v2246 = vmax.f32 %v2054, 0.0
      %v2247 = vmax.f32 %v2055, 0.0
      %v2248 = vmax.f32 %v2056, 0.0
      %v2249 = vmax.f32 %v2057, 0.0
      %v2250 = vmax.f32 %v2058, 0.0
      %v2251 = vmax.f32 %v2059, 0.0
      %v2252 = vmax.f32 %v2060, 0.0
      %v2253 = vmax.f32 %v2061, 0.0
      %v2254 = vmax.f32 %v2062, 0.0
      %v2255 = vmax.f32 %v2063, 0.0
      %v2256 = vmax.f32 %v2064, 0.0
      %v2257 = vmax.f32 %v2065, 0.0
      %v2258 = vmax.f32 %v2066, 0.0
      %v2259 = vmax.f32 %v2067, 0.0
      %v2260 = vmax.f32 %v2068, 0.0
      %v2261 = vmax.f32 %v2069, 0.0
      %v2262 = vmax.f32 %v2070, 0.0
      %v2263 = vmax.f32 %v2071, 0.0
      %v2264 = vmax.f32 %v2072, 0.0
      %v2265 = vmax.f32 %v2073, 0.0
      %v2266 = vmax.f32 %v2074, 0.0
      %v2267 = vmax.f32 %v2075, 0.0
      %v2268 = vmax.f32 %v2076, 0.0
      %v2269 = vmax.f32 %v2077, 0.0
      %v2270 = vmax.f32 %v2078, 0.0
      %v2271 = vmax.f32 %v2079, 0.0
      %v2272 = vmax.f32 %v2080, 0.0
      %v2273 = vmax.f32 %v2081, 0.0
      %v2274 = vmax.f32 %v2082, 0.0
      %v2275 = vmax.f32 %v2083, 0.0
      %v2276 = vmax.f32 %v2084, 0.0
      %v2277 = vmax.f32 %v2085, 0.0
      %v2278 = vmax.f32 %v2086, 0.0
      %v2279 = vmax.f32 %v2087, 0.0
      %v2280 = vmax.f32 %v2088, 0.0
      %v2281 = vmax.f32 %v2089, 0.0
      %v2282 = vmax.f32 %v2090, 0.0
      %v2283 = vmax.f32 %v2091, 0.0
      %v2284 = vmax.f32 %v2092, 0.0
      %v2285 = vmax.f32 %v2093, 0.0
      %v2286 = vmax.f32 %v2094, 0.0
      %v2287 = vmax.f32 %v2095, 0.0
      %v2288 = vmax.f32 %v2096, 0.0
      %v2289 = vmax.f32 %v2097, 0.0
      %v2290 = vmax.f32 %v2098, 0.0
      %v2291 = vmax.f32 %v2099, 0.0
      %v2292 = vmax.f32 %v2100, 0.0
      %v2293 = vmax.f32 %v2101, 0.0
      %v2294 = vmax.f32 %v2102, 0.0
      %v2295 = vmax.f32 %v2103, 0.0
      %v2296 = vmax.f32 %v2104, 0.0
      %v2297 = vmax.f32 %v2105, 0.0
      %v2298 = vmax.f32 %v2106, 0.0
      %v2299 = vmax.f32 %v2107, 0.0
      %v2300 = vmax.f32 %v2108, 0.0
      %v2301 = vmax.f32 %v2109, 0.0
      %v2302 = vmax.f32 %v2110, 0.0
      %v2303 = vmax.f32 %v2111, 0.0
      %v2304 = vmax.f32 %v2112, 0.0
      %v2305 = vmax.f32 %v2113, 0.0
      %v2306 = vmax.f32 %v2114, 0.0
      %v2307 = vmax.f32 %v2115, 0.0
      %v2308 = vmax.f32 %v2116, 0.0
      %v2309 = vmax.f32 %v2117, 0.0
      %v2310 = vmax.f32 %v2118, 0.0
      %v2311 = vmax.f32 %v2119, 0.0
      %v2312 = vmax.f32 %v2120, 0.0
      %v2313 = vmax.f32 %v2121, 0.0
      %v2314 = vmax.f32 %v2122, 0.0
      %v2315 = vmax.f32 %v2123, 0.0
      %v2316 = vmax.f32 %v2124, 0.0
      %v2317 = vmax.f32 %v2125, 0.0
      %v2318 = vmax.f32 %v2126, 0.0
      %v2319 = vmax.f32 %v2127, 0.0
      %v2320 = vmax.f32 %v2128, 0.0
      %v2321 = vmax.f32 %v2129, 0.0
      %v2322 = vmax.f32 %v2130, 0.0
      %v2323 = vmax.f32 %v2131, 0.0
      %v2324 = vmax.f32 %v2132, 0.0
      %v2325 = vmax.f32 %v2133, 0.0
      %v2326 = vmax.f32 %v2134, 0.0
      %v2327 = vmax.f32 %v2135, 0.0
      %v2328 = vmax.f32 %v2136, 0.0
      %v2329 = vmax.f32 %v2137, 0.0
      %v2330 = vmax.f32 %v2138, 0.0
      %v2331 = vmax.f32 %v2139, 0.0
      %v2332 = vmax.f32 %v2140, 0.0
      %v2333 = vmax.f32 %v2141, 0.0
      %v2334 = vmax.f32 %v2142, 0.0
      %v2335 = vmax.f32 %v2143, 0.0
      %v2336 = vmax.f32 %v2144, 0.0
      %v2337 = vmax.f32 %v2145, 0.0
      %v2338 = vmax.f32 %v2146, 0.0
      %v2339 = vmax.f32 %v2147, 0.0
      %v2340 = vmax.f32 %v2148, 0.0
      %v2341 = vmax.f32 %v2149, 0.0
      %v2342 = vmax.f32 %v2150, 0.0
      %v2343 = vmax.f32 %v2151, 0.0
      %v2344 = vmax.f32 %v2152, 0.0
      %v2345 = vmax.f32 %v2153, 0.0
      %v2346 = vmax.f32 %v2154, 0.0
      %v2347 = vmax.f32 %v2155, 0.0
      %v2348 = vmax.f32 %v2156, 0.0
      %v2349 = vmax.f32 %v2157, 0.0
      %v2350 = vmax.f32 %v2158, 0.0
      %v2351 = vmax.f32 %v2159, 0.0
      %v2352 = vmax.f32 %v2160, 0.0
      %v2353 = vmax.f32 %v2161, 0.0
      %v2354 = vmax.f32 %v2162, 0.0
      %v2355 = vmax.f32 %v2163, 0.0
      %v2356 = vmax.f32 %v2164, 0.0
      %v2357 = vmax.f32 %v2165, 0.0
      %v2358 = vmax.f32 %v2166, 0.0
      %v2359 = vmax.f32 %v2167, 0.0
      %v2360 = vmax.f32 %v2168, 0.0
      %v2361 = vmax.f32 %v2169, 0.0
      %v2362 = vmax.f32 %v2170, 0.0
      %v2363 = vmax.f32 %v2171, 0.0
      %v2364 = vmax.f32 %v2172, 0.0
      %v2365 = vmax.f32 %v2173, 0.0
      %v2366 = vmax.f32 %v2174, 0.0
      %v2367 = vmax.f32 %v2175, 0.0
      %v2368 = vmax.f32 %v2176, 0.0
      %v2369 = vmax.f32 %v2177, 0.0
      %v2370 = vmax.f32 %v2178, 0.0
      %v2371 = vmax.f32 %v2179, 0.0
      %v2372 = vmax.f32 %v2180, 0.0
      %v2373 = vmax.f32 %v2181, 0.0
      %v2374 = vmax.f32 %v2182, 0.0
      %v2375 = vmax.f32 %v2183, 0.0
      %v2376 = vmax.f32 %v2184, 0.0
      %v2377 = vmax.f32 %v2185, 0.0
      %v2378 = vmax.f32 %v2186, 0.0
      %v2379 = vmax.f32 %v2187, 0.0
      %v2380 = vmax.f32 %v2188, 0.0
      %v2381 = vmax.f32 %v2189, 0.0
      %v2382 = vmax.f32 %v2190, 0.0
      %v2383 = vmax.f32 %v2191, 0.0
      %v2384 = vmax.f32 %v2192, 0.0
      %v2385 = vmax.f32 %v2193, 0.0
      %v2386 = vmax.f32 %v2194, 0.0
      %v2387 = vmax.f32 %v2195, 0.0
      %v2388 = vmax.f32 %v2196, 0.0
      %v2389 = vmax.f32 %v2197, 0.0
      %v2390 = vmax.f32 %v2198, 0.0
      %v2391 = vmax.f32 %v2199, 0.0
      %v2392 = vmax.f32 %v2200, 0.0
      %v2393 = vmax.f32 %v2201, 0.0
      %v2394 = vmax.f32 %v2202, 0.0
      %v2395 = vmax.f32 %v2203, 0.0
      %v2396 = vmax.f32 %v2204, 0.0
      %v2397 = vmax.f32 %v2205, 0.0
      %v2398 = vmax.f32 %v2206, 0.0
      %v2399 = vmax.f32 %v2207, 0.0
      %v2400 = vmax.f32 %v2208, 0.0
      %v2401 = vmax.f32 %v2209, 0.0
      %v2402 = vmax.f32 %v2210, 0.0
      %v2403 = vmax.f32 %v2211, 0.0
      %v2404 = vmax.f32 %v2212, 0.0
      %v2405 = vmax.f32 %v2213, 0.0
      %v2406 = vmax.f32 %v2214, 0.0
      %v2407 = vmul.f32 %v1831, %v2215
      %v2408 = vmul.f32 %v1832, %v2216
      %v2409 = vmul.f32 %v1833, %v2217
      %v2410 = vmul.f32 %v1834, %v2218
      %v2411 = vmul.f32 %v1835, %v2219
      %v2412 = vmul.f32 %v1836, %v2220
      %v2413 = vmul.f32 %v1837, %v2221
      %v2414 = vmul.f32 %v1838, %v2222
      %v2415 = vmul.f32 %v1839, %v2223
      %v2416 = vmul.f32 %v1840, %v2224
      %v2417 = vmul.f32 %v1841, %v2225
      %v2418 = vmul.f32 %v1842, %v2226
      %v2419 = vmul.f32 %v1843, %v2227
      %v2420 = vmul.f32 %v1844, %v2228
      %v2421 = vmul.f32 %v1845, %v2229
      %v2422 = vmul.f32 %v1846, %v2230
      %v2423 = vmul.f32 %v1847, %v2231
      %v2424 = vmul.f32 %v1848, %v2232
      %v2425 = vmul.f32 %v1849, %v2233
      %v2426 = vmul.f32 %v1850, %v2234
      %v2427 = vmul.f32 %v1851, %v2235
      %v2428 = vmul.f32 %v1852, %v2236
      %v2429 = vmul.f32 %v1853, %v2237
      %v2430 = vmul.f32 %v1854, %v2238
      %v2431 = vmul.f32 %v1855, %v2239
      %v2432 = vmul.f32 %v1856, %v2240
      %v2433 = vmul.f32 %v1857, %v2241
      %v2434 = vmul.f32 %v1858, %v2242
      %v2435 = vmul.f32 %v1859, %v2243
      %v2436 = vmul.f32 %v1860, %v2244
      %v2437 = vmul.f32 %v1861, %v2245
      %v2438 = vmul.f32 %v1862, %v2246
      %v2439 = vmul.f32 %v1863, %v2247
      %v2440 = vmul.f32 %v1864, %v2248
      %v2441 = vmul.f32 %v1865, %v2249
      %v2442 = vmul.f32 %v1866, %v2250
      %v2443 = vmul.f32 %v1867, %v2251
      %v2444 = vmul.f32 %v1868, %v2252
      %v2445 = vmul.f32 %v1869, %v2253
      %v2446 = vmul.f32 %v1870, %v2254
      %v2447 = vmul.f32 %v1871, %v2255
      %v2448 = vmul.f32 %v1872, %v2256
      %v2449 = vmul.f32 %v1873, %v2257
      %v2450 = vmul.f32 %v1874, %v2258
      %v2451 = vmul.f32 %v1875, %v2259
      %v2452 = vmul.f32 %v1876, %v2260
      %v2453 = vmul.f32 %v1877, %v2261
      %v2454 = vmul.f32 %v1878, %v2262
      %v2455 = vmul.f32 %v1879, %v2263
      %v2456 = vmul.f32 %v1880, %v2264
      %v2457 = vmul.f32 %v1881, %v2265
      %v2458 = vmul.f32 %v1882, %v2266
      %v2459 = vmul.f32 %v1883, %v2267
      %v2460 = vmul.f32 %v1884, %v2268
      %v2461 = vmul.f32 %v1885, %v2269
      %v2462 = vmul.f32 %v1886, %v2270
      %v2463 = vmul.f32 %v1887, %v2271
      %v2464 = vmul.f32 %v1888, %v2272
      %v2465 = vmul.f32 %v1889, %v2273
      %v2466 = vmul.f32 %v1890, %v2274
      %v2467 = vmul.f32 %v1891, %v2275
      %v2468 = vmul.f32 %v1892, %v2276
      %v2469 = vmul.f32 %v1893, %v2277
      %v2470 = vmul.f32 %v1894, %v2278
      %v2471 = vmul.f32 %v1895, %v2279
      %v2472 = vmul.f32 %v1896, %v2280
      %v2473 = vmul.f32 %v1897, %v2281
      %v2474 = vmul.f32 %v1898, %v2282
      %v2475 = vmul.f32 %v1899, %v2283
      %v2476 = vmul.f32 %v1900, %v2284
      %v2477 = vmul.f32 %v1901, %v2285
      %v2478 = vmul.f32 %v1902, %v2286
      %v2479 = vmul.f32 %v1903, %v2287
      %v2480 = vmul.f32 %v1904, %v2288
      %v2481 = vmul.f32 %v1905, %v2289
      %v2482 = vmul.f32 %v1906, %v2290
      %v2483 = vmul.f32 %v1907, %v2291
      %v2484 = vmul.f32 %v1908, %v2292
      %v2485 = vmul.f32 %v1909, %v2293
      %v2486 = vmul.f32 %v1910, %v2294
      %v2487 = vmul.f32 %v1911, %v2295
      %v2488 = vmul.f32 %v1912, %v2296
      %v2489 = vmul.f32 %v1913, %v2297
      %v2490 = vmul.f32 %v1914, %v2298
      %v2491 = vmul.f32 %v1915, %v2299
      %v2492 = vmul.f32 %v1916, %v2300
      %v2493 = vmul.f32 %v1917, %v2301
      %v2494 = vmul.f32 %v1918, %v2302
      %v2495 = vmul.f32 %v1919, %v2303
      %v2496 = vmul.f32 %v1920, %v2304
      %v2497 = vmul.f32 %v1921, %v2305
      %v2498 = vmul.f32 %v1922, %v2306
      %v2499 = vmul.f32 %v1923, %v2307
      %v2500 = vmul.f32 %v1924, %v2308
      %v2501 = vmul.f32 %v1925, %v2309
      %v2502 = vmul.f32 %v1926, %v2310
      %v2503 = vmul.f32 %v1927, %v2311
      %v2504 = vmul.f32 %v1928, %v2312
      %v2505 = vmul.f32 %v1929, %v2313
      %v2506 = vmul.f32 %v1930, %v2314
      %v2507 = vmul.f32 %v1931, %v2315
      %v2508 = vmul.f32 %v1932, %v2316
      %v2509 = vmul.f32 %v1933, %v2317
      %v2510 = vmul.f32 %v1934, %v2318
      %v2511 = vmul.f32 %v1935, %v2319
      %v2512 = vmul.f32 %v1936, %v2320
      %v2513 = vmul.f32 %v1937, %v2321
      %v2514 = vmul.f32 %v1938, %v2322
      %v2515 = vmul.f32 %v1939, %v2323
      %v2516 = vmul.f32 %v1940, %v2324
      %v2517 = vmul.f32 %v1941, %v2325
      %v2518 = vmul.f32 %v1942, %v2326
      %v2519 = vmul.f32 %v1943, %v2327
      %v2520 = vmul.f32 %v1944, %v2328
      %v2521 = vmul.f32 %v1945, %v2329
      %v2522 = vmul.f32 %v1946, %v2330
      %v2523 = vmul.f32 %v1947, %v2331
      %v2524 = vmul.f32 %v1948, %v2332
      %v2525 = vmul.f32 %v1949, %v2333
      %v2526 = vmul.f32 %v1950, %v2334
      %v2527 = vmul.f32 %v1951, %v2335
      %v2528 = vmul.f32 %v1952, %v2336
      %v2529 = vmul.f32 %v1953, %v2337
      %v2530 = vmul.f32 %v1954, %v2338
      %v2531 = vmul.f32 %v1955, %v2339
      %v2532 = vmul.f32 %v1956, %v2340
      %v2533 = vmul.f32 %v1957, %v2341
      %v2534 = vmul.f32 %v1958, %v2342
      %v2535 = vmul.f32 %v1959, %v2343
      %v2536 = vmul.f32 %v1960, %v2344
      %v2537 = vmul.f32 %v1961, %v2345
      %v2538 = vmul.f32 %v1962, %v2346
      %v2539 = vmul.f32 %v1963, %v2347
      %v2540 = vmul.f32 %v1964, %v2348
      %v2541 = vmul.f32 %v1965, %v2349
      %v2542 = vmul.f32 %v1966, %v2350
      %v2543 = vmul.f32 %v1967, %v2351
      %v2544 = vmul.f32 %v1968, %v2352
      %v2545 = vmul.f32 %v1969, %v2353
      %v2546 = vmul.f32 %v1970, %v2354
      %v2547 = vmul.f32 %v1971, %v2355
      %v2548 = vmul.f32 %v1972, %v2356
      %v2549 = vmul.f32 %v1973, %v2357
      %v2550 = vmul.f32 %v1974, %v2358
      %v2551 = vmul.f32 %v1975, %v2359
      %v2552 = vmul.f32 %v1976, %v2360
      %v2553 = vmul.f32 %v1977, %v2361
      %v2554 = vmul.f32 %v1978, %v2362
      %v2555 = vmul.f32 %v1979, %v2363
      %v2556 = vmul.f32 %v1980, %v2364
      %v2557 = vmul.f32 %v1981, %v2365
      %v2558 = vmul.f32 %v1982, %v2366
      %v2559 = vmul.f32 %v1983, %v2367
      %v2560 = vmul.f32 %v1984, %v2368
      %v2561 = vmul.f32 %v1985, %v2369
      %v2562 = vmul.f32 %v1986, %v2370
      %v2563 = vmul.f32 %v1987, %v2371
      %v2564 = vmul.f32 %v1988, %v2372
      %v2565 = vmul.f32 %v1989, %v2373
      %v2566 = vmul.f32 %v1990, %v2374
      %v2567 = vmul.f32 %v1991, %v2375
      %v2568 = vmul.f32 %v1992, %v2376
      %v2569 = vmul.f32 %v1993, %v2377
      %v2570 = vmul.f32 %v1994, %v2378
      %v2571 = vmul.f32 %v1995, %v2379
      %v2572 = vmul.f32 %v1996, %v2380
      %v2573 = vmul.f32 %v1997, %v2381
      %v2574 = vmul.f32 %v1998, %v2382
      %v2575 = vmul.f32 %v1999, %v2383
      %v2576 = vmul.f32 %v2000, %v2384
      %v2577 = vmul.f32 %v2001, %v2385
      %v2578 = vmul.f32 %v2002, %v2386
      %v2579 = vmul.f32 %v2003, %v2387
      %v2580 = vmul.f32 %v2004, %v2388
      %v2581 = vmul.f32 %v2005, %v2389
      %v2582 = vmul.f32 %v2006, %v2390
      %v2583 = vmul.f32 %v2007, %v2391
      %v2584 = vmul.f32 %v2008, %v2392
      %v2585 = vmul.f32 %v2009, %v2393
      %v2586 = vmul.f32 %v2010, %v2394
      %v2587 = vmul.f32 %v2011, %v2395
      %v2588 = vmul.f32 %v2012, %v2396
      %v2589 = vmul.f32 %v2013, %v2397
      %v2590 = vmul.f32 %v2014, %v2398
      %v2591 = vmul.f32 %v2015, %v2399
      %v2592 = vmul.f32 %v2016, %v2400
      %v2593 = vmul.f32 %v2017, %v2401
      %v2594 = vmul.f32 %v2018, %v2402
      %v2595 = vmul.f32 %v2019, %v2403
      %v2596 = vmul.f32 %v2020, %v2404
      %v2597 = vmul.f32 %v2021, %v2405
      %v2598 = vmul.f32 %v2022, %v2406
      %2600 = vset.pattern.permute.xlu0 2
      %2601 = vperm.xlu0 %2600, %v345
      %v2602 = vpop.permute.xlu0 %2601
      %2605 = vset.pattern.permute.xlu0 2
      %2606 = vperm.xlu0 %2605, %v346
      %v2607 = vpop.permute.xlu0 %2606
      %2610 = vset.pattern.permute.xlu0 2
      %2611 = vperm.xlu0 %2610, %v347
      %v2612 = vpop.permute.xlu0 %2611
      %2615 = vset.pattern.permute.xlu0 2
      %2616 = vperm.xlu0 %2615, %v348
      %v2617 = vpop.permute.xlu0 %2616
      %2620 = vset.pattern.permute.xlu0 2
      %2621 = vperm.xlu0 %2620, %v349
      %v2622 = vpop.permute.xlu0 %2621
      %2625 = vset.pattern.permute.xlu0 2
      %2626 = vperm.xlu0 %2625, %v350
      %v2627 = vpop.permute.xlu0 %2626
      %2630 = vset.pattern.permute.xlu0 2
      %2631 = vperm.xlu0 %2630, %v351
      %v2632 = vpop.permute.xlu0 %2631
      %2635 = vset.pattern.permute.xlu0 2
      %2636 = vperm.xlu0 %2635, %v352
      %v2637 = vpop.permute.xlu0 %2636
      %2640 = vset.pattern.permute.xlu0 2
      %2641 = vperm.xlu0 %2640, %v353
      %v2642 = vpop.permute.xlu0 %2641
      %2645 = vset.pattern.permute.xlu0 2
      %2646 = vperm.xlu0 %2645, %v354
      %v2647 = vpop.permute.xlu0 %2646
      %2650 = vset.pattern.permute.xlu0 2
      %2651 = vperm.xlu0 %2650, %v355
      %v2652 = vpop.permute.xlu0 %2651
      %2655 = vset.pattern.permute.xlu0 2
      %2656 = vperm.xlu0 %2655, %v356
      %v2657 = vpop.permute.xlu0 %2656
      %2660 = vset.pattern.permute.xlu0 2
      %2661 = vperm.xlu0 %2660, %v357
      %v2662 = vpop.permute.xlu0 %2661
      %2665 = vset.pattern.permute.xlu0 2
      %2666 = vperm.xlu0 %2665, %v358
      %v2667 = vpop.permute.xlu0 %2666
      %2670 = vset.pattern.permute.xlu0 2
      %2671 = vperm.xlu0 %2670, %v359
      %v2672 = vpop.permute.xlu0 %2671
      %2675 = vset.pattern.permute.xlu0 2
      %2676 = vperm.xlu0 %2675, %v360
      %v2677 = vpop.permute.xlu0 %2676
      %v2681 = vlaneseq
      %v2682 = vshrl.u32 %v2681, 7
      %v2683 = vsub.s32 0, %v2682
      %v2684 = vrot.slane %v365, %v2683
      %v2685 = vlaneseq
      %v2686 = vshrl.u32 %v2685, 7
      %v2687 = vsub.s32 1, %v2686
      %v2688 = vrot.slane %v365, %v2687
      %v2689 = vlaneseq
      %v2690 = vshrl.u32 %v2689, 7
      %v2691 = vsub.s32 2, %v2690
      %v2692 = vrot.slane %v365, %v2691
      %v2693 = vlaneseq
      %v2694 = vshrl.u32 %v2693, 7
      %v2695 = vsub.s32 3, %v2694
      %v2696 = vrot.slane %v365, %v2695
      %v2697 = vlaneseq
      %v2698 = vshrl.u32 %v2697, 7
      %v2699 = vsub.s32 4, %v2698
      %v2700 = vrot.slane %v365, %v2699
      %v2701 = vlaneseq
      %v2702 = vshrl.u32 %v2701, 7
      %v2703 = vsub.s32 5, %v2702
      %v2704 = vrot.slane %v365, %v2703
      %v2705 = vlaneseq
      %v2706 = vshrl.u32 %v2705, 7
      %v2707 = vsub.s32 6, %v2706
      %v2708 = vrot.slane %v365, %v2707
      %v2709 = vlaneseq
      %v2710 = vshrl.u32 %v2709, 7
      %v2711 = vsub.s32 7, %v2710
      %v2712 = vrot.slane %v365, %v2711
      %v2713 = vlaneseq
      %v2714 = vshrl.u32 %v2713, 7
      %v2715 = vsub.s32 0, %v2714
      %v2716 = vrot.slane %v366, %v2715
      %v2717 = vlaneseq
      %v2718 = vshrl.u32 %v2717, 7
      %v2719 = vsub.s32 1, %v2718
      %v2720 = vrot.slane %v366, %v2719
      %v2721 = vlaneseq
      %v2722 = vshrl.u32 %v2721, 7
      %v2723 = vsub.s32 2, %v2722
      %v2724 = vrot.slane %v366, %v2723
      %v2725 = vlaneseq
      %v2726 = vshrl.u32 %v2725, 7
      %v2727 = vsub.s32 3, %v2726
      %v2728 = vrot.slane %v366, %v2727
      %v2741 = vadd.f32 %v2602, %v2684
      %v2742 = vadd.f32 %v2602, %v2688
      %v2743 = vadd.f32 %v2602, %v2692
      %v2744 = vadd.f32 %v2602, %v2696
      %v2745 = vadd.f32 %v2602, %v2700
      %v2746 = vadd.f32 %v2602, %v2704
      %v2747 = vadd.f32 %v2602, %v2708
      %v2748 = vadd.f32 %v2602, %v2712
      %v2749 = vadd.f32 %v2602, %v2716
      %v2750 = vadd.f32 %v2602, %v2720
      %v2751 = vadd.f32 %v2602, %v2724
      %v2752 = vadd.f32 %v2602, %v2728
      %v2753 = vadd.f32 %v2607, %v2684
      %v2754 = vadd.f32 %v2607, %v2688
      %v2755 = vadd.f32 %v2607, %v2692
      %v2756 = vadd.f32 %v2607, %v2696
      %v2757 = vadd.f32 %v2607, %v2700
      %v2758 = vadd.f32 %v2607, %v2704
      %v2759 = vadd.f32 %v2607, %v2708
      %v2760 = vadd.f32 %v2607, %v2712
      %v2761 = vadd.f32 %v2607, %v2716
      %v2762 = vadd.f32 %v2607, %v2720
      %v2763 = vadd.f32 %v2607, %v2724
      %v2764 = vadd.f32 %v2607, %v2728
      %v2765 = vadd.f32 %v2612, %v2684
      %v2766 = vadd.f32 %v2612, %v2688
      %v2767 = vadd.f32 %v2612, %v2692
      %v2768 = vadd.f32 %v2612, %v2696
      %v2769 = vadd.f32 %v2612, %v2700
      %v2770 = vadd.f32 %v2612, %v2704
      %v2771 = vadd.f32 %v2612, %v2708
      %v2772 = vadd.f32 %v2612, %v2712
      %v2773 = vadd.f32 %v2612, %v2716
      %v2774 = vadd.f32 %v2612, %v2720
      %v2775 = vadd.f32 %v2612, %v2724
      %v2776 = vadd.f32 %v2612, %v2728
      %v2777 = vadd.f32 %v2617, %v2684
      %v2778 = vadd.f32 %v2617, %v2688
      %v2779 = vadd.f32 %v2617, %v2692
      %v2780 = vadd.f32 %v2617, %v2696
      %v2781 = vadd.f32 %v2617, %v2700
      %v2782 = vadd.f32 %v2617, %v2704
      %v2783 = vadd.f32 %v2617, %v2708
      %v2784 = vadd.f32 %v2617, %v2712
      %v2785 = vadd.f32 %v2617, %v2716
      %v2786 = vadd.f32 %v2617, %v2720
      %v2787 = vadd.f32 %v2617, %v2724
      %v2788 = vadd.f32 %v2617, %v2728
      %v2789 = vadd.f32 %v2622, %v2684
      %v2790 = vadd.f32 %v2622, %v2688
      %v2791 = vadd.f32 %v2622, %v2692
      %v2792 = vadd.f32 %v2622, %v2696
      %v2793 = vadd.f32 %v2622, %v2700
      %v2794 = vadd.f32 %v2622, %v2704
      %v2795 = vadd.f32 %v2622, %v2708
      %v2796 = vadd.f32 %v2622, %v2712
      %v2797 = vadd.f32 %v2622, %v2716
      %v2798 = vadd.f32 %v2622, %v2720
      %v2799 = vadd.f32 %v2622, %v2724
      %v2800 = vadd.f32 %v2622, %v2728
      %v2801 = vadd.f32 %v2627, %v2684
      %v2802 = vadd.f32 %v2627, %v2688
      %v2803 = vadd.f32 %v2627, %v2692
      %v2804 = vadd.f32 %v2627, %v2696
      %v2805 = vadd.f32 %v2627, %v2700
      %v2806 = vadd.f32 %v2627, %v2704
      %v2807 = vadd.f32 %v2627, %v2708
      %v2808 = vadd.f32 %v2627, %v2712
      %v2809 = vadd.f32 %v2627, %v2716
      %v2810 = vadd.f32 %v2627, %v2720
      %v2811 = vadd.f32 %v2627, %v2724
      %v2812 = vadd.f32 %v2627, %v2728
      %v2813 = vadd.f32 %v2632, %v2684
      %v2814 = vadd.f32 %v2632, %v2688
      %v2815 = vadd.f32 %v2632, %v2692
      %v2816 = vadd.f32 %v2632, %v2696
      %v2817 = vadd.f32 %v2632, %v2700
      %v2818 = vadd.f32 %v2632, %v2704
      %v2819 = vadd.f32 %v2632, %v2708
      %v2820 = vadd.f32 %v2632, %v2712
      %v2821 = vadd.f32 %v2632, %v2716
      %v2822 = vadd.f32 %v2632, %v2720
      %v2823 = vadd.f32 %v2632, %v2724
      %v2824 = vadd.f32 %v2632, %v2728
      %v2825 = vadd.f32 %v2637, %v2684
      %v2826 = vadd.f32 %v2637, %v2688
      %v2827 = vadd.f32 %v2637, %v2692
      %v2828 = vadd.f32 %v2637, %v2696
      %v2829 = vadd.f32 %v2637, %v2700
      %v2830 = vadd.f32 %v2637, %v2704
      %v2831 = vadd.f32 %v2637, %v2708
      %v2832 = vadd.f32 %v2637, %v2712
      %v2833 = vadd.f32 %v2637, %v2716
      %v2834 = vadd.f32 %v2637, %v2720
      %v2835 = vadd.f32 %v2637, %v2724
      %v2836 = vadd.f32 %v2637, %v2728
      %v2837 = vadd.f32 %v2642, %v2684
      %v2838 = vadd.f32 %v2642, %v2688
      %v2839 = vadd.f32 %v2642, %v2692
      %v2840 = vadd.f32 %v2642, %v2696
      %v2841 = vadd.f32 %v2642, %v2700
      %v2842 = vadd.f32 %v2642, %v2704
      %v2843 = vadd.f32 %v2642, %v2708
      %v2844 = vadd.f32 %v2642, %v2712
      %v2845 = vadd.f32 %v2642, %v2716
      %v2846 = vadd.f32 %v2642, %v2720
      %v2847 = vadd.f32 %v2642, %v2724
      %v2848 = vadd.f32 %v2642, %v2728
      %v2849 = vadd.f32 %v2647, %v2684
      %v2850 = vadd.f32 %v2647, %v2688
      %v2851 = vadd.f32 %v2647, %v2692
      %v2852 = vadd.f32 %v2647, %v2696
      %v2853 = vadd.f32 %v2647, %v2700
      %v2854 = vadd.f32 %v2647, %v2704
      %v2855 = vadd.f32 %v2647, %v2708
      %v2856 = vadd.f32 %v2647, %v2712
      %v2857 = vadd.f32 %v2647, %v2716
      %v2858 = vadd.f32 %v2647, %v2720
      %v2859 = vadd.f32 %v2647, %v2724
      %v2860 = vadd.f32 %v2647, %v2728
      %v2861 = vadd.f32 %v2652, %v2684
      %v2862 = vadd.f32 %v2652, %v2688
      %v2863 = vadd.f32 %v2652, %v2692
      %v2864 = vadd.f32 %v2652, %v2696
      %v2865 = vadd.f32 %v2652, %v2700
      %v2866 = vadd.f32 %v2652, %v2704
      %v2867 = vadd.f32 %v2652, %v2708
      %v2868 = vadd.f32 %v2652, %v2712
      %v2869 = vadd.f32 %v2652, %v2716
      %v2870 = vadd.f32 %v2652, %v2720
      %v2871 = vadd.f32 %v2652, %v2724
      %v2872 = vadd.f32 %v2652, %v2728
      %v2873 = vadd.f32 %v2657, %v2684
      %v2874 = vadd.f32 %v2657, %v2688
      %v2875 = vadd.f32 %v2657, %v2692
      %v2876 = vadd.f32 %v2657, %v2696
      %v2877 = vadd.f32 %v2657, %v2700
      %v2878 = vadd.f32 %v2657, %v2704
      %v2879 = vadd.f32 %v2657, %v2708
      %v2880 = vadd.f32 %v2657, %v2712
      %v2881 = vadd.f32 %v2657, %v2716
      %v2882 = vadd.f32 %v2657, %v2720
      %v2883 = vadd.f32 %v2657, %v2724
      %v2884 = vadd.f32 %v2657, %v2728
      %v2885 = vadd.f32 %v2662, %v2684
      %v2886 = vadd.f32 %v2662, %v2688
      %v2887 = vadd.f32 %v2662, %v2692
      %v2888 = vadd.f32 %v2662, %v2696
      %v2889 = vadd.f32 %v2662, %v2700
      %v2890 = vadd.f32 %v2662, %v2704
      %v2891 = vadd.f32 %v2662, %v2708
      %v2892 = vadd.f32 %v2662, %v2712
      %v2893 = vadd.f32 %v2662, %v2716
      %v2894 = vadd.f32 %v2662, %v2720
      %v2895 = vadd.f32 %v2662, %v2724
      %v2896 = vadd.f32 %v2662, %v2728
      %v2897 = vadd.f32 %v2667, %v2684
      %v2898 = vadd.f32 %v2667, %v2688
      %v2899 = vadd.f32 %v2667, %v2692
      %v2900 = vadd.f32 %v2667, %v2696
      %v2901 = vadd.f32 %v2667, %v2700
      %v2902 = vadd.f32 %v2667, %v2704
      %v2903 = vadd.f32 %v2667, %v2708
      %v2904 = vadd.f32 %v2667, %v2712
      %v2905 = vadd.f32 %v2667, %v2716
      %v2906 = vadd.f32 %v2667, %v2720
      %v2907 = vadd.f32 %v2667, %v2724
      %v2908 = vadd.f32 %v2667, %v2728
      %v2909 = vadd.f32 %v2672, %v2684
      %v2910 = vadd.f32 %v2672, %v2688
      %v2911 = vadd.f32 %v2672, %v2692
      %v2912 = vadd.f32 %v2672, %v2696
      %v2913 = vadd.f32 %v2672, %v2700
      %v2914 = vadd.f32 %v2672, %v2704
      %v2915 = vadd.f32 %v2672, %v2708
      %v2916 = vadd.f32 %v2672, %v2712
      %v2917 = vadd.f32 %v2672, %v2716
      %v2918 = vadd.f32 %v2672, %v2720
      %v2919 = vadd.f32 %v2672, %v2724
      %v2920 = vadd.f32 %v2672, %v2728
      %v2921 = vadd.f32 %v2677, %v2684
      %v2922 = vadd.f32 %v2677, %v2688
      %v2923 = vadd.f32 %v2677, %v2692
      %v2924 = vadd.f32 %v2677, %v2696
      %v2925 = vadd.f32 %v2677, %v2700
      %v2926 = vadd.f32 %v2677, %v2704
      %v2927 = vadd.f32 %v2677, %v2708
      %v2928 = vadd.f32 %v2677, %v2712
      %v2929 = vadd.f32 %v2677, %v2716
      %v2930 = vadd.f32 %v2677, %v2720
      %v2931 = vadd.f32 %v2677, %v2724
      %v2932 = vadd.f32 %v2677, %v2728
      %v2933 = vsub.f32 %v2741, %v2407
      %v2934 = vsub.f32 %v2742, %v2408
      %v2935 = vsub.f32 %v2743, %v2409
      %v2936 = vsub.f32 %v2744, %v2410
      %v2937 = vsub.f32 %v2745, %v2411
      %v2938 = vsub.f32 %v2746, %v2412
      %v2939 = vsub.f32 %v2747, %v2413
      %v2940 = vsub.f32 %v2748, %v2414
      %v2941 = vsub.f32 %v2749, %v2415
      %v2942 = vsub.f32 %v2750, %v2416
      %v2943 = vsub.f32 %v2751, %v2417
      %v2944 = vsub.f32 %v2752, %v2418
      %v2945 = vsub.f32 %v2753, %v2419
      %v2946 = vsub.f32 %v2754, %v2420
      %v2947 = vsub.f32 %v2755, %v2421
      %v2948 = vsub.f32 %v2756, %v2422
      %v2949 = vsub.f32 %v2757, %v2423
      %v2950 = vsub.f32 %v2758, %v2424
      %v2951 = vsub.f32 %v2759, %v2425
      %v2952 = vsub.f32 %v2760, %v2426
      %v2953 = vsub.f32 %v2761, %v2427
      %v2954 = vsub.f32 %v2762, %v2428
      %v2955 = vsub.f32 %v2763, %v2429
      %v2956 = vsub.f32 %v2764, %v2430
      %v2957 = vsub.f32 %v2765, %v2431
      %v2958 = vsub.f32 %v2766, %v2432
      %v2959 = vsub.f32 %v2767, %v2433
      %v2960 = vsub.f32 %v2768, %v2434
      %v2961 = vsub.f32 %v2769, %v2435
      %v2962 = vsub.f32 %v2770, %v2436
      %v2963 = vsub.f32 %v2771, %v2437
      %v2964 = vsub.f32 %v2772, %v2438
      %v2965 = vsub.f32 %v2773, %v2439
      %v2966 = vsub.f32 %v2774, %v2440
      %v2967 = vsub.f32 %v2775, %v2441
      %v2968 = vsub.f32 %v2776, %v2442
      %v2969 = vsub.f32 %v2777, %v2443
      %v2970 = vsub.f32 %v2778, %v2444
      %v2971 = vsub.f32 %v2779, %v2445
      %v2972 = vsub.f32 %v2780, %v2446
      %v2973 = vsub.f32 %v2781, %v2447
      %v2974 = vsub.f32 %v2782, %v2448
      %v2975 = vsub.f32 %v2783, %v2449
      %v2976 = vsub.f32 %v2784, %v2450
      %v2977 = vsub.f32 %v2785, %v2451
      %v2978 = vsub.f32 %v2786, %v2452
      %v2979 = vsub.f32 %v2787, %v2453
      %v2980 = vsub.f32 %v2788, %v2454
      %v2981 = vsub.f32 %v2789, %v2455
      %v2982 = vsub.f32 %v2790, %v2456
      %v2983 = vsub.f32 %v2791, %v2457
      %v2984 = vsub.f32 %v2792, %v2458
      %v2985 = vsub.f32 %v2793, %v2459
      %v2986 = vsub.f32 %v2794, %v2460
      %v2987 = vsub.f32 %v2795, %v2461
      %v2988 = vsub.f32 %v2796, %v2462
      %v2989 = vsub.f32 %v2797, %v2463
      %v2990 = vsub.f32 %v2798, %v2464
      %v2991 = vsub.f32 %v2799, %v2465
      %v2992 = vsub.f32 %v2800, %v2466
      %v2993 = vsub.f32 %v2801, %v2467
      %v2994 = vsub.f32 %v2802, %v2468
      %v2995 = vsub.f32 %v2803, %v2469
      %v2996 = vsub.f32 %v2804, %v2470
      %v2997 = vsub.f32 %v2805, %v2471
      %v2998 = vsub.f32 %v2806, %v2472
      %v2999 = vsub.f32 %v2807, %v2473
      %v3000 = vsub.f32 %v2808, %v2474
      %v3001 = vsub.f32 %v2809, %v2475
      %v3002 = vsub.f32 %v2810, %v2476
      %v3003 = vsub.f32 %v2811, %v2477
      %v3004 = vsub.f32 %v2812, %v2478
      %v3005 = vsub.f32 %v2813, %v2479
      %v3006 = vsub.f32 %v2814, %v2480
      %v3007 = vsub.f32 %v2815, %v2481
      %v3008 = vsub.f32 %v2816, %v2482
      %v3009 = vsub.f32 %v2817, %v2483
      %v3010 = vsub.f32 %v2818, %v2484
      %v3011 = vsub.f32 %v2819, %v2485
      %v3012 = vsub.f32 %v2820, %v2486
      %v3013 = vsub.f32 %v2821, %v2487
      %v3014 = vsub.f32 %v2822, %v2488
      %v3015 = vsub.f32 %v2823, %v2489
      %v3016 = vsub.f32 %v2824, %v2490
      %v3017 = vsub.f32 %v2825, %v2491
      %v3018 = vsub.f32 %v2826, %v2492
      %v3019 = vsub.f32 %v2827, %v2493
      %v3020 = vsub.f32 %v2828, %v2494
      %v3021 = vsub.f32 %v2829, %v2495
      %v3022 = vsub.f32 %v2830, %v2496
      %v3023 = vsub.f32 %v2831, %v2497
      %v3024 = vsub.f32 %v2832, %v2498
      %v3025 = vsub.f32 %v2833, %v2499
      %v3026 = vsub.f32 %v2834, %v2500
      %v3027 = vsub.f32 %v2835, %v2501
      %v3028 = vsub.f32 %v2836, %v2502
      %v3029 = vsub.f32 %v2837, %v2503
      %v3030 = vsub.f32 %v2838, %v2504
      %v3031 = vsub.f32 %v2839, %v2505
      %v3032 = vsub.f32 %v2840, %v2506
      %v3033 = vsub.f32 %v2841, %v2507
      %v3034 = vsub.f32 %v2842, %v2508
      %v3035 = vsub.f32 %v2843, %v2509
      %v3036 = vsub.f32 %v2844, %v2510
      %v3037 = vsub.f32 %v2845, %v2511
      %v3038 = vsub.f32 %v2846, %v2512
      %v3039 = vsub.f32 %v2847, %v2513
      %v3040 = vsub.f32 %v2848, %v2514
      %v3041 = vsub.f32 %v2849, %v2515
      %v3042 = vsub.f32 %v2850, %v2516
      %v3043 = vsub.f32 %v2851, %v2517
      %v3044 = vsub.f32 %v2852, %v2518
      %v3045 = vsub.f32 %v2853, %v2519
      %v3046 = vsub.f32 %v2854, %v2520
      %v3047 = vsub.f32 %v2855, %v2521
      %v3048 = vsub.f32 %v2856, %v2522
      %v3049 = vsub.f32 %v2857, %v2523
      %v3050 = vsub.f32 %v2858, %v2524
      %v3051 = vsub.f32 %v2859, %v2525
      %v3052 = vsub.f32 %v2860, %v2526
      %v3053 = vsub.f32 %v2861, %v2527
      %v3054 = vsub.f32 %v2862, %v2528
      %v3055 = vsub.f32 %v2863, %v2529
      %v3056 = vsub.f32 %v2864, %v2530
      %v3057 = vsub.f32 %v2865, %v2531
      %v3058 = vsub.f32 %v2866, %v2532
      %v3059 = vsub.f32 %v2867, %v2533
      %v3060 = vsub.f32 %v2868, %v2534
      %v3061 = vsub.f32 %v2869, %v2535
      %v3062 = vsub.f32 %v2870, %v2536
      %v3063 = vsub.f32 %v2871, %v2537
      %v3064 = vsub.f32 %v2872, %v2538
      %v3065 = vsub.f32 %v2873, %v2539
      %v3066 = vsub.f32 %v2874, %v2540
      %v3067 = vsub.f32 %v2875, %v2541
      %v3068 = vsub.f32 %v2876, %v2542
      %v3069 = vsub.f32 %v2877, %v2543
      %v3070 = vsub.f32 %v2878, %v2544
      %v3071 = vsub.f32 %v2879, %v2545
      %v3072 = vsub.f32 %v2880, %v2546
      %v3073 = vsub.f32 %v2881, %v2547
      %v3074 = vsub.f32 %v2882, %v2548
      %v3075 = vsub.f32 %v2883, %v2549
      %v3076 = vsub.f32 %v2884, %v2550
      %v3077 = vsub.f32 %v2885, %v2551
      %v3078 = vsub.f32 %v2886, %v2552
      %v3079 = vsub.f32 %v2887, %v2553
      %v3080 = vsub.f32 %v2888, %v2554
      %v3081 = vsub.f32 %v2889, %v2555
      %v3082 = vsub.f32 %v2890, %v2556
      %v3083 = vsub.f32 %v2891, %v2557
      %v3084 = vsub.f32 %v2892, %v2558
      %v3085 = vsub.f32 %v2893, %v2559
      %v3086 = vsub.f32 %v2894, %v2560
      %v3087 = vsub.f32 %v2895, %v2561
      %v3088 = vsub.f32 %v2896, %v2562
      %v3089 = vsub.f32 %v2897, %v2563
      %v3090 = vsub.f32 %v2898, %v2564
      %v3091 = vsub.f32 %v2899, %v2565
      %v3092 = vsub.f32 %v2900, %v2566
      %v3093 = vsub.f32 %v2901, %v2567
      %v3094 = vsub.f32 %v2902, %v2568
      %v3095 = vsub.f32 %v2903, %v2569
      %v3096 = vsub.f32 %v2904, %v2570
      %v3097 = vsub.f32 %v2905, %v2571
      %v3098 = vsub.f32 %v2906, %v2572
      %v3099 = vsub.f32 %v2907, %v2573
      %v3100 = vsub.f32 %v2908, %v2574
      %v3101 = vsub.f32 %v2909, %v2575
      %v3102 = vsub.f32 %v2910, %v2576
      %v3103 = vsub.f32 %v2911, %v2577
      %v3104 = vsub.f32 %v2912, %v2578
      %v3105 = vsub.f32 %v2913, %v2579
      %v3106 = vsub.f32 %v2914, %v2580
      %v3107 = vsub.f32 %v2915, %v2581
      %v3108 = vsub.f32 %v2916, %v2582
      %v3109 = vsub.f32 %v2917, %v2583
      %v3110 = vsub.f32 %v2918, %v2584
      %v3111 = vsub.f32 %v2919, %v2585
      %v3112 = vsub.f32 %v2920, %v2586
      %v3113 = vsub.f32 %v2921, %v2587
      %v3114 = vsub.f32 %v2922, %v2588
      %v3115 = vsub.f32 %v2923, %v2589
      %v3116 = vsub.f32 %v2924, %v2590
      %v3117 = vsub.f32 %v2925, %v2591
      %v3118 = vsub.f32 %v2926, %v2592
      %v3119 = vsub.f32 %v2927, %v2593
      %v3120 = vsub.f32 %v2928, %v2594
      %v3121 = vsub.f32 %v2929, %v2595
      %v3122 = vsub.f32 %v2930, %v2596
      %v3123 = vsub.f32 %v2931, %v2597
      %v3124 = vsub.f32 %v2932, %v2598
      %v3125 = vmax.f32 %v2933, 1e-06
      %v3126 = vmax.f32 %v2934, 1e-06
      %v3127 = vmax.f32 %v2935, 1e-06
      %v3128 = vmax.f32 %v2936, 1e-06
      %v3129 = vmax.f32 %v2937, 1e-06
      %v3130 = vmax.f32 %v2938, 1e-06
      %v3131 = vmax.f32 %v2939, 1e-06
      %v3132 = vmax.f32 %v2940, 1e-06
      %v3133 = vmax.f32 %v2941, 1e-06
      %v3134 = vmax.f32 %v2942, 1e-06
      %v3135 = vmax.f32 %v2943, 1e-06
      %v3136 = vmax.f32 %v2944, 1e-06
      %v3137 = vmax.f32 %v2945, 1e-06
      %v3138 = vmax.f32 %v2946, 1e-06
      %v3139 = vmax.f32 %v2947, 1e-06
      %v3140 = vmax.f32 %v2948, 1e-06
      %v3141 = vmax.f32 %v2949, 1e-06
      %v3142 = vmax.f32 %v2950, 1e-06
      %v3143 = vmax.f32 %v2951, 1e-06
      %v3144 = vmax.f32 %v2952, 1e-06
      %v3145 = vmax.f32 %v2953, 1e-06
      %v3146 = vmax.f32 %v2954, 1e-06
      %v3147 = vmax.f32 %v2955, 1e-06
      %v3148 = vmax.f32 %v2956, 1e-06
      %v3149 = vmax.f32 %v2957, 1e-06
      %v3150 = vmax.f32 %v2958, 1e-06
      %v3151 = vmax.f32 %v2959, 1e-06
      %v3152 = vmax.f32 %v2960, 1e-06
      %v3153 = vmax.f32 %v2961, 1e-06
      %v3154 = vmax.f32 %v2962, 1e-06
      %v3155 = vmax.f32 %v2963, 1e-06
      %v3156 = vmax.f32 %v2964, 1e-06
      %v3157 = vmax.f32 %v2965, 1e-06
      %v3158 = vmax.f32 %v2966, 1e-06
      %v3159 = vmax.f32 %v2967, 1e-06
      %v3160 = vmax.f32 %v2968, 1e-06
      %v3161 = vmax.f32 %v2969, 1e-06
      %v3162 = vmax.f32 %v2970, 1e-06
      %v3163 = vmax.f32 %v2971, 1e-06
      %v3164 = vmax.f32 %v2972, 1e-06
      %v3165 = vmax.f32 %v2973, 1e-06
      %v3166 = vmax.f32 %v2974, 1e-06
      %v3167 = vmax.f32 %v2975, 1e-06
      %v3168 = vmax.f32 %v2976, 1e-06
      %v3169 = vmax.f32 %v2977, 1e-06
      %v3170 = vmax.f32 %v2978, 1e-06
      %v3171 = vmax.f32 %v2979, 1e-06
      %v3172 = vmax.f32 %v2980, 1e-06
      %v3173 = vmax.f32 %v2981, 1e-06
      %v3174 = vmax.f32 %v2982, 1e-06
      %v3175 = vmax.f32 %v2983, 1e-06
      %v3176 = vmax.f32 %v2984, 1e-06
      %v3177 = vmax.f32 %v2985, 1e-06
      %v3178 = vmax.f32 %v2986, 1e-06
      %v3179 = vmax.f32 %v2987, 1e-06
      %v3180 = vmax.f32 %v2988, 1e-06
      %v3181 = vmax.f32 %v2989, 1e-06
      %v3182 = vmax.f32 %v2990, 1e-06
      %v3183 = vmax.f32 %v2991, 1e-06
      %v3184 = vmax.f32 %v2992, 1e-06
      %v3185 = vmax.f32 %v2993, 1e-06
      %v3186 = vmax.f32 %v2994, 1e-06
      %v3187 = vmax.f32 %v2995, 1e-06
      %v3188 = vmax.f32 %v2996, 1e-06
      %v3189 = vmax.f32 %v2997, 1e-06
      %v3190 = vmax.f32 %v2998, 1e-06
      %v3191 = vmax.f32 %v2999, 1e-06
      %v3192 = vmax.f32 %v3000, 1e-06
      %v3193 = vmax.f32 %v3001, 1e-06
      %v3194 = vmax.f32 %v3002, 1e-06
      %v3195 = vmax.f32 %v3003, 1e-06
      %v3196 = vmax.f32 %v3004, 1e-06
      %v3197 = vmax.f32 %v3005, 1e-06
      %v3198 = vmax.f32 %v3006, 1e-06
      %v3199 = vmax.f32 %v3007, 1e-06
      %v3200 = vmax.f32 %v3008, 1e-06
      %v3201 = vmax.f32 %v3009, 1e-06
      %v3202 = vmax.f32 %v3010, 1e-06
      %v3203 = vmax.f32 %v3011, 1e-06
      %v3204 = vmax.f32 %v3012, 1e-06
      %v3205 = vmax.f32 %v3013, 1e-06
      %v3206 = vmax.f32 %v3014, 1e-06
      %v3207 = vmax.f32 %v3015, 1e-06
      %v3208 = vmax.f32 %v3016, 1e-06
      %v3209 = vmax.f32 %v3017, 1e-06
      %v3210 = vmax.f32 %v3018, 1e-06
      %v3211 = vmax.f32 %v3019, 1e-06
      %v3212 = vmax.f32 %v3020, 1e-06
      %v3213 = vmax.f32 %v3021, 1e-06
      %v3214 = vmax.f32 %v3022, 1e-06
      %v3215 = vmax.f32 %v3023, 1e-06
      %v3216 = vmax.f32 %v3024, 1e-06
      %v3217 = vmax.f32 %v3025, 1e-06
      %v3218 = vmax.f32 %v3026, 1e-06
      %v3219 = vmax.f32 %v3027, 1e-06
      %v3220 = vmax.f32 %v3028, 1e-06
      %v3221 = vmax.f32 %v3029, 1e-06
      %v3222 = vmax.f32 %v3030, 1e-06
      %v3223 = vmax.f32 %v3031, 1e-06
      %v3224 = vmax.f32 %v3032, 1e-06
      %v3225 = vmax.f32 %v3033, 1e-06
      %v3226 = vmax.f32 %v3034, 1e-06
      %v3227 = vmax.f32 %v3035, 1e-06
      %v3228 = vmax.f32 %v3036, 1e-06
      %v3229 = vmax.f32 %v3037, 1e-06
      %v3230 = vmax.f32 %v3038, 1e-06
      %v3231 = vmax.f32 %v3039, 1e-06
      %v3232 = vmax.f32 %v3040, 1e-06
      %v3233 = vmax.f32 %v3041, 1e-06
      %v3234 = vmax.f32 %v3042, 1e-06
      %v3235 = vmax.f32 %v3043, 1e-06
      %v3236 = vmax.f32 %v3044, 1e-06
      %v3237 = vmax.f32 %v3045, 1e-06
      %v3238 = vmax.f32 %v3046, 1e-06
      %v3239 = vmax.f32 %v3047, 1e-06
      %v3240 = vmax.f32 %v3048, 1e-06
      %v3241 = vmax.f32 %v3049, 1e-06
      %v3242 = vmax.f32 %v3050, 1e-06
      %v3243 = vmax.f32 %v3051, 1e-06
      %v3244 = vmax.f32 %v3052, 1e-06
      %v3245 = vmax.f32 %v3053, 1e-06
      %v3246 = vmax.f32 %v3054, 1e-06
      %v3247 = vmax.f32 %v3055, 1e-06
      %v3248 = vmax.f32 %v3056, 1e-06
      %v3249 = vmax.f32 %v3057, 1e-06
      %v3250 = vmax.f32 %v3058, 1e-06
      %v3251 = vmax.f32 %v3059, 1e-06
      %v3252 = vmax.f32 %v3060, 1e-06
      %v3253 = vmax.f32 %v3061, 1e-06
      %v3254 = vmax.f32 %v3062, 1e-06
      %v3255 = vmax.f32 %v3063, 1e-06
      %v3256 = vmax.f32 %v3064, 1e-06
      %v3257 = vmax.f32 %v3065, 1e-06
      %v3258 = vmax.f32 %v3066, 1e-06
      %v3259 = vmax.f32 %v3067, 1e-06
      %v3260 = vmax.f32 %v3068, 1e-06
      %v3261 = vmax.f32 %v3069, 1e-06
      %v3262 = vmax.f32 %v3070, 1e-06
      %v3263 = vmax.f32 %v3071, 1e-06
      %v3264 = vmax.f32 %v3072, 1e-06
      %v3265 = vmax.f32 %v3073, 1e-06
      %v3266 = vmax.f32 %v3074, 1e-06
      %v3267 = vmax.f32 %v3075, 1e-06
      %v3268 = vmax.f32 %v3076, 1e-06
      %v3269 = vmax.f32 %v3077, 1e-06
      %v3270 = vmax.f32 %v3078, 1e-06
      %v3271 = vmax.f32 %v3079, 1e-06
      %v3272 = vmax.f32 %v3080, 1e-06
      %v3273 = vmax.f32 %v3081, 1e-06
      %v3274 = vmax.f32 %v3082, 1e-06
      %v3275 = vmax.f32 %v3083, 1e-06
      %v3276 = vmax.f32 %v3084, 1e-06
      %v3277 = vmax.f32 %v3085, 1e-06
      %v3278 = vmax.f32 %v3086, 1e-06
      %v3279 = vmax.f32 %v3087, 1e-06
      %v3280 = vmax.f32 %v3088, 1e-06
      %v3281 = vmax.f32 %v3089, 1e-06
      %v3282 = vmax.f32 %v3090, 1e-06
      %v3283 = vmax.f32 %v3091, 1e-06
      %v3284 = vmax.f32 %v3092, 1e-06
      %v3285 = vmax.f32 %v3093, 1e-06
      %v3286 = vmax.f32 %v3094, 1e-06
      %v3287 = vmax.f32 %v3095, 1e-06
      %v3288 = vmax.f32 %v3096, 1e-06
      %v3289 = vmax.f32 %v3097, 1e-06
      %v3290 = vmax.f32 %v3098, 1e-06
      %v3291 = vmax.f32 %v3099, 1e-06
      %v3292 = vmax.f32 %v3100, 1e-06
      %v3293 = vmax.f32 %v3101, 1e-06
      %v3294 = vmax.f32 %v3102, 1e-06
      %v3295 = vmax.f32 %v3103, 1e-06
      %v3296 = vmax.f32 %v3104, 1e-06
      %v3297 = vmax.f32 %v3105, 1e-06
      %v3298 = vmax.f32 %v3106, 1e-06
      %v3299 = vmax.f32 %v3107, 1e-06
      %v3300 = vmax.f32 %v3108, 1e-06
      %v3301 = vmax.f32 %v3109, 1e-06
      %v3302 = vmax.f32 %v3110, 1e-06
      %v3303 = vmax.f32 %v3111, 1e-06
      %v3304 = vmax.f32 %v3112, 1e-06
      %v3305 = vmax.f32 %v3113, 1e-06
      %v3306 = vmax.f32 %v3114, 1e-06
      %v3307 = vmax.f32 %v3115, 1e-06
      %v3308 = vmax.f32 %v3116, 1e-06
      %v3309 = vmax.f32 %v3117, 1e-06
      %v3310 = vmax.f32 %v3118, 1e-06
      %v3311 = vmax.f32 %v3119, 1e-06
      %v3312 = vmax.f32 %v3120, 1e-06
      %v3313 = vmax.f32 %v3121, 1e-06
      %v3314 = vmax.f32 %v3122, 1e-06
      %v3315 = vmax.f32 %v3123, 1e-06
      %v3316 = vmax.f32 %v3124, 1e-06
      %v3317 = vrcp.pop %v3125
      %v3318 = vrcp.pop %v3126
      %v3319 = vrcp.pop %v3127
      %v3320 = vrcp.pop %v3128
      %v3321 = vrcp.pop %v3129
      %v3322 = vrcp.pop %v3130
      %v3323 = vrcp.pop %v3131
      %v3324 = vrcp.pop %v3132
      %v3325 = vrcp.pop %v3133
      %v3326 = vrcp.pop %v3134
      %v3327 = vrcp.pop %v3135
      %v3328 = vrcp.pop %v3136
      %v3329 = vrcp.pop %v3137
      %v3330 = vrcp.pop %v3138
      %v3331 = vrcp.pop %v3139
      %v3332 = vrcp.pop %v3140
      %v3333 = vrcp.pop %v3141
      %v3334 = vrcp.pop %v3142
      %v3335 = vrcp.pop %v3143
      %v3336 = vrcp.pop %v3144
      %v3337 = vrcp.pop %v3145
      %v3338 = vrcp.pop %v3146
      %v3339 = vrcp.pop %v3147
      %v3340 = vrcp.pop %v3148
      %v3341 = vrcp.pop %v3149
      %v3342 = vrcp.pop %v3150
      %v3343 = vrcp.pop %v3151
      %v3344 = vrcp.pop %v3152
      %v3345 = vrcp.pop %v3153
      %v3346 = vrcp.pop %v3154
      %v3347 = vrcp.pop %v3155
      %v3348 = vrcp.pop %v3156
      %v3349 = vrcp.pop %v3157
      %v3350 = vrcp.pop %v3158
      %v3351 = vrcp.pop %v3159
      %v3352 = vrcp.pop %v3160
      %v3353 = vrcp.pop %v3161
      %v3354 = vrcp.pop %v3162
      %v3355 = vrcp.pop %v3163
      %v3356 = vrcp.pop %v3164
      %v3357 = vrcp.pop %v3165
      %v3358 = vrcp.pop %v3166
      %v3359 = vrcp.pop %v3167
      %v3360 = vrcp.pop %v3168
      %v3361 = vrcp.pop %v3169
      %v3362 = vrcp.pop %v3170
      %v3363 = vrcp.pop %v3171
      %v3364 = vrcp.pop %v3172
      %v3365 = vrcp.pop %v3173
      %v3366 = vrcp.pop %v3174
      %v3367 = vrcp.pop %v3175
      %v3368 = vrcp.pop %v3176
      %v3369 = vrcp.pop %v3177
      %v3370 = vrcp.pop %v3178
      %v3371 = vrcp.pop %v3179
      %v3372 = vrcp.pop %v3180
      %v3373 = vrcp.pop %v3181
      %v3374 = vrcp.pop %v3182
      %v3375 = vrcp.pop %v3183
      %v3376 = vrcp.pop %v3184
      %v3377 = vrcp.pop %v3185
      %v3378 = vrcp.pop %v3186
      %v3379 = vrcp.pop %v3187
      %v3380 = vrcp.pop %v3188
      %v3381 = vrcp.pop %v3189
      %v3382 = vrcp.pop %v3190
      %v3383 = vrcp.pop %v3191
      %v3384 = vrcp.pop %v3192
      %v3385 = vrcp.pop %v3193
      %v3386 = vrcp.pop %v3194
      %v3387 = vrcp.pop %v3195
      %v3388 = vrcp.pop %v3196
      %v3389 = vrcp.pop %v3197
      %v3390 = vrcp.pop %v3198
      %v3391 = vrcp.pop %v3199
      %v3392 = vrcp.pop %v3200
      %v3393 = vrcp.pop %v3201
      %v3394 = vrcp.pop %v3202
      %v3395 = vrcp.pop %v3203
      %v3396 = vrcp.pop %v3204
      %v3397 = vrcp.pop %v3205
      %v3398 = vrcp.pop %v3206
      %v3399 = vrcp.pop %v3207
      %v3400 = vrcp.pop %v3208
      %v3401 = vrcp.pop %v3209
      %v3402 = vrcp.pop %v3210
      %v3403 = vrcp.pop %v3211
      %v3404 = vrcp.pop %v3212
      %v3405 = vrcp.pop %v3213
      %v3406 = vrcp.pop %v3214
      %v3407 = vrcp.pop %v3215
      %v3408 = vrcp.pop %v3216
      %v3409 = vrcp.pop %v3217
      %v3410 = vrcp.pop %v3218
      %v3411 = vrcp.pop %v3219
      %v3412 = vrcp.pop %v3220
      %v3413 = vrcp.pop %v3221
      %v3414 = vrcp.pop %v3222
      %v3415 = vrcp.pop %v3223
      %v3416 = vrcp.pop %v3224
      %v3417 = vrcp.pop %v3225
      %v3418 = vrcp.pop %v3226
      %v3419 = vrcp.pop %v3227
      %v3420 = vrcp.pop %v3228
      %v3421 = vrcp.pop %v3229
      %v3422 = vrcp.pop %v3230
      %v3423 = vrcp.pop %v3231
      %v3424 = vrcp.pop %v3232
      %v3425 = vrcp.pop %v3233
      %v3426 = vrcp.pop %v3234
      %v3427 = vrcp.pop %v3235
      %v3428 = vrcp.pop %v3236
      %v3429 = vrcp.pop %v3237
      %v3430 = vrcp.pop %v3238
      %v3431 = vrcp.pop %v3239
      %v3432 = vrcp.pop %v3240
      %v3433 = vrcp.pop %v3241
      %v3434 = vrcp.pop %v3242
      %v3435 = vrcp.pop %v3243
      %v3436 = vrcp.pop %v3244
      %v3437 = vrcp.pop %v3245
      %v3438 = vrcp.pop %v3246
      %v3439 = vrcp.pop %v3247
      %v3440 = vrcp.pop %v3248
      %v3441 = vrcp.pop %v3249
      %v3442 = vrcp.pop %v3250
      %v3443 = vrcp.pop %v3251
      %v3444 = vrcp.pop %v3252
      %v3445 = vrcp.pop %v3253
      %v3446 = vrcp.pop %v3254
      %v3447 = vrcp.pop %v3255
      %v3448 = vrcp.pop %v3256
      %v3449 = vrcp.pop %v3257
      %v3450 = vrcp.pop %v3258
      %v3451 = vrcp.pop %v3259
      %v3452 = vrcp.pop %v3260
      %v3453 = vrcp.pop %v3261
      %v3454 = vrcp.pop %v3262
      %v3455 = vrcp.pop %v3263
      %v3456 = vrcp.pop %v3264
      %v3457 = vrcp.pop %v3265
      %v3458 = vrcp.pop %v3266
      %v3459 = vrcp.pop %v3267
      %v3460 = vrcp.pop %v3268
      %v3461 = vrcp.pop %v3269
      %v3462 = vrcp.pop %v3270
      %v3463 = vrcp.pop %v3271
      %v3464 = vrcp.pop %v3272
      %v3465 = vrcp.pop %v3273
      %v3466 = vrcp.pop %v3274
      %v3467 = vrcp.pop %v3275
      %v3468 = vrcp.pop %v3276
      %v3469 = vrcp.pop %v3277
      %v3470 = vrcp.pop %v3278
      %v3471 = vrcp.pop %v3279
      %v3472 = vrcp.pop %v3280
      %v3473 = vrcp.pop %v3281
      %v3474 = vrcp.pop %v3282
      %v3475 = vrcp.pop %v3283
      %v3476 = vrcp.pop %v3284
      %v3477 = vrcp.pop %v3285
      %v3478 = vrcp.pop %v3286
      %v3479 = vrcp.pop %v3287
      %v3480 = vrcp.pop %v3288
      %v3481 = vrcp.pop %v3289
      %v3482 = vrcp.pop %v3290
      %v3483 = vrcp.pop %v3291
      %v3484 = vrcp.pop %v3292
      %v3485 = vrcp.pop %v3293
      %v3486 = vrcp.pop %v3294
      %v3487 = vrcp.pop %v3295
      %v3488 = vrcp.pop %v3296
      %v3489 = vrcp.pop %v3297
      %v3490 = vrcp.pop %v3298
      %v3491 = vrcp.pop %v3299
      %v3492 = vrcp.pop %v3300
      %v3493 = vrcp.pop %v3301
      %v3494 = vrcp.pop %v3302
      %v3495 = vrcp.pop %v3303
      %v3496 = vrcp.pop %v3304
      %v3497 = vrcp.pop %v3305
      %v3498 = vrcp.pop %v3306
      %v3499 = vrcp.pop %v3307
      %v3500 = vrcp.pop %v3308
      %v3501 = vrcp.pop %v3309
      %v3502 = vrcp.pop %v3310
      %v3503 = vrcp.pop %v3311
      %v3504 = vrcp.pop %v3312
      %v3505 = vrcp.pop %v3313
      %v3506 = vrcp.pop %v3314
      %v3507 = vrcp.pop %v3315
      %v3508 = vrcp.pop %v3316
      %v3509 = vmul.f32 %v2407, %v3317
      %v3510 = vmul.f32 %v2408, %v3318
      %v3511 = vmul.f32 %v2409, %v3319
      %v3512 = vmul.f32 %v2410, %v3320
      %v3513 = vmul.f32 %v2411, %v3321
      %v3514 = vmul.f32 %v2412, %v3322
      %v3515 = vmul.f32 %v2413, %v3323
      %v3516 = vmul.f32 %v2414, %v3324
      %v3517 = vmul.f32 %v2415, %v3325
      %v3518 = vmul.f32 %v2416, %v3326
      %v3519 = vmul.f32 %v2417, %v3327
      %v3520 = vmul.f32 %v2418, %v3328
      %v3521 = vmul.f32 %v2419, %v3329
      %v3522 = vmul.f32 %v2420, %v3330
      %v3523 = vmul.f32 %v2421, %v3331
      %v3524 = vmul.f32 %v2422, %v3332
      %v3525 = vmul.f32 %v2423, %v3333
      %v3526 = vmul.f32 %v2424, %v3334
      %v3527 = vmul.f32 %v2425, %v3335
      %v3528 = vmul.f32 %v2426, %v3336
      %v3529 = vmul.f32 %v2427, %v3337
      %v3530 = vmul.f32 %v2428, %v3338
      %v3531 = vmul.f32 %v2429, %v3339
      %v3532 = vmul.f32 %v2430, %v3340
      %v3533 = vmul.f32 %v2431, %v3341
      %v3534 = vmul.f32 %v2432, %v3342
      %v3535 = vmul.f32 %v2433, %v3343
      %v3536 = vmul.f32 %v2434, %v3344
      %v3537 = vmul.f32 %v2435, %v3345
      %v3538 = vmul.f32 %v2436, %v3346
      %v3539 = vmul.f32 %v2437, %v3347
      %v3540 = vmul.f32 %v2438, %v3348
      %v3541 = vmul.f32 %v2439, %v3349
      %v3542 = vmul.f32 %v2440, %v3350
      %v3543 = vmul.f32 %v2441, %v3351
      %v3544 = vmul.f32 %v2442, %v3352
      %v3545 = vmul.f32 %v2443, %v3353
      %v3546 = vmul.f32 %v2444, %v3354
      %v3547 = vmul.f32 %v2445, %v3355
      %v3548 = vmul.f32 %v2446, %v3356
      %v3549 = vmul.f32 %v2447, %v3357
      %v3550 = vmul.f32 %v2448, %v3358
      %v3551 = vmul.f32 %v2449, %v3359
      %v3552 = vmul.f32 %v2450, %v3360
      %v3553 = vmul.f32 %v2451, %v3361
      %v3554 = vmul.f32 %v2452, %v3362
      %v3555 = vmul.f32 %v2453, %v3363
      %v3556 = vmul.f32 %v2454, %v3364
      %v3557 = vmul.f32 %v2455, %v3365
      %v3558 = vmul.f32 %v2456, %v3366
      %v3559 = vmul.f32 %v2457, %v3367
      %v3560 = vmul.f32 %v2458, %v3368
      %v3561 = vmul.f32 %v2459, %v3369
      %v3562 = vmul.f32 %v2460, %v3370
      %v3563 = vmul.f32 %v2461, %v3371
      %v3564 = vmul.f32 %v2462, %v3372
      %v3565 = vmul.f32 %v2463, %v3373
      %v3566 = vmul.f32 %v2464, %v3374
      %v3567 = vmul.f32 %v2465, %v3375
      %v3568 = vmul.f32 %v2466, %v3376
      %v3569 = vmul.f32 %v2467, %v3377
      %v3570 = vmul.f32 %v2468, %v3378
      %v3571 = vmul.f32 %v2469, %v3379
      %v3572 = vmul.f32 %v2470, %v3380
      %v3573 = vmul.f32 %v2471, %v3381
      %v3574 = vmul.f32 %v2472, %v3382
      %v3575 = vmul.f32 %v2473, %v3383
      %v3576 = vmul.f32 %v2474, %v3384
      %v3577 = vmul.f32 %v2475, %v3385
      %v3578 = vmul.f32 %v2476, %v3386
      %v3579 = vmul.f32 %v2477, %v3387
      %v3580 = vmul.f32 %v2478, %v3388
      %v3581 = vmul.f32 %v2479, %v3389
      %v3582 = vmul.f32 %v2480, %v3390
      %v3583 = vmul.f32 %v2481, %v3391
      %v3584 = vmul.f32 %v2482, %v3392
      %v3585 = vmul.f32 %v2483, %v3393
      %v3586 = vmul.f32 %v2484, %v3394
      %v3587 = vmul.f32 %v2485, %v3395
      %v3588 = vmul.f32 %v2486, %v3396
      %v3589 = vmul.f32 %v2487, %v3397
      %v3590 = vmul.f32 %v2488, %v3398
      %v3591 = vmul.f32 %v2489, %v3399
      %v3592 = vmul.f32 %v2490, %v3400
      %v3593 = vmul.f32 %v2491, %v3401
      %v3594 = vmul.f32 %v2492, %v3402
      %v3595 = vmul.f32 %v2493, %v3403
      %v3596 = vmul.f32 %v2494, %v3404
      %v3597 = vmul.f32 %v2495, %v3405
      %v3598 = vmul.f32 %v2496, %v3406
      %v3599 = vmul.f32 %v2497, %v3407
      %v3600 = vmul.f32 %v2498, %v3408
      %v3601 = vmul.f32 %v2499, %v3409
      %v3602 = vmul.f32 %v2500, %v3410
      %v3603 = vmul.f32 %v2501, %v3411
      %v3604 = vmul.f32 %v2502, %v3412
      %v3605 = vmul.f32 %v2503, %v3413
      %v3606 = vmul.f32 %v2504, %v3414
      %v3607 = vmul.f32 %v2505, %v3415
      %v3608 = vmul.f32 %v2506, %v3416
      %v3609 = vmul.f32 %v2507, %v3417
      %v3610 = vmul.f32 %v2508, %v3418
      %v3611 = vmul.f32 %v2509, %v3419
      %v3612 = vmul.f32 %v2510, %v3420
      %v3613 = vmul.f32 %v2511, %v3421
      %v3614 = vmul.f32 %v2512, %v3422
      %v3615 = vmul.f32 %v2513, %v3423
      %v3616 = vmul.f32 %v2514, %v3424
      %v3617 = vmul.f32 %v2515, %v3425
      %v3618 = vmul.f32 %v2516, %v3426
      %v3619 = vmul.f32 %v2517, %v3427
      %v3620 = vmul.f32 %v2518, %v3428
      %v3621 = vmul.f32 %v2519, %v3429
      %v3622 = vmul.f32 %v2520, %v3430
      %v3623 = vmul.f32 %v2521, %v3431
      %v3624 = vmul.f32 %v2522, %v3432
      %v3625 = vmul.f32 %v2523, %v3433
      %v3626 = vmul.f32 %v2524, %v3434
      %v3627 = vmul.f32 %v2525, %v3435
      %v3628 = vmul.f32 %v2526, %v3436
      %v3629 = vmul.f32 %v2527, %v3437
      %v3630 = vmul.f32 %v2528, %v3438
      %v3631 = vmul.f32 %v2529, %v3439
      %v3632 = vmul.f32 %v2530, %v3440
      %v3633 = vmul.f32 %v2531, %v3441
      %v3634 = vmul.f32 %v2532, %v3442
      %v3635 = vmul.f32 %v2533, %v3443
      %v3636 = vmul.f32 %v2534, %v3444
      %v3637 = vmul.f32 %v2535, %v3445
      %v3638 = vmul.f32 %v2536, %v3446
      %v3639 = vmul.f32 %v2537, %v3447
      %v3640 = vmul.f32 %v2538, %v3448
      %v3641 = vmul.f32 %v2539, %v3449
      %v3642 = vmul.f32 %v2540, %v3450
      %v3643 = vmul.f32 %v2541, %v3451
      %v3644 = vmul.f32 %v2542, %v3452
      %v3645 = vmul.f32 %v2543, %v3453
      %v3646 = vmul.f32 %v2544, %v3454
      %v3647 = vmul.f32 %v2545, %v3455
      %v3648 = vmul.f32 %v2546, %v3456
      %v3649 = vmul.f32 %v2547, %v3457
      %v3650 = vmul.f32 %v2548, %v3458
      %v3651 = vmul.f32 %v2549, %v3459
      %v3652 = vmul.f32 %v2550, %v3460
      %v3653 = vmul.f32 %v2551, %v3461
      %v3654 = vmul.f32 %v2552, %v3462
      %v3655 = vmul.f32 %v2553, %v3463
      %v3656 = vmul.f32 %v2554, %v3464
      %v3657 = vmul.f32 %v2555, %v3465
      %v3658 = vmul.f32 %v2556, %v3466
      %v3659 = vmul.f32 %v2557, %v3467
      %v3660 = vmul.f32 %v2558, %v3468
      %v3661 = vmul.f32 %v2559, %v3469
      %v3662 = vmul.f32 %v2560, %v3470
      %v3663 = vmul.f32 %v2561, %v3471
      %v3664 = vmul.f32 %v2562, %v3472
      %v3665 = vmul.f32 %v2563, %v3473
      %v3666 = vmul.f32 %v2564, %v3474
      %v3667 = vmul.f32 %v2565, %v3475
      %v3668 = vmul.f32 %v2566, %v3476
      %v3669 = vmul.f32 %v2567, %v3477
      %v3670 = vmul.f32 %v2568, %v3478
      %v3671 = vmul.f32 %v2569, %v3479
      %v3672 = vmul.f32 %v2570, %v3480
      %v3673 = vmul.f32 %v2571, %v3481
      %v3674 = vmul.f32 %v2572, %v3482
      %v3675 = vmul.f32 %v2573, %v3483
      %v3676 = vmul.f32 %v2574, %v3484
      %v3677 = vmul.f32 %v2575, %v3485
      %v3678 = vmul.f32 %v2576, %v3486
      %v3679 = vmul.f32 %v2577, %v3487
      %v3680 = vmul.f32 %v2578, %v3488
      %v3681 = vmul.f32 %v2579, %v3489
      %v3682 = vmul.f32 %v2580, %v3490
      %v3683 = vmul.f32 %v2581, %v3491
      %v3684 = vmul.f32 %v2582, %v3492
      %v3685 = vmul.f32 %v2583, %v3493
      %v3686 = vmul.f32 %v2584, %v3494
      %v3687 = vmul.f32 %v2585, %v3495
      %v3688 = vmul.f32 %v2586, %v3496
      %v3689 = vmul.f32 %v2587, %v3497
      %v3690 = vmul.f32 %v2588, %v3498
      %v3691 = vmul.f32 %v2589, %v3499
      %v3692 = vmul.f32 %v2590, %v3500
      %v3693 = vmul.f32 %v2591, %v3501
      %v3694 = vmul.f32 %v2592, %v3502
      %v3695 = vmul.f32 %v2593, %v3503
      %v3696 = vmul.f32 %v2594, %v3504
      %v3697 = vmul.f32 %v2595, %v3505
      %v3698 = vmul.f32 %v2596, %v3506
      %v3699 = vmul.f32 %v2597, %v3507
      %v3700 = vmul.f32 %v2598, %v3508
      %v3701 = vlaneseq
      %v3702 = vand.u32 %v3701, 127
      %v3703 = vadd.s32 %v3702, 128
      %v3704 = vadd.s32 %v3702, 256
      %v3705 = vadd.s32 %v3702, 384
      %v3706 = vadd.s32 %v3702, 512
      %v3707 = vadd.s32 %v3702, 640
      %v3708 = vadd.s32 %v3702, 768
      %v3709 = vadd.s32 %v3702, 896
      %v3710 = vadd.s32 %v3702, 1024
      %v3711 = vadd.s32 %v3702, 1152
      %v3712 = vadd.s32 %v3702, 1280
      %v3713 = vadd.s32 %v3702, 1408
      %v3714 = vlaneseq
      %v3715 = vshrl.u32 %v3714, 7
      %v3716 = vadd.s32 %v3715, 8
      %v3717 = vadd.s32 %v3715, 16
      %v3718 = vadd.s32 %v3715, 24
      %v3719 = vadd.s32 %v3715, 32
      %v3720 = vadd.s32 %v3715, 40
      %v3721 = vadd.s32 %v3715, 48
      %v3722 = vadd.s32 %v3715, 56
      %v3723 = vadd.s32 %v3715, 64
      %v3724 = vadd.s32 %v3715, 72
      %v3725 = vadd.s32 %v3715, 80
      %v3726 = vadd.s32 %v3715, 88
      %v3727 = vadd.s32 %v3715, 96
      %v3728 = vadd.s32 %v3715, 104
      %v3729 = vadd.s32 %v3715, 112
      %v3730 = vadd.s32 %v3715, 120
      %s3731 = smul.u32 %s14, 128
      %v3732 = vstv %s3731
      %v3733 = vadd.s32 %v3715, %v3732
      %v3734 = vadd.s32 %v3716, %v3732
      %v3735 = vadd.s32 %v3717, %v3732
      %v3736 = vadd.s32 %v3718, %v3732
      %v3737 = vadd.s32 %v3719, %v3732
      %v3738 = vadd.s32 %v3720, %v3732
      %v3739 = vadd.s32 %v3721, %v3732
      %v3740 = vadd.s32 %v3722, %v3732
      %v3741 = vadd.s32 %v3723, %v3732
      %v3742 = vadd.s32 %v3724, %v3732
      %v3743 = vadd.s32 %v3725, %v3732
      %v3744 = vadd.s32 %v3726, %v3732
      %v3745 = vadd.s32 %v3727, %v3732
      %v3746 = vadd.s32 %v3728, %v3732
      %v3747 = vadd.s32 %v3729, %v3732
      %v3748 = vadd.s32 %v3730, %v3732
      %vm3749 = vcmp.gt.f32.partialorder %v3509, 0.7
      %vm3750 = vcmp.gt.f32.partialorder %v3510, 0.7
      %vm3751 = vcmp.gt.f32.partialorder %v3511, 0.7
      %vm3752 = vcmp.gt.f32.partialorder %v3512, 0.7
      %vm3753 = vcmp.gt.f32.partialorder %v3513, 0.7
      %vm3754 = vcmp.gt.f32.partialorder %v3514, 0.7
      %vm3755 = vcmp.gt.f32.partialorder %v3515, 0.7
      %vm3756 = vcmp.gt.f32.partialorder %v3516, 0.7
      %vm3757 = vcmp.gt.f32.partialorder %v3517, 0.7
      %vm3758 = vcmp.gt.f32.partialorder %v3518, 0.7
      %vm3759 = vcmp.gt.f32.partialorder %v3519, 0.7
      %vm3760 = vcmp.gt.f32.partialorder %v3520, 0.7
      %vm3761 = vcmp.gt.f32.partialorder %v3521, 0.7
      %vm3762 = vcmp.gt.f32.partialorder %v3522, 0.7
      %vm3763 = vcmp.gt.f32.partialorder %v3523, 0.7
      %vm3764 = vcmp.gt.f32.partialorder %v3524, 0.7
      %vm3765 = vcmp.gt.f32.partialorder %v3525, 0.7
      %vm3766 = vcmp.gt.f32.partialorder %v3526, 0.7
      %vm3767 = vcmp.gt.f32.partialorder %v3527, 0.7
      %vm3768 = vcmp.gt.f32.partialorder %v3528, 0.7
      %vm3769 = vcmp.gt.f32.partialorder %v3529, 0.7
      %vm3770 = vcmp.gt.f32.partialorder %v3530, 0.7
      %vm3771 = vcmp.gt.f32.partialorder %v3531, 0.7
      %vm3772 = vcmp.gt.f32.partialorder %v3532, 0.7
      %vm3773 = vcmp.gt.f32.partialorder %v3533, 0.7
      %vm3774 = vcmp.gt.f32.partialorder %v3534, 0.7
      %vm3775 = vcmp.gt.f32.partialorder %v3535, 0.7
      %vm3776 = vcmp.gt.f32.partialorder %v3536, 0.7
      %vm3777 = vcmp.gt.f32.partialorder %v3537, 0.7
      %vm3778 = vcmp.gt.f32.partialorder %v3538, 0.7
      %vm3779 = vcmp.gt.f32.partialorder %v3539, 0.7
      %vm3780 = vcmp.gt.f32.partialorder %v3540, 0.7
      %vm3781 = vcmp.gt.f32.partialorder %v3541, 0.7
      %vm3782 = vcmp.gt.f32.partialorder %v3542, 0.7
      %vm3783 = vcmp.gt.f32.partialorder %v3543, 0.7
      %vm3784 = vcmp.gt.f32.partialorder %v3544, 0.7
      %vm3785 = vcmp.gt.f32.partialorder %v3545, 0.7
      %vm3786 = vcmp.gt.f32.partialorder %v3546, 0.7
      %vm3787 = vcmp.gt.f32.partialorder %v3547, 0.7
      %vm3788 = vcmp.gt.f32.partialorder %v3548, 0.7
      %vm3789 = vcmp.gt.f32.partialorder %v3549, 0.7
      %vm3790 = vcmp.gt.f32.partialorder %v3550, 0.7
      %vm3791 = vcmp.gt.f32.partialorder %v3551, 0.7
      %vm3792 = vcmp.gt.f32.partialorder %v3552, 0.7
      %vm3793 = vcmp.gt.f32.partialorder %v3553, 0.7
      %vm3794 = vcmp.gt.f32.partialorder %v3554, 0.7
      %vm3795 = vcmp.gt.f32.partialorder %v3555, 0.7
      %vm3796 = vcmp.gt.f32.partialorder %v3556, 0.7
      %vm3797 = vcmp.gt.f32.partialorder %v3557, 0.7
      %vm3798 = vcmp.gt.f32.partialorder %v3558, 0.7
      %vm3799 = vcmp.gt.f32.partialorder %v3559, 0.7
      %vm3800 = vcmp.gt.f32.partialorder %v3560, 0.7
      %vm3801 = vcmp.gt.f32.partialorder %v3561, 0.7
      %vm3802 = vcmp.gt.f32.partialorder %v3562, 0.7
      %vm3803 = vcmp.gt.f32.partialorder %v3563, 0.7
      %vm3804 = vcmp.gt.f32.partialorder %v3564, 0.7
      %vm3805 = vcmp.gt.f32.partialorder %v3565, 0.7
      %vm3806 = vcmp.gt.f32.partialorder %v3566, 0.7
      %vm3807 = vcmp.gt.f32.partialorder %v3567, 0.7
      %vm3808 = vcmp.gt.f32.partialorder %v3568, 0.7
      %vm3809 = vcmp.gt.f32.partialorder %v3569, 0.7
      %vm3810 = vcmp.gt.f32.partialorder %v3570, 0.7
      %vm3811 = vcmp.gt.f32.partialorder %v3571, 0.7
      %vm3812 = vcmp.gt.f32.partialorder %v3572, 0.7
      %vm3813 = vcmp.gt.f32.partialorder %v3573, 0.7
      %vm3814 = vcmp.gt.f32.partialorder %v3574, 0.7
      %vm3815 = vcmp.gt.f32.partialorder %v3575, 0.7
      %vm3816 = vcmp.gt.f32.partialorder %v3576, 0.7
      %vm3817 = vcmp.gt.f32.partialorder %v3577, 0.7
      %vm3818 = vcmp.gt.f32.partialorder %v3578, 0.7
      %vm3819 = vcmp.gt.f32.partialorder %v3579, 0.7
      %vm3820 = vcmp.gt.f32.partialorder %v3580, 0.7
      %vm3821 = vcmp.gt.f32.partialorder %v3581, 0.7
      %vm3822 = vcmp.gt.f32.partialorder %v3582, 0.7
      %vm3823 = vcmp.gt.f32.partialorder %v3583, 0.7
      %vm3824 = vcmp.gt.f32.partialorder %v3584, 0.7
      %vm3825 = vcmp.gt.f32.partialorder %v3585, 0.7
      %vm3826 = vcmp.gt.f32.partialorder %v3586, 0.7
      %vm3827 = vcmp.gt.f32.partialorder %v3587, 0.7
      %vm3828 = vcmp.gt.f32.partialorder %v3588, 0.7
      %vm3829 = vcmp.gt.f32.partialorder %v3589, 0.7
      %vm3830 = vcmp.gt.f32.partialorder %v3590, 0.7
      %vm3831 = vcmp.gt.f32.partialorder %v3591, 0.7
      %vm3832 = vcmp.gt.f32.partialorder %v3592, 0.7
      %vm3833 = vcmp.gt.f32.partialorder %v3593, 0.7
      %vm3834 = vcmp.gt.f32.partialorder %v3594, 0.7
      %vm3835 = vcmp.gt.f32.partialorder %v3595, 0.7
      %vm3836 = vcmp.gt.f32.partialorder %v3596, 0.7
      %vm3837 = vcmp.gt.f32.partialorder %v3597, 0.7
      %vm3838 = vcmp.gt.f32.partialorder %v3598, 0.7
      %vm3839 = vcmp.gt.f32.partialorder %v3599, 0.7
      %vm3840 = vcmp.gt.f32.partialorder %v3600, 0.7
      %vm3841 = vcmp.gt.f32.partialorder %v3601, 0.7
      %vm3842 = vcmp.gt.f32.partialorder %v3602, 0.7
      %vm3843 = vcmp.gt.f32.partialorder %v3603, 0.7
      %vm3844 = vcmp.gt.f32.partialorder %v3604, 0.7
      %vm3845 = vcmp.gt.f32.partialorder %v3605, 0.7
      %vm3846 = vcmp.gt.f32.partialorder %v3606, 0.7
      %vm3847 = vcmp.gt.f32.partialorder %v3607, 0.7
      %vm3848 = vcmp.gt.f32.partialorder %v3608, 0.7
      %vm3849 = vcmp.gt.f32.partialorder %v3609, 0.7
      %vm3850 = vcmp.gt.f32.partialorder %v3610, 0.7
      %vm3851 = vcmp.gt.f32.partialorder %v3611, 0.7
      %vm3852 = vcmp.gt.f32.partialorder %v3612, 0.7
      %vm3853 = vcmp.gt.f32.partialorder %v3613, 0.7
      %vm3854 = vcmp.gt.f32.partialorder %v3614, 0.7
      %vm3855 = vcmp.gt.f32.partialorder %v3615, 0.7
      %vm3856 = vcmp.gt.f32.partialorder %v3616, 0.7
      %vm3857 = vcmp.gt.f32.partialorder %v3617, 0.7
      %vm3858 = vcmp.gt.f32.partialorder %v3618, 0.7
      %vm3859 = vcmp.gt.f32.partialorder %v3619, 0.7
      %vm3860 = vcmp.gt.f32.partialorder %v3620, 0.7
      %vm3861 = vcmp.gt.f32.partialorder %v3621, 0.7
      %vm3862 = vcmp.gt.f32.partialorder %v3622, 0.7
      %vm3863 = vcmp.gt.f32.partialorder %v3623, 0.7
      %vm3864 = vcmp.gt.f32.partialorder %v3624, 0.7
      %vm3865 = vcmp.gt.f32.partialorder %v3625, 0.7
      %vm3866 = vcmp.gt.f32.partialorder %v3626, 0.7
      %vm3867 = vcmp.gt.f32.partialorder %v3627, 0.7
      %vm3868 = vcmp.gt.f32.partialorder %v3628, 0.7
      %vm3869 = vcmp.gt.f32.partialorder %v3629, 0.7
      %vm3870 = vcmp.gt.f32.partialorder %v3630, 0.7
      %vm3871 = vcmp.gt.f32.partialorder %v3631, 0.7
      %vm3872 = vcmp.gt.f32.partialorder %v3632, 0.7
      %vm3873 = vcmp.gt.f32.partialorder %v3633, 0.7
      %vm3874 = vcmp.gt.f32.partialorder %v3634, 0.7
      %vm3875 = vcmp.gt.f32.partialorder %v3635, 0.7
      %vm3876 = vcmp.gt.f32.partialorder %v3636, 0.7
      %vm3877 = vcmp.gt.f32.partialorder %v3637, 0.7
      %vm3878 = vcmp.gt.f32.partialorder %v3638, 0.7
      %vm3879 = vcmp.gt.f32.partialorder %v3639, 0.7
      %vm3880 = vcmp.gt.f32.partialorder %v3640, 0.7
      %vm3881 = vcmp.gt.f32.partialorder %v3641, 0.7
      %vm3882 = vcmp.gt.f32.partialorder %v3642, 0.7
      %vm3883 = vcmp.gt.f32.partialorder %v3643, 0.7
      %vm3884 = vcmp.gt.f32.partialorder %v3644, 0.7
      %vm3885 = vcmp.gt.f32.partialorder %v3645, 0.7
      %vm3886 = vcmp.gt.f32.partialorder %v3646, 0.7
      %vm3887 = vcmp.gt.f32.partialorder %v3647, 0.7
      %vm3888 = vcmp.gt.f32.partialorder %v3648, 0.7
      %vm3889 = vcmp.gt.f32.partialorder %v3649, 0.7
      %vm3890 = vcmp.gt.f32.partialorder %v3650, 0.7
      %vm3891 = vcmp.gt.f32.partialorder %v3651, 0.7
      %vm3892 = vcmp.gt.f32.partialorder %v3652, 0.7
      %vm3893 = vcmp.gt.f32.partialorder %v3653, 0.7
      %vm3894 = vcmp.gt.f32.partialorder %v3654, 0.7
      %vm3895 = vcmp.gt.f32.partialorder %v3655, 0.7
      %vm3896 = vcmp.gt.f32.partialorder %v3656, 0.7
      %vm3897 = vcmp.gt.f32.partialorder %v3657, 0.7
      %vm3898 = vcmp.gt.f32.partialorder %v3658, 0.7
      %vm3899 = vcmp.gt.f32.partialorder %v3659, 0.7
      %vm3900 = vcmp.gt.f32.partialorder %v3660, 0.7
      %vm3901 = vcmp.gt.f32.partialorder %v3661, 0.7
      %vm3902 = vcmp.gt.f32.partialorder %v3662, 0.7
      %vm3903 = vcmp.gt.f32.partialorder %v3663, 0.7
      %vm3904 = vcmp.gt.f32.partialorder %v3664, 0.7
      %vm3905 = vcmp.gt.f32.partialorder %v3665, 0.7
      %vm3906 = vcmp.gt.f32.partialorder %v3666, 0.7
      %vm3907 = vcmp.gt.f32.partialorder %v3667, 0.7
      %vm3908 = vcmp.gt.f32.partialorder %v3668, 0.7
      %vm3909 = vcmp.gt.f32.partialorder %v3669, 0.7
      %vm3910 = vcmp.gt.f32.partialorder %v3670, 0.7
      %vm3911 = vcmp.gt.f32.partialorder %v3671, 0.7
      %vm3912 = vcmp.gt.f32.partialorder %v3672, 0.7
      %vm3913 = vcmp.gt.f32.partialorder %v3673, 0.7
      %vm3914 = vcmp.gt.f32.partialorder %v3674, 0.7
      %vm3915 = vcmp.gt.f32.partialorder %v3675, 0.7
      %vm3916 = vcmp.gt.f32.partialorder %v3676, 0.7
      %vm3917 = vcmp.gt.f32.partialorder %v3677, 0.7
      %vm3918 = vcmp.gt.f32.partialorder %v3678, 0.7
      %vm3919 = vcmp.gt.f32.partialorder %v3679, 0.7
      %vm3920 = vcmp.gt.f32.partialorder %v3680, 0.7
      %vm3921 = vcmp.gt.f32.partialorder %v3681, 0.7
      %vm3922 = vcmp.gt.f32.partialorder %v3682, 0.7
      %vm3923 = vcmp.gt.f32.partialorder %v3683, 0.7
      %vm3924 = vcmp.gt.f32.partialorder %v3684, 0.7
      %vm3925 = vcmp.gt.f32.partialorder %v3685, 0.7
      %vm3926 = vcmp.gt.f32.partialorder %v3686, 0.7
      %vm3927 = vcmp.gt.f32.partialorder %v3687, 0.7
      %vm3928 = vcmp.gt.f32.partialorder %v3688, 0.7
      %vm3929 = vcmp.gt.f32.partialorder %v3689, 0.7
      %vm3930 = vcmp.gt.f32.partialorder %v3690, 0.7
      %vm3931 = vcmp.gt.f32.partialorder %v3691, 0.7
      %vm3932 = vcmp.gt.f32.partialorder %v3692, 0.7
      %vm3933 = vcmp.gt.f32.partialorder %v3693, 0.7
      %vm3934 = vcmp.gt.f32.partialorder %v3694, 0.7
      %vm3935 = vcmp.gt.f32.partialorder %v3695, 0.7
      %vm3936 = vcmp.gt.f32.partialorder %v3696, 0.7
      %vm3937 = vcmp.gt.f32.partialorder %v3697, 0.7
      %vm3938 = vcmp.gt.f32.partialorder %v3698, 0.7
      %vm3939 = vcmp.gt.f32.partialorder %v3699, 0.7
      %vm3940 = vcmp.gt.f32.partialorder %v3700, 0.7
      %vm3941 = vcmp.lt.s32.totalorder %v3702, %v3733
      %vm3942 = vcmp.lt.s32.totalorder %v3703, %v3733
      %vm3943 = vcmp.lt.s32.totalorder %v3704, %v3733
      %vm3944 = vcmp.lt.s32.totalorder %v3705, %v3733
      %vm3945 = vcmp.lt.s32.totalorder %v3706, %v3733
      %vm3946 = vcmp.lt.s32.totalorder %v3707, %v3733
      %vm3947 = vcmp.lt.s32.totalorder %v3708, %v3733
      %vm3948 = vcmp.lt.s32.totalorder %v3709, %v3733
      %vm3949 = vcmp.lt.s32.totalorder %v3710, %v3733
      %vm3950 = vcmp.lt.s32.totalorder %v3711, %v3733
      %vm3951 = vcmp.lt.s32.totalorder %v3712, %v3733
      %vm3952 = vcmp.lt.s32.totalorder %v3713, %v3733
      %vm3953 = vcmp.lt.s32.totalorder %v3702, %v3734
      %vm3954 = vcmp.lt.s32.totalorder %v3703, %v3734
      %vm3955 = vcmp.lt.s32.totalorder %v3704, %v3734
      %vm3956 = vcmp.lt.s32.totalorder %v3705, %v3734
      %vm3957 = vcmp.lt.s32.totalorder %v3706, %v3734
      %vm3958 = vcmp.lt.s32.totalorder %v3707, %v3734
      %vm3959 = vcmp.lt.s32.totalorder %v3708, %v3734
      %vm3960 = vcmp.lt.s32.totalorder %v3709, %v3734
      %vm3961 = vcmp.lt.s32.totalorder %v3710, %v3734
      %vm3962 = vcmp.lt.s32.totalorder %v3711, %v3734
      %vm3963 = vcmp.lt.s32.totalorder %v3712, %v3734
      %vm3964 = vcmp.lt.s32.totalorder %v3713, %v3734
      %vm3965 = vcmp.lt.s32.totalorder %v3702, %v3735
      %vm3966 = vcmp.lt.s32.totalorder %v3703, %v3735
      %vm3967 = vcmp.lt.s32.totalorder %v3704, %v3735
      %vm3968 = vcmp.lt.s32.totalorder %v3705, %v3735
      %vm3969 = vcmp.lt.s32.totalorder %v3706, %v3735
      %vm3970 = vcmp.lt.s32.totalorder %v3707, %v3735
      %vm3971 = vcmp.lt.s32.totalorder %v3708, %v3735
      %vm3972 = vcmp.lt.s32.totalorder %v3709, %v3735
      %vm3973 = vcmp.lt.s32.totalorder %v3710, %v3735
      %vm3974 = vcmp.lt.s32.totalorder %v3711, %v3735
      %vm3975 = vcmp.lt.s32.totalorder %v3712, %v3735
      %vm3976 = vcmp.lt.s32.totalorder %v3713, %v3735
      %vm3977 = vcmp.lt.s32.totalorder %v3702, %v3736
      %vm3978 = vcmp.lt.s32.totalorder %v3703, %v3736
      %vm3979 = vcmp.lt.s32.totalorder %v3704, %v3736
      %vm3980 = vcmp.lt.s32.totalorder %v3705, %v3736
      %vm3981 = vcmp.lt.s32.totalorder %v3706, %v3736
      %vm3982 = vcmp.lt.s32.totalorder %v3707, %v3736
      %vm3983 = vcmp.lt.s32.totalorder %v3708, %v3736
      %vm3984 = vcmp.lt.s32.totalorder %v3709, %v3736
      %vm3985 = vcmp.lt.s32.totalorder %v3710, %v3736
      %vm3986 = vcmp.lt.s32.totalorder %v3711, %v3736
      %vm3987 = vcmp.lt.s32.totalorder %v3712, %v3736
      %vm3988 = vcmp.lt.s32.totalorder %v3713, %v3736
      %vm3989 = vcmp.lt.s32.totalorder %v3702, %v3737
      %vm3990 = vcmp.lt.s32.totalorder %v3703, %v3737
      %vm3991 = vcmp.lt.s32.totalorder %v3704, %v3737
      %vm3992 = vcmp.lt.s32.totalorder %v3705, %v3737
      %vm3993 = vcmp.lt.s32.totalorder %v3706, %v3737
      %vm3994 = vcmp.lt.s32.totalorder %v3707, %v3737
      %vm3995 = vcmp.lt.s32.totalorder %v3708, %v3737
      %vm3996 = vcmp.lt.s32.totalorder %v3709, %v3737
      %vm3997 = vcmp.lt.s32.totalorder %v3710, %v3737
      %vm3998 = vcmp.lt.s32.totalorder %v3711, %v3737
      %vm3999 = vcmp.lt.s32.totalorder %v3712, %v3737
      %vm4000 = vcmp.lt.s32.totalorder %v3713, %v3737
      %vm4001 = vcmp.lt.s32.totalorder %v3702, %v3738
      %vm4002 = vcmp.lt.s32.totalorder %v3703, %v3738
      %vm4003 = vcmp.lt.s32.totalorder %v3704, %v3738
      %vm4004 = vcmp.lt.s32.totalorder %v3705, %v3738
      %vm4005 = vcmp.lt.s32.totalorder %v3706, %v3738
      %vm4006 = vcmp.lt.s32.totalorder %v3707, %v3738
      %vm4007 = vcmp.lt.s32.totalorder %v3708, %v3738
      %vm4008 = vcmp.lt.s32.totalorder %v3709, %v3738
      %vm4009 = vcmp.lt.s32.totalorder %v3710, %v3738
      %vm4010 = vcmp.lt.s32.totalorder %v3711, %v3738
      %vm4011 = vcmp.lt.s32.totalorder %v3712, %v3738
      %vm4012 = vcmp.lt.s32.totalorder %v3713, %v3738
      %vm4013 = vcmp.lt.s32.totalorder %v3702, %v3739
      %vm4014 = vcmp.lt.s32.totalorder %v3703, %v3739
      %vm4015 = vcmp.lt.s32.totalorder %v3704, %v3739
      %vm4016 = vcmp.lt.s32.totalorder %v3705, %v3739
      %vm4017 = vcmp.lt.s32.totalorder %v3706, %v3739
      %vm4018 = vcmp.lt.s32.totalorder %v3707, %v3739
      %vm4019 = vcmp.lt.s32.totalorder %v3708, %v3739
      %vm4020 = vcmp.lt.s32.totalorder %v3709, %v3739
      %vm4021 = vcmp.lt.s32.totalorder %v3710, %v3739
      %vm4022 = vcmp.lt.s32.totalorder %v3711, %v3739
      %vm4023 = vcmp.lt.s32.totalorder %v3712, %v3739
      %vm4024 = vcmp.lt.s32.totalorder %v3713, %v3739
      %vm4025 = vcmp.lt.s32.totalorder %v3702, %v3740
      %vm4026 = vcmp.lt.s32.totalorder %v3703, %v3740
      %vm4027 = vcmp.lt.s32.totalorder %v3704, %v3740
      %vm4028 = vcmp.lt.s32.totalorder %v3705, %v3740
      %vm4029 = vcmp.lt.s32.totalorder %v3706, %v3740
      %vm4030 = vcmp.lt.s32.totalorder %v3707, %v3740
      %vm4031 = vcmp.lt.s32.totalorder %v3708, %v3740
      %vm4032 = vcmp.lt.s32.totalorder %v3709, %v3740
      %vm4033 = vcmp.lt.s32.totalorder %v3710, %v3740
      %vm4034 = vcmp.lt.s32.totalorder %v3711, %v3740
      %vm4035 = vcmp.lt.s32.totalorder %v3712, %v3740
      %vm4036 = vcmp.lt.s32.totalorder %v3713, %v3740
      %vm4037 = vcmp.lt.s32.totalorder %v3702, %v3741
      %vm4038 = vcmp.lt.s32.totalorder %v3703, %v3741
      %vm4039 = vcmp.lt.s32.totalorder %v3704, %v3741
      %vm4040 = vcmp.lt.s32.totalorder %v3705, %v3741
      %vm4041 = vcmp.lt.s32.totalorder %v3706, %v3741
      %vm4042 = vcmp.lt.s32.totalorder %v3707, %v3741
      %vm4043 = vcmp.lt.s32.totalorder %v3708, %v3741
      %vm4044 = vcmp.lt.s32.totalorder %v3709, %v3741
      %vm4045 = vcmp.lt.s32.totalorder %v3710, %v3741
      %vm4046 = vcmp.lt.s32.totalorder %v3711, %v3741
      %vm4047 = vcmp.lt.s32.totalorder %v3712, %v3741
      %vm4048 = vcmp.lt.s32.totalorder %v3713, %v3741
      %vm4049 = vcmp.lt.s32.totalorder %v3702, %v3742
      %vm4050 = vcmp.lt.s32.totalorder %v3703, %v3742
      %vm4051 = vcmp.lt.s32.totalorder %v3704, %v3742
      %vm4052 = vcmp.lt.s32.totalorder %v3705, %v3742
      %vm4053 = vcmp.lt.s32.totalorder %v3706, %v3742
      %vm4054 = vcmp.lt.s32.totalorder %v3707, %v3742
      %vm4055 = vcmp.lt.s32.totalorder %v3708, %v3742
      %vm4056 = vcmp.lt.s32.totalorder %v3709, %v3742
      %vm4057 = vcmp.lt.s32.totalorder %v3710, %v3742
      %vm4058 = vcmp.lt.s32.totalorder %v3711, %v3742
      %vm4059 = vcmp.lt.s32.totalorder %v3712, %v3742
      %vm4060 = vcmp.lt.s32.totalorder %v3713, %v3742
      %vm4061 = vcmp.lt.s32.totalorder %v3702, %v3743
      %vm4062 = vcmp.lt.s32.totalorder %v3703, %v3743
      %vm4063 = vcmp.lt.s32.totalorder %v3704, %v3743
      %vm4064 = vcmp.lt.s32.totalorder %v3705, %v3743
      %vm4065 = vcmp.lt.s32.totalorder %v3706, %v3743
      %vm4066 = vcmp.lt.s32.totalorder %v3707, %v3743
      %vm4067 = vcmp.lt.s32.totalorder %v3708, %v3743
      %vm4068 = vcmp.lt.s32.totalorder %v3709, %v3743
      %vm4069 = vcmp.lt.s32.totalorder %v3710, %v3743
      %vm4070 = vcmp.lt.s32.totalorder %v3711, %v3743
      %vm4071 = vcmp.lt.s32.totalorder %v3712, %v3743
      %vm4072 = vcmp.lt.s32.totalorder %v3713, %v3743
      %vm4073 = vcmp.lt.s32.totalorder %v3702, %v3744
      %vm4074 = vcmp.lt.s32.totalorder %v3703, %v3744
      %vm4075 = vcmp.lt.s32.totalorder %v3704, %v3744
      %vm4076 = vcmp.lt.s32.totalorder %v3705, %v3744
      %vm4077 = vcmp.lt.s32.totalorder %v3706, %v3744
      %vm4078 = vcmp.lt.s32.totalorder %v3707, %v3744
      %vm4079 = vcmp.lt.s32.totalorder %v3708, %v3744
      %vm4080 = vcmp.lt.s32.totalorder %v3709, %v3744
      %vm4081 = vcmp.lt.s32.totalorder %v3710, %v3744
      %vm4082 = vcmp.lt.s32.totalorder %v3711, %v3744
      %vm4083 = vcmp.lt.s32.totalorder %v3712, %v3744
      %vm4084 = vcmp.lt.s32.totalorder %v3713, %v3744
      %vm4085 = vcmp.lt.s32.totalorder %v3702, %v3745
      %vm4086 = vcmp.lt.s32.totalorder %v3703, %v3745
      %vm4087 = vcmp.lt.s32.totalorder %v3704, %v3745
      %vm4088 = vcmp.lt.s32.totalorder %v3705, %v3745
      %vm4089 = vcmp.lt.s32.totalorder %v3706, %v3745
      %vm4090 = vcmp.lt.s32.totalorder %v3707, %v3745
      %vm4091 = vcmp.lt.s32.totalorder %v3708, %v3745
      %vm4092 = vcmp.lt.s32.totalorder %v3709, %v3745
      %vm4093 = vcmp.lt.s32.totalorder %v3710, %v3745
      %vm4094 = vcmp.lt.s32.totalorder %v3711, %v3745
      %vm4095 = vcmp.lt.s32.totalorder %v3712, %v3745
      %vm4096 = vcmp.lt.s32.totalorder %v3713, %v3745
      %vm4097 = vcmp.lt.s32.totalorder %v3702, %v3746
      %vm4098 = vcmp.lt.s32.totalorder %v3703, %v3746
      %vm4099 = vcmp.lt.s32.totalorder %v3704, %v3746
      %vm4100 = vcmp.lt.s32.totalorder %v3705, %v3746
      %vm4101 = vcmp.lt.s32.totalorder %v3706, %v3746
      %vm4102 = vcmp.lt.s32.totalorder %v3707, %v3746
      %vm4103 = vcmp.lt.s32.totalorder %v3708, %v3746
      %vm4104 = vcmp.lt.s32.totalorder %v3709, %v3746
      %vm4105 = vcmp.lt.s32.totalorder %v3710, %v3746
      %vm4106 = vcmp.lt.s32.totalorder %v3711, %v3746
      %vm4107 = vcmp.lt.s32.totalorder %v3712, %v3746
      %vm4108 = vcmp.lt.s32.totalorder %v3713, %v3746
      %vm4109 = vcmp.lt.s32.totalorder %v3702, %v3747
      %vm4110 = vcmp.lt.s32.totalorder %v3703, %v3747
      %vm4111 = vcmp.lt.s32.totalorder %v3704, %v3747
      %vm4112 = vcmp.lt.s32.totalorder %v3705, %v3747
      %vm4113 = vcmp.lt.s32.totalorder %v3706, %v3747
      %vm4114 = vcmp.lt.s32.totalorder %v3707, %v3747
      %vm4115 = vcmp.lt.s32.totalorder %v3708, %v3747
      %vm4116 = vcmp.lt.s32.totalorder %v3709, %v3747
      %vm4117 = vcmp.lt.s32.totalorder %v3710, %v3747
      %vm4118 = vcmp.lt.s32.totalorder %v3711, %v3747
      %vm4119 = vcmp.lt.s32.totalorder %v3712, %v3747
      %vm4120 = vcmp.lt.s32.totalorder %v3713, %v3747
      %vm4121 = vcmp.lt.s32.totalorder %v3702, %v3748
      %vm4122 = vcmp.lt.s32.totalorder %v3703, %v3748
      %vm4123 = vcmp.lt.s32.totalorder %v3704, %v3748
      %vm4124 = vcmp.lt.s32.totalorder %v3705, %v3748
      %vm4125 = vcmp.lt.s32.totalorder %v3706, %v3748
      %vm4126 = vcmp.lt.s32.totalorder %v3707, %v3748
      %vm4127 = vcmp.lt.s32.totalorder %v3708, %v3748
      %vm4128 = vcmp.lt.s32.totalorder %v3709, %v3748
      %vm4129 = vcmp.lt.s32.totalorder %v3710, %v3748
      %vm4130 = vcmp.lt.s32.totalorder %v3711, %v3748
      %vm4131 = vcmp.lt.s32.totalorder %v3712, %v3748
      %vm4132 = vcmp.lt.s32.totalorder %v3713, %v3748
      %vm4133 = vmand %vm3749, %vm3941
      %vm4134 = vmand %vm3750, %vm3942
      %vm4135 = vmand %vm3751, %vm3943
      %vm4136 = vmand %vm3752, %vm3944
      %vm4137 = vmand %vm3753, %vm3945
      %vm4138 = vmand %vm3754, %vm3946
      %vm4139 = vmand %vm3755, %vm3947
      %vm4140 = vmand %vm3756, %vm3948
      %vm4141 = vmand %vm3757, %vm3949
      %vm4142 = vmand %vm3758, %vm3950
      %vm4143 = vmand %vm3759, %vm3951
      %vm4144 = vmand %vm3760, %vm3952
      %vm4145 = vmand %vm3761, %vm3953
      %vm4146 = vmand %vm3762, %vm3954
      %vm4147 = vmand %vm3763, %vm3955
      %vm4148 = vmand %vm3764, %vm3956
      %vm4149 = vmand %vm3765, %vm3957
      %vm4150 = vmand %vm3766, %vm3958
      %vm4151 = vmand %vm3767, %vm3959
      %vm4152 = vmand %vm3768, %vm3960
      %vm4153 = vmand %vm3769, %vm3961
      %vm4154 = vmand %vm3770, %vm3962
      %vm4155 = vmand %vm3771, %vm3963
      %vm4156 = vmand %vm3772, %vm3964
      %vm4157 = vmand %vm3773, %vm3965
      %vm4158 = vmand %vm3774, %vm3966
      %vm4159 = vmand %vm3775, %vm3967
      %vm4160 = vmand %vm3776, %vm3968
      %vm4161 = vmand %vm3777, %vm3969
      %vm4162 = vmand %vm3778, %vm3970
      %vm4163 = vmand %vm3779, %vm3971
      %vm4164 = vmand %vm3780, %vm3972
      %vm4165 = vmand %vm3781, %vm3973
      %vm4166 = vmand %vm3782, %vm3974
      %vm4167 = vmand %vm3783, %vm3975
      %vm4168 = vmand %vm3784, %vm3976
      %vm4169 = vmand %vm3785, %vm3977
      %vm4170 = vmand %vm3786, %vm3978
      %vm4171 = vmand %vm3787, %vm3979
      %vm4172 = vmand %vm3788, %vm3980
      %vm4173 = vmand %vm3789, %vm3981
      %vm4174 = vmand %vm3790, %vm3982
      %vm4175 = vmand %vm3791, %vm3983
      %vm4176 = vmand %vm3792, %vm3984
      %vm4177 = vmand %vm3793, %vm3985
      %vm4178 = vmand %vm3794, %vm3986
      %vm4179 = vmand %vm3795, %vm3987
      %vm4180 = vmand %vm3796, %vm3988
      %vm4181 = vmand %vm3797, %vm3989
      %vm4182 = vmand %vm3798, %vm3990
      %vm4183 = vmand %vm3799, %vm3991
      %vm4184 = vmand %vm3800, %vm3992
      %vm4185 = vmand %vm3801, %vm3993
      %vm4186 = vmand %vm3802, %vm3994
      %vm4187 = vmand %vm3803, %vm3995
      %vm4188 = vmand %vm3804, %vm3996
      %vm4189 = vmand %vm3805, %vm3997
      %vm4190 = vmand %vm3806, %vm3998
      %vm4191 = vmand %vm3807, %vm3999
      %vm4192 = vmand %vm3808, %vm4000
      %vm4193 = vmand %vm3809, %vm4001
      %vm4194 = vmand %vm3810, %vm4002
      %vm4195 = vmand %vm3811, %vm4003
      %vm4196 = vmand %vm3812, %vm4004
      %vm4197 = vmand %vm3813, %vm4005
      %vm4198 = vmand %vm3814, %vm4006
      %vm4199 = vmand %vm3815, %vm4007
      %vm4200 = vmand %vm3816, %vm4008
      %vm4201 = vmand %vm3817, %vm4009
      %vm4202 = vmand %vm3818, %vm4010
      %vm4203 = vmand %vm3819, %vm4011
      %vm4204 = vmand %vm3820, %vm4012
      %vm4205 = vmand %vm3821, %vm4013
      %vm4206 = vmand %vm3822, %vm4014
      %vm4207 = vmand %vm3823, %vm4015
      %vm4208 = vmand %vm3824, %vm4016
      %vm4209 = vmand %vm3825, %vm4017
      %vm4210 = vmand %vm3826, %vm4018
      %vm4211 = vmand %vm3827, %vm4019
      %vm4212 = vmand %vm3828, %vm4020
      %vm4213 = vmand %vm3829, %vm4021
      %vm4214 = vmand %vm3830, %vm4022
      %vm4215 = vmand %vm3831, %vm4023
      %vm4216 = vmand %vm3832, %vm4024
      %vm4217 = vmand %vm3833, %vm4025
      %vm4218 = vmand %vm3834, %vm4026
      %vm4219 = vmand %vm3835, %vm4027
      %vm4220 = vmand %vm3836, %vm4028
      %vm4221 = vmand %vm3837, %vm4029
      %vm4222 = vmand %vm3838, %vm4030
      %vm4223 = vmand %vm3839, %vm4031
      %vm4224 = vmand %vm3840, %vm4032
      %vm4225 = vmand %vm3841, %vm4033
      %vm4226 = vmand %vm3842, %vm4034
      %vm4227 = vmand %vm3843, %vm4035
      %vm4228 = vmand %vm3844, %vm4036
      %vm4229 = vmand %vm3845, %vm4037
      %vm4230 = vmand %vm3846, %vm4038
      %vm4231 = vmand %vm3847, %vm4039
      %vm4232 = vmand %vm3848, %vm4040
      %vm4233 = vmand %vm3849, %vm4041
      %vm4234 = vmand %vm3850, %vm4042
      %vm4235 = vmand %vm3851, %vm4043
      %vm4236 = vmand %vm3852, %vm4044
      %vm4237 = vmand %vm3853, %vm4045
      %vm4238 = vmand %vm3854, %vm4046
      %vm4239 = vmand %vm3855, %vm4047
      %vm4240 = vmand %vm3856, %vm4048
      %vm4241 = vmand %vm3857, %vm4049
      %vm4242 = vmand %vm3858, %vm4050
      %vm4243 = vmand %vm3859, %vm4051
      %vm4244 = vmand %vm3860, %vm4052
      %vm4245 = vmand %vm3861, %vm4053
      %vm4246 = vmand %vm3862, %vm4054
      %vm4247 = vmand %vm3863, %vm4055
      %vm4248 = vmand %vm3864, %vm4056
      %vm4249 = vmand %vm3865, %vm4057
      %vm4250 = vmand %vm3866, %vm4058
      %vm4251 = vmand %vm3867, %vm4059
      %vm4252 = vmand %vm3868, %vm4060
      %vm4253 = vmand %vm3869, %vm4061
      %vm4254 = vmand %vm3870, %vm4062
      %vm4255 = vmand %vm3871, %vm4063
      %vm4256 = vmand %vm3872, %vm4064
      %vm4257 = vmand %vm3873, %vm4065
      %vm4258 = vmand %vm3874, %vm4066
      %vm4259 = vmand %vm3875, %vm4067
      %vm4260 = vmand %vm3876, %vm4068
      %vm4261 = vmand %vm3877, %vm4069
      %vm4262 = vmand %vm3878, %vm4070
      %vm4263 = vmand %vm3879, %vm4071
      %vm4264 = vmand %vm3880, %vm4072
      %vm4265 = vmand %vm3881, %vm4073
      %vm4266 = vmand %vm3882, %vm4074
      %vm4267 = vmand %vm3883, %vm4075
      %vm4268 = vmand %vm3884, %vm4076
      %vm4269 = vmand %vm3885, %vm4077
      %vm4270 = vmand %vm3886, %vm4078
      %vm4271 = vmand %vm3887, %vm4079
      %vm4272 = vmand %vm3888, %vm4080
      %vm4273 = vmand %vm3889, %vm4081
      %vm4274 = vmand %vm3890, %vm4082
      %vm4275 = vmand %vm3891, %vm4083
      %vm4276 = vmand %vm3892, %vm4084
      %vm4277 = vmand %vm3893, %vm4085
      %vm4278 = vmand %vm3894, %vm4086
      %vm4279 = vmand %vm3895, %vm4087
      %vm4280 = vmand %vm3896, %vm4088
      %vm4281 = vmand %vm3897, %vm4089
      %vm4282 = vmand %vm3898, %vm4090
      %vm4283 = vmand %vm3899, %vm4091
      %vm4284 = vmand %vm3900, %vm4092
      %vm4285 = vmand %vm3901, %vm4093
      %vm4286 = vmand %vm3902, %vm4094
      %vm4287 = vmand %vm3903, %vm4095
      %vm4288 = vmand %vm3904, %vm4096
      %vm4289 = vmand %vm3905, %vm4097
      %vm4290 = vmand %vm3906, %vm4098
      %vm4291 = vmand %vm3907, %vm4099
      %vm4292 = vmand %vm3908, %vm4100
      %vm4293 = vmand %vm3909, %vm4101
      %vm4294 = vmand %vm3910, %vm4102
      %vm4295 = vmand %vm3911, %vm4103
      %vm4296 = vmand %vm3912, %vm4104
      %vm4297 = vmand %vm3913, %vm4105
      %vm4298 = vmand %vm3914, %vm4106
      %vm4299 = vmand %vm3915, %vm4107
      %vm4300 = vmand %vm3916, %vm4108
      %vm4301 = vmand %vm3917, %vm4109
      %vm4302 = vmand %vm3918, %vm4110
      %vm4303 = vmand %vm3919, %vm4111
      %vm4304 = vmand %vm3920, %vm4112
      %vm4305 = vmand %vm3921, %vm4113
      %vm4306 = vmand %vm3922, %vm4114
      %vm4307 = vmand %vm3923, %vm4115
      %vm4308 = vmand %vm3924, %vm4116
      %vm4309 = vmand %vm3925, %vm4117
      %vm4310 = vmand %vm3926, %vm4118
      %vm4311 = vmand %vm3927, %vm4119
      %vm4312 = vmand %vm3928, %vm4120
      %vm4313 = vmand %vm3929, %vm4121
      %vm4314 = vmand %vm3930, %vm4122
      %vm4315 = vmand %vm3931, %vm4123
      %vm4316 = vmand %vm3932, %vm4124
      %vm4317 = vmand %vm3933, %vm4125
      %vm4318 = vmand %vm3934, %vm4126
      %vm4319 = vmand %vm3935, %vm4127
      %vm4320 = vmand %vm3936, %vm4128
      %vm4321 = vmand %vm3937, %vm4129
      %vm4322 = vmand %vm3938, %vm4130
      %vm4323 = vmand %vm3939, %vm4131
      %vm4324 = vmand %vm3940, %vm4132
      %v4325 = vsel %vm4133, 1.0, 0.0
      %v4326 = vsel %vm4134, 1.0, 0.0
      %v4327 = vsel %vm4135, 1.0, 0.0
      %v4328 = vsel %vm4136, 1.0, 0.0
      %v4329 = vsel %vm4137, 1.0, 0.0
      %v4330 = vsel %vm4138, 1.0, 0.0
      %v4331 = vsel %vm4139, 1.0, 0.0
      %v4332 = vsel %vm4140, 1.0, 0.0
      %v4333 = vsel %vm4141, 1.0, 0.0
      %v4334 = vsel %vm4142, 1.0, 0.0
      %v4335 = vsel %vm4143, 1.0, 0.0
      %v4336 = vsel %vm4144, 1.0, 0.0
      %v4337 = vsel %vm4145, 1.0, 0.0
      %v4338 = vsel %vm4146, 1.0, 0.0
      %v4339 = vsel %vm4147, 1.0, 0.0
      %v4340 = vsel %vm4148, 1.0, 0.0
      %v4341 = vsel %vm4149, 1.0, 0.0
      %v4342 = vsel %vm4150, 1.0, 0.0
      %v4343 = vsel %vm4151, 1.0, 0.0
      %v4344 = vsel %vm4152, 1.0, 0.0
      %v4345 = vsel %vm4153, 1.0, 0.0
      %v4346 = vsel %vm4154, 1.0, 0.0
      %v4347 = vsel %vm4155, 1.0, 0.0
      %v4348 = vsel %vm4156, 1.0, 0.0
      %v4349 = vsel %vm4157, 1.0, 0.0
      %v4350 = vsel %vm4158, 1.0, 0.0
      %v4351 = vsel %vm4159, 1.0, 0.0
      %v4352 = vsel %vm4160, 1.0, 0.0
      %v4353 = vsel %vm4161, 1.0, 0.0
      %v4354 = vsel %vm4162, 1.0, 0.0
      %v4355 = vsel %vm4163, 1.0, 0.0
      %v4356 = vsel %vm4164, 1.0, 0.0
      %v4357 = vsel %vm4165, 1.0, 0.0
      %v4358 = vsel %vm4166, 1.0, 0.0
      %v4359 = vsel %vm4167, 1.0, 0.0
      %v4360 = vsel %vm4168, 1.0, 0.0
      %v4361 = vsel %vm4169, 1.0, 0.0
      %v4362 = vsel %vm4170, 1.0, 0.0
      %v4363 = vsel %vm4171, 1.0, 0.0
      %v4364 = vsel %vm4172, 1.0, 0.0
      %v4365 = vsel %vm4173, 1.0, 0.0
      %v4366 = vsel %vm4174, 1.0, 0.0
      %v4367 = vsel %vm4175, 1.0, 0.0
      %v4368 = vsel %vm4176, 1.0, 0.0
      %v4369 = vsel %vm4177, 1.0, 0.0
      %v4370 = vsel %vm4178, 1.0, 0.0
      %v4371 = vsel %vm4179, 1.0, 0.0
      %v4372 = vsel %vm4180, 1.0, 0.0
      %v4373 = vsel %vm4181, 1.0, 0.0
      %v4374 = vsel %vm4182, 1.0, 0.0
      %v4375 = vsel %vm4183, 1.0, 0.0
      %v4376 = vsel %vm4184, 1.0, 0.0
      %v4377 = vsel %vm4185, 1.0, 0.0
      %v4378 = vsel %vm4186, 1.0, 0.0
      %v4379 = vsel %vm4187, 1.0, 0.0
      %v4380 = vsel %vm4188, 1.0, 0.0
      %v4381 = vsel %vm4189, 1.0, 0.0
      %v4382 = vsel %vm4190, 1.0, 0.0
      %v4383 = vsel %vm4191, 1.0, 0.0
      %v4384 = vsel %vm4192, 1.0, 0.0
      %v4385 = vsel %vm4193, 1.0, 0.0
      %v4386 = vsel %vm4194, 1.0, 0.0
      %v4387 = vsel %vm4195, 1.0, 0.0
      %v4388 = vsel %vm4196, 1.0, 0.0
      %v4389 = vsel %vm4197, 1.0, 0.0
      %v4390 = vsel %vm4198, 1.0, 0.0
      %v4391 = vsel %vm4199, 1.0, 0.0
      %v4392 = vsel %vm4200, 1.0, 0.0
      %v4393 = vsel %vm4201, 1.0, 0.0
      %v4394 = vsel %vm4202, 1.0, 0.0
      %v4395 = vsel %vm4203, 1.0, 0.0
      %v4396 = vsel %vm4204, 1.0, 0.0
      %v4397 = vsel %vm4205, 1.0, 0.0
      %v4398 = vsel %vm4206, 1.0, 0.0
      %v4399 = vsel %vm4207, 1.0, 0.0
      %v4400 = vsel %vm4208, 1.0, 0.0
      %v4401 = vsel %vm4209, 1.0, 0.0
      %v4402 = vsel %vm4210, 1.0, 0.0
      %v4403 = vsel %vm4211, 1.0, 0.0
      %v4404 = vsel %vm4212, 1.0, 0.0
      %v4405 = vsel %vm4213, 1.0, 0.0
      %v4406 = vsel %vm4214, 1.0, 0.0
      %v4407 = vsel %vm4215, 1.0, 0.0
      %v4408 = vsel %vm4216, 1.0, 0.0
      %v4409 = vsel %vm4217, 1.0, 0.0
      %v4410 = vsel %vm4218, 1.0, 0.0
      %v4411 = vsel %vm4219, 1.0, 0.0
      %v4412 = vsel %vm4220, 1.0, 0.0
      %v4413 = vsel %vm4221, 1.0, 0.0
      %v4414 = vsel %vm4222, 1.0, 0.0
      %v4415 = vsel %vm4223, 1.0, 0.0
      %v4416 = vsel %vm4224, 1.0, 0.0
      %v4417 = vsel %vm4225, 1.0, 0.0
      %v4418 = vsel %vm4226, 1.0, 0.0
      %v4419 = vsel %vm4227, 1.0, 0.0
      %v4420 = vsel %vm4228, 1.0, 0.0
      %v4421 = vsel %vm4229, 1.0, 0.0
      %v4422 = vsel %vm4230, 1.0, 0.0
      %v4423 = vsel %vm4231, 1.0, 0.0
      %v4424 = vsel %vm4232, 1.0, 0.0
      %v4425 = vsel %vm4233, 1.0, 0.0
      %v4426 = vsel %vm4234, 1.0, 0.0
      %v4427 = vsel %vm4235, 1.0, 0.0
      %v4428 = vsel %vm4236, 1.0, 0.0
      %v4429 = vsel %vm4237, 1.0, 0.0
      %v4430 = vsel %vm4238, 1.0, 0.0
      %v4431 = vsel %vm4239, 1.0, 0.0
      %v4432 = vsel %vm4240, 1.0, 0.0
      %v4433 = vsel %vm4241, 1.0, 0.0
      %v4434 = vsel %vm4242, 1.0, 0.0
      %v4435 = vsel %vm4243, 1.0, 0.0
      %v4436 = vsel %vm4244, 1.0, 0.0
      %v4437 = vsel %vm4245, 1.0, 0.0
      %v4438 = vsel %vm4246, 1.0, 0.0
      %v4439 = vsel %vm4247, 1.0, 0.0
      %v4440 = vsel %vm4248, 1.0, 0.0
      %v4441 = vsel %vm4249, 1.0, 0.0
      %v4442 = vsel %vm4250, 1.0, 0.0
      %v4443 = vsel %vm4251, 1.0, 0.0
      %v4444 = vsel %vm4252, 1.0, 0.0
      %v4445 = vsel %vm4253, 1.0, 0.0
      %v4446 = vsel %vm4254, 1.0, 0.0
      %v4447 = vsel %vm4255, 1.0, 0.0
      %v4448 = vsel %vm4256, 1.0, 0.0
      %v4449 = vsel %vm4257, 1.0, 0.0
      %v4450 = vsel %vm4258, 1.0, 0.0
      %v4451 = vsel %vm4259, 1.0, 0.0
      %v4452 = vsel %vm4260, 1.0, 0.0
      %v4453 = vsel %vm4261, 1.0, 0.0
      %v4454 = vsel %vm4262, 1.0, 0.0
      %v4455 = vsel %vm4263, 1.0, 0.0
      %v4456 = vsel %vm4264, 1.0, 0.0
      %v4457 = vsel %vm4265, 1.0, 0.0
      %v4458 = vsel %vm4266, 1.0, 0.0
      %v4459 = vsel %vm4267, 1.0, 0.0
      %v4460 = vsel %vm4268, 1.0, 0.0
      %v4461 = vsel %vm4269, 1.0, 0.0
      %v4462 = vsel %vm4270, 1.0, 0.0
      %v4463 = vsel %vm4271, 1.0, 0.0
      %v4464 = vsel %vm4272, 1.0, 0.0
      %v4465 = vsel %vm4273, 1.0, 0.0
      %v4466 = vsel %vm4274, 1.0, 0.0
      %v4467 = vsel %vm4275, 1.0, 0.0
      %v4468 = vsel %vm4276, 1.0, 0.0
      %v4469 = vsel %vm4277, 1.0, 0.0
      %v4470 = vsel %vm4278, 1.0, 0.0
      %v4471 = vsel %vm4279, 1.0, 0.0
      %v4472 = vsel %vm4280, 1.0, 0.0
      %v4473 = vsel %vm4281, 1.0, 0.0
      %v4474 = vsel %vm4282, 1.0, 0.0
      %v4475 = vsel %vm4283, 1.0, 0.0
      %v4476 = vsel %vm4284, 1.0, 0.0
      %v4477 = vsel %vm4285, 1.0, 0.0
      %v4478 = vsel %vm4286, 1.0, 0.0
      %v4479 = vsel %vm4287, 1.0, 0.0
      %v4480 = vsel %vm4288, 1.0, 0.0
      %v4481 = vsel %vm4289, 1.0, 0.0
      %v4482 = vsel %vm4290, 1.0, 0.0
      %v4483 = vsel %vm4291, 1.0, 0.0
      %v4484 = vsel %vm4292, 1.0, 0.0
      %v4485 = vsel %vm4293, 1.0, 0.0
      %v4486 = vsel %vm4294, 1.0, 0.0
      %v4487 = vsel %vm4295, 1.0, 0.0
      %v4488 = vsel %vm4296, 1.0, 0.0
      %v4489 = vsel %vm4297, 1.0, 0.0
      %v4490 = vsel %vm4298, 1.0, 0.0
      %v4491 = vsel %vm4299, 1.0, 0.0
      %v4492 = vsel %vm4300, 1.0, 0.0
      %v4493 = vsel %vm4301, 1.0, 0.0
      %v4494 = vsel %vm4302, 1.0, 0.0
      %v4495 = vsel %vm4303, 1.0, 0.0
      %v4496 = vsel %vm4304, 1.0, 0.0
      %v4497 = vsel %vm4305, 1.0, 0.0
      %v4498 = vsel %vm4306, 1.0, 0.0
      %v4499 = vsel %vm4307, 1.0, 0.0
      %v4500 = vsel %vm4308, 1.0, 0.0
      %v4501 = vsel %vm4309, 1.0, 0.0
      %v4502 = vsel %vm4310, 1.0, 0.0
      %v4503 = vsel %vm4311, 1.0, 0.0
      %v4504 = vsel %vm4312, 1.0, 0.0
      %v4505 = vsel %vm4313, 1.0, 0.0
      %v4506 = vsel %vm4314, 1.0, 0.0
      %v4507 = vsel %vm4315, 1.0, 0.0
      %v4508 = vsel %vm4316, 1.0, 0.0
      %v4509 = vsel %vm4317, 1.0, 0.0
      %v4510 = vsel %vm4318, 1.0, 0.0
      %v4511 = vsel %vm4319, 1.0, 0.0
      %v4512 = vsel %vm4320, 1.0, 0.0
      %v4513 = vsel %vm4321, 1.0, 0.0
      %v4514 = vsel %vm4322, 1.0, 0.0
      %v4515 = vsel %vm4323, 1.0, 0.0
      %v4516 = vsel %vm4324, 1.0, 0.0
      %4517 = vst [vmem:[#allocation2] sm:$0xff] %v4325
      %4518 = vst [vmem:[#allocation2 + $0x8] sm:$0xff] %v4326
      %4519 = vst [vmem:[#allocation2 + $0x10] sm:$0xff] %v4327
      %4520 = vst [vmem:[#allocation2 + $0x18] sm:$0xff] %v4328
      %4521 = vst [vmem:[#allocation2 + $0x20] sm:$0xff] %v4329
      %4522 = vst [vmem:[#allocation2 + $0x28] sm:$0xff] %v4330
      %4523 = vst [vmem:[#allocation2 + $0x30] sm:$0xff] %v4331
      %4524 = vst [vmem:[#allocation2 + $0x38] sm:$0xff] %v4332
      %4525 = vst [vmem:[#allocation2 + $0x40] sm:$0xff] %v4333
      %4526 = vst [vmem:[#allocation2 + $0x48] sm:$0xff] %v4334
      %4527 = vst [vmem:[#allocation2 + $0x50] sm:$0xff] %v4335
      %4528 = vst [vmem:[#allocation2 + $0x58] sm:$0xff] %v4336
      %4529 = vst [vmem:[#allocation2 + $0x60] sm:$0xff] %v4337
      %4530 = vst [vmem:[#allocation2 + $0x68] sm:$0xff] %v4338
      %4531 = vst [vmem:[#allocation2 + $0x70] sm:$0xff] %v4339
      %4532 = vst [vmem:[#allocation2 + $0x78] sm:$0xff] %v4340
      %4533 = vst [vmem:[#allocation2 + $0x80] sm:$0xff] %v4341
      %4534 = vst [vmem:[#allocation2 + $0x88] sm:$0xff] %v4342
      %4535 = vst [vmem:[#allocation2 + $0x90] sm:$0xff] %v4343
      %4536 = vst [vmem:[#allocation2 + $0x98] sm:$0xff] %v4344
      %4537 = vst [vmem:[#allocation2 + $0xa0] sm:$0xff] %v4345
      %4538 = vst [vmem:[#allocation2 + $0xa8] sm:$0xff] %v4346
      %4539 = vst [vmem:[#allocation2 + $0xb0] sm:$0xff] %v4347
      %4540 = vst [vmem:[#allocation2 + $0xb8] sm:$0xff] %v4348
      %4541 = vst [vmem:[#allocation2 + $0xc0] sm:$0xff] %v4349
      %4542 = vst [vmem:[#allocation2 + $0xc8] sm:$0xff] %v4350
      %4543 = vst [vmem:[#allocation2 + $0xd0] sm:$0xff] %v4351
      %4544 = vst [vmem:[#allocation2 + $0xd8] sm:$0xff] %v4352
      %4545 = vst [vmem:[#allocation2 + $0xe0] sm:$0xff] %v4353
      %4546 = vst [vmem:[#allocation2 + $0xe8] sm:$0xff] %v4354
      %4547 = vst [vmem:[#allocation2 + $0xf0] sm:$0xff] %v4355
      %4548 = vst [vmem:[#allocation2 + $0xf8] sm:$0xff] %v4356
      %4549 = vst [vmem:[#allocation2 + $0x100] sm:$0xff] %v4357
      %4550 = vst [vmem:[#allocation2 + $0x108] sm:$0xff] %v4358
      %4551 = vst [vmem:[#allocation2 + $0x110] sm:$0xff] %v4359
      %4552 = vst [vmem:[#allocation2 + $0x118] sm:$0xff] %v4360
      %4553 = vst [vmem:[#allocation2 + $0x120] sm:$0xff] %v4361
      %4554 = vst [vmem:[#allocation2 + $0x128] sm:$0xff] %v4362
      %4555 = vst [vmem:[#allocation2 + $0x130] sm:$0xff] %v4363
      %4556 = vst [vmem:[#allocation2 + $0x138] sm:$0xff] %v4364
      %4557 = vst [vmem:[#allocation2 + $0x140] sm:$0xff] %v4365
      %4558 = vst [vmem:[#allocation2 + $0x148] sm:$0xff] %v4366
      %4559 = vst [vmem:[#allocation2 + $0x150] sm:$0xff] %v4367
      %4560 = vst [vmem:[#allocation2 + $0x158] sm:$0xff] %v4368
      %4561 = vst [vmem:[#allocation2 + $0x160] sm:$0xff] %v4369
      %4562 = vst [vmem:[#allocation2 + $0x168] sm:$0xff] %v4370
      %4563 = vst [vmem:[#allocation2 + $0x170] sm:$0xff] %v4371
      %4564 = vst [vmem:[#allocation2 + $0x178] sm:$0xff] %v4372
      %4565 = vst [vmem:[#allocation2 + $0x180] sm:$0xff] %v4373
      %4566 = vst [vmem:[#allocation2 + $0x188] sm:$0xff] %v4374
      %4567 = vst [vmem:[#allocation2 + $0x190] sm:$0xff] %v4375
      %4568 = vst [vmem:[#allocation2 + $0x198] sm:$0xff] %v4376
      %4569 = vst [vmem:[#allocation2 + $0x1a0] sm:$0xff] %v4377
      %4570 = vst [vmem:[#allocation2 + $0x1a8] sm:$0xff] %v4378
      %4571 = vst [vmem:[#allocation2 + $0x1b0] sm:$0xff] %v4379
      %4572 = vst [vmem:[#allocation2 + $0x1b8] sm:$0xff] %v4380
      %4573 = vst [vmem:[#allocation2 + $0x1c0] sm:$0xff] %v4381
      %4574 = vst [vmem:[#allocation2 + $0x1c8] sm:$0xff] %v4382
      %4575 = vst [vmem:[#allocation2 + $0x1d0] sm:$0xff] %v4383
      %4576 = vst [vmem:[#allocation2 + $0x1d8] sm:$0xff] %v4384
      %4577 = vst [vmem:[#allocation2 + $0x1e0] sm:$0xff] %v4385
      %4578 = vst [vmem:[#allocation2 + $0x1e8] sm:$0xff] %v4386
      %4579 = vst [vmem:[#allocation2 + $0x1f0] sm:$0xff] %v4387
      %4580 = vst [vmem:[#allocation2 + $0x1f8] sm:$0xff] %v4388
      %4581 = vst [vmem:[#allocation2 + $0x200] sm:$0xff] %v4389
      %4582 = vst [vmem:[#allocation2 + $0x208] sm:$0xff] %v4390
      %4583 = vst [vmem:[#allocation2 + $0x210] sm:$0xff] %v4391
      %4584 = vst [vmem:[#allocation2 + $0x218] sm:$0xff] %v4392
      %4585 = vst [vmem:[#allocation2 + $0x220] sm:$0xff] %v4393
      %4586 = vst [vmem:[#allocation2 + $0x228] sm:$0xff] %v4394
      %4587 = vst [vmem:[#allocation2 + $0x230] sm:$0xff] %v4395
      %4588 = vst [vmem:[#allocation2 + $0x238] sm:$0xff] %v4396
      %4589 = vst [vmem:[#allocation2 + $0x240] sm:$0xff] %v4397
      %4590 = vst [vmem:[#allocation2 + $0x248] sm:$0xff] %v4398
      %4591 = vst [vmem:[#allocation2 + $0x250] sm:$0xff] %v4399
      %4592 = vst [vmem:[#allocation2 + $0x258] sm:$0xff] %v4400
      %4593 = vst [vmem:[#allocation2 + $0x260] sm:$0xff] %v4401
      %4594 = vst [vmem:[#allocation2 + $0x268] sm:$0xff] %v4402
      %4595 = vst [vmem:[#allocation2 + $0x270] sm:$0xff] %v4403
      %4596 = vst [vmem:[#allocation2 + $0x278] sm:$0xff] %v4404
      %4597 = vst [vmem:[#allocation2 + $0x280] sm:$0xff] %v4405
      %4598 = vst [vmem:[#allocation2 + $0x288] sm:$0xff] %v4406
      %4599 = vst [vmem:[#allocation2 + $0x290] sm:$0xff] %v4407
      %4600 = vst [vmem:[#allocation2 + $0x298] sm:$0xff] %v4408
      %4601 = vst [vmem:[#allocation2 + $0x2a0] sm:$0xff] %v4409
      %4602 = vst [vmem:[#allocation2 + $0x2a8] sm:$0xff] %v4410
      %4603 = vst [vmem:[#allocation2 + $0x2b0] sm:$0xff] %v4411
      %4604 = vst [vmem:[#allocation2 + $0x2b8] sm:$0xff] %v4412
      %4605 = vst [vmem:[#allocation2 + $0x2c0] sm:$0xff] %v4413
      %4606 = vst [vmem:[#allocation2 + $0x2c8] sm:$0xff] %v4414
      %4607 = vst [vmem:[#allocation2 + $0x2d0] sm:$0xff] %v4415
      %4608 = vst [vmem:[#allocation2 + $0x2d8] sm:$0xff] %v4416
      %4609 = vst [vmem:[#allocation2 + $0x2e0] sm:$0xff] %v4417
      %4610 = vst [vmem:[#allocation2 + $0x2e8] sm:$0xff] %v4418
      %4611 = vst [vmem:[#allocation2 + $0x2f0] sm:$0xff] %v4419
      %4612 = vst [vmem:[#allocation2 + $0x2f8] sm:$0xff] %v4420
      %4613 = vst [vmem:[#allocation2 + $0x300] sm:$0xff] %v4421
      %4614 = vst [vmem:[#allocation2 + $0x308] sm:$0xff] %v4422
      %4615 = vst [vmem:[#allocation2 + $0x310] sm:$0xff] %v4423
      %4616 = vst [vmem:[#allocation2 + $0x318] sm:$0xff] %v4424
      %4617 = vst [vmem:[#allocation2 + $0x320] sm:$0xff] %v4425
      %4618 = vst [vmem:[#allocation2 + $0x328] sm:$0xff] %v4426
      %4619 = vst [vmem:[#allocation2 + $0x330] sm:$0xff] %v4427
      %4620 = vst [vmem:[#allocation2 + $0x338] sm:$0xff] %v4428
      %4621 = vst [vmem:[#allocation2 + $0x340] sm:$0xff] %v4429
      %4622 = vst [vmem:[#allocation2 + $0x348] sm:$0xff] %v4430
      %4623 = vst [vmem:[#allocation2 + $0x350] sm:$0xff] %v4431
      %4624 = vst [vmem:[#allocation2 + $0x358] sm:$0xff] %v4432
      %4625 = vst [vmem:[#allocation2 + $0x360] sm:$0xff] %v4433
      %4626 = vst [vmem:[#allocation2 + $0x368] sm:$0xff] %v4434
      %4627 = vst [vmem:[#allocation2 + $0x370] sm:$0xff] %v4435
      %4628 = vst [vmem:[#allocation2 + $0x378] sm:$0xff] %v4436
      %4629 = vst [vmem:[#allocation2 + $0x380] sm:$0xff] %v4437
      %4630 = vst [vmem:[#allocation2 + $0x388] sm:$0xff] %v4438
      %4631 = vst [vmem:[#allocation2 + $0x390] sm:$0xff] %v4439
      %4632 = vst [vmem:[#allocation2 + $0x398] sm:$0xff] %v4440
      %4633 = vst [vmem:[#allocation2 + $0x3a0] sm:$0xff] %v4441
      %4634 = vst [vmem:[#allocation2 + $0x3a8] sm:$0xff] %v4442
      %4635 = vst [vmem:[#allocation2 + $0x3b0] sm:$0xff] %v4443
      %4636 = vst [vmem:[#allocation2 + $0x3b8] sm:$0xff] %v4444
      %4637 = vst [vmem:[#allocation2 + $0x3c0] sm:$0xff] %v4445
      %4638 = vst [vmem:[#allocation2 + $0x3c8] sm:$0xff] %v4446
      %4639 = vst [vmem:[#allocation2 + $0x3d0] sm:$0xff] %v4447
      %4640 = vst [vmem:[#allocation2 + $0x3d8] sm:$0xff] %v4448
      %4641 = vst [vmem:[#allocation2 + $0x3e0] sm:$0xff] %v4449
      %4642 = vst [vmem:[#allocation2 + $0x3e8] sm:$0xff] %v4450
      %4643 = vst [vmem:[#allocation2 + $0x3f0] sm:$0xff] %v4451
      %4644 = vst [vmem:[#allocation2 + $0x3f8] sm:$0xff] %v4452
      %4645 = vst [vmem:[#allocation2 + $0x400] sm:$0xff] %v4453
      %4646 = vst [vmem:[#allocation2 + $0x408] sm:$0xff] %v4454
      %4647 = vst [vmem:[#allocation2 + $0x410] sm:$0xff] %v4455
      %4648 = vst [vmem:[#allocation2 + $0x418] sm:$0xff] %v4456
      %4649 = vst [vmem:[#allocation2 + $0x420] sm:$0xff] %v4457
      %4650 = vst [vmem:[#allocation2 + $0x428] sm:$0xff] %v4458
      %4651 = vst [vmem:[#allocation2 + $0x430] sm:$0xff] %v4459
      %4652 = vst [vmem:[#allocation2 + $0x438] sm:$0xff] %v4460
      %4653 = vst [vmem:[#allocation2 + $0x440] sm:$0xff] %v4461
      %4654 = vst [vmem:[#allocation2 + $0x448] sm:$0xff] %v4462
      %4655 = vst [vmem:[#allocation2 + $0x450] sm:$0xff] %v4463
      %4656 = vst [vmem:[#allocation2 + $0x458] sm:$0xff] %v4464
      %4657 = vst [vmem:[#allocation2 + $0x460] sm:$0xff] %v4465
      %4658 = vst [vmem:[#allocation2 + $0x468] sm:$0xff] %v4466
      %4659 = vst [vmem:[#allocation2 + $0x470] sm:$0xff] %v4467
      %4660 = vst [vmem:[#allocation2 + $0x478] sm:$0xff] %v4468
      %4661 = vst [vmem:[#allocation2 + $0x480] sm:$0xff] %v4469
      %4662 = vst [vmem:[#allocation2 + $0x488] sm:$0xff] %v4470
      %4663 = vst [vmem:[#allocation2 + $0x490] sm:$0xff] %v4471
      %4664 = vst [vmem:[#allocation2 + $0x498] sm:$0xff] %v4472
      %4665 = vst [vmem:[#allocation2 + $0x4a0] sm:$0xff] %v4473
      %4666 = vst [vmem:[#allocation2 + $0x4a8] sm:$0xff] %v4474
      %4667 = vst [vmem:[#allocation2 + $0x4b0] sm:$0xff] %v4475
      %4668 = vst [vmem:[#allocation2 + $0x4b8] sm:$0xff] %v4476
      %4669 = vst [vmem:[#allocation2 + $0x4c0] sm:$0xff] %v4477
      %4670 = vst [vmem:[#allocation2 + $0x4c8] sm:$0xff] %v4478
      %4671 = vst [vmem:[#allocation2 + $0x4d0] sm:$0xff] %v4479
      %4672 = vst [vmem:[#allocation2 + $0x4d8] sm:$0xff] %v4480
      %4673 = vst [vmem:[#allocation2 + $0x4e0] sm:$0xff] %v4481
      %4674 = vst [vmem:[#allocation2 + $0x4e8] sm:$0xff] %v4482
      %4675 = vst [vmem:[#allocation2 + $0x4f0] sm:$0xff] %v4483
      %4676 = vst [vmem:[#allocation2 + $0x4f8] sm:$0xff] %v4484
      %4677 = vst [vmem:[#allocation2 + $0x500] sm:$0xff] %v4485
      %4678 = vst [vmem:[#allocation2 + $0x508] sm:$0xff] %v4486
      %4679 = vst [vmem:[#allocation2 + $0x510] sm:$0xff] %v4487
      %4680 = vst [vmem:[#allocation2 + $0x518] sm:$0xff] %v4488
      %4681 = vst [vmem:[#allocation2 + $0x520] sm:$0xff] %v4489
      %4682 = vst [vmem:[#allocation2 + $0x528] sm:$0xff] %v4490
      %4683 = vst [vmem:[#allocation2 + $0x530] sm:$0xff] %v4491
      %4684 = vst [vmem:[#allocation2 + $0x538] sm:$0xff] %v4492
      %4685 = vst [vmem:[#allocation2 + $0x540] sm:$0xff] %v4493
      %4686 = vst [vmem:[#allocation2 + $0x548] sm:$0xff] %v4494
      %4687 = vst [vmem:[#allocation2 + $0x550] sm:$0xff] %v4495
      %4688 = vst [vmem:[#allocation2 + $0x558] sm:$0xff] %v4496
      %4689 = vst [vmem:[#allocation2 + $0x560] sm:$0xff] %v4497
      %4690 = vst [vmem:[#allocation2 + $0x568] sm:$0xff] %v4498
      %4691 = vst [vmem:[#allocation2 + $0x570] sm:$0xff] %v4499
      %4692 = vst [vmem:[#allocation2 + $0x578] sm:$0xff] %v4500
      %4693 = vst [vmem:[#allocation2 + $0x580] sm:$0xff] %v4501
      %4694 = vst [vmem:[#allocation2 + $0x588] sm:$0xff] %v4502
      %4695 = vst [vmem:[#allocation2 + $0x590] sm:$0xff] %v4503
      %4696 = vst [vmem:[#allocation2 + $0x598] sm:$0xff] %v4504
      %4697 = vst [vmem:[#allocation2 + $0x5a0] sm:$0xff] %v4505
      %4698 = vst [vmem:[#allocation2 + $0x5a8] sm:$0xff] %v4506
      %4699 = vst [vmem:[#allocation2 + $0x5b0] sm:$0xff] %v4507
      %4700 = vst [vmem:[#allocation2 + $0x5b8] sm:$0xff] %v4508
      %4701 = vst [vmem:[#allocation2 + $0x5c0] sm:$0xff] %v4509
      %4702 = vst [vmem:[#allocation2 + $0x5c8] sm:$0xff] %v4510
      %4703 = vst [vmem:[#allocation2 + $0x5d0] sm:$0xff] %v4511
      %4704 = vst [vmem:[#allocation2 + $0x5d8] sm:$0xff] %v4512
      %4705 = vst [vmem:[#allocation2 + $0x5e0] sm:$0xff] %v4513
      %4706 = vst [vmem:[#allocation2 + $0x5e8] sm:$0xff] %v4514
      %4707 = vst [vmem:[#allocation2 + $0x5f0] sm:$0xff] %v4515
      %4708 = vst [vmem:[#allocation2 + $0x5f8] sm:$0xff] %v4516
      %v4709 = vld [vmem:[%s3] sm:$0xff]
      %v4710 = vld [vmem:[%s3 + $0x8] sm:$0xf]
      %v4713 = vlaneseq
      %v4714 = vshrl.u32 %v4713, 7
      %v4715 = vsub.s32 0, %v4714
      %v4716 = vrot.slane %v4709, %v4715
      %v4717 = vlaneseq
      %v4718 = vshrl.u32 %v4717, 7
      %v4719 = vsub.s32 1, %v4718
      %v4720 = vrot.slane %v4709, %v4719
      %v4721 = vlaneseq
      %v4722 = vshrl.u32 %v4721, 7
      %v4723 = vsub.s32 2, %v4722
      %v4724 = vrot.slane %v4709, %v4723
      %v4725 = vlaneseq
      %v4726 = vshrl.u32 %v4725, 7
      %v4727 = vsub.s32 3, %v4726
      %v4728 = vrot.slane %v4709, %v4727
      %v4729 = vlaneseq
      %v4730 = vshrl.u32 %v4729, 7
      %v4731 = vsub.s32 4, %v4730
      %v4732 = vrot.slane %v4709, %v4731
      %v4733 = vlaneseq
      %v4734 = vshrl.u32 %v4733, 7
      %v4735 = vsub.s32 5, %v4734
      %v4736 = vrot.slane %v4709, %v4735
      %v4737 = vlaneseq
      %v4738 = vshrl.u32 %v4737, 7
      %v4739 = vsub.s32 6, %v4738
      %v4740 = vrot.slane %v4709, %v4739
      %v4741 = vlaneseq
      %v4742 = vshrl.u32 %v4741, 7
      %v4743 = vsub.s32 7, %v4742
      %v4744 = vrot.slane %v4709, %v4743
      %v4745 = vlaneseq
      %v4746 = vshrl.u32 %v4745, 7
      %v4747 = vsub.s32 0, %v4746
      %v4748 = vrot.slane %v4710, %v4747
      %v4749 = vlaneseq
      %v4750 = vshrl.u32 %v4749, 7
      %v4751 = vsub.s32 1, %v4750
      %v4752 = vrot.slane %v4710, %v4751
      %v4753 = vlaneseq
      %v4754 = vshrl.u32 %v4753, 7
      %v4755 = vsub.s32 2, %v4754
      %v4756 = vrot.slane %v4710, %v4755
      %v4757 = vlaneseq
      %v4758 = vshrl.u32 %v4757, 7
      %v4759 = vsub.s32 3, %v4758
      %v4760 = vrot.slane %v4710, %v4759
      loop: start=0, step=1, limit=128
      $region37: #{rpn_forward.3} parent=31 // loop_pre_header
        _
      $region38: #{rpn_forward.3} parent=31 // loop_header
        %s4774 = sphi 0, %s4778
        %p4775 = scmp.ge.s32.totalorder %s4774, 128
        %v4779 = vphi %v4716, %v5021
        %v4780 = vphi %v4720, %v5022
        %v4781 = vphi %v4724, %v5023
        %v4782 = vphi %v4728, %v5024
        %v4783 = vphi %v4732, %v5025
        %v4784 = vphi %v4736, %v5026
        %v4785 = vphi %v4740, %v5027
        %v4786 = vphi %v4744, %v5028
        %v4787 = vphi %v4748, %v5029
        %v4788 = vphi %v4752, %v5030
        %v4789 = vphi %v4756, %v5031
        %v4790 = vphi %v4760, %v5032
      $region39: #{rpn_forward.3} parent=31 // loop_header_branch
        %4777 = sbr.rel (%p4775) target = $region43
      $region40: #{rpn_forward.3} parent=31 // loop_body
        %s4791 = sadd.s32 %s3731, %s4774
        %s4792 = sshra.s32 %s4774, 3
        %s4793 = sand.u32 %s4774, 7
        %s4794 = sshra.s32 %s4774, 3
        %s4795 = sand.u32 %s4774, 7
        %s4796 = smul.u32 %s4792, 12
        %s4797 = smul.u32 %s4796, 8
        %s4798 = sadd.s32 %s4797, %s4795
        %s4799 = scalar_lea.vmem [#allocation2], %s4798
        %v4800 = vld [vmem:[%s4799] ss:$8 sm:$0xf]
        %v4801 = vld [vmem:[%s4799] ss:$8 sm:$0xf0]
        %v4802 = vor.u32 %v4800, %v4801
        %s4803 = sadd.s32 %s4796, 8
        %s4804 = smul.u32 %s4803, 8
        %s4805 = sadd.s32 %s4804, %s4795
        %s4806 = scalar_lea.vmem [#allocation2], %s4805
        %v4807 = vld [vmem:[%s4806] ss:$8 sm:$0xf]
        %v4820 = vcombine.low %v4779, %v4780
        %v4821 = vcombine.low %v4781, %v4782
        %v4822 = vcombine.low %v4783, %v4784
        %v4823 = vcombine.low %v4785, %v4786
        %v4825 = vunpack.c.l.s4 1966171168
        %v4826 = vunpack.c.0.s8 %v4825
        %v4827 = vlaneseq
        %v4828 = vshrl.u32 %v4827, 7
        %v4829 = vsub.s32 %v4826, %v4828
        %v4830 = vrot.slane %v4820, %v4829
        %v4832 = vunpack.c.l.s4 1966171168
        %v4833 = vunpack.c.0.s8 %v4832
        %v4834 = vlaneseq
        %v4835 = vshrl.u32 %v4834, 7
        %v4836 = vsub.s32 %v4833, %v4835
        %v4837 = vrot.slane %v4821, %v4836
        %v4839 = vunpack.c.l.s4 1966171168
        %v4840 = vunpack.c.0.s8 %v4839
        %v4841 = vlaneseq
        %v4842 = vshrl.u32 %v4841, 7
        %v4843 = vsub.s32 %v4840, %v4842
        %v4844 = vrot.slane %v4822, %v4843
        %v4846 = vunpack.c.l.s4 1966171168
        %v4847 = vunpack.c.0.s8 %v4846
        %v4848 = vlaneseq
        %v4849 = vshrl.u32 %v4848, 7
        %v4850 = vsub.s32 %v4847, %v4849
        %v4851 = vrot.slane %v4823, %v4850
        %v4852 = vcombine.low %v4830, %v4837
        %v4853 = vcombine.low %v4844, %v4851
        %v4855 = vunpack.c.l.s4 1966171168
        %v4856 = vunpack.c.0.s8 %v4855
        %v4857 = vlaneseq
        %v4858 = vshrl.u32 %v4857, 7
        %v4859 = vsub.s32 %v4856, %v4858
        %v4860 = vrot.slane %v4852, %v4859
        %v4862 = vunpack.c.l.s4 1966171168
        %v4863 = vunpack.c.0.s8 %v4862
        %v4864 = vlaneseq
        %v4865 = vshrl.u32 %v4864, 7
        %v4866 = vsub.s32 %v4863, %v4865
        %v4867 = vrot.slane %v4853, %v4866
        %v4868 = vcombine.low %v4860, %v4867
        %v4869 = vcombine.low %v4787, %v4788
        %v4870 = vcombine.low %v4789, %v4790
        %v4872 = vunpack.c.l.s4 1966171168
        %v4873 = vunpack.c.0.s8 %v4872
        %v4874 = vlaneseq
        %v4875 = vshrl.u32 %v4874, 7
        %v4876 = vsub.s32 %v4873, %v4875
        %v4877 = vrot.slane %v4869, %v4876
        %v4879 = vunpack.c.l.s4 1966171168
        %v4880 = vunpack.c.0.s8 %v4879
        %v4881 = vlaneseq
        %v4882 = vshrl.u32 %v4881, 7
        %v4883 = vsub.s32 %v4880, %v4882
        %v4884 = vrot.slane %v4870, %v4883
        %v4885 = vcombine.low %v4877, %v4884
        %v4887 = vunpack.c.l.s4 1966171168
        %v4888 = vunpack.c.0.s8 %v4887
        %v4889 = vlaneseq
        %v4890 = vshrl.u32 %v4889, 7
        %v4891 = vsub.s32 %v4888, %v4890
        %v4892 = vrot.slane %v4885, %v4891
        %v4895 = vmul.f32 %v4802, %v4868
        %v4896 = vmul.f32 %v4807, %v4892
        %v4899 = vlaneseq
        %v4900 = vshrl.u32 %v4899, 7
        %v4901 = vsub.s32 0, %v4900
        %v4902 = vrot.slane %v4895, %v4901
        %v4903 = vlaneseq
        %v4904 = vshrl.u32 %v4903, 7
        %v4905 = vsub.s32 1, %v4904
        %v4906 = vrot.slane %v4895, %v4905
        %v4907 = vlaneseq
        %v4908 = vshrl.u32 %v4907, 7
        %v4909 = vsub.s32 2, %v4908
        %v4910 = vrot.slane %v4895, %v4909
        %v4911 = vlaneseq
        %v4912 = vshrl.u32 %v4911, 7
        %v4913 = vsub.s32 3, %v4912
        %v4914 = vrot.slane %v4895, %v4913
        %v4915 = vlaneseq
        %v4916 = vshrl.u32 %v4915, 7
        %v4917 = vsub.s32 4, %v4916
        %v4918 = vrot.slane %v4895, %v4917
        %v4919 = vlaneseq
        %v4920 = vshrl.u32 %v4919, 7
        %v4921 = vsub.s32 5, %v4920
        %v4922 = vrot.slane %v4895, %v4921
        %v4923 = vlaneseq
        %v4924 = vshrl.u32 %v4923, 7
        %v4925 = vsub.s32 6, %v4924
        %v4926 = vrot.slane %v4895, %v4925
        %v4927 = vlaneseq
        %v4928 = vshrl.u32 %v4927, 7
        %v4929 = vsub.s32 7, %v4928
        %v4930 = vrot.slane %v4895, %v4929
        %v4931 = vlaneseq
        %v4932 = vshrl.u32 %v4931, 7
        %v4933 = vsub.s32 0, %v4932
        %v4934 = vrot.slane %v4896, %v4933
        %v4935 = vlaneseq
        %v4936 = vshrl.u32 %v4935, 7
        %v4937 = vsub.s32 1, %v4936
        %v4938 = vrot.slane %v4896, %v4937
        %v4939 = vlaneseq
        %v4940 = vshrl.u32 %v4939, 7
        %v4941 = vsub.s32 2, %v4940
        %v4942 = vrot.slane %v4896, %v4941
        %v4943 = vlaneseq
        %v4944 = vshrl.u32 %v4943, 7
        %v4945 = vsub.s32 3, %v4944
        %v4946 = vrot.slane %v4896, %v4945
        %vm4959 = vcmask 1040384
        %v4960 = vsel %vm4959, %v4902, 0.0
        %v4961 = vsel %vm4959, %v4906, 0.0
        %v4962 = vadd.f32 %v4960, %v4961
        %v4963 = vsel %vm4959, %v4910, 0.0
        %v4964 = vadd.f32 %v4962, %v4963
        %v4965 = vsel %vm4959, %v4914, 0.0
        %v4966 = vadd.f32 %v4964, %v4965
        %v4967 = vsel %vm4959, %v4918, 0.0
        %v4968 = vadd.f32 %v4966, %v4967
        %v4969 = vsel %vm4959, %v4922, 0.0
        %v4970 = vadd.f32 %v4968, %v4969
        %v4971 = vsel %vm4959, %v4926, 0.0
        %v4972 = vadd.f32 %v4970, %v4971
        %v4973 = vsel %vm4959, %v4930, 0.0
        %v4974 = vadd.f32 %v4972, %v4973
        %v4975 = vsel %vm4959, %v4934, 0.0
        %v4976 = vadd.f32 %v4974, %v4975
        %v4977 = vsel %vm4959, %v4938, 0.0
        %v4978 = vadd.f32 %v4976, %v4977
        %v4979 = vsel %vm4959, %v4942, 0.0
        %v4980 = vadd.f32 %v4978, %v4979
        %v4981 = vsel %vm4959, %v4946, 0.0
        %v4982 = vadd.f32 %v4980, %v4981
        %4983 = vadd.xlane.f32.xlu0 %v4982
        %v4984 = vpop.xlane.xlu0 %4983
        %v4985 = vrot.slane %v4984, 4
        %v4986 = vadd.f32 %v4984, %v4985
        %v4987 = vrot.slane %v4986, 2
        %v4988 = vadd.f32 %v4986, %v4987
        %v4989 = vrot.slane %v4988, 1
        %v4990 = vadd.f32 %v4988, %v4989
        %s4991 = vtos %v4990
        %p4992 = scmp.gt.f32.partialorder %s4991, 0.0
        %v4993 = vstv %s4791
        %vm4994 = vcmp.eq.s32.totalorder %v3702, %v4993
        %vm4995 = vcmp.eq.s32.totalorder %v3703, %v4993
        %vm4996 = vcmp.eq.s32.totalorder %v3704, %v4993
        %vm4997 = vcmp.eq.s32.totalorder %v3705, %v4993
        %vm4998 = vcmp.eq.s32.totalorder %v3706, %v4993
        %vm4999 = vcmp.eq.s32.totalorder %v3707, %v4993
        %vm5000 = vcmp.eq.s32.totalorder %v3708, %v4993
        %vm5001 = vcmp.eq.s32.totalorder %v3709, %v4993
        %vm5002 = vcmp.eq.s32.totalorder %v3710, %v4993
        %vm5003 = vcmp.eq.s32.totalorder %v3711, %v4993
        %vm5004 = vcmp.eq.s32.totalorder %v3712, %v4993
        %vm5005 = vcmp.eq.s32.totalorder %v3713, %v4993
        %s5006 = scalar_select %p4992, 1, 0
        %v5007 = vstv %s5006
        %vm5008 = vcmp.eq.s32.totalorder %v5007, 1
        %vm5009 = vmand %vm4994, %vm5008
        %vm5010 = vmand %vm4995, %vm5008
        %vm5011 = vmand %vm4996, %vm5008
        %vm5012 = vmand %vm4997, %vm5008
        %vm5013 = vmand %vm4998, %vm5008
        %vm5014 = vmand %vm4999, %vm5008
        %vm5015 = vmand %vm5000, %vm5008
        %vm5016 = vmand %vm5001, %vm5008
        %vm5017 = vmand %vm5002, %vm5008
        %vm5018 = vmand %vm5003, %vm5008
        %vm5019 = vmand %vm5004, %vm5008
        %vm5020 = vmand %vm5005, %vm5008
        %v5021 = vsel %vm5009, 0.0, %v4779
        %v5022 = vsel %vm5010, 0.0, %v4780
        %v5023 = vsel %vm5011, 0.0, %v4781
        %v5024 = vsel %vm5012, 0.0, %v4782
        %v5025 = vsel %vm5013, 0.0, %v4783
        %v5026 = vsel %vm5014, 0.0, %v4784
        %v5027 = vsel %vm5015, 0.0, %v4785
        %v5028 = vsel %vm5016, 0.0, %v4786
        %v5029 = vsel %vm5017, 0.0, %v4787
        %v5030 = vsel %vm5018, 0.0, %v4788
        %v5031 = vsel %vm5019, 0.0, %v4789
        %v5032 = vsel %vm5020, 0.0, %v4790
      $region41: #{rpn_forward.3} parent=31 // loop_footer
        %s4778 = sadd.s32 1, %s4774
      $region42: #{rpn_forward.3} parent=31 // loop_footer_branch
        %4773 = sbr.rel target = $region38
      $region43: #{rpn_forward.3} parent=31 // loop_exit
        _
      %v5045 = vcombine.low %v4779, %v4780
      %v5046 = vcombine.low %v4781, %v4782
      %v5047 = vcombine.low %v4783, %v4784
      %v5048 = vcombine.low %v4785, %v4786
      %v5050 = vunpack.c.l.s4 1966171168
      %v5051 = vunpack.c.0.s8 %v5050
      %v5052 = vlaneseq
      %v5053 = vshrl.u32 %v5052, 7
      %v5054 = vsub.s32 %v5051, %v5053
      %v5055 = vrot.slane %v5045, %v5054
      %v5057 = vunpack.c.l.s4 1966171168
      %v5058 = vunpack.c.0.s8 %v5057
      %v5059 = vlaneseq
      %v5060 = vshrl.u32 %v5059, 7
      %v5061 = vsub.s32 %v5058, %v5060
      %v5062 = vrot.slane %v5046, %v5061
      %v5064 = vunpack.c.l.s4 1966171168
      %v5065 = vunpack.c.0.s8 %v5064
      %v5066 = vlaneseq
      %v5067 = vshrl.u32 %v5066, 7
      %v5068 = vsub.s32 %v5065, %v5067
      %v5069 = vrot.slane %v5047, %v5068
      %v5071 = vunpack.c.l.s4 1966171168
      %v5072 = vunpack.c.0.s8 %v5071
      %v5073 = vlaneseq
      %v5074 = vshrl.u32 %v5073, 7
      %v5075 = vsub.s32 %v5072, %v5074
      %v5076 = vrot.slane %v5048, %v5075
      %v5077 = vcombine.low %v5055, %v5062
      %v5078 = vcombine.low %v5069, %v5076
      %v5080 = vunpack.c.l.s4 1966171168
      %v5081 = vunpack.c.0.s8 %v5080
      %v5082 = vlaneseq
      %v5083 = vshrl.u32 %v5082, 7
      %v5084 = vsub.s32 %v5081, %v5083
      %v5085 = vrot.slane %v5077, %v5084
      %v5087 = vunpack.c.l.s4 1966171168
      %v5088 = vunpack.c.0.s8 %v5087
      %v5089 = vlaneseq
      %v5090 = vshrl.u32 %v5089, 7
      %v5091 = vsub.s32 %v5088, %v5090
      %v5092 = vrot.slane %v5078, %v5091
      %v5093 = vcombine.low %v5085, %v5092
      %v5094 = vcombine.low %v4787, %v4788
      %v5095 = vcombine.low %v4789, %v4790
      %v5097 = vunpack.c.l.s4 1966171168
      %v5098 = vunpack.c.0.s8 %v5097
      %v5099 = vlaneseq
      %v5100 = vshrl.u32 %v5099, 7
      %v5101 = vsub.s32 %v5098, %v5100
      %v5102 = vrot.slane %v5094, %v5101
      %v5104 = vunpack.c.l.s4 1966171168
      %v5105 = vunpack.c.0.s8 %v5104
      %v5106 = vlaneseq
      %v5107 = vshrl.u32 %v5106, 7
      %v5108 = vsub.s32 %v5105, %v5107
      %v5109 = vrot.slane %v5095, %v5108
      %v5110 = vcombine.low %v5102, %v5109
      %v5112 = vunpack.c.l.s4 1966171168
      %v5113 = vunpack.c.0.s8 %v5112
      %v5114 = vlaneseq
      %v5115 = vshrl.u32 %v5114, 7
      %v5116 = vsub.s32 %v5113, %v5115
      %v5117 = vrot.slane %v5110, %v5116
      %5120 = vst [vmem:[%s3] sm:$0xff] %v5093
      %v5121 = vlaneseq
      %vm5122 = vcmp.ge.s32.totalorder %v5121, 0
      %vm5123 = vcmp.lt.s32.totalorder %v5121, 512
      %vm5124 = vmand %vm5122, %vm5123
      %5125 = vst.msk [vmem:[%s3 + $0x8] sm:$0xf] %vm5124, %v5117
      // Predicated region
      $region44: #{rpn_forward.3} parent=31 // pred_check
        %p5126 = pneg %p95
      $region45: #{rpn_forward.3} parent=31 // pred_check_branch
        %5128 = sbr.rel (%p5126) target = $region47
      $region46: #{rpn_forward.3} parent=31 // pred_region
        _
      $region47: #{rpn_forward.3} parent=31 // pred_fallthru
        _
      // Predicated region
      $region48: #{rpn_forward.3} parent=31 // pred_check
        %p5129 = pneg %p95
      $region49: #{rpn_forward.3} parent=31 // pred_check_branch
        %5131 = sbr.rel (%p5129) target = $region51
      $region50: #{rpn_forward.3} parent=31 // pred_region
        _
      $region51: #{rpn_forward.3} parent=31 // pred_fallthru
        _
    $region32: #{rpn_forward.3} parent=5 // pred_fallthru
      _
    %p5132 = scmp.le.s32.totalorder 2, %s9
    // Predicated region
    $region52: #{rpn_forward.3} parent=5 // pred_check
      %p5133 = pneg %p5132
    $region53: #{rpn_forward.3} parent=5 // pred_check_branch
      %5135 = sbr.rel (%p5133) target = $region55
    $region54: #{rpn_forward.3} parent=5 // pred_region
      %s5136 = ssub.s32 %s9, 2
    $region55: #{rpn_forward.3} parent=5 // pred_fallthru
      _
  $region6: #{rpn_forward.3} parent=0 // loop_footer
    %s13 = sadd.s32 1, %s9
  $region7: #{rpn_forward.3} parent=0 // loop_footer_branch
    %8 = sbr.rel target = $region3
  $region8: #{rpn_forward.3} parent=0 // loop_exit
    _

</llo_original>
